<compile_context>
chip_gen: v7x
topology: tpu7x:2x2x1
jax: 0.10.0
libtpu: 0.0.40
codegen_flags: <defaults>
</compile_context>

<pallas_src>
import functools
import math

import jax
import jax.numpy as jnp
from jax import lax
from jax.experimental import pallas as pl
from jax.experimental.pallas import tpu as pltpu

D_MODEL = 64
NUM_HEADS = 4          # TODO(synk): Encoder/Decoder internals not given; standard MHA assumed
DH = D_MODEL // NUM_HEADS
D_FF = 4 * D_MODEL     # TODO(synk): FFN width not given; 4*d_model assumed
VOCAB = 100
VOCAB_PAD = 128        # lane-dense padded vocab width
MAX_LEN = 80
NEG_INF = -1e9
SCALE = 1.0 / math.sqrt(DH)


# ----------------------------- in-kernel helpers -----------------------------

def _pad_bias(q_len, k_len, q_pad, k_pad, causal=False):
    """Additive mask (q_len, k_len) built from scalar pad counts (no HBM bias)."""
    rows = lax.broadcasted_iota(jnp.int32, (q_len, k_len), 0)
    cols = lax.broadcasted_iota(jnp.int32, (q_len, k_len), 1)
    valid = (rows < (q_len - q_pad)) & (cols < (k_len - k_pad))
    if causal:
        valid = valid & (cols <= rows)
    return jnp.where(valid, 0.0, NEG_INF).astype(jnp.float32)


# ----------------------------- fused forward kernel -----------------------------

def _fused_forward_kernel(
    # scalar prefetch (SMEM)
    enc_pads_ref, dec_pads_ref, dec_tok_ref,
    # activation block (Bt, S_enc, D)
    enc_x_ref,
    # packed weights (full-block VMEM residents)
    aw_in_ref,    # (3*3*H, D, DH)  bf16  per-head q/k/v projections, 3 attn blocks
    ab_in_ref,    # (3*3*H, 1, DH)  f32
    aw_out_ref,   # (3*H, DH, D)    bf16  per-head output projections
    ab_out_ref,   # (3, 1, D)       f32
    f_w1_ref,     # (2, D, D_FF)    bf16
    f_b1_ref,     # (2, 1, D_FF)    f32
    f_w2_ref,     # (2, D_FF, D)    bf16
    f_b2_ref,     # (2, 1, D)       f32
    ln_ref,       # (5, 2, D)       f32   gamma row 0, beta row 1
    vw_ref,       # (D, VOCAB_PAD)  bf16
    vb_ref,       # (1, VOCAB_PAD)  f32   (NEG_INF on padded columns)
    emb_ref,      # (VOCAB, D)      f32
    pe_ref,       # (S_dec, D)      f32
    # output
    out_ref,      # (Bt, S_dec, VOCAB_PAD) f32
    # scratch
    y_scr,        # VMEM (Bt*S_dec, D) f32 : decoder-input assembly buffer
    *, bt, s_enc, s_dec, apply_log_softmax):

    b0 = pl.program_id(0) * bt

    # per-batch pad scalars and additive masks (built in-kernel, no HBM traffic)
    enc_pads = [enc_pads_ref[b0 + bi] for bi in range(bt)]
    dec_pads = [dec_pads_ref[b0 + bi] for bi in range(bt)]
    enc_bias = [_pad_bias(s_enc, s_enc, p, p) for p in enc_pads]
    self_bias = [_pad_bias(s_dec, s_dec, p, p, causal=True) for p in dec_pads]
    cross_bias = [_pad_bias(s_dec, s_enc, dp, ep)
                  for dp, ep in zip(dec_pads, enc_pads)]

    def layernorm(x, idx):
        ln = ln_ref[idx]                                    # (2, D)
        mu = jnp.mean(x, axis=-1, keepdims=True)
        var = jnp.mean(jnp.square(x - mu), axis=-1, keepdims=True)
        return (x - mu) * lax.rsqrt(var + 1e-5) * ln[0:1, :] + ln[1:2, :]

    def attention(blk, xq, xkv, biases, sq, sk):
        """xq: (bt*sq, D) f32, xkv: (bt*sk, D) f32. Batched rows through MXU,
        per-sequence softmax via a static loop over bt."""
        xq_b = xq.astype(jnp.bfloat16)
        xkv_b = xkv.astype(jnp.bfloat16)
        out = jnp.zeros((bt * sq, D_MODEL), jnp.float32)    # single f32 accumulator
        for h in range(NUM_HEADS):
            iq = (blk * 3 + 0) * NUM_HEADS + h
            ik = (blk * 3 + 1) * NUM_HEADS + h
            iv = (blk * 3 + 2) * NUM_HEADS + h
            qh = (jnp.dot(xq_b, aw_in_ref[iq], preferred_element_type=jnp.float32)
                  + ab_in_ref[iq]).astype(jnp.bfloat16)     # (bt*sq, DH)
            kh = (jnp.dot(xkv_b, aw_in_ref[ik], preferred_element_type=jnp.float32)
                  + ab_in_ref[ik]).astype(jnp.bfloat16)     # (bt*sk, DH)
            vh = (jnp.dot(xkv_b, aw_in_ref[iv], preferred_element_type=jnp.float32)
                  + ab_in_ref[iv]).astype(jnp.bfloat16)     # (bt*sk, DH)
            pieces = []
            for bi in range(bt):                            # per-sequence softmax
                qb = qh[bi * sq:(bi + 1) * sq]              # aligned sublane slice
                kb = kh[bi * sk:(bi + 1) * sk]
                vb = vh[bi * sk:(bi + 1) * sk]
                s = lax.dot_general(qb, kb, (((1,), (1,)), ((), ())),
                                    preferred_element_type=jnp.float32)
                s = s * SCALE + biases[bi]
                m = jnp.max(s, axis=-1, keepdims=True)
                p = jnp.exp(s - m)
                p = p / jnp.sum(p, axis=-1, keepdims=True)  # exact division
                pieces.append(jnp.dot(p.astype(jnp.bfloat16), vb,
                                      preferred_element_type=jnp.float32))
            oh = pieces[0] if bt == 1 else jnp.concatenate(pieces, axis=0)
            out = out + jnp.dot(oh.astype(jnp.bfloat16),
                                aw_out_ref[blk * NUM_HEADS + h],
                                preferred_element_type=jnp.float32)
        return out + ab_out_ref[blk]

    def ffn(x, idx):
        h = jnp.dot(x.astype(jnp.bfloat16), f_w1_ref[idx],
                    preferred_element_type=jnp.float32) + f_b1_ref[idx]
        h = jnp.maximum(h, 0.0)
        return jnp.dot(h.astype(jnp.bfloat16), f_w2_ref[idx],
                       preferred_element_type=jnp.float32) + f_b2_ref[idx]

    # ---------------- encoder layer (batch folded into M rows) ----------------
    x = enc_x_ref[...].reshape(bt * s_enc, D_MODEL)          # (bt*S_enc, D) f32
    a = attention(0, x, x, enc_bias, s_enc, s_enc)
    x = layernorm(x + a, 0)
    x = layernorm(x + ffn(x, 0), 1)                           # encoder output

    # -------- decoder input: fused embedding gather + positional encoding ------
    for bi in range(bt):
        for s in range(s_dec):
            tok = dec_tok_ref[b0 + bi, s]                     # SMEM scalar
            y_scr[pl.ds(bi * s_dec + s, 1)] = (
                emb_ref[pl.ds(tok, 1)] + pe_ref[pl.ds(s, 1)])
    y = y_scr[...]                                            # (bt*S_dec, D) f32

    # ---------------- decoder layer ----------------
    a = attention(1, y, y, self_bias, s_dec, s_dec)           # masked self-attn
    y = layernorm(y + a, 2)
    c = attention(2, y, x, cross_bias, s_dec, s_enc)          # cross-attn
    y = layernorm(y + c, 3)
    y = layernorm(y + ffn(y, 1), 4)

    # ------------- vocab projection (+ optional log_softmax), lane-dense -------
    logits = jnp.dot(y.astype(jnp.bfloat16), vw_ref[...],
                     preferred_element_type=jnp.float32) + vb_ref[...]
    if apply_log_softmax:
        m = jnp.max(logits, axis=-1, keepdims=True)
        lse = jnp.log(jnp.sum(jnp.exp(logits - m), axis=-1, keepdims=True)) + m
        logits = logits - lse
    out_ref[...] = logits.reshape(bt, s_dec, VOCAB_PAD)


# ----------------------------- wrapper -----------------------------

def _rough_cost(B, s_enc, s_dec, operands):
    def attn_flops(mq, mk, sq, sk):
        return (2 * mq * D_MODEL * D_MODEL + 4 * mk * D_MODEL * D_MODEL
                + 4 * B * sq * sk * D_MODEL + 2 * mq * D_MODEL * D_MODEL)
    me, md = B * s_enc, B * s_dec
    flops = (attn_flops(me, me, s_enc, s_enc)
             + attn_flops(md, md, s_dec, s_dec)
             + attn_flops(md, me, s_dec, s_enc)
             + 4 * me * D_MODEL * D_FF + 4 * md * D_MODEL * D_FF
             + 2 * md * D_MODEL * VOCAB_PAD)
    transcendentals = (B * NUM_HEADS * (s_enc * s_enc + s_dec * s_dec
                                        + s_dec * s_enc) + md * VOCAB_PAD)
    bytes_accessed = int(sum(int(x.size) * x.dtype.itemsize for x in operands)
                         + md * VOCAB_PAD * 4)
    return pl.CostEstimate(flops=int(flops), transcendentals=int(transcendentals),
                           bytes_accessed=bytes_accessed)


def toy_model_forward(params, enc_x, dec_x, enc_pads, dec_pads,
                      apply_log_softmax=False, batch_tile=None):
    B, s_enc, _ = enc_x.shape
    s_dec = dec_x.shape[1]

    # Default Bt = B/2: keeps >= 2 "parallel" grid steps (both v7x TCs busy)
    # while still folding batch rows into the matmuls; override for v5e/v6e
    # with batch_tile=B if a single grid step is preferred.
    if batch_tile is None:
        batch_tile = B // 2 if (B >= 2 and B % 2 == 0) else 1
    assert B % batch_tile == 0
    bt = batch_tile

    enc_pads = jnp.asarray(enc_pads, jnp.int32)
    dec_pads = jnp.asarray(dec_pads, jnp.int32)
    dec_tok = jnp.asarray(dec_x, jnp.int32)

    pe = params["pe"][:s_dec]

    weights = [
        params["attn_w_in"], params["attn_b_in"],
        params["attn_w_out"], params["attn_b_out"],
        params["ffn_w1"], params["ffn_b1"], params["ffn_w2"], params["ffn_b2"],
        params["ln"], params["vocab_w"], params["vocab_b"],
        params["emb"], pe,
    ]

    def act_spec(s, d):
        return pl.BlockSpec((bt, s, d), lambda g, *_: (g, 0, 0))

    def w_spec(arr):
        zeros = (0,) * arr.ndim
        return pl.BlockSpec(arr.shape, lambda g, *_: zeros)

    in_specs = [act_spec(s_enc, D_MODEL)] + [w_spec(w) for w in weights]
    out_spec = pl.BlockSpec((bt, s_dec, VOCAB_PAD), lambda g, *_: (g, 0, 0))

    cost = _rough_cost(B, s_enc, s_dec,
                       [enc_x, dec_tok, enc_pads, dec_pads] + weights)

    out = pl.pallas_call(
        functools.partial(_fused_forward_kernel, bt=bt, s_enc=s_enc, s_dec=s_dec,
                          apply_log_softmax=apply_log_softmax),
        out_shape=jax.ShapeDtypeStruct((B, s_dec, VOCAB_PAD), jnp.float32),
        grid_spec=pltpu.PrefetchScalarGridSpec(
            num_scalar_prefetch=3,
            grid=(B // bt,),
            in_specs=in_specs,
            out_specs=out_spec,
            scratch_shapes=[pltpu.VMEM((bt * s_dec, D_MODEL), jnp.float32)],
        ),
        compiler_params=pltpu.CompilerParams(
            dimension_semantics=("parallel",)),
        cost_estimate=cost,
    )(enc_pads, dec_pads, dec_tok, enc_x, *weights)

    return out[:, :, :VOCAB]
    # TODO(synk): get_sampled_preds (data-dependent autoregressive sampling
    # loop) is host-side control flow and is not implemented as a kernel.


# ----------------------------- params -----------------------------

def positional_encoding(max_len, dmod):
    pos = jnp.arange(max_len, dtype=jnp.float32)[:, None]
    div = jnp.exp(jnp.arange(0, dmod, 2, dtype=jnp.float32)
                  * (-math.log(10000.0) / dmod))
    pe = jnp.zeros((max_len, dmod), jnp.float32)
    pe = pe.at[:, 0::2].set(jnp.sin(pos * div))
    pe = pe.at[:, 1::2].set(jnp.cos(pos * div))
    return pe


def init_params(key):
    keys = iter(jax.random.split(key, 64))

    def rand(shape, scale=0.02):
        return jax.random.normal(next(keys), shape, jnp.float32) * scale

    # Per-head weight split is done HERE (host side) so the kernel never has
    # to lane-slice Q/K/V / heads.  Attention blocks: 0=enc self, 1=dec self,
    # 2=dec cross.
    aw_in, ab_in, aw_out, ab_out = [], [], [], []
    for _blk in range(3):
        for _t in range(3):                           # q, k, v
            w = rand((D_MODEL, D_MODEL))
            b = rand((1, D_MODEL))
            for h in range(NUM_HEADS):
                aw_in.append(w[:, h * DH:(h + 1) * DH])
                ab_in.append(b[:, h * DH:(h + 1) * DH])
        wo = rand((D_MODEL, D_MODEL))
        ab_out.append(rand((1, D_MODEL)))
        for h in range(NUM_HEADS):
            aw_out.append(wo[h * DH:(h + 1) * DH, :])

    ffn_w1 = jnp.stack([rand((D_MODEL, D_FF)) for _ in range(2)])
    ffn_b1 = jnp.stack([rand((1, D_FF)) for _ in range(2)])
    ffn_w2 = jnp.stack([rand((D_FF, D_MODEL)) for _ in range(2)])
    ffn_b2 = jnp.stack([rand((1, D_MODEL)) for _ in range(2)])

    ln = jnp.stack([jnp.concatenate([jnp.ones((1, D_MODEL), jnp.float32),
                                     jnp.zeros((1, D_MODEL), jnp.float32)],
                                    axis=0) for _ in range(5)])

    vw = rand((D_MODEL, VOCAB))
    vb = rand((1, VOCAB))
    vocab_w = jnp.zeros((D_MODEL, VOCAB_PAD), jnp.float32).at[:, :VOCAB].set(vw)
    vocab_b = jnp.full((1, VOCAB_PAD), NEG_INF, jnp.float32).at[:, :VOCAB].set(vb)

    emb = rand((VOCAB, D_MODEL), scale=1.0)

    return {
        # MXU operands stored bf16; biases / LN / emb / PE stay f32.
        "attn_w_in": jnp.stack(aw_in).astype(jnp.bfloat16),    # (36, 64, 16)
        "attn_b_in": jnp.stack(ab_in),                         # (36, 1, 16)
        "attn_w_out": jnp.stack(aw_out).astype(jnp.bfloat16),  # (12, 16, 64)
        "attn_b_out": jnp.stack(ab_out),                       # (3, 1, 64)
        "ffn_w1": ffn_w1.astype(jnp.bfloat16),
        "ffn_b1": ffn_b1,
        "ffn_w2": ffn_w2.astype(jnp.bfloat16),
        "ffn_b2": ffn_b2,
        "ln": ln,
        "vocab_w": vocab_w.astype(jnp.bfloat16),
        "vocab_b": vocab_b,
        "emb": emb,
        "pe": positional_encoding(MAX_LEN, D_MODEL),
        # input_linear: present in __init__ but unused in forward (parity)
        "input_linear_w": rand((2048, D_MODEL)),
        "input_linear_b": jnp.zeros((1, D_MODEL), jnp.float32),
    }


# ----------------------------- main -----------------------------

if __name__ == "__main__":
    key = jax.random.PRNGKey(0)
    kp, kx, kd = jax.random.split(key, 3)

    params = init_params(kp)

    B, S_ENC, S_DEC = 2, 8, 8
    enc_x = jax.random.normal(kx, (B, S_ENC, D_MODEL), jnp.float32)
    dec_x = jax.random.randint(kd, (B, S_DEC), 0, VOCAB)
    enc_pads = [0, 2]
    dec_pads = [0, 1]

    out = toy_model_forward(params, enc_x, dec_x, enc_pads, dec_pads,
                            apply_log_softmax=True)
    out = jax.block_until_ready(out)
    assert out.shape == (B, S_DEC, VOCAB)
    assert bool(jnp.all(jnp.isfinite(out)))
    print("KERNEL_OK")
</pallas_src>

<mosaic_0001>
module attributes {stable_mosaic.version = 11 : i64} {
  func.func @_fused_forward_kernel(%arg0: i32, %arg1: memref<2xi32, #tpu.memory_space<smem>>, %arg2: memref<2xi32, #tpu.memory_space<smem>>, %arg3: memref<2x8xi32, #tpu.memory_space<smem>>, %arg4: memref<1x8x64xf32, #tpu.memory_space<vmem>>, %arg5: memref<36x64x16xbf16, #tpu.memory_space<vmem>>, %arg6: memref<36x1x16xf32, #tpu.memory_space<vmem>>, %arg7: memref<12x16x64xbf16, #tpu.memory_space<vmem>>, %arg8: memref<3x1x64xf32, #tpu.memory_space<vmem>>, %arg9: memref<2x64x256xbf16, #tpu.memory_space<vmem>>, %arg10: memref<2x1x256xf32, #tpu.memory_space<vmem>>, %arg11: memref<2x256x64xbf16, #tpu.memory_space<vmem>>, %arg12: memref<2x1x64xf32, #tpu.memory_space<vmem>>, %arg13: memref<5x2x64xf32, #tpu.memory_space<vmem>>, %arg14: memref<64x128xbf16, #tpu.memory_space<vmem>>, %arg15: memref<1x128xf32, #tpu.memory_space<vmem>>, %arg16: memref<100x64xf32, #tpu.memory_space<vmem>>, %arg17: memref<8x64xf32, #tpu.memory_space<vmem>>, %arg18: memref<1x8x128xf32, #tpu.memory_space<vmem>>, %arg19: memref<8x64xf32, #tpu.memory_space<vmem>>) attributes {dimension_semantics = [#tpu.dimension_semantics<parallel>], iteration_bounds = array<i64: 2>, scalar_prefetch = 3 : i64, scratch_operands = 1 : i64, tpu.core_type = #tpu.core_type<tc>, window_params = [{transform_indices = @transform_0, window_bounds = array<i64: 1, 8, 64>}, {pipeline_mode = #tpu.pipeline_mode<synchronous>, transform_indices = @transform_1, window_bounds = array<i64: 36, 64, 16>}, {pipeline_mode = #tpu.pipeline_mode<synchronous>, transform_indices = @transform_2, window_bounds = array<i64: 36, 1, 16>}, {pipeline_mode = #tpu.pipeline_mode<synchronous>, transform_indices = @transform_3, window_bounds = array<i64: 12, 16, 64>}, {pipeline_mode = #tpu.pipeline_mode<synchronous>, transform_indices = @transform_4, window_bounds = array<i64: 3, 1, 64>}, {pipeline_mode = #tpu.pipeline_mode<synchronous>, transform_indices = @transform_5, window_bounds = array<i64: 2, 64, 256>}, {pipeline_mode = #tpu.pipeline_mode<synchronous>, transform_indices = @transform_6, window_bounds = array<i64: 2, 1, 256>}, {pipeline_mode = #tpu.pipeline_mode<synchronous>, transform_indices = @transform_7, window_bounds = array<i64: 2, 256, 64>}, {pipeline_mode = #tpu.pipeline_mode<synchronous>, transform_indices = @transform_8, window_bounds = array<i64: 2, 1, 64>}, {pipeline_mode = #tpu.pipeline_mode<synchronous>, transform_indices = @transform_9, window_bounds = array<i64: 5, 2, 64>}, {pipeline_mode = #tpu.pipeline_mode<synchronous>, transform_indices = @transform_10, window_bounds = array<i64: 64, 128>}, {pipeline_mode = #tpu.pipeline_mode<synchronous>, transform_indices = @transform_11, window_bounds = array<i64: 1, 128>}, {pipeline_mode = #tpu.pipeline_mode<synchronous>, transform_indices = @transform_12, window_bounds = array<i64: 100, 64>}, {pipeline_mode = #tpu.pipeline_mode<synchronous>, transform_indices = @transform_13, window_bounds = array<i64: 8, 64>}, {transform_indices = @transform_14, window_bounds = array<i64: 1, 8, 128>}]} {
    %c1_i32 = arith.constant 1 : i32
    %0 = arith.muli %arg0, %c1_i32 : i32
    %c0_i32 = arith.constant 0 : i32
    %1 = arith.addi %0, %c0_i32 : i32
    %2 = arith.index_cast %1 : i32 to index
    %3 = memref.load %arg1[%2] : memref<2xi32, #tpu.memory_space<smem>>
    %c0_i32_0 = arith.constant 0 : i32
    %4 = arith.addi %0, %c0_i32_0 : i32
    %5 = arith.index_cast %4 : i32 to index
    %6 = memref.load %arg2[%5] : memref<2xi32, #tpu.memory_space<smem>>
    %7 = tpu.iota {dimensions = array<i32: 0>} : vector<8x8xi32>
    %8 = tpu.iota {dimensions = array<i32: 1>} : vector<8x8xi32>
    %c8_i32 = arith.constant 8 : i32
    %9 = arith.subi %c8_i32, %3 : i32
    %10 = vector.broadcast %9 : i32 to vector<8x8xi32>
    %11 = arith.cmpi slt, %7, %10 : vector<8x8xi32>
    %c8_i32_1 = arith.constant 8 : i32
    %12 = arith.subi %c8_i32_1, %3 : i32
    %13 = vector.broadcast %12 : i32 to vector<8x8xi32>
    %14 = arith.cmpi slt, %8, %13 : vector<8x8xi32>
    %15 = arith.andi %11, %14 : vector<8x8xi1>
    %cst = arith.constant 0.000000e+00 : f32
    %cst_2 = arith.constant -1.000000e+09 : f32
    %16 = vector.broadcast %cst : f32 to vector<8x8xf32>
    %17 = vector.broadcast %cst_2 : f32 to vector<8x8xf32>
    %18 = arith.select %15, %16, %17 : vector<8x8xi1>, vector<8x8xf32>
    %19 = tpu.iota {dimensions = array<i32: 0>} : vector<8x8xi32>
    %20 = tpu.iota {dimensions = array<i32: 1>} : vector<8x8xi32>
    %c8_i32_3 = arith.constant 8 : i32
    %21 = arith.subi %c8_i32_3, %6 : i32
    %22 = vector.broadcast %21 : i32 to vector<8x8xi32>
    %23 = arith.cmpi slt, %19, %22 : vector<8x8xi32>
    %c8_i32_4 = arith.constant 8 : i32
    %24 = arith.subi %c8_i32_4, %6 : i32
    %25 = vector.broadcast %24 : i32 to vector<8x8xi32>
    %26 = arith.cmpi slt, %20, %25 : vector<8x8xi32>
    %27 = arith.andi %23, %26 : vector<8x8xi1>
    %28 = arith.cmpi sle, %20, %19 : vector<8x8xi32>
    %29 = arith.andi %27, %28 : vector<8x8xi1>
    %cst_5 = arith.constant 0.000000e+00 : f32
    %cst_6 = arith.constant -1.000000e+09 : f32
    %30 = vector.broadcast %cst_5 : f32 to vector<8x8xf32>
    %31 = vector.broadcast %cst_6 : f32 to vector<8x8xf32>
    %32 = arith.select %29, %30, %31 : vector<8x8xi1>, vector<8x8xf32>
    %33 = tpu.iota {dimensions = array<i32: 0>} : vector<8x8xi32>
    %34 = tpu.iota {dimensions = array<i32: 1>} : vector<8x8xi32>
    %c8_i32_7 = arith.constant 8 : i32
    %35 = arith.subi %c8_i32_7, %6 : i32
    %36 = vector.broadcast %35 : i32 to vector<8x8xi32>
    %37 = arith.cmpi slt, %33, %36 : vector<8x8xi32>
    %c8_i32_8 = arith.constant 8 : i32
    %38 = arith.subi %c8_i32_8, %3 : i32
    %39 = vector.broadcast %38 : i32 to vector<8x8xi32>
    %40 = arith.cmpi slt, %34, %39 : vector<8x8xi32>
    %41 = arith.andi %37, %40 : vector<8x8xi1>
    %cst_9 = arith.constant 0.000000e+00 : f32
    %cst_10 = arith.constant -1.000000e+09 : f32
    %42 = vector.broadcast %cst_9 : f32 to vector<8x8xf32>
    %43 = vector.broadcast %cst_10 : f32 to vector<8x8xf32>
    %44 = arith.select %41, %42, %43 : vector<8x8xi1>, vector<8x8xf32>
    %c0 = arith.constant 0 : index
    %c0_11 = arith.constant 0 : index
    %c0_12 = arith.constant 0 : index
    %45 = vector.load %arg4[%c0, %c0_11, %c0_12] : memref<1x8x64xf32, #tpu.memory_space<vmem>>, vector<1x8x64xf32>
    %46 = vector.shape_cast %45 : vector<1x8x64xf32> to vector<8x64xf32>
    %47 = arith.truncf %46 : vector<8x64xf32> to vector<8x64xbf16>
    %48 = arith.truncf %46 : vector<8x64xf32> to vector<8x64xbf16>
    %cst_13 = arith.constant 0.000000e+00 : f32
    %49 = vector.broadcast %cst_13 : f32 to vector<8x64xf32>
    %c0_14 = arith.constant 0 : index
    %c0_15 = arith.constant 0 : index
    %c0_16 = arith.constant 0 : index
    %50 = vector.load %arg5[%c0_14, %c0_15, %c0_16] : memref<36x64x16xbf16, #tpu.memory_space<vmem>>, vector<1x64x16xbf16>
    %51 = vector.shape_cast %50 : vector<1x64x16xbf16> to vector<64x16xbf16>
    %cst_17 = arith.constant dense<0.000000e+00> : vector<8x16xf32>
    %52 = tpu.matmul %47, %51, %cst_17 {dimension_numbers = #tpu.dot_dimension_numbers<[1], [0], [0], [1], [0, 0, 1, 1], [], []>} : vector<8x64xbf16>, vector<64x16xbf16>, vector<8x16xf32> -> vector<8x16xf32>
    %c0_18 = arith.constant 0 : index
    %c0_19 = arith.constant 0 : index
    %c0_20 = arith.constant 0 : index
    %53 = vector.load %arg6[%c0_18, %c0_19, %c0_20] : memref<36x1x16xf32, #tpu.memory_space<vmem>>, vector<1x1x16xf32>
    %54 = vector.shape_cast %53 : vector<1x1x16xf32> to vector<1x16xf32>
    %55 = vector.broadcast %54 : vector<1x16xf32> to vector<8x16xf32>
    %56 = arith.addf %52, %55 : vector<8x16xf32>
    %57 = arith.truncf %56 : vector<8x16xf32> to vector<8x16xbf16>
    %c4 = arith.constant 4 : index
    %c0_21 = arith.constant 0 : index
    %c0_22 = arith.constant 0 : index
    %58 = vector.load %arg5[%c4, %c0_21, %c0_22] : memref<36x64x16xbf16, #tpu.memory_space<vmem>>, vector<1x64x16xbf16>
    %59 = vector.shape_cast %58 : vector<1x64x16xbf16> to vector<64x16xbf16>
    %cst_23 = arith.constant dense<0.000000e+00> : vector<8x16xf32>
    %60 = tpu.matmul %48, %59, %cst_23 {dimension_numbers = #tpu.dot_dimension_numbers<[1], [0], [0], [1], [0, 0, 1, 1], [], []>} : vector<8x64xbf16>, vector<64x16xbf16>, vector<8x16xf32> -> vector<8x16xf32>
    %c4_24 = arith.constant 4 : index
    %c0_25 = arith.constant 0 : index
    %c0_26 = arith.constant 0 : index
    %61 = vector.load %arg6[%c4_24, %c0_25, %c0_26] : memref<36x1x16xf32, #tpu.memory_space<vmem>>, vector<1x1x16xf32>
    %62 = vector.shape_cast %61 : vector<1x1x16xf32> to vector<1x16xf32>
    %63 = vector.broadcast %62 : vector<1x16xf32> to vector<8x16xf32>
    %64 = arith.addf %60, %63 : vector<8x16xf32>
    %65 = arith.truncf %64 : vector<8x16xf32> to vector<8x16xbf16>
    %c8 = arith.constant 8 : index
    %c0_27 = arith.constant 0 : index
    %c0_28 = arith.constant 0 : index
    %66 = vector.load %arg5[%c8, %c0_27, %c0_28] : memref<36x64x16xbf16, #tpu.memory_space<vmem>>, vector<1x64x16xbf16>
    %67 = vector.shape_cast %66 : vector<1x64x16xbf16> to vector<64x16xbf16>
    %cst_29 = arith.constant dense<0.000000e+00> : vector<8x16xf32>
    %68 = tpu.matmul %48, %67, %cst_29 {dimension_numbers = #tpu.dot_dimension_numbers<[1], [0], [0], [1], [0, 0, 1, 1], [], []>} : vector<8x64xbf16>, vector<64x16xbf16>, vector<8x16xf32> -> vector<8x16xf32>
    %c8_30 = arith.constant 8 : index
    %c0_31 = arith.constant 0 : index
    %c0_32 = arith.constant 0 : index
    %69 = vector.load %arg6[%c8_30, %c0_31, %c0_32] : memref<36x1x16xf32, #tpu.memory_space<vmem>>, vector<1x1x16xf32>
    %70 = vector.shape_cast %69 : vector<1x1x16xf32> to vector<1x16xf32>
    %71 = vector.broadcast %70 : vector<1x16xf32> to vector<8x16xf32>
    %72 = arith.addf %68, %71 : vector<8x16xf32>
    %73 = arith.truncf %72 : vector<8x16xf32> to vector<8x16xbf16>
    %cst_33 = arith.constant dense<0.000000e+00> : vector<8x8xf32>
    %74 = tpu.matmul %57, %65, %cst_33 {dimension_numbers = #tpu.dot_dimension_numbers<[1], [1], [0], [0], [0, 0, 1, 0], [], []>} : vector<8x16xbf16>, vector<8x16xbf16>, vector<8x8xf32> -> vector<8x8xf32>
    %cst_34 = arith.constant 2.500000e-01 : f32
    %75 = vector.broadcast %cst_34 : f32 to vector<8x8xf32>
    %76 = arith.mulf %74, %75 : vector<8x8xf32>
    %77 = arith.addf %76, %18 : vector<8x8xf32>
    %cst_35 = arith.constant dense<0xFF800000> : vector<8xf32>
    %78 = vector.multi_reduction <maximumf>, %77, %cst_35 [1] : vector<8x8xf32> to vector<8xf32>
    %79 = vector.shape_cast %78 : vector<8xf32> to vector<8x1xf32>
    %80 = vector.broadcast %79 : vector<8x1xf32> to vector<8x8xf32>
    %81 = arith.subf %77, %80 : vector<8x8xf32>
    %82 = math.exp %81 : vector<8x8xf32>
    %cst_36 = arith.constant dense<0.000000e+00> : vector<8xf32>
    %83 = vector.multi_reduction <add>, %82, %cst_36 [1] : vector<8x8xf32> to vector<8xf32>
    %84 = vector.shape_cast %83 : vector<8xf32> to vector<8x1xf32>
    %85 = vector.broadcast %84 : vector<8x1xf32> to vector<8x8xf32>
    %86 = arith.divf %82, %85 : vector<8x8xf32>
    %87 = arith.truncf %86 : vector<8x8xf32> to vector<8x8xbf16>
    %cst_37 = arith.constant dense<0.000000e+00> : vector<8x16xf32>
    %88 = tpu.matmul %87, %73, %cst_37 {dimension_numbers = #tpu.dot_dimension_numbers<[1], [0], [0], [1], [0, 0, 1, 1], [], []>} : vector<8x8xbf16>, vector<8x16xbf16>, vector<8x16xf32> -> vector<8x16xf32>
    %89 = arith.truncf %88 : vector<8x16xf32> to vector<8x16xbf16>
    %c0_38 = arith.constant 0 : index
    %c0_39 = arith.constant 0 : index
    %c0_40 = arith.constant 0 : index
    %90 = vector.load %arg7[%c0_38, %c0_39, %c0_40] : memref<12x16x64xbf16, #tpu.memory_space<vmem>>, vector<1x16x64xbf16>
    %91 = vector.shape_cast %90 : vector<1x16x64xbf16> to vector<16x64xbf16>
    %cst_41 = arith.constant dense<0.000000e+00> : vector<8x64xf32>
    %92 = tpu.matmul %89, %91, %cst_41 {dimension_numbers = #tpu.dot_dimension_numbers<[1], [0], [0], [1], [0, 0, 1, 1], [], []>} : vector<8x16xbf16>, vector<16x64xbf16>, vector<8x64xf32> -> vector<8x64xf32>
    %93 = arith.addf %49, %92 : vector<8x64xf32>
    %c1 = arith.constant 1 : index
    %c0_42 = arith.constant 0 : index
    %c0_43 = arith.constant 0 : index
    %94 = vector.load %arg5[%c1, %c0_42, %c0_43] : memref<36x64x16xbf16, #tpu.memory_space<vmem>>, vector<1x64x16xbf16>
    %95 = vector.shape_cast %94 : vector<1x64x16xbf16> to vector<64x16xbf16>
    %cst_44 = arith.constant dense<0.000000e+00> : vector<8x16xf32>
    %96 = tpu.matmul %47, %95, %cst_44 {dimension_numbers = #tpu.dot_dimension_numbers<[1], [0], [0], [1], [0, 0, 1, 1], [], []>} : vector<8x64xbf16>, vector<64x16xbf16>, vector<8x16xf32> -> vector<8x16xf32>
    %c1_45 = arith.constant 1 : index
    %c0_46 = arith.constant 0 : index
    %c0_47 = arith.constant 0 : index
    %97 = vector.load %arg6[%c1_45, %c0_46, %c0_47] : memref<36x1x16xf32, #tpu.memory_space<vmem>>, vector<1x1x16xf32>
    %98 = vector.shape_cast %97 : vector<1x1x16xf32> to vector<1x16xf32>
    %99 = vector.broadcast %98 : vector<1x16xf32> to vector<8x16xf32>
    %100 = arith.addf %96, %99 : vector<8x16xf32>
    %101 = arith.truncf %100 : vector<8x16xf32> to vector<8x16xbf16>
    %c5 = arith.constant 5 : index
    %c0_48 = arith.constant 0 : index
    %c0_49 = arith.constant 0 : index
    %102 = vector.load %arg5[%c5, %c0_48, %c0_49] : memref<36x64x16xbf16, #tpu.memory_space<vmem>>, vector<1x64x16xbf16>
    %103 = vector.shape_cast %102 : vector<1x64x16xbf16> to vector<64x16xbf16>
    %cst_50 = arith.constant dense<0.000000e+00> : vector<8x16xf32>
    %104 = tpu.matmul %48, %103, %cst_50 {dimension_numbers = #tpu.dot_dimension_numbers<[1], [0], [0], [1], [0, 0, 1, 1], [], []>} : vector<8x64xbf16>, vector<64x16xbf16>, vector<8x16xf32> -> vector<8x16xf32>
    %c5_51 = arith.constant 5 : index
    %c0_52 = arith.constant 0 : index
    %c0_53 = arith.constant 0 : index
    %105 = vector.load %arg6[%c5_51, %c0_52, %c0_53] : memref<36x1x16xf32, #tpu.memory_space<vmem>>, vector<1x1x16xf32>
    %106 = vector.shape_cast %105 : vector<1x1x16xf32> to vector<1x16xf32>
    %107 = vector.broadcast %106 : vector<1x16xf32> to vector<8x16xf32>
    %108 = arith.addf %104, %107 : vector<8x16xf32>
    %109 = arith.truncf %108 : vector<8x16xf32> to vector<8x16xbf16>
    %c9 = arith.constant 9 : index
    %c0_54 = arith.constant 0 : index
    %c0_55 = arith.constant 0 : index
    %110 = vector.load %arg5[%c9, %c0_54, %c0_55] : memref<36x64x16xbf16, #tpu.memory_space<vmem>>, vector<1x64x16xbf16>
    %111 = vector.shape_cast %110 : vector<1x64x16xbf16> to vector<64x16xbf16>
    %cst_56 = arith.constant dense<0.000000e+00> : vector<8x16xf32>
    %112 = tpu.matmul %48, %111, %cst_56 {dimension_numbers = #tpu.dot_dimension_numbers<[1], [0], [0], [1], [0, 0, 1, 1], [], []>} : vector<8x64xbf16>, vector<64x16xbf16>, vector<8x16xf32> -> vector<8x16xf32>
    %c9_57 = arith.constant 9 : index
    %c0_58 = arith.constant 0 : index
    %c0_59 = arith.constant 0 : index
    %113 = vector.load %arg6[%c9_57, %c0_58, %c0_59] : memref<36x1x16xf32, #tpu.memory_space<vmem>>, vector<1x1x16xf32>
    %114 = vector.shape_cast %113 : vector<1x1x16xf32> to vector<1x16xf32>
    %115 = vector.broadcast %114 : vector<1x16xf32> to vector<8x16xf32>
    %116 = arith.addf %112, %115 : vector<8x16xf32>
    %117 = arith.truncf %116 : vector<8x16xf32> to vector<8x16xbf16>
    %cst_60 = arith.constant dense<0.000000e+00> : vector<8x8xf32>
    %118 = tpu.matmul %101, %109, %cst_60 {dimension_numbers = #tpu.dot_dimension_numbers<[1], [1], [0], [0], [0, 0, 1, 0], [], []>} : vector<8x16xbf16>, vector<8x16xbf16>, vector<8x8xf32> -> vector<8x8xf32>
    %cst_61 = arith.constant 2.500000e-01 : f32
    %119 = vector.broadcast %cst_61 : f32 to vector<8x8xf32>
    %120 = arith.mulf %118, %119 : vector<8x8xf32>
    %121 = arith.addf %120, %18 : vector<8x8xf32>
    %cst_62 = arith.constant dense<0xFF800000> : vector<8xf32>
    %122 = vector.multi_reduction <maximumf>, %121, %cst_62 [1] : vector<8x8xf32> to vector<8xf32>
    %123 = vector.shape_cast %122 : vector<8xf32> to vector<8x1xf32>
    %124 = vector.broadcast %123 : vector<8x1xf32> to vector<8x8xf32>
    %125 = arith.subf %121, %124 : vector<8x8xf32>
    %126 = math.exp %125 : vector<8x8xf32>
    %cst_63 = arith.constant dense<0.000000e+00> : vector<8xf32>
    %127 = vector.multi_reduction <add>, %126, %cst_63 [1] : vector<8x8xf32> to vector<8xf32>
    %128 = vector.shape_cast %127 : vector<8xf32> to vector<8x1xf32>
    %129 = vector.broadcast %128 : vector<8x1xf32> to vector<8x8xf32>
    %130 = arith.divf %126, %129 : vector<8x8xf32>
    %131 = arith.truncf %130 : vector<8x8xf32> to vector<8x8xbf16>
    %cst_64 = arith.constant dense<0.000000e+00> : vector<8x16xf32>
    %132 = tpu.matmul %131, %117, %cst_64 {dimension_numbers = #tpu.dot_dimension_numbers<[1], [0], [0], [1], [0, 0, 1, 1], [], []>} : vector<8x8xbf16>, vector<8x16xbf16>, vector<8x16xf32> -> vector<8x16xf32>
    %133 = arith.truncf %132 : vector<8x16xf32> to vector<8x16xbf16>
    %c1_65 = arith.constant 1 : index
    %c0_66 = arith.constant 0 : index
    %c0_67 = arith.constant 0 : index
    %134 = vector.load %arg7[%c1_65, %c0_66, %c0_67] : memref<12x16x64xbf16, #tpu.memory_space<vmem>>, vector<1x16x64xbf16>
    %135 = vector.shape_cast %134 : vector<1x16x64xbf16> to vector<16x64xbf16>
    %cst_68 = arith.constant dense<0.000000e+00> : vector<8x64xf32>
    %136 = tpu.matmul %133, %135, %cst_68 {dimension_numbers = #tpu.dot_dimension_numbers<[1], [0], [0], [1], [0, 0, 1, 1], [], []>} : vector<8x16xbf16>, vector<16x64xbf16>, vector<8x64xf32> -> vector<8x64xf32>
    %137 = arith.addf %93, %136 : vector<8x64xf32>
    %c2 = arith.constant 2 : index
    %c0_69 = arith.constant 0 : index
    %c0_70 = arith.constant 0 : index
    %138 = vector.load %arg5[%c2, %c0_69, %c0_70] : memref<36x64x16xbf16, #tpu.memory_space<vmem>>, vector<1x64x16xbf16>
    %139 = vector.shape_cast %138 : vector<1x64x16xbf16> to vector<64x16xbf16>
    %cst_71 = arith.constant dense<0.000000e+00> : vector<8x16xf32>
    %140 = tpu.matmul %47, %139, %cst_71 {dimension_numbers = #tpu.dot_dimension_numbers<[1], [0], [0], [1], [0, 0, 1, 1], [], []>} : vector<8x64xbf16>, vector<64x16xbf16>, vector<8x16xf32> -> vector<8x16xf32>
    %c2_72 = arith.constant 2 : index
    %c0_73 = arith.constant 0 : index
    %c0_74 = arith.constant 0 : index
    %141 = vector.load %arg6[%c2_72, %c0_73, %c0_74] : memref<36x1x16xf32, #tpu.memory_space<vmem>>, vector<1x1x16xf32>
    %142 = vector.shape_cast %141 : vector<1x1x16xf32> to vector<1x16xf32>
    %143 = vector.broadcast %142 : vector<1x16xf32> to vector<8x16xf32>
    %144 = arith.addf %140, %143 : vector<8x16xf32>
    %145 = arith.truncf %144 : vector<8x16xf32> to vector<8x16xbf16>
    %c6 = arith.constant 6 : index
    %c0_75 = arith.constant 0 : index
    %c0_76 = arith.constant 0 : index
    %146 = vector.load %arg5[%c6, %c0_75, %c0_76] : memref<36x64x16xbf16, #tpu.memory_space<vmem>>, vector<1x64x16xbf16>
    %147 = vector.shape_cast %146 : vector<1x64x16xbf16> to vector<64x16xbf16>
    %cst_77 = arith.constant dense<0.000000e+00> : vector<8x16xf32>
    %148 = tpu.matmul %48, %147, %cst_77 {dimension_numbers = #tpu.dot_dimension_numbers<[1], [0], [0], [1], [0, 0, 1, 1], [], []>} : vector<8x64xbf16>, vector<64x16xbf16>, vector<8x16xf32> -> vector<8x16xf32>
    %c6_78 = arith.constant 6 : index
    %c0_79 = arith.constant 0 : index
    %c0_80 = arith.constant 0 : index
    %149 = vector.load %arg6[%c6_78, %c0_79, %c0_80] : memref<36x1x16xf32, #tpu.memory_space<vmem>>, vector<1x1x16xf32>
    %150 = vector.shape_cast %149 : vector<1x1x16xf32> to vector<1x16xf32>
    %151 = vector.broadcast %150 : vector<1x16xf32> to vector<8x16xf32>
    %152 = arith.addf %148, %151 : vector<8x16xf32>
    %153 = arith.truncf %152 : vector<8x16xf32> to vector<8x16xbf16>
    %c10 = arith.constant 10 : index
    %c0_81 = arith.constant 0 : index
    %c0_82 = arith.constant 0 : index
    %154 = vector.load %arg5[%c10, %c0_81, %c0_82] : memref<36x64x16xbf16, #tpu.memory_space<vmem>>, vector<1x64x16xbf16>
    %155 = vector.shape_cast %154 : vector<1x64x16xbf16> to vector<64x16xbf16>
    %cst_83 = arith.constant dense<0.000000e+00> : vector<8x16xf32>
    %156 = tpu.matmul %48, %155, %cst_83 {dimension_numbers = #tpu.dot_dimension_numbers<[1], [0], [0], [1], [0, 0, 1, 1], [], []>} : vector<8x64xbf16>, vector<64x16xbf16>, vector<8x16xf32> -> vector<8x16xf32>
    %c10_84 = arith.constant 10 : index
    %c0_85 = arith.constant 0 : index
    %c0_86 = arith.constant 0 : index
    %157 = vector.load %arg6[%c10_84, %c0_85, %c0_86] : memref<36x1x16xf32, #tpu.memory_space<vmem>>, vector<1x1x16xf32>
    %158 = vector.shape_cast %157 : vector<1x1x16xf32> to vector<1x16xf32>
    %159 = vector.broadcast %158 : vector<1x16xf32> to vector<8x16xf32>
    %160 = arith.addf %156, %159 : vector<8x16xf32>
    %161 = arith.truncf %160 : vector<8x16xf32> to vector<8x16xbf16>
    %cst_87 = arith.constant dense<0.000000e+00> : vector<8x8xf32>
    %162 = tpu.matmul %145, %153, %cst_87 {dimension_numbers = #tpu.dot_dimension_numbers<[1], [1], [0], [0], [0, 0, 1, 0], [], []>} : vector<8x16xbf16>, vector<8x16xbf16>, vector<8x8xf32> -> vector<8x8xf32>
    %cst_88 = arith.constant 2.500000e-01 : f32
    %163 = vector.broadcast %cst_88 : f32 to vector<8x8xf32>
    %164 = arith.mulf %162, %163 : vector<8x8xf32>
    %165 = arith.addf %164, %18 : vector<8x8xf32>
    %cst_89 = arith.constant dense<0xFF800000> : vector<8xf32>
    %166 = vector.multi_reduction <maximumf>, %165, %cst_89 [1] : vector<8x8xf32> to vector<8xf32>
    %167 = vector.shape_cast %166 : vector<8xf32> to vector<8x1xf32>
    %168 = vector.broadcast %167 : vector<8x1xf32> to vector<8x8xf32>
    %169 = arith.subf %165, %168 : vector<8x8xf32>
    %170 = math.exp %169 : vector<8x8xf32>
    %cst_90 = arith.constant dense<0.000000e+00> : vector<8xf32>
    %171 = vector.multi_reduction <add>, %170, %cst_90 [1] : vector<8x8xf32> to vector<8xf32>
    %172 = vector.shape_cast %171 : vector<8xf32> to vector<8x1xf32>
    %173 = vector.broadcast %172 : vector<8x1xf32> to vector<8x8xf32>
    %174 = arith.divf %170, %173 : vector<8x8xf32>
    %175 = arith.truncf %174 : vector<8x8xf32> to vector<8x8xbf16>
    %cst_91 = arith.constant dense<0.000000e+00> : vector<8x16xf32>
    %176 = tpu.matmul %175, %161, %cst_91 {dimension_numbers = #tpu.dot_dimension_numbers<[1], [0], [0], [1], [0, 0, 1, 1], [], []>} : vector<8x8xbf16>, vector<8x16xbf16>, vector<8x16xf32> -> vector<8x16xf32>
    %177 = arith.truncf %176 : vector<8x16xf32> to vector<8x16xbf16>
    %c2_92 = arith.constant 2 : index
    %c0_93 = arith.constant 0 : index
    %c0_94 = arith.constant 0 : index
    %178 = vector.load %arg7[%c2_92, %c0_93, %c0_94] : memref<12x16x64xbf16, #tpu.memory_space<vmem>>, vector<1x16x64xbf16>
    %179 = vector.shape_cast %178 : vector<1x16x64xbf16> to vector<16x64xbf16>
    %cst_95 = arith.constant dense<0.000000e+00> : vector<8x64xf32>
    %180 = tpu.matmul %177, %179, %cst_95 {dimension_numbers = #tpu.dot_dimension_numbers<[1], [0], [0], [1], [0, 0, 1, 1], [], []>} : vector<8x16xbf16>, vector<16x64xbf16>, vector<8x64xf32> -> vector<8x64xf32>
    %181 = arith.addf %137, %180 : vector<8x64xf32>
    %c3 = arith.constant 3 : index
    %c0_96 = arith.constant 0 : index
    %c0_97 = arith.constant 0 : index
    %182 = vector.load %arg5[%c3, %c0_96, %c0_97] : memref<36x64x16xbf16, #tpu.memory_space<vmem>>, vector<1x64x16xbf16>
    %183 = vector.shape_cast %182 : vector<1x64x16xbf16> to vector<64x16xbf16>
    %cst_98 = arith.constant dense<0.000000e+00> : vector<8x16xf32>
    %184 = tpu.matmul %47, %183, %cst_98 {dimension_numbers = #tpu.dot_dimension_numbers<[1], [0], [0], [1], [0, 0, 1, 1], [], []>} : vector<8x64xbf16>, vector<64x16xbf16>, vector<8x16xf32> -> vector<8x16xf32>
    %c3_99 = arith.constant 3 : index
    %c0_100 = arith.constant 0 : index
    %c0_101 = arith.constant 0 : index
    %185 = vector.load %arg6[%c3_99, %c0_100, %c0_101] : memref<36x1x16xf32, #tpu.memory_space<vmem>>, vector<1x1x16xf32>
    %186 = vector.shape_cast %185 : vector<1x1x16xf32> to vector<1x16xf32>
    %187 = vector.broadcast %186 : vector<1x16xf32> to vector<8x16xf32>
    %188 = arith.addf %184, %187 : vector<8x16xf32>
    %189 = arith.truncf %188 : vector<8x16xf32> to vector<8x16xbf16>
    %c7 = arith.constant 7 : index
    %c0_102 = arith.constant 0 : index
    %c0_103 = arith.constant 0 : index
    %190 = vector.load %arg5[%c7, %c0_102, %c0_103] : memref<36x64x16xbf16, #tpu.memory_space<vmem>>, vector<1x64x16xbf16>
    %191 = vector.shape_cast %190 : vector<1x64x16xbf16> to vector<64x16xbf16>
    %cst_104 = arith.constant dense<0.000000e+00> : vector<8x16xf32>
    %192 = tpu.matmul %48, %191, %cst_104 {dimension_numbers = #tpu.dot_dimension_numbers<[1], [0], [0], [1], [0, 0, 1, 1], [], []>} : vector<8x64xbf16>, vector<64x16xbf16>, vector<8x16xf32> -> vector<8x16xf32>
    %c7_105 = arith.constant 7 : index
    %c0_106 = arith.constant 0 : index
    %c0_107 = arith.constant 0 : index
    %193 = vector.load %arg6[%c7_105, %c0_106, %c0_107] : memref<36x1x16xf32, #tpu.memory_space<vmem>>, vector<1x1x16xf32>
    %194 = vector.shape_cast %193 : vector<1x1x16xf32> to vector<1x16xf32>
    %195 = vector.broadcast %194 : vector<1x16xf32> to vector<8x16xf32>
    %196 = arith.addf %192, %195 : vector<8x16xf32>
    %197 = arith.truncf %196 : vector<8x16xf32> to vector<8x16xbf16>
    %c11 = arith.constant 11 : index
    %c0_108 = arith.constant 0 : index
    %c0_109 = arith.constant 0 : index
    %198 = vector.load %arg5[%c11, %c0_108, %c0_109] : memref<36x64x16xbf16, #tpu.memory_space<vmem>>, vector<1x64x16xbf16>
    %199 = vector.shape_cast %198 : vector<1x64x16xbf16> to vector<64x16xbf16>
    %cst_110 = arith.constant dense<0.000000e+00> : vector<8x16xf32>
    %200 = tpu.matmul %48, %199, %cst_110 {dimension_numbers = #tpu.dot_dimension_numbers<[1], [0], [0], [1], [0, 0, 1, 1], [], []>} : vector<8x64xbf16>, vector<64x16xbf16>, vector<8x16xf32> -> vector<8x16xf32>
    %c11_111 = arith.constant 11 : index
    %c0_112 = arith.constant 0 : index
    %c0_113 = arith.constant 0 : index
    %201 = vector.load %arg6[%c11_111, %c0_112, %c0_113] : memref<36x1x16xf32, #tpu.memory_space<vmem>>, vector<1x1x16xf32>
    %202 = vector.shape_cast %201 : vector<1x1x16xf32> to vector<1x16xf32>
    %203 = vector.broadcast %202 : vector<1x16xf32> to vector<8x16xf32>
    %204 = arith.addf %200, %203 : vector<8x16xf32>
    %205 = arith.truncf %204 : vector<8x16xf32> to vector<8x16xbf16>
    %cst_114 = arith.constant dense<0.000000e+00> : vector<8x8xf32>
    %206 = tpu.matmul %189, %197, %cst_114 {dimension_numbers = #tpu.dot_dimension_numbers<[1], [1], [0], [0], [0, 0, 1, 0], [], []>} : vector<8x16xbf16>, vector<8x16xbf16>, vector<8x8xf32> -> vector<8x8xf32>
    %cst_115 = arith.constant 2.500000e-01 : f32
    %207 = vector.broadcast %cst_115 : f32 to vector<8x8xf32>
    %208 = arith.mulf %206, %207 : vector<8x8xf32>
    %209 = arith.addf %208, %18 : vector<8x8xf32>
    %cst_116 = arith.constant dense<0xFF800000> : vector<8xf32>
    %210 = vector.multi_reduction <maximumf>, %209, %cst_116 [1] : vector<8x8xf32> to vector<8xf32>
    %211 = vector.shape_cast %210 : vector<8xf32> to vector<8x1xf32>
    %212 = vector.broadcast %211 : vector<8x1xf32> to vector<8x8xf32>
    %213 = arith.subf %209, %212 : vector<8x8xf32>
    %214 = math.exp %213 : vector<8x8xf32>
    %cst_117 = arith.constant dense<0.000000e+00> : vector<8xf32>
    %215 = vector.multi_reduction <add>, %214, %cst_117 [1] : vector<8x8xf32> to vector<8xf32>
    %216 = vector.shape_cast %215 : vector<8xf32> to vector<8x1xf32>
    %217 = vector.broadcast %216 : vector<8x1xf32> to vector<8x8xf32>
    %218 = arith.divf %214, %217 : vector<8x8xf32>
    %219 = arith.truncf %218 : vector<8x8xf32> to vector<8x8xbf16>
    %cst_118 = arith.constant dense<0.000000e+00> : vector<8x16xf32>
    %220 = tpu.matmul %219, %205, %cst_118 {dimension_numbers = #tpu.dot_dimension_numbers<[1], [0], [0], [1], [0, 0, 1, 1], [], []>} : vector<8x8xbf16>, vector<8x16xbf16>, vector<8x16xf32> -> vector<8x16xf32>
    %221 = arith.truncf %220 : vector<8x16xf32> to vector<8x16xbf16>
    %c3_119 = arith.constant 3 : index
    %c0_120 = arith.constant 0 : index
    %c0_121 = arith.constant 0 : index
    %222 = vector.load %arg7[%c3_119, %c0_120, %c0_121] : memref<12x16x64xbf16, #tpu.memory_space<vmem>>, vector<1x16x64xbf16>
    %223 = vector.shape_cast %222 : vector<1x16x64xbf16> to vector<16x64xbf16>
    %cst_122 = arith.constant dense<0.000000e+00> : vector<8x64xf32>
    %224 = tpu.matmul %221, %223, %cst_122 {dimension_numbers = #tpu.dot_dimension_numbers<[1], [0], [0], [1], [0, 0, 1, 1], [], []>} : vector<8x16xbf16>, vector<16x64xbf16>, vector<8x64xf32> -> vector<8x64xf32>
    %225 = arith.addf %181, %224 : vector<8x64xf32>
    %c0_123 = arith.constant 0 : index
    %c0_124 = arith.constant 0 : index
    %c0_125 = arith.constant 0 : index
    %226 = vector.load %arg8[%c0_123, %c0_124, %c0_125] : memref<3x1x64xf32, #tpu.memory_space<vmem>>, vector<1x1x64xf32>
    %227 = vector.shape_cast %226 : vector<1x1x64xf32> to vector<1x64xf32>
    %228 = vector.broadcast %227 : vector<1x64xf32> to vector<8x64xf32>
    %229 = arith.addf %225, %228 : vector<8x64xf32>
    %230 = arith.addf %46, %229 : vector<8x64xf32>
    %c0_126 = arith.constant 0 : index
    %c0_127 = arith.constant 0 : index
    %c0_128 = arith.constant 0 : index
    %231 = vector.load %arg13[%c0_126, %c0_127, %c0_128] : memref<5x2x64xf32, #tpu.memory_space<vmem>>, vector<1x2x64xf32>
    %232 = vector.shape_cast %231 : vector<1x2x64xf32> to vector<2x64xf32>
    %cst_129 = arith.constant dense<0.000000e+00> : vector<8xf32>
    %233 = vector.multi_reduction <add>, %230, %cst_129 [1] : vector<8x64xf32> to vector<8xf32>
    %234 = vector.shape_cast %233 : vector<8xf32> to vector<8x1xf32>
    %cst_130 = arith.constant 6.400000e+01 : f32
    %235 = vector.broadcast %cst_130 : f32 to vector<8x1xf32>
    %236 = arith.divf %234, %235 : vector<8x1xf32>
    %237 = vector.broadcast %236 : vector<8x1xf32> to vector<8x64xf32>
    %238 = arith.subf %230, %237 : vector<8x64xf32>
    %239 = arith.mulf %238, %238 : vector<8x64xf32>
    %cst_131 = arith.constant dense<0.000000e+00> : vector<8xf32>
    %240 = vector.multi_reduction <add>, %239, %cst_131 [1] : vector<8x64xf32> to vector<8xf32>
    %241 = vector.shape_cast %240 : vector<8xf32> to vector<8x1xf32>
    %cst_132 = arith.constant 6.400000e+01 : f32
    %242 = vector.broadcast %cst_132 : f32 to vector<8x1xf32>
    %243 = arith.divf %241, %242 : vector<8x1xf32>
    %244 = vector.broadcast %236 : vector<8x1xf32> to vector<8x64xf32>
    %245 = arith.subf %230, %244 : vector<8x64xf32>
    %cst_133 = arith.constant 9.99999974E-6 : f32
    %246 = vector.broadcast %cst_133 : f32 to vector<8x1xf32>
    %247 = arith.addf %243, %246 : vector<8x1xf32>
    %248 = math.rsqrt %247 : vector<8x1xf32>
    %249 = vector.broadcast %248 : vector<8x1xf32> to vector<8x64xf32>
    %250 = arith.mulf %245, %249 : vector<8x64xf32>
    %251 = vector.extract_strided_slice %232 {offsets = [0, 0], sizes = [1, 64], strides = [1, 1]} : vector<2x64xf32> to vector<1x64xf32>
    %252 = vector.broadcast %251 : vector<1x64xf32> to vector<8x64xf32>
    %253 = arith.mulf %250, %252 : vector<8x64xf32>
    %254 = vector.extract_strided_slice %232 {offsets = [1, 0], sizes = [1, 64], strides = [1, 1]} : vector<2x64xf32> to vector<1x64xf32>
    %255 = vector.broadcast %254 : vector<1x64xf32> to vector<8x64xf32>
    %256 = arith.addf %253, %255 : vector<8x64xf32>
    %257 = arith.truncf %256 : vector<8x64xf32> to vector<8x64xbf16>
    %c0_134 = arith.constant 0 : index
    %c0_135 = arith.constant 0 : index
    %c0_136 = arith.constant 0 : index
    %258 = vector.load %arg9[%c0_134, %c0_135, %c0_136] : memref<2x64x256xbf16, #tpu.memory_space<vmem>>, vector<1x64x256xbf16>
    %259 = vector.shape_cast %258 : vector<1x64x256xbf16> to vector<64x256xbf16>
    %cst_137 = arith.constant dense<0.000000e+00> : vector<8x256xf32>
    %260 = tpu.matmul %257, %259, %cst_137 {dimension_numbers = #tpu.dot_dimension_numbers<[1], [0], [0], [1], [0, 0, 1, 1], [], []>} : vector<8x64xbf16>, vector<64x256xbf16>, vector<8x256xf32> -> vector<8x256xf32>
    %c0_138 = arith.constant 0 : index
    %c0_139 = arith.constant 0 : index
    %c0_140 = arith.constant 0 : index
    %261 = vector.load %arg10[%c0_138, %c0_139, %c0_140] : memref<2x1x256xf32, #tpu.memory_space<vmem>>, vector<1x1x256xf32>
    %262 = vector.shape_cast %261 : vector<1x1x256xf32> to vector<1x256xf32>
    %263 = vector.broadcast %262 : vector<1x256xf32> to vector<8x256xf32>
    %264 = arith.addf %260, %263 : vector<8x256xf32>
    %cst_141 = arith.constant 0.000000e+00 : f32
    %265 = vector.broadcast %cst_141 : f32 to vector<8x256xf32>
    %266 = arith.maximumf %264, %265 : vector<8x256xf32>
    %267 = arith.truncf %266 : vector<8x256xf32> to vector<8x256xbf16>
    %c0_142 = arith.constant 0 : index
    %c0_143 = arith.constant 0 : index
    %c0_144 = arith.constant 0 : index
    %268 = vector.load %arg11[%c0_142, %c0_143, %c0_144] : memref<2x256x64xbf16, #tpu.memory_space<vmem>>, vector<1x256x64xbf16>
    %269 = vector.shape_cast %268 : vector<1x256x64xbf16> to vector<256x64xbf16>
    %cst_145 = arith.constant dense<0.000000e+00> : vector<8x64xf32>
    %270 = tpu.matmul %267, %269, %cst_145 {dimension_numbers = #tpu.dot_dimension_numbers<[1], [0], [0], [1], [0, 0, 1, 1], [], []>} : vector<8x256xbf16>, vector<256x64xbf16>, vector<8x64xf32> -> vector<8x64xf32>
    %c0_146 = arith.constant 0 : index
    %c0_147 = arith.constant 0 : index
    %c0_148 = arith.constant 0 : index
    %271 = vector.load %arg12[%c0_146, %c0_147, %c0_148] : memref<2x1x64xf32, #tpu.memory_space<vmem>>, vector<1x1x64xf32>
    %272 = vector.shape_cast %271 : vector<1x1x64xf32> to vector<1x64xf32>
    %273 = vector.broadcast %272 : vector<1x64xf32> to vector<8x64xf32>
    %274 = arith.addf %270, %273 : vector<8x64xf32>
    %275 = arith.addf %256, %274 : vector<8x64xf32>
    %c1_149 = arith.constant 1 : index
    %c0_150 = arith.constant 0 : index
    %c0_151 = arith.constant 0 : index
    %276 = vector.load %arg13[%c1_149, %c0_150, %c0_151] : memref<5x2x64xf32, #tpu.memory_space<vmem>>, vector<1x2x64xf32>
    %277 = vector.shape_cast %276 : vector<1x2x64xf32> to vector<2x64xf32>
    %cst_152 = arith.constant dense<0.000000e+00> : vector<8xf32>
    %278 = vector.multi_reduction <add>, %275, %cst_152 [1] : vector<8x64xf32> to vector<8xf32>
    %279 = vector.shape_cast %278 : vector<8xf32> to vector<8x1xf32>
    %cst_153 = arith.constant 6.400000e+01 : f32
    %280 = vector.broadcast %cst_153 : f32 to vector<8x1xf32>
    %281 = arith.divf %279, %280 : vector<8x1xf32>
    %282 = vector.broadcast %281 : vector<8x1xf32> to vector<8x64xf32>
    %283 = arith.subf %275, %282 : vector<8x64xf32>
    %284 = arith.mulf %283, %283 : vector<8x64xf32>
    %cst_154 = arith.constant dense<0.000000e+00> : vector<8xf32>
    %285 = vector.multi_reduction <add>, %284, %cst_154 [1] : vector<8x64xf32> to vector<8xf32>
    %286 = vector.shape_cast %285 : vector<8xf32> to vector<8x1xf32>
    %cst_155 = arith.constant 6.400000e+01 : f32
    %287 = vector.broadcast %cst_155 : f32 to vector<8x1xf32>
    %288 = arith.divf %286, %287 : vector<8x1xf32>
    %289 = vector.broadcast %281 : vector<8x1xf32> to vector<8x64xf32>
    %290 = arith.subf %275, %289 : vector<8x64xf32>
    %cst_156 = arith.constant 9.99999974E-6 : f32
    %291 = vector.broadcast %cst_156 : f32 to vector<8x1xf32>
    %292 = arith.addf %288, %291 : vector<8x1xf32>
    %293 = math.rsqrt %292 : vector<8x1xf32>
    %294 = vector.broadcast %293 : vector<8x1xf32> to vector<8x64xf32>
    %295 = arith.mulf %290, %294 : vector<8x64xf32>
    %296 = vector.extract_strided_slice %277 {offsets = [0, 0], sizes = [1, 64], strides = [1, 1]} : vector<2x64xf32> to vector<1x64xf32>
    %297 = vector.broadcast %296 : vector<1x64xf32> to vector<8x64xf32>
    %298 = arith.mulf %295, %297 : vector<8x64xf32>
    %299 = vector.extract_strided_slice %277 {offsets = [1, 0], sizes = [1, 64], strides = [1, 1]} : vector<2x64xf32> to vector<1x64xf32>
    %300 = vector.broadcast %299 : vector<1x64xf32> to vector<8x64xf32>
    %301 = arith.addf %298, %300 : vector<8x64xf32>
    %c0_i32_157 = arith.constant 0 : i32
    %302 = arith.addi %0, %c0_i32_157 : i32
    %303 = arith.index_cast %302 : i32 to index
    %c0_158 = arith.constant 0 : index
    %304 = memref.load %arg3[%303, %c0_158] : memref<2x8xi32, #tpu.memory_space<smem>>
    %305 = arith.index_cast %304 : i32 to index
    %c0_159 = arith.constant 0 : index
    %306 = vector.load %arg16[%305, %c0_159] : memref<100x64xf32, #tpu.memory_space<vmem>>, vector<1x64xf32>
    %c0_160 = arith.constant 0 : index
    %c0_161 = arith.constant 0 : index
    %307 = vector.load %arg17[%c0_160, %c0_161] : memref<8x64xf32, #tpu.memory_space<vmem>>, vector<1x64xf32>
    %308 = arith.addf %306, %307 : vector<1x64xf32>
    %c0_162 = arith.constant 0 : index
    %c0_163 = arith.constant 0 : index
    %309 = vector.load %arg19[%c0_162, %c0_163] : memref<8x64xf32, #tpu.memory_space<vmem>>, vector<1x64xf32>
    tpu.vector_store %arg19[%c0_162, %c0_163], %308 {strides = array<i32>} : memref<8x64xf32, #tpu.memory_space<vmem>>, vector<1x64xf32>,
    %c0_i32_164 = arith.constant 0 : i32
    %310 = arith.addi %0, %c0_i32_164 : i32
    %311 = arith.index_cast %310 : i32 to index
    %c1_165 = arith.constant 1 : index
    %312 = memref.load %arg3[%311, %c1_165] : memref<2x8xi32, #tpu.memory_space<smem>>
    %313 = arith.index_cast %312 : i32 to index
    %c0_166 = arith.constant 0 : index
    %314 = vector.load %arg16[%313, %c0_166] : memref<100x64xf32, #tpu.memory_space<vmem>>, vector<1x64xf32>
    %c1_167 = arith.constant 1 : index
    %c0_168 = arith.constant 0 : index
    %315 = vector.load %arg17[%c1_167, %c0_168] : memref<8x64xf32, #tpu.memory_space<vmem>>, vector<1x64xf32>
    %316 = arith.addf %314, %315 : vector<1x64xf32>
    %c1_169 = arith.constant 1 : index
    %c0_170 = arith.constant 0 : index
    %317 = vector.load %arg19[%c1_169, %c0_170] : memref<8x64xf32, #tpu.memory_space<vmem>>, vector<1x64xf32>
    tpu.vector_store %arg19[%c1_169, %c0_170], %316 {strides = array<i32>} : memref<8x64xf32, #tpu.memory_space<vmem>>, vector<1x64xf32>,
    %c0_i32_171 = arith.constant 0 : i32
    %318 = arith.addi %0, %c0_i32_171 : i32
    %319 = arith.index_cast %318 : i32 to index
    %c2_172 = arith.constant 2 : index
    %320 = memref.load %arg3[%319, %c2_172] : memref<2x8xi32, #tpu.memory_space<smem>>
    %321 = arith.index_cast %320 : i32 to index
    %c0_173 = arith.constant 0 : index
    %322 = vector.load %arg16[%321, %c0_173] : memref<100x64xf32, #tpu.memory_space<vmem>>, vector<1x64xf32>
    %c2_174 = arith.constant 2 : index
    %c0_175 = arith.constant 0 : index
    %323 = vector.load %arg17[%c2_174, %c0_175] : memref<8x64xf32, #tpu.memory_space<vmem>>, vector<1x64xf32>
    %324 = arith.addf %322, %323 : vector<1x64xf32>
    %c2_176 = arith.constant 2 : index
    %c0_177 = arith.constant 0 : index
    %325 = vector.load %arg19[%c2_176, %c0_177] : memref<8x64xf32, #tpu.memory_space<vmem>>, vector<1x64xf32>
    tpu.vector_store %arg19[%c2_176, %c0_177], %324 {strides = array<i32>} : memref<8x64xf32, #tpu.memory_space<vmem>>, vector<1x64xf32>,
    %c0_i32_178 = arith.constant 0 : i32
    %326 = arith.addi %0, %c0_i32_178 : i32
    %327 = arith.index_cast %326 : i32 to index
    %c3_179 = arith.constant 3 : index
    %328 = memref.load %arg3[%327, %c3_179] : memref<2x8xi32, #tpu.memory_space<smem>>
    %329 = arith.index_cast %328 : i32 to index
    %c0_180 = arith.constant 0 : index
    %330 = vector.load %arg16[%329, %c0_180] : memref<100x64xf32, #tpu.memory_space<vmem>>, vector<1x64xf32>
    %c3_181 = arith.constant 3 : index
    %c0_182 = arith.constant 0 : index
    %331 = vector.load %arg17[%c3_181, %c0_182] : memref<8x64xf32, #tpu.memory_space<vmem>>, vector<1x64xf32>
    %332 = arith.addf %330, %331 : vector<1x64xf32>
    %c3_183 = arith.constant 3 : index
    %c0_184 = arith.constant 0 : index
    %333 = vector.load %arg19[%c3_183, %c0_184] : memref<8x64xf32, #tpu.memory_space<vmem>>, vector<1x64xf32>
    tpu.vector_store %arg19[%c3_183, %c0_184], %332 {strides = array<i32>} : memref<8x64xf32, #tpu.memory_space<vmem>>, vector<1x64xf32>,
    %c0_i32_185 = arith.constant 0 : i32
    %334 = arith.addi %0, %c0_i32_185 : i32
    %335 = arith.index_cast %334 : i32 to index
    %c4_186 = arith.constant 4 : index
    %336 = memref.load %arg3[%335, %c4_186] : memref<2x8xi32, #tpu.memory_space<smem>>
    %337 = arith.index_cast %336 : i32 to index
    %c0_187 = arith.constant 0 : index
    %338 = vector.load %arg16[%337, %c0_187] : memref<100x64xf32, #tpu.memory_space<vmem>>, vector<1x64xf32>
    %c4_188 = arith.constant 4 : index
    %c0_189 = arith.constant 0 : index
    %339 = vector.load %arg17[%c4_188, %c0_189] : memref<8x64xf32, #tpu.memory_space<vmem>>, vector<1x64xf32>
    %340 = arith.addf %338, %339 : vector<1x64xf32>
    %c4_190 = arith.constant 4 : index
    %c0_191 = arith.constant 0 : index
    %341 = vector.load %arg19[%c4_190, %c0_191] : memref<8x64xf32, #tpu.memory_space<vmem>>, vector<1x64xf32>
    tpu.vector_store %arg19[%c4_190, %c0_191], %340 {strides = array<i32>} : memref<8x64xf32, #tpu.memory_space<vmem>>, vector<1x64xf32>,
    %c0_i32_192 = arith.constant 0 : i32
    %342 = arith.addi %0, %c0_i32_192 : i32
    %343 = arith.index_cast %342 : i32 to index
    %c5_193 = arith.constant 5 : index
    %344 = memref.load %arg3[%343, %c5_193] : memref<2x8xi32, #tpu.memory_space<smem>>
    %345 = arith.index_cast %344 : i32 to index
    %c0_194 = arith.constant 0 : index
    %346 = vector.load %arg16[%345, %c0_194] : memref<100x64xf32, #tpu.memory_space<vmem>>, vector<1x64xf32>
    %c5_195 = arith.constant 5 : index
    %c0_196 = arith.constant 0 : index
    %347 = vector.load %arg17[%c5_195, %c0_196] : memref<8x64xf32, #tpu.memory_space<vmem>>, vector<1x64xf32>
    %348 = arith.addf %346, %347 : vector<1x64xf32>
    %c5_197 = arith.constant 5 : index
    %c0_198 = arith.constant 0 : index
    %349 = vector.load %arg19[%c5_197, %c0_198] : memref<8x64xf32, #tpu.memory_space<vmem>>, vector<1x64xf32>
    tpu.vector_store %arg19[%c5_197, %c0_198], %348 {strides = array<i32>} : memref<8x64xf32, #tpu.memory_space<vmem>>, vector<1x64xf32>,
    %c0_i32_199 = arith.constant 0 : i32
    %350 = arith.addi %0, %c0_i32_199 : i32
    %351 = arith.index_cast %350 : i32 to index
    %c6_200 = arith.constant 6 : index
    %352 = memref.load %arg3[%351, %c6_200] : memref<2x8xi32, #tpu.memory_space<smem>>
    %353 = arith.index_cast %352 : i32 to index
    %c0_201 = arith.constant 0 : index
    %354 = vector.load %arg16[%353, %c0_201] : memref<100x64xf32, #tpu.memory_space<vmem>>, vector<1x64xf32>
    %c6_202 = arith.constant 6 : index
    %c0_203 = arith.constant 0 : index
    %355 = vector.load %arg17[%c6_202, %c0_203] : memref<8x64xf32, #tpu.memory_space<vmem>>, vector<1x64xf32>
    %356 = arith.addf %354, %355 : vector<1x64xf32>
    %c6_204 = arith.constant 6 : index
    %c0_205 = arith.constant 0 : index
    %357 = vector.load %arg19[%c6_204, %c0_205] : memref<8x64xf32, #tpu.memory_space<vmem>>, vector<1x64xf32>
    tpu.vector_store %arg19[%c6_204, %c0_205], %356 {strides = array<i32>} : memref<8x64xf32, #tpu.memory_space<vmem>>, vector<1x64xf32>,
    %c0_i32_206 = arith.constant 0 : i32
    %358 = arith.addi %0, %c0_i32_206 : i32
    %359 = arith.index_cast %358 : i32 to index
    %c7_207 = arith.constant 7 : index
    %360 = memref.load %arg3[%359, %c7_207] : memref<2x8xi32, #tpu.memory_space<smem>>
    %361 = arith.index_cast %360 : i32 to index
    %c0_208 = arith.constant 0 : index
    %362 = vector.load %arg16[%361, %c0_208] : memref<100x64xf32, #tpu.memory_space<vmem>>, vector<1x64xf32>
    %c7_209 = arith.constant 7 : index
    %c0_210 = arith.constant 0 : index
    %363 = vector.load %arg17[%c7_209, %c0_210] : memref<8x64xf32, #tpu.memory_space<vmem>>, vector<1x64xf32>
    %364 = arith.addf %362, %363 : vector<1x64xf32>
    %c7_211 = arith.constant 7 : index
    %c0_212 = arith.constant 0 : index
    %365 = vector.load %arg19[%c7_211, %c0_212] : memref<8x64xf32, #tpu.memory_space<vmem>>, vector<1x64xf32>
    tpu.vector_store %arg19[%c7_211, %c0_212], %364 {strides = array<i32>} : memref<8x64xf32, #tpu.memory_space<vmem>>, vector<1x64xf32>,
    %c0_213 = arith.constant 0 : index
    %c0_214 = arith.constant 0 : index
    %366 = vector.load %arg19[%c0_213, %c0_214] : memref<8x64xf32, #tpu.memory_space<vmem>>, vector<8x64xf32>
    %367 = arith.truncf %366 : vector<8x64xf32> to vector<8x64xbf16>
    %368 = arith.truncf %366 : vector<8x64xf32> to vector<8x64xbf16>
    %cst_215 = arith.constant 0.000000e+00 : f32
    %369 = vector.broadcast %cst_215 : f32 to vector<8x64xf32>
    %c12 = arith.constant 12 : index
    %c0_216 = arith.constant 0 : index
    %c0_217 = arith.constant 0 : index
    %370 = vector.load %arg5[%c12, %c0_216, %c0_217] : memref<36x64x16xbf16, #tpu.memory_space<vmem>>, vector<1x64x16xbf16>
    %371 = vector.shape_cast %370 : vector<1x64x16xbf16> to vector<64x16xbf16>
    %cst_218 = arith.constant dense<0.000000e+00> : vector<8x16xf32>
    %372 = tpu.matmul %367, %371, %cst_218 {dimension_numbers = #tpu.dot_dimension_numbers<[1], [0], [0], [1], [0, 0, 1, 1], [], []>} : vector<8x64xbf16>, vector<64x16xbf16>, vector<8x16xf32> -> vector<8x16xf32>
    %c12_219 = arith.constant 12 : index
    %c0_220 = arith.constant 0 : index
    %c0_221 = arith.constant 0 : index
    %373 = vector.load %arg6[%c12_219, %c0_220, %c0_221] : memref<36x1x16xf32, #tpu.memory_space<vmem>>, vector<1x1x16xf32>
    %374 = vector.shape_cast %373 : vector<1x1x16xf32> to vector<1x16xf32>
    %375 = vector.broadcast %374 : vector<1x16xf32> to vector<8x16xf32>
    %376 = arith.addf %372, %375 : vector<8x16xf32>
    %377 = arith.truncf %376 : vector<8x16xf32> to vector<8x16xbf16>
    %c16 = arith.constant 16 : index
    %c0_222 = arith.constant 0 : index
    %c0_223 = arith.constant 0 : index
    %378 = vector.load %arg5[%c16, %c0_222, %c0_223] : memref<36x64x16xbf16, #tpu.memory_space<vmem>>, vector<1x64x16xbf16>
    %379 = vector.shape_cast %378 : vector<1x64x16xbf16> to vector<64x16xbf16>
    %cst_224 = arith.constant dense<0.000000e+00> : vector<8x16xf32>
    %380 = tpu.matmul %368, %379, %cst_224 {dimension_numbers = #tpu.dot_dimension_numbers<[1], [0], [0], [1], [0, 0, 1, 1], [], []>} : vector<8x64xbf16>, vector<64x16xbf16>, vector<8x16xf32> -> vector<8x16xf32>
    %c16_225 = arith.constant 16 : index
    %c0_226 = arith.constant 0 : index
    %c0_227 = arith.constant 0 : index
    %381 = vector.load %arg6[%c16_225, %c0_226, %c0_227] : memref<36x1x16xf32, #tpu.memory_space<vmem>>, vector<1x1x16xf32>
    %382 = vector.shape_cast %381 : vector<1x1x16xf32> to vector<1x16xf32>
    %383 = vector.broadcast %382 : vector<1x16xf32> to vector<8x16xf32>
    %384 = arith.addf %380, %383 : vector<8x16xf32>
    %385 = arith.truncf %384 : vector<8x16xf32> to vector<8x16xbf16>
    %c20 = arith.constant 20 : index
    %c0_228 = arith.constant 0 : index
    %c0_229 = arith.constant 0 : index
    %386 = vector.load %arg5[%c20, %c0_228, %c0_229] : memref<36x64x16xbf16, #tpu.memory_space<vmem>>, vector<1x64x16xbf16>
    %387 = vector.shape_cast %386 : vector<1x64x16xbf16> to vector<64x16xbf16>
    %cst_230 = arith.constant dense<0.000000e+00> : vector<8x16xf32>
    %388 = tpu.matmul %368, %387, %cst_230 {dimension_numbers = #tpu.dot_dimension_numbers<[1], [0], [0], [1], [0, 0, 1, 1], [], []>} : vector<8x64xbf16>, vector<64x16xbf16>, vector<8x16xf32> -> vector<8x16xf32>
    %c20_231 = arith.constant 20 : index
    %c0_232 = arith.constant 0 : index
    %c0_233 = arith.constant 0 : index
    %389 = vector.load %arg6[%c20_231, %c0_232, %c0_233] : memref<36x1x16xf32, #tpu.memory_space<vmem>>, vector<1x1x16xf32>
    %390 = vector.shape_cast %389 : vector<1x1x16xf32> to vector<1x16xf32>
    %391 = vector.broadcast %390 : vector<1x16xf32> to vector<8x16xf32>
    %392 = arith.addf %388, %391 : vector<8x16xf32>
    %393 = arith.truncf %392 : vector<8x16xf32> to vector<8x16xbf16>
    %cst_234 = arith.constant dense<0.000000e+00> : vector<8x8xf32>
    %394 = tpu.matmul %377, %385, %cst_234 {dimension_numbers = #tpu.dot_dimension_numbers<[1], [1], [0], [0], [0, 0, 1, 0], [], []>} : vector<8x16xbf16>, vector<8x16xbf16>, vector<8x8xf32> -> vector<8x8xf32>
    %cst_235 = arith.constant 2.500000e-01 : f32
    %395 = vector.broadcast %cst_235 : f32 to vector<8x8xf32>
    %396 = arith.mulf %394, %395 : vector<8x8xf32>
    %397 = arith.addf %396, %32 : vector<8x8xf32>
    %cst_236 = arith.constant dense<0xFF800000> : vector<8xf32>
    %398 = vector.multi_reduction <maximumf>, %397, %cst_236 [1] : vector<8x8xf32> to vector<8xf32>
    %399 = vector.shape_cast %398 : vector<8xf32> to vector<8x1xf32>
    %400 = vector.broadcast %399 : vector<8x1xf32> to vector<8x8xf32>
    %401 = arith.subf %397, %400 : vector<8x8xf32>
    %402 = math.exp %401 : vector<8x8xf32>
    %cst_237 = arith.constant dense<0.000000e+00> : vector<8xf32>
    %403 = vector.multi_reduction <add>, %402, %cst_237 [1] : vector<8x8xf32> to vector<8xf32>
    %404 = vector.shape_cast %403 : vector<8xf32> to vector<8x1xf32>
    %405 = vector.broadcast %404 : vector<8x1xf32> to vector<8x8xf32>
    %406 = arith.divf %402, %405 : vector<8x8xf32>
    %407 = arith.truncf %406 : vector<8x8xf32> to vector<8x8xbf16>
    %cst_238 = arith.constant dense<0.000000e+00> : vector<8x16xf32>
    %408 = tpu.matmul %407, %393, %cst_238 {dimension_numbers = #tpu.dot_dimension_numbers<[1], [0], [0], [1], [0, 0, 1, 1], [], []>} : vector<8x8xbf16>, vector<8x16xbf16>, vector<8x16xf32> -> vector<8x16xf32>
    %409 = arith.truncf %408 : vector<8x16xf32> to vector<8x16xbf16>
    %c4_239 = arith.constant 4 : index
    %c0_240 = arith.constant 0 : index
    %c0_241 = arith.constant 0 : index
    %410 = vector.load %arg7[%c4_239, %c0_240, %c0_241] : memref<12x16x64xbf16, #tpu.memory_space<vmem>>, vector<1x16x64xbf16>
    %411 = vector.shape_cast %410 : vector<1x16x64xbf16> to vector<16x64xbf16>
    %cst_242 = arith.constant dense<0.000000e+00> : vector<8x64xf32>
    %412 = tpu.matmul %409, %411, %cst_242 {dimension_numbers = #tpu.dot_dimension_numbers<[1], [0], [0], [1], [0, 0, 1, 1], [], []>} : vector<8x16xbf16>, vector<16x64xbf16>, vector<8x64xf32> -> vector<8x64xf32>
    %413 = arith.addf %369, %412 : vector<8x64xf32>
    %c13 = arith.constant 13 : index
    %c0_243 = arith.constant 0 : index
    %c0_244 = arith.constant 0 : index
    %414 = vector.load %arg5[%c13, %c0_243, %c0_244] : memref<36x64x16xbf16, #tpu.memory_space<vmem>>, vector<1x64x16xbf16>
    %415 = vector.shape_cast %414 : vector<1x64x16xbf16> to vector<64x16xbf16>
    %cst_245 = arith.constant dense<0.000000e+00> : vector<8x16xf32>
    %416 = tpu.matmul %367, %415, %cst_245 {dimension_numbers = #tpu.dot_dimension_numbers<[1], [0], [0], [1], [0, 0, 1, 1], [], []>} : vector<8x64xbf16>, vector<64x16xbf16>, vector<8x16xf32> -> vector<8x16xf32>
    %c13_246 = arith.constant 13 : index
    %c0_247 = arith.constant 0 : index
    %c0_248 = arith.constant 0 : index
    %417 = vector.load %arg6[%c13_246, %c0_247, %c0_248] : memref<36x1x16xf32, #tpu.memory_space<vmem>>, vector<1x1x16xf32>
    %418 = vector.shape_cast %417 : vector<1x1x16xf32> to vector<1x16xf32>
    %419 = vector.broadcast %418 : vector<1x16xf32> to vector<8x16xf32>
    %420 = arith.addf %416, %419 : vector<8x16xf32>
    %421 = arith.truncf %420 : vector<8x16xf32> to vector<8x16xbf16>
    %c17 = arith.constant 17 : index
    %c0_249 = arith.constant 0 : index
    %c0_250 = arith.constant 0 : index
    %422 = vector.load %arg5[%c17, %c0_249, %c0_250] : memref<36x64x16xbf16, #tpu.memory_space<vmem>>, vector<1x64x16xbf16>
    %423 = vector.shape_cast %422 : vector<1x64x16xbf16> to vector<64x16xbf16>
    %cst_251 = arith.constant dense<0.000000e+00> : vector<8x16xf32>
    %424 = tpu.matmul %368, %423, %cst_251 {dimension_numbers = #tpu.dot_dimension_numbers<[1], [0], [0], [1], [0, 0, 1, 1], [], []>} : vector<8x64xbf16>, vector<64x16xbf16>, vector<8x16xf32> -> vector<8x16xf32>
    %c17_252 = arith.constant 17 : index
    %c0_253 = arith.constant 0 : index
    %c0_254 = arith.constant 0 : index
    %425 = vector.load %arg6[%c17_252, %c0_253, %c0_254] : memref<36x1x16xf32, #tpu.memory_space<vmem>>, vector<1x1x16xf32>
    %426 = vector.shape_cast %425 : vector<1x1x16xf32> to vector<1x16xf32>
    %427 = vector.broadcast %426 : vector<1x16xf32> to vector<8x16xf32>
    %428 = arith.addf %424, %427 : vector<8x16xf32>
    %429 = arith.truncf %428 : vector<8x16xf32> to vector<8x16xbf16>
    %c21 = arith.constant 21 : index
    %c0_255 = arith.constant 0 : index
    %c0_256 = arith.constant 0 : index
    %430 = vector.load %arg5[%c21, %c0_255, %c0_256] : memref<36x64x16xbf16, #tpu.memory_space<vmem>>, vector<1x64x16xbf16>
    %431 = vector.shape_cast %430 : vector<1x64x16xbf16> to vector<64x16xbf16>
    %cst_257 = arith.constant dense<0.000000e+00> : vector<8x16xf32>
    %432 = tpu.matmul %368, %431, %cst_257 {dimension_numbers = #tpu.dot_dimension_numbers<[1], [0], [0], [1], [0, 0, 1, 1], [], []>} : vector<8x64xbf16>, vector<64x16xbf16>, vector<8x16xf32> -> vector<8x16xf32>
    %c21_258 = arith.constant 21 : index
    %c0_259 = arith.constant 0 : index
    %c0_260 = arith.constant 0 : index
    %433 = vector.load %arg6[%c21_258, %c0_259, %c0_260] : memref<36x1x16xf32, #tpu.memory_space<vmem>>, vector<1x1x16xf32>
    %434 = vector.shape_cast %433 : vector<1x1x16xf32> to vector<1x16xf32>
    %435 = vector.broadcast %434 : vector<1x16xf32> to vector<8x16xf32>
    %436 = arith.addf %432, %435 : vector<8x16xf32>
    %437 = arith.truncf %436 : vector<8x16xf32> to vector<8x16xbf16>
    %cst_261 = arith.constant dense<0.000000e+00> : vector<8x8xf32>
    %438 = tpu.matmul %421, %429, %cst_261 {dimension_numbers = #tpu.dot_dimension_numbers<[1], [1], [0], [0], [0, 0, 1, 0], [], []>} : vector<8x16xbf16>, vector<8x16xbf16>, vector<8x8xf32> -> vector<8x8xf32>
    %cst_262 = arith.constant 2.500000e-01 : f32
    %439 = vector.broadcast %cst_262 : f32 to vector<8x8xf32>
    %440 = arith.mulf %438, %439 : vector<8x8xf32>
    %441 = arith.addf %440, %32 : vector<8x8xf32>
    %cst_263 = arith.constant dense<0xFF800000> : vector<8xf32>
    %442 = vector.multi_reduction <maximumf>, %441, %cst_263 [1] : vector<8x8xf32> to vector<8xf32>
    %443 = vector.shape_cast %442 : vector<8xf32> to vector<8x1xf32>
    %444 = vector.broadcast %443 : vector<8x1xf32> to vector<8x8xf32>
    %445 = arith.subf %441, %444 : vector<8x8xf32>
    %446 = math.exp %445 : vector<8x8xf32>
    %cst_264 = arith.constant dense<0.000000e+00> : vector<8xf32>
    %447 = vector.multi_reduction <add>, %446, %cst_264 [1] : vector<8x8xf32> to vector<8xf32>
    %448 = vector.shape_cast %447 : vector<8xf32> to vector<8x1xf32>
    %449 = vector.broadcast %448 : vector<8x1xf32> to vector<8x8xf32>
    %450 = arith.divf %446, %449 : vector<8x8xf32>
    %451 = arith.truncf %450 : vector<8x8xf32> to vector<8x8xbf16>
    %cst_265 = arith.constant dense<0.000000e+00> : vector<8x16xf32>
    %452 = tpu.matmul %451, %437, %cst_265 {dimension_numbers = #tpu.dot_dimension_numbers<[1], [0], [0], [1], [0, 0, 1, 1], [], []>} : vector<8x8xbf16>, vector<8x16xbf16>, vector<8x16xf32> -> vector<8x16xf32>
    %453 = arith.truncf %452 : vector<8x16xf32> to vector<8x16xbf16>
    %c5_266 = arith.constant 5 : index
    %c0_267 = arith.constant 0 : index
    %c0_268 = arith.constant 0 : index
    %454 = vector.load %arg7[%c5_266, %c0_267, %c0_268] : memref<12x16x64xbf16, #tpu.memory_space<vmem>>, vector<1x16x64xbf16>
    %455 = vector.shape_cast %454 : vector<1x16x64xbf16> to vector<16x64xbf16>
    %cst_269 = arith.constant dense<0.000000e+00> : vector<8x64xf32>
    %456 = tpu.matmul %453, %455, %cst_269 {dimension_numbers = #tpu.dot_dimension_numbers<[1], [0], [0], [1], [0, 0, 1, 1], [], []>} : vector<8x16xbf16>, vector<16x64xbf16>, vector<8x64xf32> -> vector<8x64xf32>
    %457 = arith.addf %413, %456 : vector<8x64xf32>
    %c14 = arith.constant 14 : index
    %c0_270 = arith.constant 0 : index
    %c0_271 = arith.constant 0 : index
    %458 = vector.load %arg5[%c14, %c0_270, %c0_271] : memref<36x64x16xbf16, #tpu.memory_space<vmem>>, vector<1x64x16xbf16>
    %459 = vector.shape_cast %458 : vector<1x64x16xbf16> to vector<64x16xbf16>
    %cst_272 = arith.constant dense<0.000000e+00> : vector<8x16xf32>
    %460 = tpu.matmul %367, %459, %cst_272 {dimension_numbers = #tpu.dot_dimension_numbers<[1], [0], [0], [1], [0, 0, 1, 1], [], []>} : vector<8x64xbf16>, vector<64x16xbf16>, vector<8x16xf32> -> vector<8x16xf32>
    %c14_273 = arith.constant 14 : index
    %c0_274 = arith.constant 0 : index
    %c0_275 = arith.constant 0 : index
    %461 = vector.load %arg6[%c14_273, %c0_274, %c0_275] : memref<36x1x16xf32, #tpu.memory_space<vmem>>, vector<1x1x16xf32>
    %462 = vector.shape_cast %461 : vector<1x1x16xf32> to vector<1x16xf32>
    %463 = vector.broadcast %462 : vector<1x16xf32> to vector<8x16xf32>
    %464 = arith.addf %460, %463 : vector<8x16xf32>
    %465 = arith.truncf %464 : vector<8x16xf32> to vector<8x16xbf16>
    %c18 = arith.constant 18 : index
    %c0_276 = arith.constant 0 : index
    %c0_277 = arith.constant 0 : index
    %466 = vector.load %arg5[%c18, %c0_276, %c0_277] : memref<36x64x16xbf16, #tpu.memory_space<vmem>>, vector<1x64x16xbf16>
    %467 = vector.shape_cast %466 : vector<1x64x16xbf16> to vector<64x16xbf16>
    %cst_278 = arith.constant dense<0.000000e+00> : vector<8x16xf32>
    %468 = tpu.matmul %368, %467, %cst_278 {dimension_numbers = #tpu.dot_dimension_numbers<[1], [0], [0], [1], [0, 0, 1, 1], [], []>} : vector<8x64xbf16>, vector<64x16xbf16>, vector<8x16xf32> -> vector<8x16xf32>
    %c18_279 = arith.constant 18 : index
    %c0_280 = arith.constant 0 : index
    %c0_281 = arith.constant 0 : index
    %469 = vector.load %arg6[%c18_279, %c0_280, %c0_281] : memref<36x1x16xf32, #tpu.memory_space<vmem>>, vector<1x1x16xf32>
    %470 = vector.shape_cast %469 : vector<1x1x16xf32> to vector<1x16xf32>
    %471 = vector.broadcast %470 : vector<1x16xf32> to vector<8x16xf32>
    %472 = arith.addf %468, %471 : vector<8x16xf32>
    %473 = arith.truncf %472 : vector<8x16xf32> to vector<8x16xbf16>
    %c22 = arith.constant 22 : index
    %c0_282 = arith.constant 0 : index
    %c0_283 = arith.constant 0 : index
    %474 = vector.load %arg5[%c22, %c0_282, %c0_283] : memref<36x64x16xbf16, #tpu.memory_space<vmem>>, vector<1x64x16xbf16>
    %475 = vector.shape_cast %474 : vector<1x64x16xbf16> to vector<64x16xbf16>
    %cst_284 = arith.constant dense<0.000000e+00> : vector<8x16xf32>
    %476 = tpu.matmul %368, %475, %cst_284 {dimension_numbers = #tpu.dot_dimension_numbers<[1], [0], [0], [1], [0, 0, 1, 1], [], []>} : vector<8x64xbf16>, vector<64x16xbf16>, vector<8x16xf32> -> vector<8x16xf32>
    %c22_285 = arith.constant 22 : index
    %c0_286 = arith.constant 0 : index
    %c0_287 = arith.constant 0 : index
    %477 = vector.load %arg6[%c22_285, %c0_286, %c0_287] : memref<36x1x16xf32, #tpu.memory_space<vmem>>, vector<1x1x16xf32>
    %478 = vector.shape_cast %477 : vector<1x1x16xf32> to vector<1x16xf32>
    %479 = vector.broadcast %478 : vector<1x16xf32> to vector<8x16xf32>
    %480 = arith.addf %476, %479 : vector<8x16xf32>
    %481 = arith.truncf %480 : vector<8x16xf32> to vector<8x16xbf16>
    %cst_288 = arith.constant dense<0.000000e+00> : vector<8x8xf32>
    %482 = tpu.matmul %465, %473, %cst_288 {dimension_numbers = #tpu.dot_dimension_numbers<[1], [1], [0], [0], [0, 0, 1, 0], [], []>} : vector<8x16xbf16>, vector<8x16xbf16>, vector<8x8xf32> -> vector<8x8xf32>
    %cst_289 = arith.constant 2.500000e-01 : f32
    %483 = vector.broadcast %cst_289 : f32 to vector<8x8xf32>
    %484 = arith.mulf %482, %483 : vector<8x8xf32>
    %485 = arith.addf %484, %32 : vector<8x8xf32>
    %cst_290 = arith.constant dense<0xFF800000> : vector<8xf32>
    %486 = vector.multi_reduction <maximumf>, %485, %cst_290 [1] : vector<8x8xf32> to vector<8xf32>
    %487 = vector.shape_cast %486 : vector<8xf32> to vector<8x1xf32>
    %488 = vector.broadcast %487 : vector<8x1xf32> to vector<8x8xf32>
    %489 = arith.subf %485, %488 : vector<8x8xf32>
    %490 = math.exp %489 : vector<8x8xf32>
    %cst_291 = arith.constant dense<0.000000e+00> : vector<8xf32>
    %491 = vector.multi_reduction <add>, %490, %cst_291 [1] : vector<8x8xf32> to vector<8xf32>
    %492 = vector.shape_cast %491 : vector<8xf32> to vector<8x1xf32>
    %493 = vector.broadcast %492 : vector<8x1xf32> to vector<8x8xf32>
    %494 = arith.divf %490, %493 : vector<8x8xf32>
    %495 = arith.truncf %494 : vector<8x8xf32> to vector<8x8xbf16>
    %cst_292 = arith.constant dense<0.000000e+00> : vector<8x16xf32>
    %496 = tpu.matmul %495, %481, %cst_292 {dimension_numbers = #tpu.dot_dimension_numbers<[1], [0], [0], [1], [0, 0, 1, 1], [], []>} : vector<8x8xbf16>, vector<8x16xbf16>, vector<8x16xf32> -> vector<8x16xf32>
    %497 = arith.truncf %496 : vector<8x16xf32> to vector<8x16xbf16>
    %c6_293 = arith.constant 6 : index
    %c0_294 = arith.constant 0 : index
    %c0_295 = arith.constant 0 : index
    %498 = vector.load %arg7[%c6_293, %c0_294, %c0_295] : memref<12x16x64xbf16, #tpu.memory_space<vmem>>, vector<1x16x64xbf16>
    %499 = vector.shape_cast %498 : vector<1x16x64xbf16> to vector<16x64xbf16>
    %cst_296 = arith.constant dense<0.000000e+00> : vector<8x64xf32>
    %500 = tpu.matmul %497, %499, %cst_296 {dimension_numbers = #tpu.dot_dimension_numbers<[1], [0], [0], [1], [0, 0, 1, 1], [], []>} : vector<8x16xbf16>, vector<16x64xbf16>, vector<8x64xf32> -> vector<8x64xf32>
    %501 = arith.addf %457, %500 : vector<8x64xf32>
    %c15 = arith.constant 15 : index
    %c0_297 = arith.constant 0 : index
    %c0_298 = arith.constant 0 : index
    %502 = vector.load %arg5[%c15, %c0_297, %c0_298] : memref<36x64x16xbf16, #tpu.memory_space<vmem>>, vector<1x64x16xbf16>
    %503 = vector.shape_cast %502 : vector<1x64x16xbf16> to vector<64x16xbf16>
    %cst_299 = arith.constant dense<0.000000e+00> : vector<8x16xf32>
    %504 = tpu.matmul %367, %503, %cst_299 {dimension_numbers = #tpu.dot_dimension_numbers<[1], [0], [0], [1], [0, 0, 1, 1], [], []>} : vector<8x64xbf16>, vector<64x16xbf16>, vector<8x16xf32> -> vector<8x16xf32>
    %c15_300 = arith.constant 15 : index
    %c0_301 = arith.constant 0 : index
    %c0_302 = arith.constant 0 : index
    %505 = vector.load %arg6[%c15_300, %c0_301, %c0_302] : memref<36x1x16xf32, #tpu.memory_space<vmem>>, vector<1x1x16xf32>
    %506 = vector.shape_cast %505 : vector<1x1x16xf32> to vector<1x16xf32>
    %507 = vector.broadcast %506 : vector<1x16xf32> to vector<8x16xf32>
    %508 = arith.addf %504, %507 : vector<8x16xf32>
    %509 = arith.truncf %508 : vector<8x16xf32> to vector<8x16xbf16>
    %c19 = arith.constant 19 : index
    %c0_303 = arith.constant 0 : index
    %c0_304 = arith.constant 0 : index
    %510 = vector.load %arg5[%c19, %c0_303, %c0_304] : memref<36x64x16xbf16, #tpu.memory_space<vmem>>, vector<1x64x16xbf16>
    %511 = vector.shape_cast %510 : vector<1x64x16xbf16> to vector<64x16xbf16>
    %cst_305 = arith.constant dense<0.000000e+00> : vector<8x16xf32>
    %512 = tpu.matmul %368, %511, %cst_305 {dimension_numbers = #tpu.dot_dimension_numbers<[1], [0], [0], [1], [0, 0, 1, 1], [], []>} : vector<8x64xbf16>, vector<64x16xbf16>, vector<8x16xf32> -> vector<8x16xf32>
    %c19_306 = arith.constant 19 : index
    %c0_307 = arith.constant 0 : index
    %c0_308 = arith.constant 0 : index
    %513 = vector.load %arg6[%c19_306, %c0_307, %c0_308] : memref<36x1x16xf32, #tpu.memory_space<vmem>>, vector<1x1x16xf32>
    %514 = vector.shape_cast %513 : vector<1x1x16xf32> to vector<1x16xf32>
    %515 = vector.broadcast %514 : vector<1x16xf32> to vector<8x16xf32>
    %516 = arith.addf %512, %515 : vector<8x16xf32>
    %517 = arith.truncf %516 : vector<8x16xf32> to vector<8x16xbf16>
    %c23 = arith.constant 23 : index
    %c0_309 = arith.constant 0 : index
    %c0_310 = arith.constant 0 : index
    %518 = vector.load %arg5[%c23, %c0_309, %c0_310] : memref<36x64x16xbf16, #tpu.memory_space<vmem>>, vector<1x64x16xbf16>
    %519 = vector.shape_cast %518 : vector<1x64x16xbf16> to vector<64x16xbf16>
    %cst_311 = arith.constant dense<0.000000e+00> : vector<8x16xf32>
    %520 = tpu.matmul %368, %519, %cst_311 {dimension_numbers = #tpu.dot_dimension_numbers<[1], [0], [0], [1], [0, 0, 1, 1], [], []>} : vector<8x64xbf16>, vector<64x16xbf16>, vector<8x16xf32> -> vector<8x16xf32>
    %c23_312 = arith.constant 23 : index
    %c0_313 = arith.constant 0 : index
    %c0_314 = arith.constant 0 : index
    %521 = vector.load %arg6[%c23_312, %c0_313, %c0_314] : memref<36x1x16xf32, #tpu.memory_space<vmem>>, vector<1x1x16xf32>
    %522 = vector.shape_cast %521 : vector<1x1x16xf32> to vector<1x16xf32>
    %523 = vector.broadcast %522 : vector<1x16xf32> to vector<8x16xf32>
    %524 = arith.addf %520, %523 : vector<8x16xf32>
    %525 = arith.truncf %524 : vector<8x16xf32> to vector<8x16xbf16>
    %cst_315 = arith.constant dense<0.000000e+00> : vector<8x8xf32>
    %526 = tpu.matmul %509, %517, %cst_315 {dimension_numbers = #tpu.dot_dimension_numbers<[1], [1], [0], [0], [0, 0, 1, 0], [], []>} : vector<8x16xbf16>, vector<8x16xbf16>, vector<8x8xf32> -> vector<8x8xf32>
    %cst_316 = arith.constant 2.500000e-01 : f32
    %527 = vector.broadcast %cst_316 : f32 to vector<8x8xf32>
    %528 = arith.mulf %526, %527 : vector<8x8xf32>
    %529 = arith.addf %528, %32 : vector<8x8xf32>
    %cst_317 = arith.constant dense<0xFF800000> : vector<8xf32>
    %530 = vector.multi_reduction <maximumf>, %529, %cst_317 [1] : vector<8x8xf32> to vector<8xf32>
    %531 = vector.shape_cast %530 : vector<8xf32> to vector<8x1xf32>
    %532 = vector.broadcast %531 : vector<8x1xf32> to vector<8x8xf32>
    %533 = arith.subf %529, %532 : vector<8x8xf32>
    %534 = math.exp %533 : vector<8x8xf32>
    %cst_318 = arith.constant dense<0.000000e+00> : vector<8xf32>
    %535 = vector.multi_reduction <add>, %534, %cst_318 [1] : vector<8x8xf32> to vector<8xf32>
    %536 = vector.shape_cast %535 : vector<8xf32> to vector<8x1xf32>
    %537 = vector.broadcast %536 : vector<8x1xf32> to vector<8x8xf32>
    %538 = arith.divf %534, %537 : vector<8x8xf32>
    %539 = arith.truncf %538 : vector<8x8xf32> to vector<8x8xbf16>
    %cst_319 = arith.constant dense<0.000000e+00> : vector<8x16xf32>
    %540 = tpu.matmul %539, %525, %cst_319 {dimension_numbers = #tpu.dot_dimension_numbers<[1], [0], [0], [1], [0, 0, 1, 1], [], []>} : vector<8x8xbf16>, vector<8x16xbf16>, vector<8x16xf32> -> vector<8x16xf32>
    %541 = arith.truncf %540 : vector<8x16xf32> to vector<8x16xbf16>
    %c7_320 = arith.constant 7 : index
    %c0_321 = arith.constant 0 : index
    %c0_322 = arith.constant 0 : index
    %542 = vector.load %arg7[%c7_320, %c0_321, %c0_322] : memref<12x16x64xbf16, #tpu.memory_space<vmem>>, vector<1x16x64xbf16>
    %543 = vector.shape_cast %542 : vector<1x16x64xbf16> to vector<16x64xbf16>
    %cst_323 = arith.constant dense<0.000000e+00> : vector<8x64xf32>
    %544 = tpu.matmul %541, %543, %cst_323 {dimension_numbers = #tpu.dot_dimension_numbers<[1], [0], [0], [1], [0, 0, 1, 1], [], []>} : vector<8x16xbf16>, vector<16x64xbf16>, vector<8x64xf32> -> vector<8x64xf32>
    %545 = arith.addf %501, %544 : vector<8x64xf32>
    %c1_324 = arith.constant 1 : index
    %c0_325 = arith.constant 0 : index
    %c0_326 = arith.constant 0 : index
    %546 = vector.load %arg8[%c1_324, %c0_325, %c0_326] : memref<3x1x64xf32, #tpu.memory_space<vmem>>, vector<1x1x64xf32>
    %547 = vector.shape_cast %546 : vector<1x1x64xf32> to vector<1x64xf32>
    %548 = vector.broadcast %547 : vector<1x64xf32> to vector<8x64xf32>
    %549 = arith.addf %545, %548 : vector<8x64xf32>
    %550 = arith.addf %366, %549 : vector<8x64xf32>
    %c2_327 = arith.constant 2 : index
    %c0_328 = arith.constant 0 : index
    %c0_329 = arith.constant 0 : index
    %551 = vector.load %arg13[%c2_327, %c0_328, %c0_329] : memref<5x2x64xf32, #tpu.memory_space<vmem>>, vector<1x2x64xf32>
    %552 = vector.shape_cast %551 : vector<1x2x64xf32> to vector<2x64xf32>
    %cst_330 = arith.constant dense<0.000000e+00> : vector<8xf32>
    %553 = vector.multi_reduction <add>, %550, %cst_330 [1] : vector<8x64xf32> to vector<8xf32>
    %554 = vector.shape_cast %553 : vector<8xf32> to vector<8x1xf32>
    %cst_331 = arith.constant 6.400000e+01 : f32
    %555 = vector.broadcast %cst_331 : f32 to vector<8x1xf32>
    %556 = arith.divf %554, %555 : vector<8x1xf32>
    %557 = vector.broadcast %556 : vector<8x1xf32> to vector<8x64xf32>
    %558 = arith.subf %550, %557 : vector<8x64xf32>
    %559 = arith.mulf %558, %558 : vector<8x64xf32>
    %cst_332 = arith.constant dense<0.000000e+00> : vector<8xf32>
    %560 = vector.multi_reduction <add>, %559, %cst_332 [1] : vector<8x64xf32> to vector<8xf32>
    %561 = vector.shape_cast %560 : vector<8xf32> to vector<8x1xf32>
    %cst_333 = arith.constant 6.400000e+01 : f32
    %562 = vector.broadcast %cst_333 : f32 to vector<8x1xf32>
    %563 = arith.divf %561, %562 : vector<8x1xf32>
    %564 = vector.broadcast %556 : vector<8x1xf32> to vector<8x64xf32>
    %565 = arith.subf %550, %564 : vector<8x64xf32>
    %cst_334 = arith.constant 9.99999974E-6 : f32
    %566 = vector.broadcast %cst_334 : f32 to vector<8x1xf32>
    %567 = arith.addf %563, %566 : vector<8x1xf32>
    %568 = math.rsqrt %567 : vector<8x1xf32>
    %569 = vector.broadcast %568 : vector<8x1xf32> to vector<8x64xf32>
    %570 = arith.mulf %565, %569 : vector<8x64xf32>
    %571 = vector.extract_strided_slice %552 {offsets = [0, 0], sizes = [1, 64], strides = [1, 1]} : vector<2x64xf32> to vector<1x64xf32>
    %572 = vector.broadcast %571 : vector<1x64xf32> to vector<8x64xf32>
    %573 = arith.mulf %570, %572 : vector<8x64xf32>
    %574 = vector.extract_strided_slice %552 {offsets = [1, 0], sizes = [1, 64], strides = [1, 1]} : vector<2x64xf32> to vector<1x64xf32>
    %575 = vector.broadcast %574 : vector<1x64xf32> to vector<8x64xf32>
    %576 = arith.addf %573, %575 : vector<8x64xf32>
    %577 = arith.truncf %576 : vector<8x64xf32> to vector<8x64xbf16>
    %578 = arith.truncf %301 : vector<8x64xf32> to vector<8x64xbf16>
    %cst_335 = arith.constant 0.000000e+00 : f32
    %579 = vector.broadcast %cst_335 : f32 to vector<8x64xf32>
    %c24 = arith.constant 24 : index
    %c0_336 = arith.constant 0 : index
    %c0_337 = arith.constant 0 : index
    %580 = vector.load %arg5[%c24, %c0_336, %c0_337] : memref<36x64x16xbf16, #tpu.memory_space<vmem>>, vector<1x64x16xbf16>
    %581 = vector.shape_cast %580 : vector<1x64x16xbf16> to vector<64x16xbf16>
    %cst_338 = arith.constant dense<0.000000e+00> : vector<8x16xf32>
    %582 = tpu.matmul %577, %581, %cst_338 {dimension_numbers = #tpu.dot_dimension_numbers<[1], [0], [0], [1], [0, 0, 1, 1], [], []>} : vector<8x64xbf16>, vector<64x16xbf16>, vector<8x16xf32> -> vector<8x16xf32>
    %c24_339 = arith.constant 24 : index
    %c0_340 = arith.constant 0 : index
    %c0_341 = arith.constant 0 : index
    %583 = vector.load %arg6[%c24_339, %c0_340, %c0_341] : memref<36x1x16xf32, #tpu.memory_space<vmem>>, vector<1x1x16xf32>
    %584 = vector.shape_cast %583 : vector<1x1x16xf32> to vector<1x16xf32>
    %585 = vector.broadcast %584 : vector<1x16xf32> to vector<8x16xf32>
    %586 = arith.addf %582, %585 : vector<8x16xf32>
    %587 = arith.truncf %586 : vector<8x16xf32> to vector<8x16xbf16>
    %c28 = arith.constant 28 : index
    %c0_342 = arith.constant 0 : index
    %c0_343 = arith.constant 0 : index
    %588 = vector.load %arg5[%c28, %c0_342, %c0_343] : memref<36x64x16xbf16, #tpu.memory_space<vmem>>, vector<1x64x16xbf16>
    %589 = vector.shape_cast %588 : vector<1x64x16xbf16> to vector<64x16xbf16>
    %cst_344 = arith.constant dense<0.000000e+00> : vector<8x16xf32>
    %590 = tpu.matmul %578, %589, %cst_344 {dimension_numbers = #tpu.dot_dimension_numbers<[1], [0], [0], [1], [0, 0, 1, 1], [], []>} : vector<8x64xbf16>, vector<64x16xbf16>, vector<8x16xf32> -> vector<8x16xf32>
    %c28_345 = arith.constant 28 : index
    %c0_346 = arith.constant 0 : index
    %c0_347 = arith.constant 0 : index
    %591 = vector.load %arg6[%c28_345, %c0_346, %c0_347] : memref<36x1x16xf32, #tpu.memory_space<vmem>>, vector<1x1x16xf32>
    %592 = vector.shape_cast %591 : vector<1x1x16xf32> to vector<1x16xf32>
    %593 = vector.broadcast %592 : vector<1x16xf32> to vector<8x16xf32>
    %594 = arith.addf %590, %593 : vector<8x16xf32>
    %595 = arith.truncf %594 : vector<8x16xf32> to vector<8x16xbf16>
    %c32 = arith.constant 32 : index
    %c0_348 = arith.constant 0 : index
    %c0_349 = arith.constant 0 : index
    %596 = vector.load %arg5[%c32, %c0_348, %c0_349] : memref<36x64x16xbf16, #tpu.memory_space<vmem>>, vector<1x64x16xbf16>
    %597 = vector.shape_cast %596 : vector<1x64x16xbf16> to vector<64x16xbf16>
    %cst_350 = arith.constant dense<0.000000e+00> : vector<8x16xf32>
    %598 = tpu.matmul %578, %597, %cst_350 {dimension_numbers = #tpu.dot_dimension_numbers<[1], [0], [0], [1], [0, 0, 1, 1], [], []>} : vector<8x64xbf16>, vector<64x16xbf16>, vector<8x16xf32> -> vector<8x16xf32>
    %c32_351 = arith.constant 32 : index
    %c0_352 = arith.constant 0 : index
    %c0_353 = arith.constant 0 : index
    %599 = vector.load %arg6[%c32_351, %c0_352, %c0_353] : memref<36x1x16xf32, #tpu.memory_space<vmem>>, vector<1x1x16xf32>
    %600 = vector.shape_cast %599 : vector<1x1x16xf32> to vector<1x16xf32>
    %601 = vector.broadcast %600 : vector<1x16xf32> to vector<8x16xf32>
    %602 = arith.addf %598, %601 : vector<8x16xf32>
    %603 = arith.truncf %602 : vector<8x16xf32> to vector<8x16xbf16>
    %cst_354 = arith.constant dense<0.000000e+00> : vector<8x8xf32>
    %604 = tpu.matmul %587, %595, %cst_354 {dimension_numbers = #tpu.dot_dimension_numbers<[1], [1], [0], [0], [0, 0, 1, 0], [], []>} : vector<8x16xbf16>, vector<8x16xbf16>, vector<8x8xf32> -> vector<8x8xf32>
    %cst_355 = arith.constant 2.500000e-01 : f32
    %605 = vector.broadcast %cst_355 : f32 to vector<8x8xf32>
    %606 = arith.mulf %604, %605 : vector<8x8xf32>
    %607 = arith.addf %606, %44 : vector<8x8xf32>
    %cst_356 = arith.constant dense<0xFF800000> : vector<8xf32>
    %608 = vector.multi_reduction <maximumf>, %607, %cst_356 [1] : vector<8x8xf32> to vector<8xf32>
    %609 = vector.shape_cast %608 : vector<8xf32> to vector<8x1xf32>
    %610 = vector.broadcast %609 : vector<8x1xf32> to vector<8x8xf32>
    %611 = arith.subf %607, %610 : vector<8x8xf32>
    %612 = math.exp %611 : vector<8x8xf32>
    %cst_357 = arith.constant dense<0.000000e+00> : vector<8xf32>
    %613 = vector.multi_reduction <add>, %612, %cst_357 [1] : vector<8x8xf32> to vector<8xf32>
    %614 = vector.shape_cast %613 : vector<8xf32> to vector<8x1xf32>
    %615 = vector.broadcast %614 : vector<8x1xf32> to vector<8x8xf32>
    %616 = arith.divf %612, %615 : vector<8x8xf32>
    %617 = arith.truncf %616 : vector<8x8xf32> to vector<8x8xbf16>
    %cst_358 = arith.constant dense<0.000000e+00> : vector<8x16xf32>
    %618 = tpu.matmul %617, %603, %cst_358 {dimension_numbers = #tpu.dot_dimension_numbers<[1], [0], [0], [1], [0, 0, 1, 1], [], []>} : vector<8x8xbf16>, vector<8x16xbf16>, vector<8x16xf32> -> vector<8x16xf32>
    %619 = arith.truncf %618 : vector<8x16xf32> to vector<8x16xbf16>
    %c8_359 = arith.constant 8 : index
    %c0_360 = arith.constant 0 : index
    %c0_361 = arith.constant 0 : index
    %620 = vector.load %arg7[%c8_359, %c0_360, %c0_361] : memref<12x16x64xbf16, #tpu.memory_space<vmem>>, vector<1x16x64xbf16>
    %621 = vector.shape_cast %620 : vector<1x16x64xbf16> to vector<16x64xbf16>
    %cst_362 = arith.constant dense<0.000000e+00> : vector<8x64xf32>
    %622 = tpu.matmul %619, %621, %cst_362 {dimension_numbers = #tpu.dot_dimension_numbers<[1], [0], [0], [1], [0, 0, 1, 1], [], []>} : vector<8x16xbf16>, vector<16x64xbf16>, vector<8x64xf32> -> vector<8x64xf32>
    %623 = arith.addf %579, %622 : vector<8x64xf32>
    %c25 = arith.constant 25 : index
    %c0_363 = arith.constant 0 : index
    %c0_364 = arith.constant 0 : index
    %624 = vector.load %arg5[%c25, %c0_363, %c0_364] : memref<36x64x16xbf16, #tpu.memory_space<vmem>>, vector<1x64x16xbf16>
    %625 = vector.shape_cast %624 : vector<1x64x16xbf16> to vector<64x16xbf16>
    %cst_365 = arith.constant dense<0.000000e+00> : vector<8x16xf32>
    %626 = tpu.matmul %577, %625, %cst_365 {dimension_numbers = #tpu.dot_dimension_numbers<[1], [0], [0], [1], [0, 0, 1, 1], [], []>} : vector<8x64xbf16>, vector<64x16xbf16>, vector<8x16xf32> -> vector<8x16xf32>
    %c25_366 = arith.constant 25 : index
    %c0_367 = arith.constant 0 : index
    %c0_368 = arith.constant 0 : index
    %627 = vector.load %arg6[%c25_366, %c0_367, %c0_368] : memref<36x1x16xf32, #tpu.memory_space<vmem>>, vector<1x1x16xf32>
    %628 = vector.shape_cast %627 : vector<1x1x16xf32> to vector<1x16xf32>
    %629 = vector.broadcast %628 : vector<1x16xf32> to vector<8x16xf32>
    %630 = arith.addf %626, %629 : vector<8x16xf32>
    %631 = arith.truncf %630 : vector<8x16xf32> to vector<8x16xbf16>
    %c29 = arith.constant 29 : index
    %c0_369 = arith.constant 0 : index
    %c0_370 = arith.constant 0 : index
    %632 = vector.load %arg5[%c29, %c0_369, %c0_370] : memref<36x64x16xbf16, #tpu.memory_space<vmem>>, vector<1x64x16xbf16>
    %633 = vector.shape_cast %632 : vector<1x64x16xbf16> to vector<64x16xbf16>
    %cst_371 = arith.constant dense<0.000000e+00> : vector<8x16xf32>
    %634 = tpu.matmul %578, %633, %cst_371 {dimension_numbers = #tpu.dot_dimension_numbers<[1], [0], [0], [1], [0, 0, 1, 1], [], []>} : vector<8x64xbf16>, vector<64x16xbf16>, vector<8x16xf32> -> vector<8x16xf32>
    %c29_372 = arith.constant 29 : index
    %c0_373 = arith.constant 0 : index
    %c0_374 = arith.constant 0 : index
    %635 = vector.load %arg6[%c29_372, %c0_373, %c0_374] : memref<36x1x16xf32, #tpu.memory_space<vmem>>, vector<1x1x16xf32>
    %636 = vector.shape_cast %635 : vector<1x1x16xf32> to vector<1x16xf32>
    %637 = vector.broadcast %636 : vector<1x16xf32> to vector<8x16xf32>
    %638 = arith.addf %634, %637 : vector<8x16xf32>
    %639 = arith.truncf %638 : vector<8x16xf32> to vector<8x16xbf16>
    %c33 = arith.constant 33 : index
    %c0_375 = arith.constant 0 : index
    %c0_376 = arith.constant 0 : index
    %640 = vector.load %arg5[%c33, %c0_375, %c0_376] : memref<36x64x16xbf16, #tpu.memory_space<vmem>>, vector<1x64x16xbf16>
    %641 = vector.shape_cast %640 : vector<1x64x16xbf16> to vector<64x16xbf16>
    %cst_377 = arith.constant dense<0.000000e+00> : vector<8x16xf32>
    %642 = tpu.matmul %578, %641, %cst_377 {dimension_numbers = #tpu.dot_dimension_numbers<[1], [0], [0], [1], [0, 0, 1, 1], [], []>} : vector<8x64xbf16>, vector<64x16xbf16>, vector<8x16xf32> -> vector<8x16xf32>
    %c33_378 = arith.constant 33 : index
    %c0_379 = arith.constant 0 : index
    %c0_380 = arith.constant 0 : index
    %643 = vector.load %arg6[%c33_378, %c0_379, %c0_380] : memref<36x1x16xf32, #tpu.memory_space<vmem>>, vector<1x1x16xf32>
    %644 = vector.shape_cast %643 : vector<1x1x16xf32> to vector<1x16xf32>
    %645 = vector.broadcast %644 : vector<1x16xf32> to vector<8x16xf32>
    %646 = arith.addf %642, %645 : vector<8x16xf32>
    %647 = arith.truncf %646 : vector<8x16xf32> to vector<8x16xbf16>
    %cst_381 = arith.constant dense<0.000000e+00> : vector<8x8xf32>
    %648 = tpu.matmul %631, %639, %cst_381 {dimension_numbers = #tpu.dot_dimension_numbers<[1], [1], [0], [0], [0, 0, 1, 0], [], []>} : vector<8x16xbf16>, vector<8x16xbf16>, vector<8x8xf32> -> vector<8x8xf32>
    %cst_382 = arith.constant 2.500000e-01 : f32
    %649 = vector.broadcast %cst_382 : f32 to vector<8x8xf32>
    %650 = arith.mulf %648, %649 : vector<8x8xf32>
    %651 = arith.addf %650, %44 : vector<8x8xf32>
    %cst_383 = arith.constant dense<0xFF800000> : vector<8xf32>
    %652 = vector.multi_reduction <maximumf>, %651, %cst_383 [1] : vector<8x8xf32> to vector<8xf32>
    %653 = vector.shape_cast %652 : vector<8xf32> to vector<8x1xf32>
    %654 = vector.broadcast %653 : vector<8x1xf32> to vector<8x8xf32>
    %655 = arith.subf %651, %654 : vector<8x8xf32>
    %656 = math.exp %655 : vector<8x8xf32>
    %cst_384 = arith.constant dense<0.000000e+00> : vector<8xf32>
    %657 = vector.multi_reduction <add>, %656, %cst_384 [1] : vector<8x8xf32> to vector<8xf32>
    %658 = vector.shape_cast %657 : vector<8xf32> to vector<8x1xf32>
    %659 = vector.broadcast %658 : vector<8x1xf32> to vector<8x8xf32>
    %660 = arith.divf %656, %659 : vector<8x8xf32>
    %661 = arith.truncf %660 : vector<8x8xf32> to vector<8x8xbf16>
    %cst_385 = arith.constant dense<0.000000e+00> : vector<8x16xf32>
    %662 = tpu.matmul %661, %647, %cst_385 {dimension_numbers = #tpu.dot_dimension_numbers<[1], [0], [0], [1], [0, 0, 1, 1], [], []>} : vector<8x8xbf16>, vector<8x16xbf16>, vector<8x16xf32> -> vector<8x16xf32>
    %663 = arith.truncf %662 : vector<8x16xf32> to vector<8x16xbf16>
    %c9_386 = arith.constant 9 : index
    %c0_387 = arith.constant 0 : index
    %c0_388 = arith.constant 0 : index
    %664 = vector.load %arg7[%c9_386, %c0_387, %c0_388] : memref<12x16x64xbf16, #tpu.memory_space<vmem>>, vector<1x16x64xbf16>
    %665 = vector.shape_cast %664 : vector<1x16x64xbf16> to vector<16x64xbf16>
    %cst_389 = arith.constant dense<0.000000e+00> : vector<8x64xf32>
    %666 = tpu.matmul %663, %665, %cst_389 {dimension_numbers = #tpu.dot_dimension_numbers<[1], [0], [0], [1], [0, 0, 1, 1], [], []>} : vector<8x16xbf16>, vector<16x64xbf16>, vector<8x64xf32> -> vector<8x64xf32>
    %667 = arith.addf %623, %666 : vector<8x64xf32>
    %c26 = arith.constant 26 : index
    %c0_390 = arith.constant 0 : index
    %c0_391 = arith.constant 0 : index
    %668 = vector.load %arg5[%c26, %c0_390, %c0_391] : memref<36x64x16xbf16, #tpu.memory_space<vmem>>, vector<1x64x16xbf16>
    %669 = vector.shape_cast %668 : vector<1x64x16xbf16> to vector<64x16xbf16>
    %cst_392 = arith.constant dense<0.000000e+00> : vector<8x16xf32>
    %670 = tpu.matmul %577, %669, %cst_392 {dimension_numbers = #tpu.dot_dimension_numbers<[1], [0], [0], [1], [0, 0, 1, 1], [], []>} : vector<8x64xbf16>, vector<64x16xbf16>, vector<8x16xf32> -> vector<8x16xf32>
    %c26_393 = arith.constant 26 : index
    %c0_394 = arith.constant 0 : index
    %c0_395 = arith.constant 0 : index
    %671 = vector.load %arg6[%c26_393, %c0_394, %c0_395] : memref<36x1x16xf32, #tpu.memory_space<vmem>>, vector<1x1x16xf32>
    %672 = vector.shape_cast %671 : vector<1x1x16xf32> to vector<1x16xf32>
    %673 = vector.broadcast %672 : vector<1x16xf32> to vector<8x16xf32>
    %674 = arith.addf %670, %673 : vector<8x16xf32>
    %675 = arith.truncf %674 : vector<8x16xf32> to vector<8x16xbf16>
    %c30 = arith.constant 30 : index
    %c0_396 = arith.constant 0 : index
    %c0_397 = arith.constant 0 : index
    %676 = vector.load %arg5[%c30, %c0_396, %c0_397] : memref<36x64x16xbf16, #tpu.memory_space<vmem>>, vector<1x64x16xbf16>
    %677 = vector.shape_cast %676 : vector<1x64x16xbf16> to vector<64x16xbf16>
    %cst_398 = arith.constant dense<0.000000e+00> : vector<8x16xf32>
    %678 = tpu.matmul %578, %677, %cst_398 {dimension_numbers = #tpu.dot_dimension_numbers<[1], [0], [0], [1], [0, 0, 1, 1], [], []>} : vector<8x64xbf16>, vector<64x16xbf16>, vector<8x16xf32> -> vector<8x16xf32>
    %c30_399 = arith.constant 30 : index
    %c0_400 = arith.constant 0 : index
    %c0_401 = arith.constant 0 : index
    %679 = vector.load %arg6[%c30_399, %c0_400, %c0_401] : memref<36x1x16xf32, #tpu.memory_space<vmem>>, vector<1x1x16xf32>
    %680 = vector.shape_cast %679 : vector<1x1x16xf32> to vector<1x16xf32>
    %681 = vector.broadcast %680 : vector<1x16xf32> to vector<8x16xf32>
    %682 = arith.addf %678, %681 : vector<8x16xf32>
    %683 = arith.truncf %682 : vector<8x16xf32> to vector<8x16xbf16>
    %c34 = arith.constant 34 : index
    %c0_402 = arith.constant 0 : index
    %c0_403 = arith.constant 0 : index
    %684 = vector.load %arg5[%c34, %c0_402, %c0_403] : memref<36x64x16xbf16, #tpu.memory_space<vmem>>, vector<1x64x16xbf16>
    %685 = vector.shape_cast %684 : vector<1x64x16xbf16> to vector<64x16xbf16>
    %cst_404 = arith.constant dense<0.000000e+00> : vector<8x16xf32>
    %686 = tpu.matmul %578, %685, %cst_404 {dimension_numbers = #tpu.dot_dimension_numbers<[1], [0], [0], [1], [0, 0, 1, 1], [], []>} : vector<8x64xbf16>, vector<64x16xbf16>, vector<8x16xf32> -> vector<8x16xf32>
    %c34_405 = arith.constant 34 : index
    %c0_406 = arith.constant 0 : index
    %c0_407 = arith.constant 0 : index
    %687 = vector.load %arg6[%c34_405, %c0_406, %c0_407] : memref<36x1x16xf32, #tpu.memory_space<vmem>>, vector<1x1x16xf32>
    %688 = vector.shape_cast %687 : vector<1x1x16xf32> to vector<1x16xf32>
    %689 = vector.broadcast %688 : vector<1x16xf32> to vector<8x16xf32>
    %690 = arith.addf %686, %689 : vector<8x16xf32>
    %691 = arith.truncf %690 : vector<8x16xf32> to vector<8x16xbf16>
    %cst_408 = arith.constant dense<0.000000e+00> : vector<8x8xf32>
    %692 = tpu.matmul %675, %683, %cst_408 {dimension_numbers = #tpu.dot_dimension_numbers<[1], [1], [0], [0], [0, 0, 1, 0], [], []>} : vector<8x16xbf16>, vector<8x16xbf16>, vector<8x8xf32> -> vector<8x8xf32>
    %cst_409 = arith.constant 2.500000e-01 : f32
    %693 = vector.broadcast %cst_409 : f32 to vector<8x8xf32>
    %694 = arith.mulf %692, %693 : vector<8x8xf32>
    %695 = arith.addf %694, %44 : vector<8x8xf32>
    %cst_410 = arith.constant dense<0xFF800000> : vector<8xf32>
    %696 = vector.multi_reduction <maximumf>, %695, %cst_410 [1] : vector<8x8xf32> to vector<8xf32>
    %697 = vector.shape_cast %696 : vector<8xf32> to vector<8x1xf32>
    %698 = vector.broadcast %697 : vector<8x1xf32> to vector<8x8xf32>
    %699 = arith.subf %695, %698 : vector<8x8xf32>
    %700 = math.exp %699 : vector<8x8xf32>
    %cst_411 = arith.constant dense<0.000000e+00> : vector<8xf32>
    %701 = vector.multi_reduction <add>, %700, %cst_411 [1] : vector<8x8xf32> to vector<8xf32>
    %702 = vector.shape_cast %701 : vector<8xf32> to vector<8x1xf32>
    %703 = vector.broadcast %702 : vector<8x1xf32> to vector<8x8xf32>
    %704 = arith.divf %700, %703 : vector<8x8xf32>
    %705 = arith.truncf %704 : vector<8x8xf32> to vector<8x8xbf16>
    %cst_412 = arith.constant dense<0.000000e+00> : vector<8x16xf32>
    %706 = tpu.matmul %705, %691, %cst_412 {dimension_numbers = #tpu.dot_dimension_numbers<[1], [0], [0], [1], [0, 0, 1, 1], [], []>} : vector<8x8xbf16>, vector<8x16xbf16>, vector<8x16xf32> -> vector<8x16xf32>
    %707 = arith.truncf %706 : vector<8x16xf32> to vector<8x16xbf16>
    %c10_413 = arith.constant 10 : index
    %c0_414 = arith.constant 0 : index
    %c0_415 = arith.constant 0 : index
    %708 = vector.load %arg7[%c10_413, %c0_414, %c0_415] : memref<12x16x64xbf16, #tpu.memory_space<vmem>>, vector<1x16x64xbf16>
    %709 = vector.shape_cast %708 : vector<1x16x64xbf16> to vector<16x64xbf16>
    %cst_416 = arith.constant dense<0.000000e+00> : vector<8x64xf32>
    %710 = tpu.matmul %707, %709, %cst_416 {dimension_numbers = #tpu.dot_dimension_numbers<[1], [0], [0], [1], [0, 0, 1, 1], [], []>} : vector<8x16xbf16>, vector<16x64xbf16>, vector<8x64xf32> -> vector<8x64xf32>
    %711 = arith.addf %667, %710 : vector<8x64xf32>
    %c27 = arith.constant 27 : index
    %c0_417 = arith.constant 0 : index
    %c0_418 = arith.constant 0 : index
    %712 = vector.load %arg5[%c27, %c0_417, %c0_418] : memref<36x64x16xbf16, #tpu.memory_space<vmem>>, vector<1x64x16xbf16>
    %713 = vector.shape_cast %712 : vector<1x64x16xbf16> to vector<64x16xbf16>
    %cst_419 = arith.constant dense<0.000000e+00> : vector<8x16xf32>
    %714 = tpu.matmul %577, %713, %cst_419 {dimension_numbers = #tpu.dot_dimension_numbers<[1], [0], [0], [1], [0, 0, 1, 1], [], []>} : vector<8x64xbf16>, vector<64x16xbf16>, vector<8x16xf32> -> vector<8x16xf32>
    %c27_420 = arith.constant 27 : index
    %c0_421 = arith.constant 0 : index
    %c0_422 = arith.constant 0 : index
    %715 = vector.load %arg6[%c27_420, %c0_421, %c0_422] : memref<36x1x16xf32, #tpu.memory_space<vmem>>, vector<1x1x16xf32>
    %716 = vector.shape_cast %715 : vector<1x1x16xf32> to vector<1x16xf32>
    %717 = vector.broadcast %716 : vector<1x16xf32> to vector<8x16xf32>
    %718 = arith.addf %714, %717 : vector<8x16xf32>
    %719 = arith.truncf %718 : vector<8x16xf32> to vector<8x16xbf16>
    %c31 = arith.constant 31 : index
    %c0_423 = arith.constant 0 : index
    %c0_424 = arith.constant 0 : index
    %720 = vector.load %arg5[%c31, %c0_423, %c0_424] : memref<36x64x16xbf16, #tpu.memory_space<vmem>>, vector<1x64x16xbf16>
    %721 = vector.shape_cast %720 : vector<1x64x16xbf16> to vector<64x16xbf16>
    %cst_425 = arith.constant dense<0.000000e+00> : vector<8x16xf32>
    %722 = tpu.matmul %578, %721, %cst_425 {dimension_numbers = #tpu.dot_dimension_numbers<[1], [0], [0], [1], [0, 0, 1, 1], [], []>} : vector<8x64xbf16>, vector<64x16xbf16>, vector<8x16xf32> -> vector<8x16xf32>
    %c31_426 = arith.constant 31 : index
    %c0_427 = arith.constant 0 : index
    %c0_428 = arith.constant 0 : index
    %723 = vector.load %arg6[%c31_426, %c0_427, %c0_428] : memref<36x1x16xf32, #tpu.memory_space<vmem>>, vector<1x1x16xf32>
    %724 = vector.shape_cast %723 : vector<1x1x16xf32> to vector<1x16xf32>
    %725 = vector.broadcast %724 : vector<1x16xf32> to vector<8x16xf32>
    %726 = arith.addf %722, %725 : vector<8x16xf32>
    %727 = arith.truncf %726 : vector<8x16xf32> to vector<8x16xbf16>
    %c35 = arith.constant 35 : index
    %c0_429 = arith.constant 0 : index
    %c0_430 = arith.constant 0 : index
    %728 = vector.load %arg5[%c35, %c0_429, %c0_430] : memref<36x64x16xbf16, #tpu.memory_space<vmem>>, vector<1x64x16xbf16>
    %729 = vector.shape_cast %728 : vector<1x64x16xbf16> to vector<64x16xbf16>
    %cst_431 = arith.constant dense<0.000000e+00> : vector<8x16xf32>
    %730 = tpu.matmul %578, %729, %cst_431 {dimension_numbers = #tpu.dot_dimension_numbers<[1], [0], [0], [1], [0, 0, 1, 1], [], []>} : vector<8x64xbf16>, vector<64x16xbf16>, vector<8x16xf32> -> vector<8x16xf32>
    %c35_432 = arith.constant 35 : index
    %c0_433 = arith.constant 0 : index
    %c0_434 = arith.constant 0 : index
    %731 = vector.load %arg6[%c35_432, %c0_433, %c0_434] : memref<36x1x16xf32, #tpu.memory_space<vmem>>, vector<1x1x16xf32>
    %732 = vector.shape_cast %731 : vector<1x1x16xf32> to vector<1x16xf32>
    %733 = vector.broadcast %732 : vector<1x16xf32> to vector<8x16xf32>
    %734 = arith.addf %730, %733 : vector<8x16xf32>
    %735 = arith.truncf %734 : vector<8x16xf32> to vector<8x16xbf16>
    %cst_435 = arith.constant dense<0.000000e+00> : vector<8x8xf32>
    %736 = tpu.matmul %719, %727, %cst_435 {dimension_numbers = #tpu.dot_dimension_numbers<[1], [1], [0], [0], [0, 0, 1, 0], [], []>} : vector<8x16xbf16>, vector<8x16xbf16>, vector<8x8xf32> -> vector<8x8xf32>
    %cst_436 = arith.constant 2.500000e-01 : f32
    %737 = vector.broadcast %cst_436 : f32 to vector<8x8xf32>
    %738 = arith.mulf %736, %737 : vector<8x8xf32>
    %739 = arith.addf %738, %44 : vector<8x8xf32>
    %cst_437 = arith.constant dense<0xFF800000> : vector<8xf32>
    %740 = vector.multi_reduction <maximumf>, %739, %cst_437 [1] : vector<8x8xf32> to vector<8xf32>
    %741 = vector.shape_cast %740 : vector<8xf32> to vector<8x1xf32>
    %742 = vector.broadcast %741 : vector<8x1xf32> to vector<8x8xf32>
    %743 = arith.subf %739, %742 : vector<8x8xf32>
    %744 = math.exp %743 : vector<8x8xf32>
    %cst_438 = arith.constant dense<0.000000e+00> : vector<8xf32>
    %745 = vector.multi_reduction <add>, %744, %cst_438 [1] : vector<8x8xf32> to vector<8xf32>
    %746 = vector.shape_cast %745 : vector<8xf32> to vector<8x1xf32>
    %747 = vector.broadcast %746 : vector<8x1xf32> to vector<8x8xf32>
    %748 = arith.divf %744, %747 : vector<8x8xf32>
    %749 = arith.truncf %748 : vector<8x8xf32> to vector<8x8xbf16>
    %cst_439 = arith.constant dense<0.000000e+00> : vector<8x16xf32>
    %750 = tpu.matmul %749, %735, %cst_439 {dimension_numbers = #tpu.dot_dimension_numbers<[1], [0], [0], [1], [0, 0, 1, 1], [], []>} : vector<8x8xbf16>, vector<8x16xbf16>, vector<8x16xf32> -> vector<8x16xf32>
    %751 = arith.truncf %750 : vector<8x16xf32> to vector<8x16xbf16>
    %c11_440 = arith.constant 11 : index
    %c0_441 = arith.constant 0 : index
    %c0_442 = arith.constant 0 : index
    %752 = vector.load %arg7[%c11_440, %c0_441, %c0_442] : memref<12x16x64xbf16, #tpu.memory_space<vmem>>, vector<1x16x64xbf16>
    %753 = vector.shape_cast %752 : vector<1x16x64xbf16> to vector<16x64xbf16>
    %cst_443 = arith.constant dense<0.000000e+00> : vector<8x64xf32>
    %754 = tpu.matmul %751, %753, %cst_443 {dimension_numbers = #tpu.dot_dimension_numbers<[1], [0], [0], [1], [0, 0, 1, 1], [], []>} : vector<8x16xbf16>, vector<16x64xbf16>, vector<8x64xf32> -> vector<8x64xf32>
    %755 = arith.addf %711, %754 : vector<8x64xf32>
    %c2_444 = arith.constant 2 : index
    %c0_445 = arith.constant 0 : index
    %c0_446 = arith.constant 0 : index
    %756 = vector.load %arg8[%c2_444, %c0_445, %c0_446] : memref<3x1x64xf32, #tpu.memory_space<vmem>>, vector<1x1x64xf32>
    %757 = vector.shape_cast %756 : vector<1x1x64xf32> to vector<1x64xf32>
    %758 = vector.broadcast %757 : vector<1x64xf32> to vector<8x64xf32>
    %759 = arith.addf %755, %758 : vector<8x64xf32>
    %760 = arith.addf %576, %759 : vector<8x64xf32>
    %c3_447 = arith.constant 3 : index
    %c0_448 = arith.constant 0 : index
    %c0_449 = arith.constant 0 : index
    %761 = vector.load %arg13[%c3_447, %c0_448, %c0_449] : memref<5x2x64xf32, #tpu.memory_space<vmem>>, vector<1x2x64xf32>
    %762 = vector.shape_cast %761 : vector<1x2x64xf32> to vector<2x64xf32>
    %cst_450 = arith.constant dense<0.000000e+00> : vector<8xf32>
    %763 = vector.multi_reduction <add>, %760, %cst_450 [1] : vector<8x64xf32> to vector<8xf32>
    %764 = vector.shape_cast %763 : vector<8xf32> to vector<8x1xf32>
    %cst_451 = arith.constant 6.400000e+01 : f32
    %765 = vector.broadcast %cst_451 : f32 to vector<8x1xf32>
    %766 = arith.divf %764, %765 : vector<8x1xf32>
    %767 = vector.broadcast %766 : vector<8x1xf32> to vector<8x64xf32>
    %768 = arith.subf %760, %767 : vector<8x64xf32>
    %769 = arith.mulf %768, %768 : vector<8x64xf32>
    %cst_452 = arith.constant dense<0.000000e+00> : vector<8xf32>
    %770 = vector.multi_reduction <add>, %769, %cst_452 [1] : vector<8x64xf32> to vector<8xf32>
    %771 = vector.shape_cast %770 : vector<8xf32> to vector<8x1xf32>
    %cst_453 = arith.constant 6.400000e+01 : f32
    %772 = vector.broadcast %cst_453 : f32 to vector<8x1xf32>
    %773 = arith.divf %771, %772 : vector<8x1xf32>
    %774 = vector.broadcast %766 : vector<8x1xf32> to vector<8x64xf32>
    %775 = arith.subf %760, %774 : vector<8x64xf32>
    %cst_454 = arith.constant 9.99999974E-6 : f32
    %776 = vector.broadcast %cst_454 : f32 to vector<8x1xf32>
    %777 = arith.addf %773, %776 : vector<8x1xf32>
    %778 = math.rsqrt %777 : vector<8x1xf32>
    %779 = vector.broadcast %778 : vector<8x1xf32> to vector<8x64xf32>
    %780 = arith.mulf %775, %779 : vector<8x64xf32>
    %781 = vector.extract_strided_slice %762 {offsets = [0, 0], sizes = [1, 64], strides = [1, 1]} : vector<2x64xf32> to vector<1x64xf32>
    %782 = vector.broadcast %781 : vector<1x64xf32> to vector<8x64xf32>
    %783 = arith.mulf %780, %782 : vector<8x64xf32>
    %784 = vector.extract_strided_slice %762 {offsets = [1, 0], sizes = [1, 64], strides = [1, 1]} : vector<2x64xf32> to vector<1x64xf32>
    %785 = vector.broadcast %784 : vector<1x64xf32> to vector<8x64xf32>
    %786 = arith.addf %783, %785 : vector<8x64xf32>
    %787 = arith.truncf %786 : vector<8x64xf32> to vector<8x64xbf16>
    %c1_455 = arith.constant 1 : index
    %c0_456 = arith.constant 0 : index
    %c0_457 = arith.constant 0 : index
    %788 = vector.load %arg9[%c1_455, %c0_456, %c0_457] : memref<2x64x256xbf16, #tpu.memory_space<vmem>>, vector<1x64x256xbf16>
    %789 = vector.shape_cast %788 : vector<1x64x256xbf16> to vector<64x256xbf16>
    %cst_458 = arith.constant dense<0.000000e+00> : vector<8x256xf32>
    %790 = tpu.matmul %787, %789, %cst_458 {dimension_numbers = #tpu.dot_dimension_numbers<[1], [0], [0], [1], [0, 0, 1, 1], [], []>} : vector<8x64xbf16>, vector<64x256xbf16>, vector<8x256xf32> -> vector<8x256xf32>
    %c1_459 = arith.constant 1 : index
    %c0_460 = arith.constant 0 : index
    %c0_461 = arith.constant 0 : index
    %791 = vector.load %arg10[%c1_459, %c0_460, %c0_461] : memref<2x1x256xf32, #tpu.memory_space<vmem>>, vector<1x1x256xf32>
    %792 = vector.shape_cast %791 : vector<1x1x256xf32> to vector<1x256xf32>
    %793 = vector.broadcast %792 : vector<1x256xf32> to vector<8x256xf32>
    %794 = arith.addf %790, %793 : vector<8x256xf32>
    %cst_462 = arith.constant 0.000000e+00 : f32
    %795 = vector.broadcast %cst_462 : f32 to vector<8x256xf32>
    %796 = arith.maximumf %794, %795 : vector<8x256xf32>
    %797 = arith.truncf %796 : vector<8x256xf32> to vector<8x256xbf16>
    %c1_463 = arith.constant 1 : index
    %c0_464 = arith.constant 0 : index
    %c0_465 = arith.constant 0 : index
    %798 = vector.load %arg11[%c1_463, %c0_464, %c0_465] : memref<2x256x64xbf16, #tpu.memory_space<vmem>>, vector<1x256x64xbf16>
    %799 = vector.shape_cast %798 : vector<1x256x64xbf16> to vector<256x64xbf16>
    %cst_466 = arith.constant dense<0.000000e+00> : vector<8x64xf32>
    %800 = tpu.matmul %797, %799, %cst_466 {dimension_numbers = #tpu.dot_dimension_numbers<[1], [0], [0], [1], [0, 0, 1, 1], [], []>} : vector<8x256xbf16>, vector<256x64xbf16>, vector<8x64xf32> -> vector<8x64xf32>
    %c1_467 = arith.constant 1 : index
    %c0_468 = arith.constant 0 : index
    %c0_469 = arith.constant 0 : index
    %801 = vector.load %arg12[%c1_467, %c0_468, %c0_469] : memref<2x1x64xf32, #tpu.memory_space<vmem>>, vector<1x1x64xf32>
    %802 = vector.shape_cast %801 : vector<1x1x64xf32> to vector<1x64xf32>
    %803 = vector.broadcast %802 : vector<1x64xf32> to vector<8x64xf32>
    %804 = arith.addf %800, %803 : vector<8x64xf32>
    %805 = arith.addf %786, %804 : vector<8x64xf32>
    %c4_470 = arith.constant 4 : index
    %c0_471 = arith.constant 0 : index
    %c0_472 = arith.constant 0 : index
    %806 = vector.load %arg13[%c4_470, %c0_471, %c0_472] : memref<5x2x64xf32, #tpu.memory_space<vmem>>, vector<1x2x64xf32>
    %807 = vector.shape_cast %806 : vector<1x2x64xf32> to vector<2x64xf32>
    %cst_473 = arith.constant dense<0.000000e+00> : vector<8xf32>
    %808 = vector.multi_reduction <add>, %805, %cst_473 [1] : vector<8x64xf32> to vector<8xf32>
    %809 = vector.shape_cast %808 : vector<8xf32> to vector<8x1xf32>
    %cst_474 = arith.constant 6.400000e+01 : f32
    %810 = vector.broadcast %cst_474 : f32 to vector<8x1xf32>
    %811 = arith.divf %809, %810 : vector<8x1xf32>
    %812 = vector.broadcast %811 : vector<8x1xf32> to vector<8x64xf32>
    %813 = arith.subf %805, %812 : vector<8x64xf32>
    %814 = arith.mulf %813, %813 : vector<8x64xf32>
    %cst_475 = arith.constant dense<0.000000e+00> : vector<8xf32>
    %815 = vector.multi_reduction <add>, %814, %cst_475 [1] : vector<8x64xf32> to vector<8xf32>
    %816 = vector.shape_cast %815 : vector<8xf32> to vector<8x1xf32>
    %cst_476 = arith.constant 6.400000e+01 : f32
    %817 = vector.broadcast %cst_476 : f32 to vector<8x1xf32>
    %818 = arith.divf %816, %817 : vector<8x1xf32>
    %819 = vector.broadcast %811 : vector<8x1xf32> to vector<8x64xf32>
    %820 = arith.subf %805, %819 : vector<8x64xf32>
    %cst_477 = arith.constant 9.99999974E-6 : f32
    %821 = vector.broadcast %cst_477 : f32 to vector<8x1xf32>
    %822 = arith.addf %818, %821 : vector<8x1xf32>
    %823 = math.rsqrt %822 : vector<8x1xf32>
    %824 = vector.broadcast %823 : vector<8x1xf32> to vector<8x64xf32>
    %825 = arith.mulf %820, %824 : vector<8x64xf32>
    %826 = vector.extract_strided_slice %807 {offsets = [0, 0], sizes = [1, 64], strides = [1, 1]} : vector<2x64xf32> to vector<1x64xf32>
    %827 = vector.broadcast %826 : vector<1x64xf32> to vector<8x64xf32>
    %828 = arith.mulf %825, %827 : vector<8x64xf32>
    %829 = vector.extract_strided_slice %807 {offsets = [1, 0], sizes = [1, 64], strides = [1, 1]} : vector<2x64xf32> to vector<1x64xf32>
    %830 = vector.broadcast %829 : vector<1x64xf32> to vector<8x64xf32>
    %831 = arith.addf %828, %830 : vector<8x64xf32>
    %832 = arith.truncf %831 : vector<8x64xf32> to vector<8x64xbf16>
    %c0_478 = arith.constant 0 : index
    %c0_479 = arith.constant 0 : index
    %833 = vector.load %arg14[%c0_478, %c0_479] : memref<64x128xbf16, #tpu.memory_space<vmem>>, vector<64x128xbf16>
    %cst_480 = arith.constant dense<0.000000e+00> : vector<8x128xf32>
    %834 = tpu.matmul %832, %833, %cst_480 {dimension_numbers = #tpu.dot_dimension_numbers<[1], [0], [0], [1], [0, 0, 1, 1], [], []>} : vector<8x64xbf16>, vector<64x128xbf16>, vector<8x128xf32> -> vector<8x128xf32>
    %c0_481 = arith.constant 0 : index
    %c0_482 = arith.constant 0 : index
    %835 = vector.load %arg15[%c0_481, %c0_482] : memref<1x128xf32, #tpu.memory_space<vmem>>, vector<1x128xf32>
    %836 = vector.broadcast %835 : vector<1x128xf32> to vector<8x128xf32>
    %837 = arith.addf %834, %836 : vector<8x128xf32>
    %cst_483 = arith.constant dense<0xFF800000> : vector<8xf32>
    %838 = vector.multi_reduction <maximumf>, %837, %cst_483 [1] : vector<8x128xf32> to vector<8xf32>
    %839 = vector.shape_cast %838 : vector<8xf32> to vector<8x1xf32>
    %840 = vector.broadcast %839 : vector<8x1xf32> to vector<8x128xf32>
    %841 = arith.subf %837, %840 : vector<8x128xf32>
    %842 = math.exp %841 : vector<8x128xf32>
    %cst_484 = arith.constant dense<0.000000e+00> : vector<8xf32>
    %843 = vector.multi_reduction <add>, %842, %cst_484 [1] : vector<8x128xf32> to vector<8xf32>
    %844 = vector.shape_cast %843 : vector<8xf32> to vector<8x1xf32>
    %845 = math.log %844 : vector<8x1xf32>
    %846 = arith.addf %845, %839 : vector<8x1xf32>
    %847 = vector.broadcast %846 : vector<8x1xf32> to vector<8x128xf32>
    %848 = arith.subf %837, %847 : vector<8x128xf32>
    %849 = vector.shape_cast %848 : vector<8x128xf32> to vector<1x8x128xf32>
    %c0_485 = arith.constant 0 : index
    %c0_486 = arith.constant 0 : index
    %c0_487 = arith.constant 0 : index
    %850 = vector.load %arg18[%c0_485, %c0_486, %c0_487] : memref<1x8x128xf32, #tpu.memory_space<vmem>>, vector<1x8x128xf32>
    tpu.vector_store %arg18[%c0_485, %c0_486, %c0_487], %849 {strides = array<i32>} : memref<1x8x128xf32, #tpu.memory_space<vmem>>, vector<1x8x128xf32>,
    return
  }
  func.func @transform_0(%arg0: i32, %arg1: memref<2xi32, #tpu.memory_space<smem>>, %arg2: memref<2xi32, #tpu.memory_space<smem>>, %arg3: memref<2x8xi32, #tpu.memory_space<smem>>) -> (i32, i32, i32) {
    %c0_i32 = arith.constant 0 : i32
    %c0_i32_0 = arith.constant 0 : i32
    %c0_i32_1 = arith.constant 0 : i32
    return %arg0, %c0_i32, %c0_i32_0 : i32, i32, i32
  }
  func.func @transform_1(%arg0: i32, %arg1: memref<2xi32, #tpu.memory_space<smem>>, %arg2: memref<2xi32, #tpu.memory_space<smem>>, %arg3: memref<2x8xi32, #tpu.memory_space<smem>>) -> (i32, i32, i32) {
    %c0_i32 = arith.constant 0 : i32
    %c0_i32_0 = arith.constant 0 : i32
    %c0_i32_1 = arith.constant 0 : i32
    %c0_i32_2 = arith.constant 0 : i32
    return %c0_i32, %c0_i32_0, %c0_i32_1 : i32, i32, i32
  }
  func.func @transform_2(%arg0: i32, %arg1: memref<2xi32, #tpu.memory_space<smem>>, %arg2: memref<2xi32, #tpu.memory_space<smem>>, %arg3: memref<2x8xi32, #tpu.memory_space<smem>>) -> (i32, i32, i32) {
    %c0_i32 = arith.constant 0 : i32
    %c0_i32_0 = arith.constant 0 : i32
    %c0_i32_1 = arith.constant 0 : i32
    %c0_i32_2 = arith.constant 0 : i32
    return %c0_i32, %c0_i32_0, %c0_i32_1 : i32, i32, i32
  }
  func.func @transform_3(%arg0: i32, %arg1: memref<2xi32, #tpu.memory_space<smem>>, %arg2: memref<2xi32, #tpu.memory_space<smem>>, %arg3: memref<2x8xi32, #tpu.memory_space<smem>>) -> (i32, i32, i32) {
    %c0_i32 = arith.constant 0 : i32
    %c0_i32_0 = arith.constant 0 : i32
    %c0_i32_1 = arith.constant 0 : i32
    %c0_i32_2 = arith.constant 0 : i32
    return %c0_i32, %c0_i32_0, %c0_i32_1 : i32, i32, i32
  }
  func.func @transform_4(%arg0: i32, %arg1: memref<2xi32, #tpu.memory_space<smem>>, %arg2: memref<2xi32, #tpu.memory_space<smem>>, %arg3: memref<2x8xi32, #tpu.memory_space<smem>>) -> (i32, i32, i32) {
    %c0_i32 = arith.constant 0 : i32
    %c0_i32_0 = arith.constant 0 : i32
    %c0_i32_1 = arith.constant 0 : i32
    %c0_i32_2 = arith.constant 0 : i32
    return %c0_i32, %c0_i32_0, %c0_i32_1 : i32, i32, i32
  }
  func.func @transform_5(%arg0: i32, %arg1: memref<2xi32, #tpu.memory_space<smem>>, %arg2: memref<2xi32, #tpu.memory_space<smem>>, %arg3: memref<2x8xi32, #tpu.memory_space<smem>>) -> (i32, i32, i32) {
    %c0_i32 = arith.constant 0 : i32
    %c0_i32_0 = arith.constant 0 : i32
    %c0_i32_1 = arith.constant 0 : i32
    %c0_i32_2 = arith.constant 0 : i32
    return %c0_i32, %c0_i32_0, %c0_i32_1 : i32, i32, i32
  }
  func.func @transform_6(%arg0: i32, %arg1: memref<2xi32, #tpu.memory_space<smem>>, %arg2: memref<2xi32, #tpu.memory_space<smem>>, %arg3: memref<2x8xi32, #tpu.memory_space<smem>>) -> (i32, i32, i32) {
    %c0_i32 = arith.constant 0 : i32
    %c0_i32_0 = arith.constant 0 : i32
    %c0_i32_1 = arith.constant 0 : i32
    %c0_i32_2 = arith.constant 0 : i32
    return %c0_i32, %c0_i32_0, %c0_i32_1 : i32, i32, i32
  }
  func.func @transform_7(%arg0: i32, %arg1: memref<2xi32, #tpu.memory_space<smem>>, %arg2: memref<2xi32, #tpu.memory_space<smem>>, %arg3: memref<2x8xi32, #tpu.memory_space<smem>>) -> (i32, i32, i32) {
    %c0_i32 = arith.constant 0 : i32
    %c0_i32_0 = arith.constant 0 : i32
    %c0_i32_1 = arith.constant 0 : i32
    %c0_i32_2 = arith.constant 0 : i32
    return %c0_i32, %c0_i32_0, %c0_i32_1 : i32, i32, i32
  }
  func.func @transform_8(%arg0: i32, %arg1: memref<2xi32, #tpu.memory_space<smem>>, %arg2: memref<2xi32, #tpu.memory_space<smem>>, %arg3: memref<2x8xi32, #tpu.memory_space<smem>>) -> (i32, i32, i32) {
    %c0_i32 = arith.constant 0 : i32
    %c0_i32_0 = arith.constant 0 : i32
    %c0_i32_1 = arith.constant 0 : i32
    %c0_i32_2 = arith.constant 0 : i32
    return %c0_i32, %c0_i32_0, %c0_i32_1 : i32, i32, i32
  }
  func.func @transform_9(%arg0: i32, %arg1: memref<2xi32, #tpu.memory_space<smem>>, %arg2: memref<2xi32, #tpu.memory_space<smem>>, %arg3: memref<2x8xi32, #tpu.memory_space<smem>>) -> (i32, i32, i32) {
    %c0_i32 = arith.constant 0 : i32
    %c0_i32_0 = arith.constant 0 : i32
    %c0_i32_1 = arith.constant 0 : i32
    %c0_i32_2 = arith.constant 0 : i32
    return %c0_i32, %c0_i32_0, %c0_i32_1 : i32, i32, i32
  }
  func.func @transform_10(%arg0: i32, %arg1: memref<2xi32, #tpu.memory_space<smem>>, %arg2: memref<2xi32, #tpu.memory_space<smem>>, %arg3: memref<2x8xi32, #tpu.memory_space<smem>>) -> (i32, i32) {
    %c0_i32 = arith.constant 0 : i32
    %c0_i32_0 = arith.constant 0 : i32
    %c0_i32_1 = arith.constant 0 : i32
    return %c0_i32, %c0_i32_0 : i32, i32
  }
  func.func @transform_11(%arg0: i32, %arg1: memref<2xi32, #tpu.memory_space<smem>>, %arg2: memref<2xi32, #tpu.memory_space<smem>>, %arg3: memref<2x8xi32, #tpu.memory_space<smem>>) -> (i32, i32) {
    %c0_i32 = arith.constant 0 : i32
    %c0_i32_0 = arith.constant 0 : i32
    %c0_i32_1 = arith.constant 0 : i32
    return %c0_i32, %c0_i32_0 : i32, i32
  }
  func.func @transform_12(%arg0: i32, %arg1: memref<2xi32, #tpu.memory_space<smem>>, %arg2: memref<2xi32, #tpu.memory_space<smem>>, %arg3: memref<2x8xi32, #tpu.memory_space<smem>>) -> (i32, i32) {
    %c0_i32 = arith.constant 0 : i32
    %c0_i32_0 = arith.constant 0 : i32
    %c0_i32_1 = arith.constant 0 : i32
    return %c0_i32, %c0_i32_0 : i32, i32
  }
  func.func @transform_13(%arg0: i32, %arg1: memref<2xi32, #tpu.memory_space<smem>>, %arg2: memref<2xi32, #tpu.memory_space<smem>>, %arg3: memref<2x8xi32, #tpu.memory_space<smem>>) -> (i32, i32) {
    %c0_i32 = arith.constant 0 : i32
    %c0_i32_0 = arith.constant 0 : i32
    %c0_i32_1 = arith.constant 0 : i32
    return %c0_i32, %c0_i32_0 : i32, i32
  }
  func.func @transform_14(%arg0: i32, %arg1: memref<2xi32, #tpu.memory_space<smem>>, %arg2: memref<2xi32, #tpu.memory_space<smem>>, %arg3: memref<2x8xi32, #tpu.memory_space<smem>>) -> (i32, i32, i32) {
    %c0_i32 = arith.constant 0 : i32
    %c0_i32_0 = arith.constant 0 : i32
    %c0_i32_1 = arith.constant 0 : i32
    return %arg0, %c0_i32, %c0_i32_0 : i32, i32, i32
  }
}

</mosaic_0001>

<llo_original>
// kernel: tpu_custom_call.1
$region0: #{tpu_custom_call.1}
  #allocation0 [shape = 'u32[]', space=smem, size = 0x4, offset = 0x4, fixed_abs, tag = 'smem constant byte address 0x4 - core index']
  #allocation1 [shape = 'u32[144,128]{1,0:T(1,128)}', space=vmem, size = 0x12000, scoped, tag = 'internal scratch']
  #allocation2 [shape = 'f32[8,64]{1,0:T(8,128)}', space=vmem, size = 0x1000, scoped, tag = 'scratch operand']
  #allocation3 [shape = 's32[1]{0}', space=sflag, size = 0x4, scoped, tag = 'scoped memory for tpu_custom_call.1']
  #allocation4 [shape = 'u8[512]{0}', space=smem, size = 0x200, scoped, tag = 'prefetched SMEM operand 0']
  #allocation5 [shape = 'u8[512]{0}', space=smem, size = 0x200, scoped, tag = 'prefetched SMEM operand 1']
  #allocation6 [shape = 'u8[1024]{0}', space=smem, size = 0x400, scoped, tag = 'prefetched SMEM operand 2']
  %s0 = inlined_call_operand.vmem [shape: s32[2], index: 0, kind: input, shape index: {}]
  %s1 = inlined_call_operand.vmem [shape: s32[2], index: 1, kind: input, shape index: {}]
  %s2 = inlined_call_operand.vmem [shape: s32[2,8], index: 2, kind: input, shape index: {}]
  %s3 = inlined_call_operand.vmem [shape: f32[2,8,64], index: 3, kind: input, shape index: {}]
  %s4 = inlined_call_operand.vmem [shape: bf16[36,64,16], index: 4, kind: input, shape index: {}]
  %s5 = inlined_call_operand.vmem [shape: f32[36,1,16], index: 5, kind: input, shape index: {}]
  %s6 = inlined_call_operand.vmem [shape: bf16[12,16,64], index: 6, kind: input, shape index: {}]
  %s7 = inlined_call_operand.vmem [shape: f32[3,1,64], index: 7, kind: input, shape index: {}]
  %s8 = inlined_call_operand.vmem [shape: bf16[2,64,256], index: 8, kind: input, shape index: {}]
  %s9 = inlined_call_operand.vmem [shape: f32[2,1,256], index: 9, kind: input, shape index: {}]
  %s10 = inlined_call_operand.vmem [shape: bf16[2,256,64], index: 10, kind: input, shape index: {}]
  %s11 = inlined_call_operand.vmem [shape: f32[2,1,64], index: 11, kind: input, shape index: {}]
  %s12 = inlined_call_operand.vmem [shape: f32[5,2,64], index: 12, kind: input, shape index: {}]
  %s13 = inlined_call_operand.vmem [shape: bf16[64,128], index: 13, kind: input, shape index: {}]
  %s14 = inlined_call_operand.vmem [shape: f32[1,128], index: 14, kind: input, shape index: {}]
  %s15 = inlined_call_operand.vmem [shape: f32[100,64], index: 15, kind: input, shape index: {}]
  %s16 = inlined_call_operand.vmem [shape: f32[8,64], index: 16, kind: input, shape index: {}]
  %s17 = inlined_call_operand.hbm [shape: f32[2,8,128], index: 17, kind: output, shape index: {}]
  %s18 = sld [smem:[#allocation0]]
  $region89: #{tpu_custom_call.1} parent=0
    _
  %s20 = ssub.s32 1, %s18
  %s21 = scalar_select 0, %s20, %s18
  %s22 = sshll.u32 %s0, 4
  %s23 = int_to_ptr.vmem [resolvable:$true] %s22
  %25 = dma.vmem_to_smem %s23, 16, [#allocation4], [#allocation3]
  %s26 = sshll.u32 %s1, 4
  %s27 = int_to_ptr.vmem [resolvable:$true] %s26
  %29 = dma.vmem_to_smem %s27, 16, [#allocation5], [#allocation3]
  %s30 = sshll.u32 %s2, 4
  %s31 = int_to_ptr.vmem [resolvable:$true] %s30
  %33 = dma.vmem_to_smem %s31, 32, [#allocation6], [#allocation3]
  %34 = dma.done [#allocation3], 64
  %35 = sfence
  $region1: #{tpu_custom_call.1} parent=0
    #allocation7 [shape = 'u8[8192]{0}', space=vmem, size = 0x2000, scoped, tag = 'output window, operand 0']
    #allocation8 [shape = 's32[2]{0}', space=sflag, size = 0x8, scoped, tag = 'scoped memory for tpu_custom_call.1']
    %36 = vsyncpa [#allocation8], 0
    %s37 = scalar_lea.sflag [#allocation8], 1
    %38 = vsyncpa %s37, 0
    loop: start=0, step=1, limit=4
    $region2: #{tpu_custom_call.1} parent=1 // loop_pre_header
      _
    $region3: #{tpu_custom_call.1} parent=1 // loop_header
      %s40 = sphi 0, %s44
      %p41 = scmp.ge.s32.totalorder %s40, 4
      %s50 = sphi 0, %s52
      %s53 = sphi 0, %s50
      %s54 = sphi 0, %s53
      %s70 = sphi 0, %s54
      %s74 = sphi 0, %s74
      %s76 = sphi 0, %s74
      %s77 = sphi 0, %s76
      %s91 = sphi 0, %s77
      %s95 = sphi 0, %s95
      %s97 = sphi 0, %s95
      %s98 = sphi 0, %s97
      %s112 = sphi 0, %s98
      %s116 = sphi 0, %s116
      %s118 = sphi 0, %s116
      %s119 = sphi 0, %s118
      %s133 = sphi 0, %s119
      %s137 = sphi 0, %s137
      %s139 = sphi 0, %s137
      %s140 = sphi 0, %s139
      %s154 = sphi 0, %s140
      %s158 = sphi 0, %s158
      %s160 = sphi 0, %s158
      %s161 = sphi 0, %s160
      %s175 = sphi 0, %s161
      %s179 = sphi 0, %s179
      %s181 = sphi 0, %s179
      %s182 = sphi 0, %s181
      %s196 = sphi 0, %s182
      %s200 = sphi 0, %s200
      %s202 = sphi 0, %s200
      %s203 = sphi 0, %s202
      %s217 = sphi 0, %s203
      %s221 = sphi 0, %s221
      %s223 = sphi 0, %s221
      %s224 = sphi 0, %s223
      %s238 = sphi 0, %s224
      %s242 = sphi 0, %s242
      %s244 = sphi 0, %s242
      %s245 = sphi 0, %s244
      %s259 = sphi 0, %s245
      %s263 = sphi 0, %s263
      %s265 = sphi 0, %s263
      %s266 = sphi 0, %s265
      %s280 = sphi 0, %s266
      %s284 = sphi 0, %s284
      %s286 = sphi 0, %s284
      %s287 = sphi 0, %s286
      %s301 = sphi 0, %s287
      %s305 = sphi 0, %s305
      %s307 = sphi 0, %s305
      %s308 = sphi 0, %s307
      %s322 = sphi 0, %s308
      %s326 = sphi 0, %s326
      %s328 = sphi 0, %s326
      %s329 = sphi 0, %s328
      %s343 = sphi 0, %s329
      %s349 = sphi 0, %s351
      %s352 = sphi 0, %s349
      %s353 = sphi 0, %s352
      %s369 = sphi 0, %s353
    $region4: #{tpu_custom_call.1} parent=1 // loop_header_branch
      %43 = sbr.rel (%p41) target = $region8
    $region5: #{tpu_custom_call.1} parent=1 // loop_body
      %s45 = ssub.s32 %s40, 1
      %s46 = ssub.s32 %s40, 2
      %s47 = sadd.s32 %s40, 1
      %s48 = ssub.s32 %s40, %s47
      %p49 = scmp.eq.s32.totalorder %s48, 0
      %s51 = sadd.s32 %s50, 1
      %s52 = scalar_select %p49, %s50, %s51
      %p55 = pneg %p49
      %p56 = scmp.eq.s32.totalorder %s40, 1
      %p57 = por %p55, %p56
      %p58 = scmp.ne.s32.totalorder %s50, %s53
      %p59 = scmp.eq.s32.totalorder %s40, 0
      %p60 = por %p58, %p59
      %p61 = scmp.ne.s32.totalorder %s50, %s53
      %p62 = scmp.eq.s32.totalorder %s45, 1
      %p63 = por %p61, %p62
      %p64 = scmp.ne.s32.totalorder %s53, %s54
      %p65 = scmp.eq.s32.totalorder %s45, 0
      %p66 = por %p64, %p65
      %p67 = scmp.ne.s32.totalorder %s53, %s54
      %p68 = scmp.eq.s32.totalorder %s46, 1
      %p69 = por %p67, %p68
      %p71 = scmp.ne.s32.totalorder %s54, %s70
      %p72 = scmp.eq.s32.totalorder %s46, 0
      %p73 = por %p71, %p72
      %s75 = sadd.s32 %s74, 1
      %p78 = scmp.eq.s32.totalorder %s40, 1
      %p79 = scmp.ne.s32.totalorder %s74, %s76
      %p80 = scmp.eq.s32.totalorder %s40, 0
      %p81 = por %p79, %p80
      %p82 = scmp.ne.s32.totalorder %s74, %s76
      %p83 = scmp.eq.s32.totalorder %s45, 1
      %p84 = por %p82, %p83
      %p85 = scmp.ne.s32.totalorder %s76, %s77
      %p86 = scmp.eq.s32.totalorder %s45, 0
      %p87 = por %p85, %p86
      %p88 = scmp.ne.s32.totalorder %s76, %s77
      %p89 = scmp.eq.s32.totalorder %s46, 1
      %p90 = por %p88, %p89
      %p92 = scmp.ne.s32.totalorder %s77, %s91
      %p93 = scmp.eq.s32.totalorder %s46, 0
      %p94 = por %p92, %p93
      %s96 = sadd.s32 %s95, 1
      %p99 = scmp.eq.s32.totalorder %s40, 1
      %p100 = scmp.ne.s32.totalorder %s95, %s97
      %p101 = scmp.eq.s32.totalorder %s40, 0
      %p102 = por %p100, %p101
      %p103 = scmp.ne.s32.totalorder %s95, %s97
      %p104 = scmp.eq.s32.totalorder %s45, 1
      %p105 = por %p103, %p104
      %p106 = scmp.ne.s32.totalorder %s97, %s98
      %p107 = scmp.eq.s32.totalorder %s45, 0
      %p108 = por %p106, %p107
      %p109 = scmp.ne.s32.totalorder %s97, %s98
      %p110 = scmp.eq.s32.totalorder %s46, 1
      %p111 = por %p109, %p110
      %p113 = scmp.ne.s32.totalorder %s98, %s112
      %p114 = scmp.eq.s32.totalorder %s46, 0
      %p115 = por %p113, %p114
      %s117 = sadd.s32 %s116, 1
      %p120 = scmp.eq.s32.totalorder %s40, 1
      %p121 = scmp.ne.s32.totalorder %s116, %s118
      %p122 = scmp.eq.s32.totalorder %s40, 0
      %p123 = por %p121, %p122
      %p124 = scmp.ne.s32.totalorder %s116, %s118
      %p125 = scmp.eq.s32.totalorder %s45, 1
      %p126 = por %p124, %p125
      %p127 = scmp.ne.s32.totalorder %s118, %s119
      %p128 = scmp.eq.s32.totalorder %s45, 0
      %p129 = por %p127, %p128
      %p130 = scmp.ne.s32.totalorder %s118, %s119
      %p131 = scmp.eq.s32.totalorder %s46, 1
      %p132 = por %p130, %p131
      %p134 = scmp.ne.s32.totalorder %s119, %s133
      %p135 = scmp.eq.s32.totalorder %s46, 0
      %p136 = por %p134, %p135
      %s138 = sadd.s32 %s137, 1
      %p141 = scmp.eq.s32.totalorder %s40, 1
      %p142 = scmp.ne.s32.totalorder %s137, %s139
      %p143 = scmp.eq.s32.totalorder %s40, 0
      %p144 = por %p142, %p143
      %p145 = scmp.ne.s32.totalorder %s137, %s139
      %p146 = scmp.eq.s32.totalorder %s45, 1
      %p147 = por %p145, %p146
      %p148 = scmp.ne.s32.totalorder %s139, %s140
      %p149 = scmp.eq.s32.totalorder %s45, 0
      %p150 = por %p148, %p149
      %p151 = scmp.ne.s32.totalorder %s139, %s140
      %p152 = scmp.eq.s32.totalorder %s46, 1
      %p153 = por %p151, %p152
      %p155 = scmp.ne.s32.totalorder %s140, %s154
      %p156 = scmp.eq.s32.totalorder %s46, 0
      %p157 = por %p155, %p156
      %s159 = sadd.s32 %s158, 1
      %p162 = scmp.eq.s32.totalorder %s40, 1
      %p163 = scmp.ne.s32.totalorder %s158, %s160
      %p164 = scmp.eq.s32.totalorder %s40, 0
      %p165 = por %p163, %p164
      %p166 = scmp.ne.s32.totalorder %s158, %s160
      %p167 = scmp.eq.s32.totalorder %s45, 1
      %p168 = por %p166, %p167
      %p169 = scmp.ne.s32.totalorder %s160, %s161
      %p170 = scmp.eq.s32.totalorder %s45, 0
      %p171 = por %p169, %p170
      %p172 = scmp.ne.s32.totalorder %s160, %s161
      %p173 = scmp.eq.s32.totalorder %s46, 1
      %p174 = por %p172, %p173
      %p176 = scmp.ne.s32.totalorder %s161, %s175
      %p177 = scmp.eq.s32.totalorder %s46, 0
      %p178 = por %p176, %p177
      %s180 = sadd.s32 %s179, 1
      %p183 = scmp.eq.s32.totalorder %s40, 1
      %p184 = scmp.ne.s32.totalorder %s179, %s181
      %p185 = scmp.eq.s32.totalorder %s40, 0
      %p186 = por %p184, %p185
      %p187 = scmp.ne.s32.totalorder %s179, %s181
      %p188 = scmp.eq.s32.totalorder %s45, 1
      %p189 = por %p187, %p188
      %p190 = scmp.ne.s32.totalorder %s181, %s182
      %p191 = scmp.eq.s32.totalorder %s45, 0
      %p192 = por %p190, %p191
      %p193 = scmp.ne.s32.totalorder %s181, %s182
      %p194 = scmp.eq.s32.totalorder %s46, 1
      %p195 = por %p193, %p194
      %p197 = scmp.ne.s32.totalorder %s182, %s196
      %p198 = scmp.eq.s32.totalorder %s46, 0
      %p199 = por %p197, %p198
      %s201 = sadd.s32 %s200, 1
      %p204 = scmp.eq.s32.totalorder %s40, 1
      %p205 = scmp.ne.s32.totalorder %s200, %s202
      %p206 = scmp.eq.s32.totalorder %s40, 0
      %p207 = por %p205, %p206
      %p208 = scmp.ne.s32.totalorder %s200, %s202
      %p209 = scmp.eq.s32.totalorder %s45, 1
      %p210 = por %p208, %p209
      %p211 = scmp.ne.s32.totalorder %s202, %s203
      %p212 = scmp.eq.s32.totalorder %s45, 0
      %p213 = por %p211, %p212
      %p214 = scmp.ne.s32.totalorder %s202, %s203
      %p215 = scmp.eq.s32.totalorder %s46, 1
      %p216 = por %p214, %p215
      %p218 = scmp.ne.s32.totalorder %s203, %s217
      %p219 = scmp.eq.s32.totalorder %s46, 0
      %p220 = por %p218, %p219
      %s222 = sadd.s32 %s221, 1
      %p225 = scmp.eq.s32.totalorder %s40, 1
      %p226 = scmp.ne.s32.totalorder %s221, %s223
      %p227 = scmp.eq.s32.totalorder %s40, 0
      %p228 = por %p226, %p227
      %p229 = scmp.ne.s32.totalorder %s221, %s223
      %p230 = scmp.eq.s32.totalorder %s45, 1
      %p231 = por %p229, %p230
      %p232 = scmp.ne.s32.totalorder %s223, %s224
      %p233 = scmp.eq.s32.totalorder %s45, 0
      %p234 = por %p232, %p233
      %p235 = scmp.ne.s32.totalorder %s223, %s224
      %p236 = scmp.eq.s32.totalorder %s46, 1
      %p237 = por %p235, %p236
      %p239 = scmp.ne.s32.totalorder %s224, %s238
      %p240 = scmp.eq.s32.totalorder %s46, 0
      %p241 = por %p239, %p240
      %s243 = sadd.s32 %s242, 1
      %p246 = scmp.eq.s32.totalorder %s40, 1
      %p247 = scmp.ne.s32.totalorder %s242, %s244
      %p248 = scmp.eq.s32.totalorder %s40, 0
      %p249 = por %p247, %p248
      %p250 = scmp.ne.s32.totalorder %s242, %s244
      %p251 = scmp.eq.s32.totalorder %s45, 1
      %p252 = por %p250, %p251
      %p253 = scmp.ne.s32.totalorder %s244, %s245
      %p254 = scmp.eq.s32.totalorder %s45, 0
      %p255 = por %p253, %p254
      %p256 = scmp.ne.s32.totalorder %s244, %s245
      %p257 = scmp.eq.s32.totalorder %s46, 1
      %p258 = por %p256, %p257
      %p260 = scmp.ne.s32.totalorder %s245, %s259
      %p261 = scmp.eq.s32.totalorder %s46, 0
      %p262 = por %p260, %p261
      %s264 = sadd.s32 %s263, 1
      %p267 = scmp.eq.s32.totalorder %s40, 1
      %p268 = scmp.ne.s32.totalorder %s263, %s265
      %p269 = scmp.eq.s32.totalorder %s40, 0
      %p270 = por %p268, %p269
      %p271 = scmp.ne.s32.totalorder %s263, %s265
      %p272 = scmp.eq.s32.totalorder %s45, 1
      %p273 = por %p271, %p272
      %p274 = scmp.ne.s32.totalorder %s265, %s266
      %p275 = scmp.eq.s32.totalorder %s45, 0
      %p276 = por %p274, %p275
      %p277 = scmp.ne.s32.totalorder %s265, %s266
      %p278 = scmp.eq.s32.totalorder %s46, 1
      %p279 = por %p277, %p278
      %p281 = scmp.ne.s32.totalorder %s266, %s280
      %p282 = scmp.eq.s32.totalorder %s46, 0
      %p283 = por %p281, %p282
      %s285 = sadd.s32 %s284, 1
      %p288 = scmp.eq.s32.totalorder %s40, 1
      %p289 = scmp.ne.s32.totalorder %s284, %s286
      %p290 = scmp.eq.s32.totalorder %s40, 0
      %p291 = por %p289, %p290
      %p292 = scmp.ne.s32.totalorder %s284, %s286
      %p293 = scmp.eq.s32.totalorder %s45, 1
      %p294 = por %p292, %p293
      %p295 = scmp.ne.s32.totalorder %s286, %s287
      %p296 = scmp.eq.s32.totalorder %s45, 0
      %p297 = por %p295, %p296
      %p298 = scmp.ne.s32.totalorder %s286, %s287
      %p299 = scmp.eq.s32.totalorder %s46, 1
      %p300 = por %p298, %p299
      %p302 = scmp.ne.s32.totalorder %s287, %s301
      %p303 = scmp.eq.s32.totalorder %s46, 0
      %p304 = por %p302, %p303
      %s306 = sadd.s32 %s305, 1
      %p309 = scmp.eq.s32.totalorder %s40, 1
      %p310 = scmp.ne.s32.totalorder %s305, %s307
      %p311 = scmp.eq.s32.totalorder %s40, 0
      %p312 = por %p310, %p311
      %p313 = scmp.ne.s32.totalorder %s305, %s307
      %p314 = scmp.eq.s32.totalorder %s45, 1
      %p315 = por %p313, %p314
      %p316 = scmp.ne.s32.totalorder %s307, %s308
      %p317 = scmp.eq.s32.totalorder %s45, 0
      %p318 = por %p316, %p317
      %p319 = scmp.ne.s32.totalorder %s307, %s308
      %p320 = scmp.eq.s32.totalorder %s46, 1
      %p321 = por %p319, %p320
      %p323 = scmp.ne.s32.totalorder %s308, %s322
      %p324 = scmp.eq.s32.totalorder %s46, 0
      %p325 = por %p323, %p324
      %s327 = sadd.s32 %s326, 1
      %p330 = scmp.eq.s32.totalorder %s40, 1
      %p331 = scmp.ne.s32.totalorder %s326, %s328
      %p332 = scmp.eq.s32.totalorder %s40, 0
      %p333 = por %p331, %p332
      %p334 = scmp.ne.s32.totalorder %s326, %s328
      %p335 = scmp.eq.s32.totalorder %s45, 1
      %p336 = por %p334, %p335
      %p337 = scmp.ne.s32.totalorder %s328, %s329
      %p338 = scmp.eq.s32.totalorder %s45, 0
      %p339 = por %p337, %p338
      %p340 = scmp.ne.s32.totalorder %s328, %s329
      %p341 = scmp.eq.s32.totalorder %s46, 1
      %p342 = por %p340, %p341
      %p344 = scmp.ne.s32.totalorder %s329, %s343
      %p345 = scmp.eq.s32.totalorder %s46, 0
      %p346 = por %p344, %p345
      %s347 = ssub.s32 %s40, %s47
      %p348 = scmp.eq.s32.totalorder %s347, 0
      %s350 = sadd.s32 %s349, 1
      %s351 = scalar_select %p348, %s349, %s350
      %p354 = pneg %p348
      %p355 = scmp.eq.s32.totalorder %s40, 1
      %p356 = por %p354, %p355
      %p357 = scmp.ne.s32.totalorder %s349, %s352
      %p358 = scmp.eq.s32.totalorder %s40, 0
      %p359 = por %p357, %p358
      %p360 = scmp.ne.s32.totalorder %s349, %s352
      %p361 = scmp.eq.s32.totalorder %s45, 1
      %p362 = por %p360, %p361
      %p363 = scmp.ne.s32.totalorder %s352, %s353
      %p364 = scmp.eq.s32.totalorder %s45, 0
      %p365 = por %p363, %p364
      %p366 = scmp.ne.s32.totalorder %s352, %s353
      %p367 = scmp.eq.s32.totalorder %s46, 1
      %p368 = por %p366, %p367
      %p370 = scmp.ne.s32.totalorder %s353, %s369
      %p371 = scmp.eq.s32.totalorder %s46, 0
      %p372 = por %p370, %p371
      %p373 = scmp.le.s32.totalorder 1, %s40
      %p374 = scmp.lt.s32.totalorder %s40, 3
      %p375 = pnand %p373, %p374
      %p376 = pneg %p375
      // Predicated region
      $region9: #{tpu_custom_call.1} parent=5 // pred_check
        _
      $region10: #{tpu_custom_call.1} parent=5 // pred_check_branch
        %378 = sbr.rel (%p375) target = $region12
      $region11: #{tpu_custom_call.1} parent=5 // pred_region
        %s379 = ssub.s32 %s40, 1
        // Predicated region
        $region13: #{tpu_custom_call.1} parent=11 // pred_check
          %p380 = pneg %p87
        $region14: #{tpu_custom_call.1} parent=11 // pred_check_branch
          %382 = sbr.rel (%p380) target = $region16
        $region15: #{tpu_custom_call.1} parent=11 // pred_region
          _
        $region16: #{tpu_custom_call.1} parent=11 // pred_fallthru
          _
        // Predicated region
        $region17: #{tpu_custom_call.1} parent=11 // pred_check
          %p383 = pneg %p108
        $region18: #{tpu_custom_call.1} parent=11 // pred_check_branch
          %385 = sbr.rel (%p383) target = $region20
        $region19: #{tpu_custom_call.1} parent=11 // pred_region
          _
        $region20: #{tpu_custom_call.1} parent=11 // pred_fallthru
          _
        // Predicated region
        $region21: #{tpu_custom_call.1} parent=11 // pred_check
          %p386 = pneg %p129
        $region22: #{tpu_custom_call.1} parent=11 // pred_check_branch
          %388 = sbr.rel (%p386) target = $region24
        $region23: #{tpu_custom_call.1} parent=11 // pred_region
          _
        $region24: #{tpu_custom_call.1} parent=11 // pred_fallthru
          _
        // Predicated region
        $region25: #{tpu_custom_call.1} parent=11 // pred_check
          %p389 = pneg %p150
        $region26: #{tpu_custom_call.1} parent=11 // pred_check_branch
          %391 = sbr.rel (%p389) target = $region28
        $region27: #{tpu_custom_call.1} parent=11 // pred_region
          _
        $region28: #{tpu_custom_call.1} parent=11 // pred_fallthru
          _
        // Predicated region
        $region29: #{tpu_custom_call.1} parent=11 // pred_check
          %p392 = pneg %p171
        $region30: #{tpu_custom_call.1} parent=11 // pred_check_branch
          %394 = sbr.rel (%p392) target = $region32
        $region31: #{tpu_custom_call.1} parent=11 // pred_region
          _
        $region32: #{tpu_custom_call.1} parent=11 // pred_fallthru
          _
        // Predicated region
        $region33: #{tpu_custom_call.1} parent=11 // pred_check
          %p395 = pneg %p192
        $region34: #{tpu_custom_call.1} parent=11 // pred_check_branch
          %397 = sbr.rel (%p395) target = $region36
        $region35: #{tpu_custom_call.1} parent=11 // pred_region
          _
        $region36: #{tpu_custom_call.1} parent=11 // pred_fallthru
          _
        // Predicated region
        $region37: #{tpu_custom_call.1} parent=11 // pred_check
          %p398 = pneg %p213
        $region38: #{tpu_custom_call.1} parent=11 // pred_check_branch
          %400 = sbr.rel (%p398) target = $region40
        $region39: #{tpu_custom_call.1} parent=11 // pred_region
          _
        $region40: #{tpu_custom_call.1} parent=11 // pred_fallthru
          _
        // Predicated region
        $region41: #{tpu_custom_call.1} parent=11 // pred_check
          %p401 = pneg %p234
        $region42: #{tpu_custom_call.1} parent=11 // pred_check_branch
          %403 = sbr.rel (%p401) target = $region44
        $region43: #{tpu_custom_call.1} parent=11 // pred_region
          _
        $region44: #{tpu_custom_call.1} parent=11 // pred_fallthru
          _
        // Predicated region
        $region45: #{tpu_custom_call.1} parent=11 // pred_check
          %p404 = pneg %p255
        $region46: #{tpu_custom_call.1} parent=11 // pred_check_branch
          %406 = sbr.rel (%p404) target = $region48
        $region47: #{tpu_custom_call.1} parent=11 // pred_region
          _
        $region48: #{tpu_custom_call.1} parent=11 // pred_fallthru
          _
        // Predicated region
        $region49: #{tpu_custom_call.1} parent=11 // pred_check
          %p407 = pneg %p276
        $region50: #{tpu_custom_call.1} parent=11 // pred_check_branch
          %409 = sbr.rel (%p407) target = $region52
        $region51: #{tpu_custom_call.1} parent=11 // pred_region
          _
        $region52: #{tpu_custom_call.1} parent=11 // pred_fallthru
          _
        // Predicated region
        $region53: #{tpu_custom_call.1} parent=11 // pred_check
          %p410 = pneg %p297
        $region54: #{tpu_custom_call.1} parent=11 // pred_check_branch
          %412 = sbr.rel (%p410) target = $region56
        $region55: #{tpu_custom_call.1} parent=11 // pred_region
          _
        $region56: #{tpu_custom_call.1} parent=11 // pred_fallthru
          _
        // Predicated region
        $region57: #{tpu_custom_call.1} parent=11 // pred_check
          %p413 = pneg %p318
        $region58: #{tpu_custom_call.1} parent=11 // pred_check_branch
          %415 = sbr.rel (%p413) target = $region60
        $region59: #{tpu_custom_call.1} parent=11 // pred_region
          _
        $region60: #{tpu_custom_call.1} parent=11 // pred_fallthru
          _
        // Predicated region
        $region61: #{tpu_custom_call.1} parent=11 // pred_check
          %p416 = pneg %p339
        $region62: #{tpu_custom_call.1} parent=11 // pred_check_branch
          %418 = sbr.rel (%p416) target = $region64
        $region63: #{tpu_custom_call.1} parent=11 // pred_region
          _
        $region64: #{tpu_custom_call.1} parent=11 // pred_fallthru
          _
      $region12: #{tpu_custom_call.1} parent=5 // pred_fallthru
        _
      %p419 = scmp.lt.s32.totalorder %s40, 2
      // Predicated region
      $region65: #{tpu_custom_call.1} parent=5 // pred_check
        %p420 = pneg %p419
      $region66: #{tpu_custom_call.1} parent=5 // pred_check_branch
        %422 = sbr.rel (%p420) target = $region68
      $region67: #{tpu_custom_call.1} parent=5 // pred_region
        // Predicated region
        $region69: #{tpu_custom_call.1} parent=67 // pred_check
          %p423 = pneg %p60
        $region70: #{tpu_custom_call.1} parent=67 // pred_check_branch
          %425 = sbr.rel (%p423) target = $region72
        $region71: #{tpu_custom_call.1} parent=67 // pred_region
          %p426 = scmp.lt.s32.totalorder %s40, 1
          %s427 = scalar_select %p426, %s40, 1
          %s428 = smul.addr %s427, 8
          %s429 = scalar_lea.vmem %s3, %s428
        $region72: #{tpu_custom_call.1} parent=67 // pred_fallthru
          _
      $region68: #{tpu_custom_call.1} parent=5 // pred_fallthru
        _
      %p430 = scmp.le.s32.totalorder 1, %s40
      %p431 = scmp.lt.s32.totalorder %s40, 3
      %p432 = pnand %p430, %p431
      %p433 = pneg %p432
      // Predicated region
      $region73: #{tpu_custom_call.1} parent=5 // pred_check
        _
      $region74: #{tpu_custom_call.1} parent=5 // pred_check_branch
        %435 = sbr.rel (%p432) target = $region76
      $region75: #{tpu_custom_call.1} parent=5 // pred_region
        %s436 = ssub.s32 %s40, 1
        %p437 = scmp.lt.s32.totalorder %s45, 1
        %s438 = scalar_select %p437, %s45, 1
        %s439 = smul.addr %s438, 8
        %s440 = scalar_lea.vmem %s3, %s439
        %p441 = pneg %p66
        %p442 = pneg %p63
        %p443 = pneg %p87
        %p444 = pneg %p84
        %p445 = pneg %p108
        %p446 = pneg %p105
        %p447 = pneg %p129
        %p448 = pneg %p126
        %p449 = pneg %p150
        %p450 = pneg %p147
        %p451 = pneg %p171
        %p452 = pneg %p168
        %p453 = pneg %p192
        %p454 = pneg %p189
        %p455 = pneg %p213
        %p456 = pneg %p210
        %p457 = pneg %p234
        %p458 = pneg %p231
        %p459 = pneg %p255
        %p460 = pneg %p252
        %p461 = pneg %p276
        %p462 = pneg %p273
        %p463 = pneg %p297
        %p464 = pneg %p294
        %p465 = pneg %p318
        %p466 = pneg %p315
        %p467 = pneg %p339
        %p468 = pneg %p336
        %p469 = pneg %p365
        %p470 = pneg %p362
        %s471 = sand.u32 %s352, 1
        %s472 = scalar_lea.sflag [#allocation8], %s471
        %s473 = sand.u32 %s352, 1
        %s474 = smul.addr %s473, 8
        %s475 = scalar_lea.vmem [#allocation7], %s474
        %p476 = scmp.lt.s32.totalorder %s45, 1
        %s477 = scalar_select %p476, %s45, 1
        %s478 = smul.addr %s477, 8
        %s479 = scalar_lea.vmem %s3, %s478
        %s481 = sld [smem:[#allocation4 + %s45]]
        %s482 = sld [smem:[#allocation5 + %s45]]
        %v483 = vlaneseq
        %v484 = vshrl.u32 %v483, 7
        %v485 = vlaneseq
        %v486 = vand.u32 %v485, 127
        %s487 = ssub.s32 8, %s481
        %v488 = vstv %s487
        %vm489 = vcmp.lt.s32.totalorder %v484, %v488
        %vm490 = vcmp.lt.s32.totalorder %v486, %v488
        %vm491 = vmand %vm489, %vm490
        %v492 = vsel %vm491, 0.0, -1e+09
        %s493 = ssub.s32 8, %s482
        %v494 = vstv %s493
        %vm495 = vcmp.lt.s32.totalorder %v484, %v494
        %vm496 = vcmp.lt.s32.totalorder %v486, %v494
        %vm497 = vmand %vm495, %vm496
        %vm498 = vcmp.le.s32.totalorder %v486, %v484
        %vm499 = vmand %vm497, %vm498
        %v500 = vsel %vm499, 0.0, -1e+09
        %vm501 = vmand %vm495, %vm490
        %v502 = vsel %vm501, 0.0, -1e+09
        %v503 = vld [vmem:[%s479] sm:$0xff]
        %v504 = vpack.c.bf16 %v503, %v503
        %v505 = vld [vmem:[%s4] sm:$0xf]
        %v506 = vld [vmem:[%s4 + $0x4] sm:$0xf]
        %v507 = vld [vmem:[%s4 + $0x8] sm:$0xf]
        %v508 = vld [vmem:[%s4 + $0xc] sm:$0xf]
        %v509 = vld [vmem:[%s4 + $0x10] sm:$0xf]
        %v510 = vld [vmem:[%s4 + $0x14] sm:$0xf]
        %v511 = vld [vmem:[%s4 + $0x18] sm:$0xf]
        %v512 = vld [vmem:[%s4 + $0x1c] sm:$0xf]
        %v513 = vld [vmem:[%s5] sm:$0x1]
        %v515 = vlaneseq
        %v516 = vshrl.u32 %v515, 7
        %v517 = vsub.s32 0, %v516
        %v518 = vrot.slane %v513, %v517
        %v528 = vunpack.c.l.b16 %v505
        %v529 = vunpack.c.l.b16 %v506
        %v530 = vunpack.c.l.b16 %v507
        %v531 = vunpack.c.l.b16 %v508
        %v532 = vunpack.c.l.b16 %v509
        %v533 = vunpack.c.l.b16 %v510
        %v534 = vunpack.c.l.b16 %v511
        %v535 = vunpack.c.l.b16 %v512
        %v536 = vpack.c.b16 %v529, %v528
        %v537 = vpack.c.b16 %v531, %v530
        %v538 = vpack.c.b16 %v533, %v532
        %v539 = vpack.c.b16 %v535, %v534
        %vm544 = vcmask 523264
        %v546 = vsel %vm544, %v504, 0
        %548 = vmatprep.subr.bf16.mxu0 0
        %549 = vmatpush1.bf16.msra.mxu0 %v536
        %550 = vmatprep.subr.bf16.mxu0 0
        %551 = vmatpush1.bf16.msra.mxu0 %v537
        %552 = vmatprep.subr.bf16.mxu0 0
        %553 = vmatpush1.bf16.msra.mxu0 %v538
        %554 = vmatprep.subr.bf16.mxu0 0
        %555 = vmatpush1.bf16.msra.mxu0 %v539
        %556 = vmatprep.subr.bf16.mxu0 0
        %557 = vmatpush1.bf16.msra.mxu0 0
        %558 = vmatprep.subr.bf16.mxu0 0
        %559 = vmatpush1.bf16.msra.mxu0 0
        %560 = vmatprep.subr.bf16.mxu0 0
        %561 = vmatpush1.bf16.msra.mxu0 0
        %562 = vmatprep.subr.bf16.mxu0 0
        %563 = vmatpush1.bf16.msra.mxu0 0
        %564 = vmatprep.subr.bf16.mxu0 0
        %565 = vmatpush1.bf16.msra.mxu0 0
        %566 = vmatprep.subr.bf16.mxu0 0
        %567 = vmatpush1.bf16.msra.mxu0 0
        %568 = vmatprep.subr.bf16.mxu0 0
        %569 = vmatpush1.bf16.msra.mxu0 0
        %570 = vmatprep.subr.bf16.mxu0 0
        %571 = vmatpush1.bf16.msra.mxu0 0
        %572 = vmatprep.subr.bf16.mxu0 0
        %573 = vmatpush1.bf16.msra.mxu0 0
        %574 = vmatprep.subr.bf16.mxu0 0
        %575 = vmatpush1.bf16.msra.mxu0 0
        %576 = vmatprep.subr.bf16.mxu0 0
        %577 = vmatpush1.bf16.msra.mxu0 0
        %578 = vmatprep.subr.bf16.mxu0 0
        %579 = vmatpush1.bf16.msra.mxu0 0
        %580 = vmatprep.mubr.bf16.mxu0 0
        %581 = vmatmul.mubr.bf16.gmra.mrb[0].mxu0 %v546
        %v582 = vpop.f32.mrb[0].mxu0
        %v583 = vadd.f32 %v518, %v582
        %v584 = vpop.f32.mrb[0].mxu0
        %v585 = vpop.f32.mrb[0].mxu0
        %v586 = vpop.f32.mrb[0].mxu0
        %587 = vdwg.mxu0
        %v588 = vpack.c.bf16 %v583, %v583
        %s589 = scalar_lea.vmem %s4, 128
        %v590 = vld [vmem:[%s589] sm:$0xf]
        %v591 = vld [vmem:[%s589 + $0x4] sm:$0xf]
        %v592 = vld [vmem:[%s589 + $0x8] sm:$0xf]
        %v593 = vld [vmem:[%s589 + $0xc] sm:$0xf]
        %v594 = vld [vmem:[%s589 + $0x10] sm:$0xf]
        %v595 = vld [vmem:[%s589 + $0x14] sm:$0xf]
        %v596 = vld [vmem:[%s589 + $0x18] sm:$0xf]
        %v597 = vld [vmem:[%s589 + $0x1c] sm:$0xf]
        %s598 = scalar_lea.vmem %s5, 4
        %v599 = vld [vmem:[%s598] sm:$0x1]
        %v601 = vlaneseq
        %v602 = vshrl.u32 %v601, 7
        %v603 = vsub.s32 0, %v602
        %v604 = vrot.slane %v599, %v603
        %v614 = vunpack.c.l.b16 %v590
        %v615 = vunpack.c.l.b16 %v591
        %v616 = vunpack.c.l.b16 %v592
        %v617 = vunpack.c.l.b16 %v593
        %v618 = vunpack.c.l.b16 %v594
        %v619 = vunpack.c.l.b16 %v595
        %v620 = vunpack.c.l.b16 %v596
        %v621 = vunpack.c.l.b16 %v597
        %v622 = vpack.c.b16 %v615, %v614
        %v623 = vpack.c.b16 %v617, %v616
        %v624 = vpack.c.b16 %v619, %v618
        %v625 = vpack.c.b16 %v621, %v620
        %630 = vmatprep.subr.bf16.mxu0 0
        %631 = vmatpush1.bf16.msra.mxu0 %v622
        %632 = vmatprep.subr.bf16.mxu0 0
        %633 = vmatpush1.bf16.msra.mxu0 %v623
        %634 = vmatprep.subr.bf16.mxu0 0
        %635 = vmatpush1.bf16.msra.mxu0 %v624
        %636 = vmatprep.subr.bf16.mxu0 0
        %637 = vmatpush1.bf16.msra.mxu0 %v625
        %638 = vmatprep.subr.bf16.mxu0 0
        %639 = vmatpush1.bf16.msra.mxu0 0
        %640 = vmatprep.subr.bf16.mxu0 0
        %641 = vmatpush1.bf16.msra.mxu0 0
        %642 = vmatprep.subr.bf16.mxu0 0
        %643 = vmatpush1.bf16.msra.mxu0 0
        %644 = vmatprep.subr.bf16.mxu0 0
        %645 = vmatpush1.bf16.msra.mxu0 0
        %646 = vmatprep.subr.bf16.mxu0 0
        %647 = vmatpush1.bf16.msra.mxu0 0
        %648 = vmatprep.subr.bf16.mxu0 0
        %649 = vmatpush1.bf16.msra.mxu0 0
        %650 = vmatprep.subr.bf16.mxu0 0
        %651 = vmatpush1.bf16.msra.mxu0 0
        %652 = vmatprep.subr.bf16.mxu0 0
        %653 = vmatpush1.bf16.msra.mxu0 0
        %654 = vmatprep.subr.bf16.mxu0 0
        %655 = vmatpush1.bf16.msra.mxu0 0
        %656 = vmatprep.subr.bf16.mxu0 0
        %657 = vmatpush1.bf16.msra.mxu0 0
        %658 = vmatprep.subr.bf16.mxu0 0
        %659 = vmatpush1.bf16.msra.mxu0 0
        %660 = vmatprep.subr.bf16.mxu0 0
        %661 = vmatpush1.bf16.msra.mxu0 0
        %662 = vmatprep.mubr.bf16.mxu0 0
        %663 = vmatmul.mubr.bf16.gmra.mrb[0].mxu0 %v546
        %v664 = vpop.f32.mrb[0].mxu0
        %v665 = vadd.f32 %v604, %v664
        %v666 = vpop.f32.mrb[0].mxu0
        %v667 = vpop.f32.mrb[0].mxu0
        %v668 = vpop.f32.mrb[0].mxu0
        %669 = vdwg.mxu0
        %v670 = vpack.c.bf16 %v665, %v665
        %s671 = scalar_lea.vmem %s4, 256
        %v672 = vld [vmem:[%s671] sm:$0xf]
        %v673 = vld [vmem:[%s671 + $0x4] sm:$0xf]
        %v674 = vld [vmem:[%s671 + $0x8] sm:$0xf]
        %v675 = vld [vmem:[%s671 + $0xc] sm:$0xf]
        %v676 = vld [vmem:[%s671 + $0x10] sm:$0xf]
        %v677 = vld [vmem:[%s671 + $0x14] sm:$0xf]
        %v678 = vld [vmem:[%s671 + $0x18] sm:$0xf]
        %v679 = vld [vmem:[%s671 + $0x1c] sm:$0xf]
        %s680 = scalar_lea.vmem %s5, 8
        %v681 = vld [vmem:[%s680] sm:$0x1]
        %v683 = vlaneseq
        %v684 = vshrl.u32 %v683, 7
        %v685 = vsub.s32 0, %v684
        %v686 = vrot.slane %v681, %v685
        %v696 = vunpack.c.l.b16 %v672
        %v697 = vunpack.c.l.b16 %v673
        %v698 = vunpack.c.l.b16 %v674
        %v699 = vunpack.c.l.b16 %v675
        %v700 = vunpack.c.l.b16 %v676
        %v701 = vunpack.c.l.b16 %v677
        %v702 = vunpack.c.l.b16 %v678
        %v703 = vunpack.c.l.b16 %v679
        %v704 = vpack.c.b16 %v697, %v696
        %v705 = vpack.c.b16 %v699, %v698
        %v706 = vpack.c.b16 %v701, %v700
        %v707 = vpack.c.b16 %v703, %v702
        %712 = vmatprep.subr.bf16.mxu0 0
        %713 = vmatpush1.bf16.msra.mxu0 %v704
        %714 = vmatprep.subr.bf16.mxu0 0
        %715 = vmatpush1.bf16.msra.mxu0 %v705
        %716 = vmatprep.subr.bf16.mxu0 0
        %717 = vmatpush1.bf16.msra.mxu0 %v706
        %718 = vmatprep.subr.bf16.mxu0 0
        %719 = vmatpush1.bf16.msra.mxu0 %v707
        %720 = vmatprep.subr.bf16.mxu0 0
        %721 = vmatpush1.bf16.msra.mxu0 0
        %722 = vmatprep.subr.bf16.mxu0 0
        %723 = vmatpush1.bf16.msra.mxu0 0
        %724 = vmatprep.subr.bf16.mxu0 0
        %725 = vmatpush1.bf16.msra.mxu0 0
        %726 = vmatprep.subr.bf16.mxu0 0
        %727 = vmatpush1.bf16.msra.mxu0 0
        %728 = vmatprep.subr.bf16.mxu0 0
        %729 = vmatpush1.bf16.msra.mxu0 0
        %730 = vmatprep.subr.bf16.mxu0 0
        %731 = vmatpush1.bf16.msra.mxu0 0
        %732 = vmatprep.subr.bf16.mxu0 0
        %733 = vmatpush1.bf16.msra.mxu0 0
        %734 = vmatprep.subr.bf16.mxu0 0
        %735 = vmatpush1.bf16.msra.mxu0 0
        %736 = vmatprep.subr.bf16.mxu0 0
        %737 = vmatpush1.bf16.msra.mxu0 0
        %738 = vmatprep.subr.bf16.mxu0 0
        %739 = vmatpush1.bf16.msra.mxu0 0
        %740 = vmatprep.subr.bf16.mxu0 0
        %741 = vmatpush1.bf16.msra.mxu0 0
        %742 = vmatprep.subr.bf16.mxu0 0
        %743 = vmatpush1.bf16.msra.mxu0 0
        %744 = vmatprep.mubr.bf16.mxu0 0
        %745 = vmatmul.mubr.bf16.gmra.mrb[0].mxu0 %v546
        %v746 = vpop.f32.mrb[0].mxu0
        %v747 = vadd.f32 %v686, %v746
        %v748 = vpop.f32.mrb[0].mxu0
        %v749 = vpop.f32.mrb[0].mxu0
        %v750 = vpop.f32.mrb[0].mxu0
        %751 = vdwg.mxu0
        %v752 = vpack.c.bf16 %v747, %v747
        %vm753 = vcmask 130048
        %v755 = vsel %vm753, %v588, 0
        %v758 = vsel %vm753, %v670, 0
        %760 = vmatprep.subr.bf16.mxu0 0
        %761 = vmatpush1.bf16.xpose.msra.mxu0 %v758
        %762 = vmatprep.subr.bf16.mxu0 0
        %763 = vmatpush1.bf16.xpose.msra.mxu0 0
        %764 = vmatprep.subr.bf16.mxu0 0
        %765 = vmatpush1.bf16.xpose.msra.mxu0 0
        %766 = vmatprep.subr.bf16.mxu0 0
        %767 = vmatpush1.bf16.xpose.msra.mxu0 0
        %768 = vmatprep.subr.bf16.mxu0 0
        %769 = vmatpush1.bf16.xpose.msra.mxu0 0
        %770 = vmatprep.subr.bf16.mxu0 0
        %771 = vmatpush1.bf16.xpose.msra.mxu0 0
        %772 = vmatprep.subr.bf16.mxu0 0
        %773 = vmatpush1.bf16.xpose.msra.mxu0 0
        %774 = vmatprep.subr.bf16.mxu0 0
        %775 = vmatpush1.bf16.xpose.msra.mxu0 0
        %776 = vmatprep.subr.bf16.mxu0 0
        %777 = vmatpush1.bf16.xpose.msra.mxu0 0
        %778 = vmatprep.subr.bf16.mxu0 0
        %779 = vmatpush1.bf16.xpose.msra.mxu0 0
        %780 = vmatprep.subr.bf16.mxu0 0
        %781 = vmatpush1.bf16.xpose.msra.mxu0 0
        %782 = vmatprep.subr.bf16.mxu0 0
        %783 = vmatpush1.bf16.xpose.msra.mxu0 0
        %784 = vmatprep.subr.bf16.mxu0 0
        %785 = vmatpush1.bf16.xpose.msra.mxu0 0
        %786 = vmatprep.subr.bf16.mxu0 0
        %787 = vmatpush1.bf16.xpose.msra.mxu0 0
        %788 = vmatprep.subr.bf16.mxu0 0
        %789 = vmatpush1.bf16.xpose.msra.mxu0 0
        %790 = vmatprep.subr.bf16.mxu0 0
        %791 = vmatpush1.bf16.xpose.msra.mxu0 0
        %792 = vmatprep.mubr.bf16.mxu0 0
        %793 = vmatmul.mubr.bf16.gmra.mrb[0].mxu0 %v755
        %v794 = vpop.f32.mrb[0].mxu0
        %v795 = vadd.f32 0.0, %v794
        %v796 = vpop.f32.mrb[0].mxu0
        %v797 = vpop.f32.mrb[0].mxu0
        %v798 = vpop.f32.mrb[0].mxu0
        %799 = vdwg.mxu0
        %v800 = vmul.f32 %v795, 0.25
        %v801 = vadd.f32 %v800, %v492
        %vm802 = vcmask 64512
        %v803 = vsel %vm802, %v801, -inf
        %804 = vmax.xlane.f32.xlu0 %v803
        %v805 = vpop.xlane.xlu0 %804
        %v806 = vsub.f32 %v801, %v805
        %v807 = vmul.f32 %v806, 1.442695
        %v808 = vpow.pop %v807
        %v809 = vsel %vm802, %v808, 0.0
        %810 = vadd.xlane.f32.xlu0 %v809
        %v811 = vpop.xlane.xlu0 %810
        %v812 = vrcp.pop %v811
        %v813 = vmul.f32 %v808, %v812
        %v814 = vpack.c.bf16 %v813, %v813
        %v816 = vsel %vm802, %v814, 0
        %vm818 = vcmask 1043456
        %v820 = vsel %vm818, %v752, 0
        %822 = vmatprep.subr.bf16.mxu0 0
        %823 = vmatpush1.bf16.msra.mxu0 %v820
        %824 = vmatprep.subr.bf16.mxu0 0
        %825 = vmatpush1.bf16.msra.mxu0 0
        %826 = vmatprep.subr.bf16.mxu0 0
        %827 = vmatpush1.bf16.msra.mxu0 0
        %828 = vmatprep.subr.bf16.mxu0 0
        %829 = vmatpush1.bf16.msra.mxu0 0
        %830 = vmatprep.subr.bf16.mxu0 0
        %831 = vmatpush1.bf16.msra.mxu0 0
        %832 = vmatprep.subr.bf16.mxu0 0
        %833 = vmatpush1.bf16.msra.mxu0 0
        %834 = vmatprep.subr.bf16.mxu0 0
        %835 = vmatpush1.bf16.msra.mxu0 0
        %836 = vmatprep.subr.bf16.mxu0 0
        %837 = vmatpush1.bf16.msra.mxu0 0
        %838 = vmatprep.subr.bf16.mxu0 0
        %839 = vmatpush1.bf16.msra.mxu0 0
        %840 = vmatprep.subr.bf16.mxu0 0
        %841 = vmatpush1.bf16.msra.mxu0 0
        %842 = vmatprep.subr.bf16.mxu0 0
        %843 = vmatpush1.bf16.msra.mxu0 0
        %844 = vmatprep.subr.bf16.mxu0 0
        %845 = vmatpush1.bf16.msra.mxu0 0
        %846 = vmatprep.subr.bf16.mxu0 0
        %847 = vmatpush1.bf16.msra.mxu0 0
        %848 = vmatprep.subr.bf16.mxu0 0
        %849 = vmatpush1.bf16.msra.mxu0 0
        %850 = vmatprep.subr.bf16.mxu0 0
        %851 = vmatpush1.bf16.msra.mxu0 0
        %852 = vmatprep.subr.bf16.mxu0 0
        %853 = vmatpush1.bf16.msra.mxu0 0
        %854 = vmatprep.mubr.bf16.mxu0 0
        %855 = vmatmul.mubr.bf16.gmra.mrb[0].mxu0 %v816
        %v856 = vpop.f32.mrb[0].mxu0
        %v857 = vadd.f32 0.0, %v856
        %v858 = vpop.f32.mrb[0].mxu0
        %v859 = vpop.f32.mrb[0].mxu0
        %v860 = vpop.f32.mrb[0].mxu0
        %861 = vdwg.mxu0
        %v862 = vpack.c.bf16 %v857, %v857
        %v863 = vld [vmem:[%s6] sm:$0xf]
        %v864 = vld [vmem:[%s6 + $0x4] sm:$0xf]
        %s865 = scalar_lea.vmem %s4, 32
        %v866 = vld [vmem:[%s865] sm:$0xf]
        %v867 = vld [vmem:[%s865 + $0x4] sm:$0xf]
        %v868 = vld [vmem:[%s865 + $0x8] sm:$0xf]
        %v869 = vld [vmem:[%s865 + $0xc] sm:$0xf]
        %v870 = vld [vmem:[%s865 + $0x10] sm:$0xf]
        %v871 = vld [vmem:[%s865 + $0x14] sm:$0xf]
        %v872 = vld [vmem:[%s865 + $0x18] sm:$0xf]
        %v873 = vld [vmem:[%s865 + $0x1c] sm:$0xf]
        %s874 = scalar_lea.vmem %s5, 1
        %v875 = vld [vmem:[%s874] sm:$0x1]
        %v877 = vlaneseq
        %v878 = vshrl.u32 %v877, 7
        %v879 = vsub.s32 0, %v878
        %v880 = vrot.slane %v875, %v879
        %v890 = vunpack.c.l.b16 %v866
        %v891 = vunpack.c.l.b16 %v867
        %v892 = vunpack.c.l.b16 %v868
        %v893 = vunpack.c.l.b16 %v869
        %v894 = vunpack.c.l.b16 %v870
        %v895 = vunpack.c.l.b16 %v871
        %v896 = vunpack.c.l.b16 %v872
        %v897 = vunpack.c.l.b16 %v873
        %v898 = vpack.c.b16 %v891, %v890
        %v899 = vpack.c.b16 %v893, %v892
        %v900 = vpack.c.b16 %v895, %v894
        %v901 = vpack.c.b16 %v897, %v896
        %906 = vmatprep.subr.bf16.mxu0 0
        %907 = vmatpush1.bf16.msra.mxu0 %v898
        %908 = vmatprep.subr.bf16.mxu0 0
        %909 = vmatpush1.bf16.msra.mxu0 %v899
        %910 = vmatprep.subr.bf16.mxu0 0
        %911 = vmatpush1.bf16.msra.mxu0 %v900
        %912 = vmatprep.subr.bf16.mxu0 0
        %913 = vmatpush1.bf16.msra.mxu0 %v901
        %914 = vmatprep.subr.bf16.mxu0 0
        %915 = vmatpush1.bf16.msra.mxu0 0
        %916 = vmatprep.subr.bf16.mxu0 0
        %917 = vmatpush1.bf16.msra.mxu0 0
        %918 = vmatprep.subr.bf16.mxu0 0
        %919 = vmatpush1.bf16.msra.mxu0 0
        %920 = vmatprep.subr.bf16.mxu0 0
        %921 = vmatpush1.bf16.msra.mxu0 0
        %922 = vmatprep.subr.bf16.mxu0 0
        %923 = vmatpush1.bf16.msra.mxu0 0
        %924 = vmatprep.subr.bf16.mxu0 0
        %925 = vmatpush1.bf16.msra.mxu0 0
        %926 = vmatprep.subr.bf16.mxu0 0
        %927 = vmatpush1.bf16.msra.mxu0 0
        %928 = vmatprep.subr.bf16.mxu0 0
        %929 = vmatpush1.bf16.msra.mxu0 0
        %930 = vmatprep.subr.bf16.mxu0 0
        %931 = vmatpush1.bf16.msra.mxu0 0
        %932 = vmatprep.subr.bf16.mxu0 0
        %933 = vmatpush1.bf16.msra.mxu0 0
        %934 = vmatprep.subr.bf16.mxu0 0
        %935 = vmatpush1.bf16.msra.mxu0 0
        %936 = vmatprep.subr.bf16.mxu0 0
        %937 = vmatpush1.bf16.msra.mxu0 0
        %938 = vmatprep.mubr.bf16.mxu0 0
        %939 = vmatmul.mubr.bf16.gmra.mrb[0].mxu0 %v546
        %v940 = vpop.f32.mrb[0].mxu0
        %v941 = vadd.f32 %v880, %v940
        %v942 = vpop.f32.mrb[0].mxu0
        %v943 = vpop.f32.mrb[0].mxu0
        %v944 = vpop.f32.mrb[0].mxu0
        %945 = vdwg.mxu0
        %v946 = vpack.c.bf16 %v941, %v941
        %s947 = scalar_lea.vmem %s4, 160
        %v948 = vld [vmem:[%s947] sm:$0xf]
        %v949 = vld [vmem:[%s947 + $0x4] sm:$0xf]
        %v950 = vld [vmem:[%s947 + $0x8] sm:$0xf]
        %v951 = vld [vmem:[%s947 + $0xc] sm:$0xf]
        %v952 = vld [vmem:[%s947 + $0x10] sm:$0xf]
        %v953 = vld [vmem:[%s947 + $0x14] sm:$0xf]
        %v954 = vld [vmem:[%s947 + $0x18] sm:$0xf]
        %v955 = vld [vmem:[%s947 + $0x1c] sm:$0xf]
        %s956 = scalar_lea.vmem %s5, 5
        %v957 = vld [vmem:[%s956] sm:$0x1]
        %v959 = vlaneseq
        %v960 = vshrl.u32 %v959, 7
        %v961 = vsub.s32 0, %v960
        %v962 = vrot.slane %v957, %v961
        %v972 = vunpack.c.l.b16 %v948
        %v973 = vunpack.c.l.b16 %v949
        %v974 = vunpack.c.l.b16 %v950
        %v975 = vunpack.c.l.b16 %v951
        %v976 = vunpack.c.l.b16 %v952
        %v977 = vunpack.c.l.b16 %v953
        %v978 = vunpack.c.l.b16 %v954
        %v979 = vunpack.c.l.b16 %v955
        %v980 = vpack.c.b16 %v973, %v972
        %v981 = vpack.c.b16 %v975, %v974
        %v982 = vpack.c.b16 %v977, %v976
        %v983 = vpack.c.b16 %v979, %v978
        %988 = vmatprep.subr.bf16.mxu0 0
        %989 = vmatpush1.bf16.msra.mxu0 %v980
        %990 = vmatprep.subr.bf16.mxu0 0
        %991 = vmatpush1.bf16.msra.mxu0 %v981
        %992 = vmatprep.subr.bf16.mxu0 0
        %993 = vmatpush1.bf16.msra.mxu0 %v982
        %994 = vmatprep.subr.bf16.mxu0 0
        %995 = vmatpush1.bf16.msra.mxu0 %v983
        %996 = vmatprep.subr.bf16.mxu0 0
        %997 = vmatpush1.bf16.msra.mxu0 0
        %998 = vmatprep.subr.bf16.mxu0 0
        %999 = vmatpush1.bf16.msra.mxu0 0
        %1000 = vmatprep.subr.bf16.mxu0 0
        %1001 = vmatpush1.bf16.msra.mxu0 0
        %1002 = vmatprep.subr.bf16.mxu0 0
        %1003 = vmatpush1.bf16.msra.mxu0 0
        %1004 = vmatprep.subr.bf16.mxu0 0
        %1005 = vmatpush1.bf16.msra.mxu0 0
        %1006 = vmatprep.subr.bf16.mxu0 0
        %1007 = vmatpush1.bf16.msra.mxu0 0
        %1008 = vmatprep.subr.bf16.mxu0 0
        %1009 = vmatpush1.bf16.msra.mxu0 0
        %1010 = vmatprep.subr.bf16.mxu0 0
        %1011 = vmatpush1.bf16.msra.mxu0 0
        %1012 = vmatprep.subr.bf16.mxu0 0
        %1013 = vmatpush1.bf16.msra.mxu0 0
        %1014 = vmatprep.subr.bf16.mxu0 0
        %1015 = vmatpush1.bf16.msra.mxu0 0
        %1016 = vmatprep.subr.bf16.mxu0 0
        %1017 = vmatpush1.bf16.msra.mxu0 0
        %1018 = vmatprep.subr.bf16.mxu0 0
        %1019 = vmatpush1.bf16.msra.mxu0 0
        %1020 = vmatprep.mubr.bf16.mxu0 0
        %1021 = vmatmul.mubr.bf16.gmra.mrb[0].mxu0 %v546
        %v1022 = vpop.f32.mrb[0].mxu0
        %v1023 = vadd.f32 %v962, %v1022
        %v1024 = vpop.f32.mrb[0].mxu0
        %v1025 = vpop.f32.mrb[0].mxu0
        %v1026 = vpop.f32.mrb[0].mxu0
        %1027 = vdwg.mxu0
        %v1028 = vpack.c.bf16 %v1023, %v1023
        %s1029 = scalar_lea.vmem %s4, 288
        %v1030 = vld [vmem:[%s1029] sm:$0xf]
        %v1031 = vld [vmem:[%s1029 + $0x4] sm:$0xf]
        %v1032 = vld [vmem:[%s1029 + $0x8] sm:$0xf]
        %v1033 = vld [vmem:[%s1029 + $0xc] sm:$0xf]
        %v1034 = vld [vmem:[%s1029 + $0x10] sm:$0xf]
        %v1035 = vld [vmem:[%s1029 + $0x14] sm:$0xf]
        %v1036 = vld [vmem:[%s1029 + $0x18] sm:$0xf]
        %v1037 = vld [vmem:[%s1029 + $0x1c] sm:$0xf]
        %s1038 = scalar_lea.vmem %s5, 9
        %v1039 = vld [vmem:[%s1038] sm:$0x1]
        %v1041 = vlaneseq
        %v1042 = vshrl.u32 %v1041, 7
        %v1043 = vsub.s32 0, %v1042
        %v1044 = vrot.slane %v1039, %v1043
        %v1054 = vunpack.c.l.b16 %v1030
        %v1055 = vunpack.c.l.b16 %v1031
        %v1056 = vunpack.c.l.b16 %v1032
        %v1057 = vunpack.c.l.b16 %v1033
        %v1058 = vunpack.c.l.b16 %v1034
        %v1059 = vunpack.c.l.b16 %v1035
        %v1060 = vunpack.c.l.b16 %v1036
        %v1061 = vunpack.c.l.b16 %v1037
        %v1062 = vpack.c.b16 %v1055, %v1054
        %v1063 = vpack.c.b16 %v1057, %v1056
        %v1064 = vpack.c.b16 %v1059, %v1058
        %v1065 = vpack.c.b16 %v1061, %v1060
        %1070 = vmatprep.subr.bf16.mxu0 0
        %1071 = vmatpush1.bf16.msra.mxu0 %v1062
        %1072 = vmatprep.subr.bf16.mxu0 0
        %1073 = vmatpush1.bf16.msra.mxu0 %v1063
        %1074 = vmatprep.subr.bf16.mxu0 0
        %1075 = vmatpush1.bf16.msra.mxu0 %v1064
        %1076 = vmatprep.subr.bf16.mxu0 0
        %1077 = vmatpush1.bf16.msra.mxu0 %v1065
        %1078 = vmatprep.subr.bf16.mxu0 0
        %1079 = vmatpush1.bf16.msra.mxu0 0
        %1080 = vmatprep.subr.bf16.mxu0 0
        %1081 = vmatpush1.bf16.msra.mxu0 0
        %1082 = vmatprep.subr.bf16.mxu0 0
        %1083 = vmatpush1.bf16.msra.mxu0 0
        %1084 = vmatprep.subr.bf16.mxu0 0
        %1085 = vmatpush1.bf16.msra.mxu0 0
        %1086 = vmatprep.subr.bf16.mxu0 0
        %1087 = vmatpush1.bf16.msra.mxu0 0
        %1088 = vmatprep.subr.bf16.mxu0 0
        %1089 = vmatpush1.bf16.msra.mxu0 0
        %1090 = vmatprep.subr.bf16.mxu0 0
        %1091 = vmatpush1.bf16.msra.mxu0 0
        %1092 = vmatprep.subr.bf16.mxu0 0
        %1093 = vmatpush1.bf16.msra.mxu0 0
        %1094 = vmatprep.subr.bf16.mxu0 0
        %1095 = vmatpush1.bf16.msra.mxu0 0
        %1096 = vmatprep.subr.bf16.mxu0 0
        %1097 = vmatpush1.bf16.msra.mxu0 0
        %1098 = vmatprep.subr.bf16.mxu0 0
        %1099 = vmatpush1.bf16.msra.mxu0 0
        %1100 = vmatprep.subr.bf16.mxu0 0
        %1101 = vmatpush1.bf16.msra.mxu0 0
        %1102 = vmatprep.mubr.bf16.mxu0 0
        %1103 = vmatmul.mubr.bf16.gmra.mrb[0].mxu0 %v546
        %v1104 = vpop.f32.mrb[0].mxu0
        %v1105 = vadd.f32 %v1044, %v1104
        %v1106 = vpop.f32.mrb[0].mxu0
        %v1107 = vpop.f32.mrb[0].mxu0
        %v1108 = vpop.f32.mrb[0].mxu0
        %1109 = vdwg.mxu0
        %v1110 = vpack.c.bf16 %v1105, %v1105
        %v1112 = vsel %vm753, %v946, 0
        %v1115 = vsel %vm753, %v1028, 0
        %1117 = vmatprep.subr.bf16.mxu0 0
        %1118 = vmatpush1.bf16.xpose.msra.mxu0 %v1115
        %1119 = vmatprep.subr.bf16.mxu0 0
        %1120 = vmatpush1.bf16.xpose.msra.mxu0 0
        %1121 = vmatprep.subr.bf16.mxu0 0
        %1122 = vmatpush1.bf16.xpose.msra.mxu0 0
        %1123 = vmatprep.subr.bf16.mxu0 0
        %1124 = vmatpush1.bf16.xpose.msra.mxu0 0
        %1125 = vmatprep.subr.bf16.mxu0 0
        %1126 = vmatpush1.bf16.xpose.msra.mxu0 0
        %1127 = vmatprep.subr.bf16.mxu0 0
        %1128 = vmatpush1.bf16.xpose.msra.mxu0 0
        %1129 = vmatprep.subr.bf16.mxu0 0
        %1130 = vmatpush1.bf16.xpose.msra.mxu0 0
        %1131 = vmatprep.subr.bf16.mxu0 0
        %1132 = vmatpush1.bf16.xpose.msra.mxu0 0
        %1133 = vmatprep.subr.bf16.mxu0 0
        %1134 = vmatpush1.bf16.xpose.msra.mxu0 0
        %1135 = vmatprep.subr.bf16.mxu0 0
        %1136 = vmatpush1.bf16.xpose.msra.mxu0 0
        %1137 = vmatprep.subr.bf16.mxu0 0
        %1138 = vmatpush1.bf16.xpose.msra.mxu0 0
        %1139 = vmatprep.subr.bf16.mxu0 0
        %1140 = vmatpush1.bf16.xpose.msra.mxu0 0
        %1141 = vmatprep.subr.bf16.mxu0 0
        %1142 = vmatpush1.bf16.xpose.msra.mxu0 0
        %1143 = vmatprep.subr.bf16.mxu0 0
        %1144 = vmatpush1.bf16.xpose.msra.mxu0 0
        %1145 = vmatprep.subr.bf16.mxu0 0
        %1146 = vmatpush1.bf16.xpose.msra.mxu0 0
        %1147 = vmatprep.subr.bf16.mxu0 0
        %1148 = vmatpush1.bf16.xpose.msra.mxu0 0
        %1149 = vmatprep.mubr.bf16.mxu0 0
        %1150 = vmatmul.mubr.bf16.gmra.mrb[0].mxu0 %v1112
        %v1151 = vpop.f32.mrb[0].mxu0
        %v1152 = vadd.f32 0.0, %v1151
        %v1153 = vpop.f32.mrb[0].mxu0
        %v1154 = vpop.f32.mrb[0].mxu0
        %v1155 = vpop.f32.mrb[0].mxu0
        %1156 = vdwg.mxu0
        %v1157 = vmul.f32 %v1152, 0.25
        %v1158 = vadd.f32 %v1157, %v492
        %v1159 = vsel %vm802, %v1158, -inf
        %1160 = vmax.xlane.f32.xlu0 %v1159
        %v1161 = vpop.xlane.xlu0 %1160
        %v1162 = vsub.f32 %v1158, %v1161
        %v1163 = vmul.f32 %v1162, 1.442695
        %v1164 = vpow.pop %v1163
        %v1165 = vsel %vm802, %v1164, 0.0
        %1166 = vadd.xlane.f32.xlu0 %v1165
        %v1167 = vpop.xlane.xlu0 %1166
        %v1168 = vrcp.pop %v1167
        %v1169 = vmul.f32 %v1164, %v1168
        %v1170 = vpack.c.bf16 %v1169, %v1169
        %v1172 = vsel %vm802, %v1170, 0
        %v1175 = vsel %vm818, %v1110, 0
        %1177 = vmatprep.subr.bf16.mxu0 0
        %1178 = vmatpush1.bf16.msra.mxu0 %v1175
        %1179 = vmatprep.subr.bf16.mxu0 0
        %1180 = vmatpush1.bf16.msra.mxu0 0
        %1181 = vmatprep.subr.bf16.mxu0 0
        %1182 = vmatpush1.bf16.msra.mxu0 0
        %1183 = vmatprep.subr.bf16.mxu0 0
        %1184 = vmatpush1.bf16.msra.mxu0 0
        %1185 = vmatprep.subr.bf16.mxu0 0
        %1186 = vmatpush1.bf16.msra.mxu0 0
        %1187 = vmatprep.subr.bf16.mxu0 0
        %1188 = vmatpush1.bf16.msra.mxu0 0
        %1189 = vmatprep.subr.bf16.mxu0 0
        %1190 = vmatpush1.bf16.msra.mxu0 0
        %1191 = vmatprep.subr.bf16.mxu0 0
        %1192 = vmatpush1.bf16.msra.mxu0 0
        %1193 = vmatprep.subr.bf16.mxu0 0
        %1194 = vmatpush1.bf16.msra.mxu0 0
        %1195 = vmatprep.subr.bf16.mxu0 0
        %1196 = vmatpush1.bf16.msra.mxu0 0
        %1197 = vmatprep.subr.bf16.mxu0 0
        %1198 = vmatpush1.bf16.msra.mxu0 0
        %1199 = vmatprep.subr.bf16.mxu0 0
        %1200 = vmatpush1.bf16.msra.mxu0 0
        %1201 = vmatprep.subr.bf16.mxu0 0
        %1202 = vmatpush1.bf16.msra.mxu0 0
        %1203 = vmatprep.subr.bf16.mxu0 0
        %1204 = vmatpush1.bf16.msra.mxu0 0
        %1205 = vmatprep.subr.bf16.mxu0 0
        %1206 = vmatpush1.bf16.msra.mxu0 0
        %1207 = vmatprep.subr.bf16.mxu0 0
        %1208 = vmatpush1.bf16.msra.mxu0 0
        %1209 = vmatprep.mubr.bf16.mxu0 0
        %1210 = vmatmul.mubr.bf16.gmra.mrb[0].mxu0 %v1172
        %v1211 = vpop.f32.mrb[0].mxu0
        %v1212 = vadd.f32 0.0, %v1211
        %v1213 = vpop.f32.mrb[0].mxu0
        %v1214 = vpop.f32.mrb[0].mxu0
        %v1215 = vpop.f32.mrb[0].mxu0
        %1216 = vdwg.mxu0
        %v1217 = vpack.c.bf16 %v1212, %v1212
        %s1218 = scalar_lea.vmem %s6, 8
        %v1219 = vld [vmem:[%s1218] sm:$0xf]
        %v1220 = vld [vmem:[%s1218 + $0x4] sm:$0xf]
        %v1223 = vunpack.c.l.b16 %v1219
        %v1224 = vunpack.c.l.b16 %v1220
        %v1225 = vpack.c.b16 %v1224, %v1223
        %v1228 = vsel %vm753, %v1217, 0
        %1230 = vmatprep.subr.bf16.mxu0 0
        %1231 = vmatpush1.bf16.msra.mxu0 %v1225
        %1232 = vmatprep.subr.bf16.mxu0 0
        %1233 = vmatpush1.bf16.msra.mxu0 0
        %1234 = vmatprep.subr.bf16.mxu0 0
        %1235 = vmatpush1.bf16.msra.mxu0 0
        %1236 = vmatprep.subr.bf16.mxu0 0
        %1237 = vmatpush1.bf16.msra.mxu0 0
        %1238 = vmatprep.subr.bf16.mxu0 0
        %1239 = vmatpush1.bf16.msra.mxu0 0
        %1240 = vmatprep.subr.bf16.mxu0 0
        %1241 = vmatpush1.bf16.msra.mxu0 0
        %1242 = vmatprep.subr.bf16.mxu0 0
        %1243 = vmatpush1.bf16.msra.mxu0 0
        %1244 = vmatprep.subr.bf16.mxu0 0
        %1245 = vmatpush1.bf16.msra.mxu0 0
        %1246 = vmatprep.subr.bf16.mxu0 0
        %1247 = vmatpush1.bf16.msra.mxu0 0
        %1248 = vmatprep.subr.bf16.mxu0 0
        %1249 = vmatpush1.bf16.msra.mxu0 0
        %1250 = vmatprep.subr.bf16.mxu0 0
        %1251 = vmatpush1.bf16.msra.mxu0 0
        %1252 = vmatprep.subr.bf16.mxu0 0
        %1253 = vmatpush1.bf16.msra.mxu0 0
        %1254 = vmatprep.subr.bf16.mxu0 0
        %1255 = vmatpush1.bf16.msra.mxu0 0
        %1256 = vmatprep.subr.bf16.mxu0 0
        %1257 = vmatpush1.bf16.msra.mxu0 0
        %1258 = vmatprep.subr.bf16.mxu0 0
        %1259 = vmatpush1.bf16.msra.mxu0 0
        %1260 = vmatprep.subr.bf16.mxu0 0
        %1261 = vmatpush1.bf16.msra.mxu0 0
        %1262 = vmatprep.mubr.bf16.mxu0 0
        %1263 = vmatmul.mubr.bf16.gmra.mrb[0].mxu0 %v1228
        %v1264 = vpop.f32.mrb[0].mxu0
        %v1265 = vadd.f32 0.0, %v1264
        %v1266 = vpop.f32.mrb[0].mxu0
        %v1267 = vpop.f32.mrb[0].mxu0
        %v1268 = vpop.f32.mrb[0].mxu0
        %1269 = vdwg.mxu0
        %v1272 = vunpack.c.l.b16 %v863
        %v1273 = vunpack.c.l.b16 %v864
        %v1274 = vpack.c.b16 %v1273, %v1272
        %v1277 = vsel %vm753, %v862, 0
        %1279 = vmatprep.subr.bf16.mxu0 0
        %1280 = vmatpush1.bf16.msra.mxu0 %v1274
        %1281 = vmatprep.subr.bf16.mxu0 0
        %1282 = vmatpush1.bf16.msra.mxu0 0
        %1283 = vmatprep.subr.bf16.mxu0 0
        %1284 = vmatpush1.bf16.msra.mxu0 0
        %1285 = vmatprep.subr.bf16.mxu0 0
        %1286 = vmatpush1.bf16.msra.mxu0 0
        %1287 = vmatprep.subr.bf16.mxu0 0
        %1288 = vmatpush1.bf16.msra.mxu0 0
        %1289 = vmatprep.subr.bf16.mxu0 0
        %1290 = vmatpush1.bf16.msra.mxu0 0
        %1291 = vmatprep.subr.bf16.mxu0 0
        %1292 = vmatpush1.bf16.msra.mxu0 0
        %1293 = vmatprep.subr.bf16.mxu0 0
        %1294 = vmatpush1.bf16.msra.mxu0 0
        %1295 = vmatprep.subr.bf16.mxu0 0
        %1296 = vmatpush1.bf16.msra.mxu0 0
        %1297 = vmatprep.subr.bf16.mxu0 0
        %1298 = vmatpush1.bf16.msra.mxu0 0
        %1299 = vmatprep.subr.bf16.mxu0 0
        %1300 = vmatpush1.bf16.msra.mxu0 0
        %1301 = vmatprep.subr.bf16.mxu0 0
        %1302 = vmatpush1.bf16.msra.mxu0 0
        %1303 = vmatprep.subr.bf16.mxu0 0
        %1304 = vmatpush1.bf16.msra.mxu0 0
        %1305 = vmatprep.subr.bf16.mxu0 0
        %1306 = vmatpush1.bf16.msra.mxu0 0
        %1307 = vmatprep.subr.bf16.mxu0 0
        %1308 = vmatpush1.bf16.msra.mxu0 0
        %1309 = vmatprep.subr.bf16.mxu0 0
        %1310 = vmatpush1.bf16.msra.mxu0 0
        %1311 = vmatprep.mubr.bf16.mxu0 0
        %1312 = vmatmul.mubr.bf16.gmra.mrb[0].mxu0 %v1277
        %v1313 = vpop.f32.mrb[0].mxu0
        %v1314 = vadd.f32 %v1265, %v1313
        %v1315 = vpop.f32.mrb[0].mxu0
        %v1316 = vpop.f32.mrb[0].mxu0
        %v1317 = vpop.f32.mrb[0].mxu0
        %1318 = vdwg.mxu0
        %s1319 = scalar_lea.vmem %s4, 64
        %v1320 = vld [vmem:[%s1319] sm:$0xf]
        %v1321 = vld [vmem:[%s1319 + $0x4] sm:$0xf]
        %v1322 = vld [vmem:[%s1319 + $0x8] sm:$0xf]
        %v1323 = vld [vmem:[%s1319 + $0xc] sm:$0xf]
        %v1324 = vld [vmem:[%s1319 + $0x10] sm:$0xf]
        %v1325 = vld [vmem:[%s1319 + $0x14] sm:$0xf]
        %v1326 = vld [vmem:[%s1319 + $0x18] sm:$0xf]
        %v1327 = vld [vmem:[%s1319 + $0x1c] sm:$0xf]
        %s1328 = scalar_lea.vmem %s5, 2
        %v1329 = vld [vmem:[%s1328] sm:$0x1]
        %v1331 = vlaneseq
        %v1332 = vshrl.u32 %v1331, 7
        %v1333 = vsub.s32 0, %v1332
        %v1334 = vrot.slane %v1329, %v1333
        %v1344 = vunpack.c.l.b16 %v1320
        %v1345 = vunpack.c.l.b16 %v1321
        %v1346 = vunpack.c.l.b16 %v1322
        %v1347 = vunpack.c.l.b16 %v1323
        %v1348 = vunpack.c.l.b16 %v1324
        %v1349 = vunpack.c.l.b16 %v1325
        %v1350 = vunpack.c.l.b16 %v1326
        %v1351 = vunpack.c.l.b16 %v1327
        %v1352 = vpack.c.b16 %v1345, %v1344
        %v1353 = vpack.c.b16 %v1347, %v1346
        %v1354 = vpack.c.b16 %v1349, %v1348
        %v1355 = vpack.c.b16 %v1351, %v1350
        %1360 = vmatprep.subr.bf16.mxu0 0
        %1361 = vmatpush1.bf16.msra.mxu0 %v1352
        %1362 = vmatprep.subr.bf16.mxu0 0
        %1363 = vmatpush1.bf16.msra.mxu0 %v1353
        %1364 = vmatprep.subr.bf16.mxu0 0
        %1365 = vmatpush1.bf16.msra.mxu0 %v1354
        %1366 = vmatprep.subr.bf16.mxu0 0
        %1367 = vmatpush1.bf16.msra.mxu0 %v1355
        %1368 = vmatprep.subr.bf16.mxu0 0
        %1369 = vmatpush1.bf16.msra.mxu0 0
        %1370 = vmatprep.subr.bf16.mxu0 0
        %1371 = vmatpush1.bf16.msra.mxu0 0
        %1372 = vmatprep.subr.bf16.mxu0 0
        %1373 = vmatpush1.bf16.msra.mxu0 0
        %1374 = vmatprep.subr.bf16.mxu0 0
        %1375 = vmatpush1.bf16.msra.mxu0 0
        %1376 = vmatprep.subr.bf16.mxu0 0
        %1377 = vmatpush1.bf16.msra.mxu0 0
        %1378 = vmatprep.subr.bf16.mxu0 0
        %1379 = vmatpush1.bf16.msra.mxu0 0
        %1380 = vmatprep.subr.bf16.mxu0 0
        %1381 = vmatpush1.bf16.msra.mxu0 0
        %1382 = vmatprep.subr.bf16.mxu0 0
        %1383 = vmatpush1.bf16.msra.mxu0 0
        %1384 = vmatprep.subr.bf16.mxu0 0
        %1385 = vmatpush1.bf16.msra.mxu0 0
        %1386 = vmatprep.subr.bf16.mxu0 0
        %1387 = vmatpush1.bf16.msra.mxu0 0
        %1388 = vmatprep.subr.bf16.mxu0 0
        %1389 = vmatpush1.bf16.msra.mxu0 0
        %1390 = vmatprep.subr.bf16.mxu0 0
        %1391 = vmatpush1.bf16.msra.mxu0 0
        %1392 = vmatprep.mubr.bf16.mxu0 0
        %1393 = vmatmul.mubr.bf16.gmra.mrb[0].mxu0 %v546
        %v1394 = vpop.f32.mrb[0].mxu0
        %v1395 = vadd.f32 %v1334, %v1394
        %v1396 = vpop.f32.mrb[0].mxu0
        %v1397 = vpop.f32.mrb[0].mxu0
        %v1398 = vpop.f32.mrb[0].mxu0
        %1399 = vdwg.mxu0
        %v1400 = vpack.c.bf16 %v1395, %v1395
        %s1401 = scalar_lea.vmem %s4, 192
        %v1402 = vld [vmem:[%s1401] sm:$0xf]
        %v1403 = vld [vmem:[%s1401 + $0x4] sm:$0xf]
        %v1404 = vld [vmem:[%s1401 + $0x8] sm:$0xf]
        %v1405 = vld [vmem:[%s1401 + $0xc] sm:$0xf]
        %v1406 = vld [vmem:[%s1401 + $0x10] sm:$0xf]
        %v1407 = vld [vmem:[%s1401 + $0x14] sm:$0xf]
        %v1408 = vld [vmem:[%s1401 + $0x18] sm:$0xf]
        %v1409 = vld [vmem:[%s1401 + $0x1c] sm:$0xf]
        %s1410 = scalar_lea.vmem %s5, 6
        %v1411 = vld [vmem:[%s1410] sm:$0x1]
        %v1413 = vlaneseq
        %v1414 = vshrl.u32 %v1413, 7
        %v1415 = vsub.s32 0, %v1414
        %v1416 = vrot.slane %v1411, %v1415
        %v1426 = vunpack.c.l.b16 %v1402
        %v1427 = vunpack.c.l.b16 %v1403
        %v1428 = vunpack.c.l.b16 %v1404
        %v1429 = vunpack.c.l.b16 %v1405
        %v1430 = vunpack.c.l.b16 %v1406
        %v1431 = vunpack.c.l.b16 %v1407
        %v1432 = vunpack.c.l.b16 %v1408
        %v1433 = vunpack.c.l.b16 %v1409
        %v1434 = vpack.c.b16 %v1427, %v1426
        %v1435 = vpack.c.b16 %v1429, %v1428
        %v1436 = vpack.c.b16 %v1431, %v1430
        %v1437 = vpack.c.b16 %v1433, %v1432
        %1442 = vmatprep.subr.bf16.mxu0 0
        %1443 = vmatpush1.bf16.msra.mxu0 %v1434
        %1444 = vmatprep.subr.bf16.mxu0 0
        %1445 = vmatpush1.bf16.msra.mxu0 %v1435
        %1446 = vmatprep.subr.bf16.mxu0 0
        %1447 = vmatpush1.bf16.msra.mxu0 %v1436
        %1448 = vmatprep.subr.bf16.mxu0 0
        %1449 = vmatpush1.bf16.msra.mxu0 %v1437
        %1450 = vmatprep.subr.bf16.mxu0 0
        %1451 = vmatpush1.bf16.msra.mxu0 0
        %1452 = vmatprep.subr.bf16.mxu0 0
        %1453 = vmatpush1.bf16.msra.mxu0 0
        %1454 = vmatprep.subr.bf16.mxu0 0
        %1455 = vmatpush1.bf16.msra.mxu0 0
        %1456 = vmatprep.subr.bf16.mxu0 0
        %1457 = vmatpush1.bf16.msra.mxu0 0
        %1458 = vmatprep.subr.bf16.mxu0 0
        %1459 = vmatpush1.bf16.msra.mxu0 0
        %1460 = vmatprep.subr.bf16.mxu0 0
        %1461 = vmatpush1.bf16.msra.mxu0 0
        %1462 = vmatprep.subr.bf16.mxu0 0
        %1463 = vmatpush1.bf16.msra.mxu0 0
        %1464 = vmatprep.subr.bf16.mxu0 0
        %1465 = vmatpush1.bf16.msra.mxu0 0
        %1466 = vmatprep.subr.bf16.mxu0 0
        %1467 = vmatpush1.bf16.msra.mxu0 0
        %1468 = vmatprep.subr.bf16.mxu0 0
        %1469 = vmatpush1.bf16.msra.mxu0 0
        %1470 = vmatprep.subr.bf16.mxu0 0
        %1471 = vmatpush1.bf16.msra.mxu0 0
        %1472 = vmatprep.subr.bf16.mxu0 0
        %1473 = vmatpush1.bf16.msra.mxu0 0
        %1474 = vmatprep.mubr.bf16.mxu0 0
        %1475 = vmatmul.mubr.bf16.gmra.mrb[0].mxu0 %v546
        %v1476 = vpop.f32.mrb[0].mxu0
        %v1477 = vadd.f32 %v1416, %v1476
        %v1478 = vpop.f32.mrb[0].mxu0
        %v1479 = vpop.f32.mrb[0].mxu0
        %v1480 = vpop.f32.mrb[0].mxu0
        %1481 = vdwg.mxu0
        %v1482 = vpack.c.bf16 %v1477, %v1477
        %s1483 = scalar_lea.vmem %s4, 320
        %v1484 = vld [vmem:[%s1483] sm:$0xf]
        %v1485 = vld [vmem:[%s1483 + $0x4] sm:$0xf]
        %v1486 = vld [vmem:[%s1483 + $0x8] sm:$0xf]
        %v1487 = vld [vmem:[%s1483 + $0xc] sm:$0xf]
        %v1488 = vld [vmem:[%s1483 + $0x10] sm:$0xf]
        %v1489 = vld [vmem:[%s1483 + $0x14] sm:$0xf]
        %v1490 = vld [vmem:[%s1483 + $0x18] sm:$0xf]
        %v1491 = vld [vmem:[%s1483 + $0x1c] sm:$0xf]
        %s1492 = scalar_lea.vmem %s5, 10
        %v1493 = vld [vmem:[%s1492] sm:$0x1]
        %v1495 = vlaneseq
        %v1496 = vshrl.u32 %v1495, 7
        %v1497 = vsub.s32 0, %v1496
        %v1498 = vrot.slane %v1493, %v1497
        %v1508 = vunpack.c.l.b16 %v1484
        %v1509 = vunpack.c.l.b16 %v1485
        %v1510 = vunpack.c.l.b16 %v1486
        %v1511 = vunpack.c.l.b16 %v1487
        %v1512 = vunpack.c.l.b16 %v1488
        %v1513 = vunpack.c.l.b16 %v1489
        %v1514 = vunpack.c.l.b16 %v1490
        %v1515 = vunpack.c.l.b16 %v1491
        %v1516 = vpack.c.b16 %v1509, %v1508
        %v1517 = vpack.c.b16 %v1511, %v1510
        %v1518 = vpack.c.b16 %v1513, %v1512
        %v1519 = vpack.c.b16 %v1515, %v1514
        %1524 = vmatprep.subr.bf16.mxu0 0
        %1525 = vmatpush1.bf16.msra.mxu0 %v1516
        %1526 = vmatprep.subr.bf16.mxu0 0
        %1527 = vmatpush1.bf16.msra.mxu0 %v1517
        %1528 = vmatprep.subr.bf16.mxu0 0
        %1529 = vmatpush1.bf16.msra.mxu0 %v1518
        %1530 = vmatprep.subr.bf16.mxu0 0
        %1531 = vmatpush1.bf16.msra.mxu0 %v1519
        %1532 = vmatprep.subr.bf16.mxu0 0
        %1533 = vmatpush1.bf16.msra.mxu0 0
        %1534 = vmatprep.subr.bf16.mxu0 0
        %1535 = vmatpush1.bf16.msra.mxu0 0
        %1536 = vmatprep.subr.bf16.mxu0 0
        %1537 = vmatpush1.bf16.msra.mxu0 0
        %1538 = vmatprep.subr.bf16.mxu0 0
        %1539 = vmatpush1.bf16.msra.mxu0 0
        %1540 = vmatprep.subr.bf16.mxu0 0
        %1541 = vmatpush1.bf16.msra.mxu0 0
        %1542 = vmatprep.subr.bf16.mxu0 0
        %1543 = vmatpush1.bf16.msra.mxu0 0
        %1544 = vmatprep.subr.bf16.mxu0 0
        %1545 = vmatpush1.bf16.msra.mxu0 0
        %1546 = vmatprep.subr.bf16.mxu0 0
        %1547 = vmatpush1.bf16.msra.mxu0 0
        %1548 = vmatprep.subr.bf16.mxu0 0
        %1549 = vmatpush1.bf16.msra.mxu0 0
        %1550 = vmatprep.subr.bf16.mxu0 0
        %1551 = vmatpush1.bf16.msra.mxu0 0
        %1552 = vmatprep.subr.bf16.mxu0 0
        %1553 = vmatpush1.bf16.msra.mxu0 0
        %1554 = vmatprep.subr.bf16.mxu0 0
        %1555 = vmatpush1.bf16.msra.mxu0 0
        %1556 = vmatprep.mubr.bf16.mxu0 0
        %1557 = vmatmul.mubr.bf16.gmra.mrb[0].mxu0 %v546
        %v1558 = vpop.f32.mrb[0].mxu0
        %v1559 = vadd.f32 %v1498, %v1558
        %v1560 = vpop.f32.mrb[0].mxu0
        %v1561 = vpop.f32.mrb[0].mxu0
        %v1562 = vpop.f32.mrb[0].mxu0
        %1563 = vdwg.mxu0
        %v1564 = vpack.c.bf16 %v1559, %v1559
        %v1566 = vsel %vm753, %v1400, 0
        %v1569 = vsel %vm753, %v1482, 0
        %1571 = vmatprep.subr.bf16.mxu0 0
        %1572 = vmatpush1.bf16.xpose.msra.mxu0 %v1569
        %1573 = vmatprep.subr.bf16.mxu0 0
        %1574 = vmatpush1.bf16.xpose.msra.mxu0 0
        %1575 = vmatprep.subr.bf16.mxu0 0
        %1576 = vmatpush1.bf16.xpose.msra.mxu0 0
        %1577 = vmatprep.subr.bf16.mxu0 0
        %1578 = vmatpush1.bf16.xpose.msra.mxu0 0
        %1579 = vmatprep.subr.bf16.mxu0 0
        %1580 = vmatpush1.bf16.xpose.msra.mxu0 0
        %1581 = vmatprep.subr.bf16.mxu0 0
        %1582 = vmatpush1.bf16.xpose.msra.mxu0 0
        %1583 = vmatprep.subr.bf16.mxu0 0
        %1584 = vmatpush1.bf16.xpose.msra.mxu0 0
        %1585 = vmatprep.subr.bf16.mxu0 0
        %1586 = vmatpush1.bf16.xpose.msra.mxu0 0
        %1587 = vmatprep.subr.bf16.mxu0 0
        %1588 = vmatpush1.bf16.xpose.msra.mxu0 0
        %1589 = vmatprep.subr.bf16.mxu0 0
        %1590 = vmatpush1.bf16.xpose.msra.mxu0 0
        %1591 = vmatprep.subr.bf16.mxu0 0
        %1592 = vmatpush1.bf16.xpose.msra.mxu0 0
        %1593 = vmatprep.subr.bf16.mxu0 0
        %1594 = vmatpush1.bf16.xpose.msra.mxu0 0
        %1595 = vmatprep.subr.bf16.mxu0 0
        %1596 = vmatpush1.bf16.xpose.msra.mxu0 0
        %1597 = vmatprep.subr.bf16.mxu0 0
        %1598 = vmatpush1.bf16.xpose.msra.mxu0 0
        %1599 = vmatprep.subr.bf16.mxu0 0
        %1600 = vmatpush1.bf16.xpose.msra.mxu0 0
        %1601 = vmatprep.subr.bf16.mxu0 0
        %1602 = vmatpush1.bf16.xpose.msra.mxu0 0
        %1603 = vmatprep.mubr.bf16.mxu0 0
        %1604 = vmatmul.mubr.bf16.gmra.mrb[0].mxu0 %v1566
        %v1605 = vpop.f32.mrb[0].mxu0
        %v1606 = vadd.f32 0.0, %v1605
        %v1607 = vpop.f32.mrb[0].mxu0
        %v1608 = vpop.f32.mrb[0].mxu0
        %v1609 = vpop.f32.mrb[0].mxu0
        %1610 = vdwg.mxu0
        %v1611 = vmul.f32 %v1606, 0.25
        %v1612 = vadd.f32 %v1611, %v492
        %v1613 = vsel %vm802, %v1612, -inf
        %1614 = vmax.xlane.f32.xlu0 %v1613
        %v1615 = vpop.xlane.xlu0 %1614
        %v1616 = vsub.f32 %v1612, %v1615
        %v1617 = vmul.f32 %v1616, 1.442695
        %v1618 = vpow.pop %v1617
        %v1619 = vsel %vm802, %v1618, 0.0
        %1620 = vadd.xlane.f32.xlu0 %v1619
        %v1621 = vpop.xlane.xlu0 %1620
        %v1622 = vrcp.pop %v1621
        %v1623 = vmul.f32 %v1618, %v1622
        %v1624 = vpack.c.bf16 %v1623, %v1623
        %v1626 = vsel %vm802, %v1624, 0
        %v1629 = vsel %vm818, %v1564, 0
        %1631 = vmatprep.subr.bf16.mxu0 0
        %1632 = vmatpush1.bf16.msra.mxu0 %v1629
        %1633 = vmatprep.subr.bf16.mxu0 0
        %1634 = vmatpush1.bf16.msra.mxu0 0
        %1635 = vmatprep.subr.bf16.mxu0 0
        %1636 = vmatpush1.bf16.msra.mxu0 0
        %1637 = vmatprep.subr.bf16.mxu0 0
        %1638 = vmatpush1.bf16.msra.mxu0 0
        %1639 = vmatprep.subr.bf16.mxu0 0
        %1640 = vmatpush1.bf16.msra.mxu0 0
        %1641 = vmatprep.subr.bf16.mxu0 0
        %1642 = vmatpush1.bf16.msra.mxu0 0
        %1643 = vmatprep.subr.bf16.mxu0 0
        %1644 = vmatpush1.bf16.msra.mxu0 0
        %1645 = vmatprep.subr.bf16.mxu0 0
        %1646 = vmatpush1.bf16.msra.mxu0 0
        %1647 = vmatprep.subr.bf16.mxu0 0
        %1648 = vmatpush1.bf16.msra.mxu0 0
        %1649 = vmatprep.subr.bf16.mxu0 0
        %1650 = vmatpush1.bf16.msra.mxu0 0
        %1651 = vmatprep.subr.bf16.mxu0 0
        %1652 = vmatpush1.bf16.msra.mxu0 0
        %1653 = vmatprep.subr.bf16.mxu0 0
        %1654 = vmatpush1.bf16.msra.mxu0 0
        %1655 = vmatprep.subr.bf16.mxu0 0
        %1656 = vmatpush1.bf16.msra.mxu0 0
        %1657 = vmatprep.subr.bf16.mxu0 0
        %1658 = vmatpush1.bf16.msra.mxu0 0
        %1659 = vmatprep.subr.bf16.mxu0 0
        %1660 = vmatpush1.bf16.msra.mxu0 0
        %1661 = vmatprep.subr.bf16.mxu0 0
        %1662 = vmatpush1.bf16.msra.mxu0 0
        %1663 = vmatprep.mubr.bf16.mxu0 0
        %1664 = vmatmul.mubr.bf16.gmra.mrb[0].mxu0 %v1626
        %v1665 = vpop.f32.mrb[0].mxu0
        %v1666 = vadd.f32 0.0, %v1665
        %v1667 = vpop.f32.mrb[0].mxu0
        %v1668 = vpop.f32.mrb[0].mxu0
        %v1669 = vpop.f32.mrb[0].mxu0
        %1670 = vdwg.mxu0
        %v1671 = vpack.c.bf16 %v1666, %v1666
        %s1672 = scalar_lea.vmem %s6, 16
        %v1673 = vld [vmem:[%s1672] sm:$0xf]
        %v1674 = vld [vmem:[%s1672 + $0x4] sm:$0xf]
        %v1677 = vunpack.c.l.b16 %v1673
        %v1678 = vunpack.c.l.b16 %v1674
        %v1679 = vpack.c.b16 %v1678, %v1677
        %v1682 = vsel %vm753, %v1671, 0
        %1684 = vmatprep.subr.bf16.mxu0 0
        %1685 = vmatpush1.bf16.msra.mxu0 %v1679
        %1686 = vmatprep.subr.bf16.mxu0 0
        %1687 = vmatpush1.bf16.msra.mxu0 0
        %1688 = vmatprep.subr.bf16.mxu0 0
        %1689 = vmatpush1.bf16.msra.mxu0 0
        %1690 = vmatprep.subr.bf16.mxu0 0
        %1691 = vmatpush1.bf16.msra.mxu0 0
        %1692 = vmatprep.subr.bf16.mxu0 0
        %1693 = vmatpush1.bf16.msra.mxu0 0
        %1694 = vmatprep.subr.bf16.mxu0 0
        %1695 = vmatpush1.bf16.msra.mxu0 0
        %1696 = vmatprep.subr.bf16.mxu0 0
        %1697 = vmatpush1.bf16.msra.mxu0 0
        %1698 = vmatprep.subr.bf16.mxu0 0
        %1699 = vmatpush1.bf16.msra.mxu0 0
        %1700 = vmatprep.subr.bf16.mxu0 0
        %1701 = vmatpush1.bf16.msra.mxu0 0
        %1702 = vmatprep.subr.bf16.mxu0 0
        %1703 = vmatpush1.bf16.msra.mxu0 0
        %1704 = vmatprep.subr.bf16.mxu0 0
        %1705 = vmatpush1.bf16.msra.mxu0 0
        %1706 = vmatprep.subr.bf16.mxu0 0
        %1707 = vmatpush1.bf16.msra.mxu0 0
        %1708 = vmatprep.subr.bf16.mxu0 0
        %1709 = vmatpush1.bf16.msra.mxu0 0
        %1710 = vmatprep.subr.bf16.mxu0 0
        %1711 = vmatpush1.bf16.msra.mxu0 0
        %1712 = vmatprep.subr.bf16.mxu0 0
        %1713 = vmatpush1.bf16.msra.mxu0 0
        %1714 = vmatprep.subr.bf16.mxu0 0
        %1715 = vmatpush1.bf16.msra.mxu0 0
        %1716 = vmatprep.mubr.bf16.mxu0 0
        %1717 = vmatmul.mubr.bf16.gmra.mrb[0].mxu0 %v1682
        %v1718 = vpop.f32.mrb[0].mxu0
        %v1719 = vadd.f32 0.0, %v1718
        %v1720 = vpop.f32.mrb[0].mxu0
        %v1721 = vpop.f32.mrb[0].mxu0
        %v1722 = vpop.f32.mrb[0].mxu0
        %1723 = vdwg.mxu0
        %v1724 = vadd.f32 %v1314, %v1719
        %s1725 = scalar_lea.vmem %s4, 96
        %v1726 = vld [vmem:[%s1725] sm:$0xf]
        %v1727 = vld [vmem:[%s1725 + $0x4] sm:$0xf]
        %v1728 = vld [vmem:[%s1725 + $0x8] sm:$0xf]
        %v1729 = vld [vmem:[%s1725 + $0xc] sm:$0xf]
        %v1730 = vld [vmem:[%s1725 + $0x10] sm:$0xf]
        %v1731 = vld [vmem:[%s1725 + $0x14] sm:$0xf]
        %v1732 = vld [vmem:[%s1725 + $0x18] sm:$0xf]
        %v1733 = vld [vmem:[%s1725 + $0x1c] sm:$0xf]
        %s1734 = scalar_lea.vmem %s5, 3
        %v1735 = vld [vmem:[%s1734] sm:$0x1]
        %v1737 = vlaneseq
        %v1738 = vshrl.u32 %v1737, 7
        %v1739 = vsub.s32 0, %v1738
        %v1740 = vrot.slane %v1735, %v1739
        %v1750 = vunpack.c.l.b16 %v1726
        %v1751 = vunpack.c.l.b16 %v1727
        %v1752 = vunpack.c.l.b16 %v1728
        %v1753 = vunpack.c.l.b16 %v1729
        %v1754 = vunpack.c.l.b16 %v1730
        %v1755 = vunpack.c.l.b16 %v1731
        %v1756 = vunpack.c.l.b16 %v1732
        %v1757 = vunpack.c.l.b16 %v1733
        %v1758 = vpack.c.b16 %v1751, %v1750
        %v1759 = vpack.c.b16 %v1753, %v1752
        %v1760 = vpack.c.b16 %v1755, %v1754
        %v1761 = vpack.c.b16 %v1757, %v1756
        %1766 = vmatprep.subr.bf16.mxu0 0
        %1767 = vmatpush1.bf16.msra.mxu0 %v1758
        %1768 = vmatprep.subr.bf16.mxu0 0
        %1769 = vmatpush1.bf16.msra.mxu0 %v1759
        %1770 = vmatprep.subr.bf16.mxu0 0
        %1771 = vmatpush1.bf16.msra.mxu0 %v1760
        %1772 = vmatprep.subr.bf16.mxu0 0
        %1773 = vmatpush1.bf16.msra.mxu0 %v1761
        %1774 = vmatprep.subr.bf16.mxu0 0
        %1775 = vmatpush1.bf16.msra.mxu0 0
        %1776 = vmatprep.subr.bf16.mxu0 0
        %1777 = vmatpush1.bf16.msra.mxu0 0
        %1778 = vmatprep.subr.bf16.mxu0 0
        %1779 = vmatpush1.bf16.msra.mxu0 0
        %1780 = vmatprep.subr.bf16.mxu0 0
        %1781 = vmatpush1.bf16.msra.mxu0 0
        %1782 = vmatprep.subr.bf16.mxu0 0
        %1783 = vmatpush1.bf16.msra.mxu0 0
        %1784 = vmatprep.subr.bf16.mxu0 0
        %1785 = vmatpush1.bf16.msra.mxu0 0
        %1786 = vmatprep.subr.bf16.mxu0 0
        %1787 = vmatpush1.bf16.msra.mxu0 0
        %1788 = vmatprep.subr.bf16.mxu0 0
        %1789 = vmatpush1.bf16.msra.mxu0 0
        %1790 = vmatprep.subr.bf16.mxu0 0
        %1791 = vmatpush1.bf16.msra.mxu0 0
        %1792 = vmatprep.subr.bf16.mxu0 0
        %1793 = vmatpush1.bf16.msra.mxu0 0
        %1794 = vmatprep.subr.bf16.mxu0 0
        %1795 = vmatpush1.bf16.msra.mxu0 0
        %1796 = vmatprep.subr.bf16.mxu0 0
        %1797 = vmatpush1.bf16.msra.mxu0 0
        %1798 = vmatprep.mubr.bf16.mxu0 0
        %1799 = vmatmul.mubr.bf16.gmra.mrb[0].mxu0 %v546
        %v1800 = vpop.f32.mrb[0].mxu0
        %v1801 = vadd.f32 %v1740, %v1800
        %v1802 = vpop.f32.mrb[0].mxu0
        %v1803 = vpop.f32.mrb[0].mxu0
        %v1804 = vpop.f32.mrb[0].mxu0
        %1805 = vdwg.mxu0
        %v1806 = vpack.c.bf16 %v1801, %v1801
        %s1807 = scalar_lea.vmem %s4, 224
        %v1808 = vld [vmem:[%s1807] sm:$0xf]
        %v1809 = vld [vmem:[%s1807 + $0x4] sm:$0xf]
        %v1810 = vld [vmem:[%s1807 + $0x8] sm:$0xf]
        %v1811 = vld [vmem:[%s1807 + $0xc] sm:$0xf]
        %v1812 = vld [vmem:[%s1807 + $0x10] sm:$0xf]
        %v1813 = vld [vmem:[%s1807 + $0x14] sm:$0xf]
        %v1814 = vld [vmem:[%s1807 + $0x18] sm:$0xf]
        %v1815 = vld [vmem:[%s1807 + $0x1c] sm:$0xf]
        %s1816 = scalar_lea.vmem %s5, 7
        %v1817 = vld [vmem:[%s1816] sm:$0x1]
        %v1819 = vlaneseq
        %v1820 = vshrl.u32 %v1819, 7
        %v1821 = vsub.s32 0, %v1820
        %v1822 = vrot.slane %v1817, %v1821
        %v1832 = vunpack.c.l.b16 %v1808
        %v1833 = vunpack.c.l.b16 %v1809
        %v1834 = vunpack.c.l.b16 %v1810
        %v1835 = vunpack.c.l.b16 %v1811
        %v1836 = vunpack.c.l.b16 %v1812
        %v1837 = vunpack.c.l.b16 %v1813
        %v1838 = vunpack.c.l.b16 %v1814
        %v1839 = vunpack.c.l.b16 %v1815
        %v1840 = vpack.c.b16 %v1833, %v1832
        %v1841 = vpack.c.b16 %v1835, %v1834
        %v1842 = vpack.c.b16 %v1837, %v1836
        %v1843 = vpack.c.b16 %v1839, %v1838
        %1848 = vmatprep.subr.bf16.mxu0 0
        %1849 = vmatpush1.bf16.msra.mxu0 %v1840
        %1850 = vmatprep.subr.bf16.mxu0 0
        %1851 = vmatpush1.bf16.msra.mxu0 %v1841
        %1852 = vmatprep.subr.bf16.mxu0 0
        %1853 = vmatpush1.bf16.msra.mxu0 %v1842
        %1854 = vmatprep.subr.bf16.mxu0 0
        %1855 = vmatpush1.bf16.msra.mxu0 %v1843
        %1856 = vmatprep.subr.bf16.mxu0 0
        %1857 = vmatpush1.bf16.msra.mxu0 0
        %1858 = vmatprep.subr.bf16.mxu0 0
        %1859 = vmatpush1.bf16.msra.mxu0 0
        %1860 = vmatprep.subr.bf16.mxu0 0
        %1861 = vmatpush1.bf16.msra.mxu0 0
        %1862 = vmatprep.subr.bf16.mxu0 0
        %1863 = vmatpush1.bf16.msra.mxu0 0
        %1864 = vmatprep.subr.bf16.mxu0 0
        %1865 = vmatpush1.bf16.msra.mxu0 0
        %1866 = vmatprep.subr.bf16.mxu0 0
        %1867 = vmatpush1.bf16.msra.mxu0 0
        %1868 = vmatprep.subr.bf16.mxu0 0
        %1869 = vmatpush1.bf16.msra.mxu0 0
        %1870 = vmatprep.subr.bf16.mxu0 0
        %1871 = vmatpush1.bf16.msra.mxu0 0
        %1872 = vmatprep.subr.bf16.mxu0 0
        %1873 = vmatpush1.bf16.msra.mxu0 0
        %1874 = vmatprep.subr.bf16.mxu0 0
        %1875 = vmatpush1.bf16.msra.mxu0 0
        %1876 = vmatprep.subr.bf16.mxu0 0
        %1877 = vmatpush1.bf16.msra.mxu0 0
        %1878 = vmatprep.subr.bf16.mxu0 0
        %1879 = vmatpush1.bf16.msra.mxu0 0
        %1880 = vmatprep.mubr.bf16.mxu0 0
        %1881 = vmatmul.mubr.bf16.gmra.mrb[0].mxu0 %v546
        %v1882 = vpop.f32.mrb[0].mxu0
        %v1883 = vadd.f32 %v1822, %v1882
        %v1884 = vpop.f32.mrb[0].mxu0
        %v1885 = vpop.f32.mrb[0].mxu0
        %v1886 = vpop.f32.mrb[0].mxu0
        %1887 = vdwg.mxu0
        %v1888 = vpack.c.bf16 %v1883, %v1883
        %s1889 = scalar_lea.vmem %s4, 352
        %v1890 = vld [vmem:[%s1889] sm:$0xf]
        %v1891 = vld [vmem:[%s1889 + $0x4] sm:$0xf]
        %v1892 = vld [vmem:[%s1889 + $0x8] sm:$0xf]
        %v1893 = vld [vmem:[%s1889 + $0xc] sm:$0xf]
        %v1894 = vld [vmem:[%s1889 + $0x10] sm:$0xf]
        %v1895 = vld [vmem:[%s1889 + $0x14] sm:$0xf]
        %v1896 = vld [vmem:[%s1889 + $0x18] sm:$0xf]
        %v1897 = vld [vmem:[%s1889 + $0x1c] sm:$0xf]
        %s1898 = scalar_lea.vmem %s5, 11
        %v1899 = vld [vmem:[%s1898] sm:$0x1]
        %v1901 = vlaneseq
        %v1902 = vshrl.u32 %v1901, 7
        %v1903 = vsub.s32 0, %v1902
        %v1904 = vrot.slane %v1899, %v1903
        %v1914 = vunpack.c.l.b16 %v1890
        %v1915 = vunpack.c.l.b16 %v1891
        %v1916 = vunpack.c.l.b16 %v1892
        %v1917 = vunpack.c.l.b16 %v1893
        %v1918 = vunpack.c.l.b16 %v1894
        %v1919 = vunpack.c.l.b16 %v1895
        %v1920 = vunpack.c.l.b16 %v1896
        %v1921 = vunpack.c.l.b16 %v1897
        %v1922 = vpack.c.b16 %v1915, %v1914
        %v1923 = vpack.c.b16 %v1917, %v1916
        %v1924 = vpack.c.b16 %v1919, %v1918
        %v1925 = vpack.c.b16 %v1921, %v1920
        %1930 = vmatprep.subr.bf16.mxu0 0
        %1931 = vmatpush1.bf16.msra.mxu0 %v1922
        %1932 = vmatprep.subr.bf16.mxu0 0
        %1933 = vmatpush1.bf16.msra.mxu0 %v1923
        %1934 = vmatprep.subr.bf16.mxu0 0
        %1935 = vmatpush1.bf16.msra.mxu0 %v1924
        %1936 = vmatprep.subr.bf16.mxu0 0
        %1937 = vmatpush1.bf16.msra.mxu0 %v1925
        %1938 = vmatprep.subr.bf16.mxu0 0
        %1939 = vmatpush1.bf16.msra.mxu0 0
        %1940 = vmatprep.subr.bf16.mxu0 0
        %1941 = vmatpush1.bf16.msra.mxu0 0
        %1942 = vmatprep.subr.bf16.mxu0 0
        %1943 = vmatpush1.bf16.msra.mxu0 0
        %1944 = vmatprep.subr.bf16.mxu0 0
        %1945 = vmatpush1.bf16.msra.mxu0 0
        %1946 = vmatprep.subr.bf16.mxu0 0
        %1947 = vmatpush1.bf16.msra.mxu0 0
        %1948 = vmatprep.subr.bf16.mxu0 0
        %1949 = vmatpush1.bf16.msra.mxu0 0
        %1950 = vmatprep.subr.bf16.mxu0 0
        %1951 = vmatpush1.bf16.msra.mxu0 0
        %1952 = vmatprep.subr.bf16.mxu0 0
        %1953 = vmatpush1.bf16.msra.mxu0 0
        %1954 = vmatprep.subr.bf16.mxu0 0
        %1955 = vmatpush1.bf16.msra.mxu0 0
        %1956 = vmatprep.subr.bf16.mxu0 0
        %1957 = vmatpush1.bf16.msra.mxu0 0
        %1958 = vmatprep.subr.bf16.mxu0 0
        %1959 = vmatpush1.bf16.msra.mxu0 0
        %1960 = vmatprep.subr.bf16.mxu0 0
        %1961 = vmatpush1.bf16.msra.mxu0 0
        %1962 = vmatprep.mubr.bf16.mxu0 0
        %1963 = vmatmul.mubr.bf16.gmra.mrb[0].mxu0 %v546
        %v1964 = vpop.f32.mrb[0].mxu0
        %v1965 = vadd.f32 %v1904, %v1964
        %v1966 = vpop.f32.mrb[0].mxu0
        %v1967 = vpop.f32.mrb[0].mxu0
        %v1968 = vpop.f32.mrb[0].mxu0
        %1969 = vdwg.mxu0
        %v1970 = vpack.c.bf16 %v1965, %v1965
        %v1972 = vsel %vm753, %v1806, 0
        %v1975 = vsel %vm753, %v1888, 0
        %1977 = vmatprep.subr.bf16.mxu0 0
        %1978 = vmatpush1.bf16.xpose.msra.mxu0 %v1975
        %1979 = vmatprep.subr.bf16.mxu0 0
        %1980 = vmatpush1.bf16.xpose.msra.mxu0 0
        %1981 = vmatprep.subr.bf16.mxu0 0
        %1982 = vmatpush1.bf16.xpose.msra.mxu0 0
        %1983 = vmatprep.subr.bf16.mxu0 0
        %1984 = vmatpush1.bf16.xpose.msra.mxu0 0
        %1985 = vmatprep.subr.bf16.mxu0 0
        %1986 = vmatpush1.bf16.xpose.msra.mxu0 0
        %1987 = vmatprep.subr.bf16.mxu0 0
        %1988 = vmatpush1.bf16.xpose.msra.mxu0 0
        %1989 = vmatprep.subr.bf16.mxu0 0
        %1990 = vmatpush1.bf16.xpose.msra.mxu0 0
        %1991 = vmatprep.subr.bf16.mxu0 0
        %1992 = vmatpush1.bf16.xpose.msra.mxu0 0
        %1993 = vmatprep.subr.bf16.mxu0 0
        %1994 = vmatpush1.bf16.xpose.msra.mxu0 0
        %1995 = vmatprep.subr.bf16.mxu0 0
        %1996 = vmatpush1.bf16.xpose.msra.mxu0 0
        %1997 = vmatprep.subr.bf16.mxu0 0
        %1998 = vmatpush1.bf16.xpose.msra.mxu0 0
        %1999 = vmatprep.subr.bf16.mxu0 0
        %2000 = vmatpush1.bf16.xpose.msra.mxu0 0
        %2001 = vmatprep.subr.bf16.mxu0 0
        %2002 = vmatpush1.bf16.xpose.msra.mxu0 0
        %2003 = vmatprep.subr.bf16.mxu0 0
        %2004 = vmatpush1.bf16.xpose.msra.mxu0 0
        %2005 = vmatprep.subr.bf16.mxu0 0
        %2006 = vmatpush1.bf16.xpose.msra.mxu0 0
        %2007 = vmatprep.subr.bf16.mxu0 0
        %2008 = vmatpush1.bf16.xpose.msra.mxu0 0
        %2009 = vmatprep.mubr.bf16.mxu0 0
        %2010 = vmatmul.mubr.bf16.gmra.mrb[0].mxu0 %v1972
        %v2011 = vpop.f32.mrb[0].mxu0
        %v2012 = vadd.f32 0.0, %v2011
        %v2013 = vpop.f32.mrb[0].mxu0
        %v2014 = vpop.f32.mrb[0].mxu0
        %v2015 = vpop.f32.mrb[0].mxu0
        %2016 = vdwg.mxu0
        %v2017 = vmul.f32 %v2012, 0.25
        %v2018 = vadd.f32 %v2017, %v492
        %v2019 = vsel %vm802, %v2018, -inf
        %2020 = vmax.xlane.f32.xlu0 %v2019
        %v2021 = vpop.xlane.xlu0 %2020
        %v2022 = vsub.f32 %v2018, %v2021
        %v2023 = vmul.f32 %v2022, 1.442695
        %v2024 = vpow.pop %v2023
        %v2025 = vsel %vm802, %v2024, 0.0
        %2026 = vadd.xlane.f32.xlu0 %v2025
        %v2027 = vpop.xlane.xlu0 %2026
        %v2028 = vrcp.pop %v2027
        %v2029 = vmul.f32 %v2024, %v2028
        %v2030 = vpack.c.bf16 %v2029, %v2029
        %v2032 = vsel %vm802, %v2030, 0
        %v2035 = vsel %vm818, %v1970, 0
        %2037 = vmatprep.subr.bf16.mxu0 0
        %2038 = vmatpush1.bf16.msra.mxu0 %v2035
        %2039 = vmatprep.subr.bf16.mxu0 0
        %2040 = vmatpush1.bf16.msra.mxu0 0
        %2041 = vmatprep.subr.bf16.mxu0 0
        %2042 = vmatpush1.bf16.msra.mxu0 0
        %2043 = vmatprep.subr.bf16.mxu0 0
        %2044 = vmatpush1.bf16.msra.mxu0 0
        %2045 = vmatprep.subr.bf16.mxu0 0
        %2046 = vmatpush1.bf16.msra.mxu0 0
        %2047 = vmatprep.subr.bf16.mxu0 0
        %2048 = vmatpush1.bf16.msra.mxu0 0
        %2049 = vmatprep.subr.bf16.mxu0 0
        %2050 = vmatpush1.bf16.msra.mxu0 0
        %2051 = vmatprep.subr.bf16.mxu0 0
        %2052 = vmatpush1.bf16.msra.mxu0 0
        %2053 = vmatprep.subr.bf16.mxu0 0
        %2054 = vmatpush1.bf16.msra.mxu0 0
        %2055 = vmatprep.subr.bf16.mxu0 0
        %2056 = vmatpush1.bf16.msra.mxu0 0
        %2057 = vmatprep.subr.bf16.mxu0 0
        %2058 = vmatpush1.bf16.msra.mxu0 0
        %2059 = vmatprep.subr.bf16.mxu0 0
        %2060 = vmatpush1.bf16.msra.mxu0 0
        %2061 = vmatprep.subr.bf16.mxu0 0
        %2062 = vmatpush1.bf16.msra.mxu0 0
        %2063 = vmatprep.subr.bf16.mxu0 0
        %2064 = vmatpush1.bf16.msra.mxu0 0
        %2065 = vmatprep.subr.bf16.mxu0 0
        %2066 = vmatpush1.bf16.msra.mxu0 0
        %2067 = vmatprep.subr.bf16.mxu0 0
        %2068 = vmatpush1.bf16.msra.mxu0 0
        %2069 = vmatprep.mubr.bf16.mxu0 0
        %2070 = vmatmul.mubr.bf16.gmra.mrb[0].mxu0 %v2032
        %v2071 = vpop.f32.mrb[0].mxu0
        %v2072 = vadd.f32 0.0, %v2071
        %v2073 = vpop.f32.mrb[0].mxu0
        %v2074 = vpop.f32.mrb[0].mxu0
        %v2075 = vpop.f32.mrb[0].mxu0
        %2076 = vdwg.mxu0
        %v2077 = vpack.c.bf16 %v2072, %v2072
        %s2078 = scalar_lea.vmem %s6, 24
        %v2079 = vld [vmem:[%s2078] sm:$0xf]
        %v2080 = vld [vmem:[%s2078 + $0x4] sm:$0xf]
        %v2083 = vunpack.c.l.b16 %v2079
        %v2084 = vunpack.c.l.b16 %v2080
        %v2085 = vpack.c.b16 %v2084, %v2083
        %v2088 = vsel %vm753, %v2077, 0
        %2090 = vmatprep.subr.bf16.mxu0 0
        %2091 = vmatpush1.bf16.msra.mxu0 %v2085
        %2092 = vmatprep.subr.bf16.mxu0 0
        %2093 = vmatpush1.bf16.msra.mxu0 0
        %2094 = vmatprep.subr.bf16.mxu0 0
        %2095 = vmatpush1.bf16.msra.mxu0 0
        %2096 = vmatprep.subr.bf16.mxu0 0
        %2097 = vmatpush1.bf16.msra.mxu0 0
        %2098 = vmatprep.subr.bf16.mxu0 0
        %2099 = vmatpush1.bf16.msra.mxu0 0
        %2100 = vmatprep.subr.bf16.mxu0 0
        %2101 = vmatpush1.bf16.msra.mxu0 0
        %2102 = vmatprep.subr.bf16.mxu0 0
        %2103 = vmatpush1.bf16.msra.mxu0 0
        %2104 = vmatprep.subr.bf16.mxu0 0
        %2105 = vmatpush1.bf16.msra.mxu0 0
        %2106 = vmatprep.subr.bf16.mxu0 0
        %2107 = vmatpush1.bf16.msra.mxu0 0
        %2108 = vmatprep.subr.bf16.mxu0 0
        %2109 = vmatpush1.bf16.msra.mxu0 0
        %2110 = vmatprep.subr.bf16.mxu0 0
        %2111 = vmatpush1.bf16.msra.mxu0 0
        %2112 = vmatprep.subr.bf16.mxu0 0
        %2113 = vmatpush1.bf16.msra.mxu0 0
        %2114 = vmatprep.subr.bf16.mxu0 0
        %2115 = vmatpush1.bf16.msra.mxu0 0
        %2116 = vmatprep.subr.bf16.mxu0 0
        %2117 = vmatpush1.bf16.msra.mxu0 0
        %2118 = vmatprep.subr.bf16.mxu0 0
        %2119 = vmatpush1.bf16.msra.mxu0 0
        %2120 = vmatprep.subr.bf16.mxu0 0
        %2121 = vmatpush1.bf16.msra.mxu0 0
        %2122 = vmatprep.mubr.bf16.mxu0 0
        %2123 = vmatmul.mubr.bf16.gmra.mrb[0].mxu0 %v2088
        %v2124 = vpop.f32.mrb[0].mxu0
        %v2125 = vadd.f32 0.0, %v2124
        %v2126 = vpop.f32.mrb[0].mxu0
        %v2127 = vpop.f32.mrb[0].mxu0
        %v2128 = vpop.f32.mrb[0].mxu0
        %2129 = vdwg.mxu0
        %v2130 = vadd.f32 %v1724, %v2125
        %v2131 = vld [vmem:[%s7] sm:$0x1]
        %v2133 = vlaneseq
        %v2134 = vshrl.u32 %v2133, 7
        %v2135 = vsub.s32 0, %v2134
        %v2136 = vrot.slane %v2131, %v2135
        %v2138 = vadd.f32 %v2130, %v2136
        %v2139 = vadd.f32 %v503, %v2138
        %v2140 = vld [vmem:[%s12] sm:$0x3]
        %v2141 = vsel %vm544, %v2139, 0.0
        %2142 = vadd.xlane.f32.xlu0 %v2141
        %v2143 = vpop.xlane.xlu0 %2142
        %v2144 = vrcp.pop 64.0
        %v2145 = vmul.f32 %v2143, %v2144
        %v2146 = vsub.f32 %v2139, %v2145
        %v2147 = vmul.f32 %v2146, %v2146
        %v2148 = vsel %vm544, %v2147, 0.0
        %2149 = vadd.xlane.f32.xlu0 %v2148
        %v2150 = vpop.xlane.xlu0 %2149
        %v2151 = vmul.f32 %v2150, %v2144
        %v2152 = vadd.f32 %v2151, 1e-05
        %v2153 = vrsqrt.pop %v2152
        %v2154 = vmul.f32 %v2146, %v2153
        %v2155 = vlaneseq
        %v2156 = vshrl.u32 %v2155, 7
        %v2157 = vsub.s32 0, %v2156
        %v2158 = vrot.slane %v2140, %v2157
        %v2159 = vmul.f32 %v2154, %v2158
        %v2160 = vlaneseq
        %v2161 = vshrl.u32 %v2160, 7
        %v2162 = vsub.s32 1, %v2161
        %v2163 = vrot.slane %v2140, %v2162
        %v2164 = vadd.f32 %v2159, %v2163
        %v2165 = vpack.c.bf16 %v2164, %v2164
        %v2166 = vld [vmem:[%s8] sm:$0xff]
        %v2167 = vld [vmem:[%s8 + $0x8] sm:$0xff]
        %v2168 = vld [vmem:[%s8 + $0x10] sm:$0xff]
        %v2169 = vld [vmem:[%s8 + $0x18] sm:$0xff]
        %v2170 = vld [vmem:[%s8 + $0x20] sm:$0xff]
        %v2171 = vld [vmem:[%s8 + $0x28] sm:$0xff]
        %v2172 = vld [vmem:[%s8 + $0x30] sm:$0xff]
        %v2173 = vld [vmem:[%s8 + $0x38] sm:$0xff]
        %v2174 = vld [vmem:[%s9] sm:$0x3]
        %v2176 = vlaneseq
        %v2177 = vshrl.u32 %v2176, 7
        %v2178 = vsub.s32 0, %v2177
        %v2179 = vrot.slane %v2174, %v2178
        %v2180 = vlaneseq
        %v2181 = vshrl.u32 %v2180, 7
        %v2182 = vsub.s32 1, %v2181
        %v2183 = vrot.slane %v2174, %v2182
        %v2194 = vunpack.c.l.b16 %v2166
        %v2195 = vunpack.c.h.b16 %v2166
        %v2196 = vunpack.c.l.b16 %v2167
        %v2197 = vunpack.c.h.b16 %v2167
        %v2198 = vunpack.c.l.b16 %v2168
        %v2199 = vunpack.c.h.b16 %v2168
        %v2200 = vunpack.c.l.b16 %v2169
        %v2201 = vunpack.c.h.b16 %v2169
        %v2202 = vunpack.c.l.b16 %v2170
        %v2203 = vunpack.c.h.b16 %v2170
        %v2204 = vunpack.c.l.b16 %v2171
        %v2205 = vunpack.c.h.b16 %v2171
        %v2206 = vunpack.c.l.b16 %v2172
        %v2207 = vunpack.c.h.b16 %v2172
        %v2208 = vunpack.c.l.b16 %v2173
        %v2209 = vunpack.c.h.b16 %v2173
        %v2210 = vpack.c.b16 %v2196, %v2194
        %v2211 = vpack.c.b16 %v2197, %v2195
        %v2212 = vpack.c.b16 %v2200, %v2198
        %v2213 = vpack.c.b16 %v2201, %v2199
        %v2214 = vpack.c.b16 %v2204, %v2202
        %v2215 = vpack.c.b16 %v2205, %v2203
        %v2216 = vpack.c.b16 %v2208, %v2206
        %v2217 = vpack.c.b16 %v2209, %v2207
        %v2227 = vsel %vm544, %v2165, 0
        %2229 = vmatprep.subr.bf16.mxu0 %v2211
        %2230 = vmatpush1.bf16.msra.mxu0 %v2210
        %2231 = vmatprep.subr.bf16.mxu0 %v2213
        %2232 = vmatpush1.bf16.msra.mxu0 %v2212
        %2233 = vmatprep.subr.bf16.mxu0 %v2215
        %2234 = vmatpush1.bf16.msra.mxu0 %v2214
        %2235 = vmatprep.subr.bf16.mxu0 %v2217
        %2236 = vmatpush1.bf16.msra.mxu0 %v2216
        %2237 = vmatprep.subr.bf16.mxu0 0
        %2238 = vmatpush1.bf16.msra.mxu0 0
        %2239 = vmatprep.subr.bf16.mxu0 0
        %2240 = vmatpush1.bf16.msra.mxu0 0
        %2241 = vmatprep.subr.bf16.mxu0 0
        %2242 = vmatpush1.bf16.msra.mxu0 0
        %2243 = vmatprep.subr.bf16.mxu0 0
        %2244 = vmatpush1.bf16.msra.mxu0 0
        %2245 = vmatprep.subr.bf16.mxu0 0
        %2246 = vmatpush1.bf16.msra.mxu0 0
        %2247 = vmatprep.subr.bf16.mxu0 0
        %2248 = vmatpush1.bf16.msra.mxu0 0
        %2249 = vmatprep.subr.bf16.mxu0 0
        %2250 = vmatpush1.bf16.msra.mxu0 0
        %2251 = vmatprep.subr.bf16.mxu0 0
        %2252 = vmatpush1.bf16.msra.mxu0 0
        %2253 = vmatprep.subr.bf16.mxu0 0
        %2254 = vmatpush1.bf16.msra.mxu0 0
        %2255 = vmatprep.subr.bf16.mxu0 0
        %2256 = vmatpush1.bf16.msra.mxu0 0
        %2257 = vmatprep.subr.bf16.mxu0 0
        %2258 = vmatpush1.bf16.msra.mxu0 0
        %2259 = vmatprep.subr.bf16.mxu0 0
        %2260 = vmatpush1.bf16.msra.mxu0 0
        %2261 = vmatprep.mubr.bf16.mxu0 0
        %2262 = vmatmul.mubr.bf16.gmra.mrb[0].mxu0 %v2227
        %v2263 = vpop.f32.mrb[0].mxu0
        %v2264 = vadd.f32 %v2179, %v2263
        %v2265 = vpop.f32.mrb[0].mxu0
        %v2266 = vadd.f32 %v2183, %v2265
        %v2267 = vpop.f32.mrb[0].mxu0
        %v2268 = vpop.f32.mrb[0].mxu0
        %2269 = vdwg.mxu0
        %v2270 = vmax.f32 %v2264, 0.0
        %v2271 = vmax.f32 %v2266, 0.0
        %v2272 = vpack.c.bf16 %v2270, %v2270
        %v2273 = vpack.c.bf16 %v2271, %v2271
        %v2274 = vld [vmem:[%s10] sm:$0xf]
        %v2275 = vld [vmem:[%s10 + $0x4] sm:$0xf]
        %v2276 = vld [vmem:[%s10 + $0x8] sm:$0xf]
        %v2277 = vld [vmem:[%s10 + $0xc] sm:$0xf]
        %v2278 = vld [vmem:[%s10 + $0x10] sm:$0xf]
        %v2279 = vld [vmem:[%s10 + $0x14] sm:$0xf]
        %v2280 = vld [vmem:[%s10 + $0x18] sm:$0xf]
        %v2281 = vld [vmem:[%s10 + $0x1c] sm:$0xf]
        %v2282 = vld [vmem:[%s10 + $0x20] sm:$0xf]
        %v2283 = vld [vmem:[%s10 + $0x24] sm:$0xf]
        %v2284 = vld [vmem:[%s10 + $0x28] sm:$0xf]
        %v2285 = vld [vmem:[%s10 + $0x2c] sm:$0xf]
        %v2286 = vld [vmem:[%s10 + $0x30] sm:$0xf]
        %v2287 = vld [vmem:[%s10 + $0x34] sm:$0xf]
        %v2288 = vld [vmem:[%s10 + $0x38] sm:$0xf]
        %v2289 = vld [vmem:[%s10 + $0x3c] sm:$0xf]
        %v2290 = vld [vmem:[%s10 + $0x40] sm:$0xf]
        %v2291 = vld [vmem:[%s10 + $0x44] sm:$0xf]
        %v2292 = vld [vmem:[%s10 + $0x48] sm:$0xf]
        %v2293 = vld [vmem:[%s10 + $0x4c] sm:$0xf]
        %v2294 = vld [vmem:[%s10 + $0x50] sm:$0xf]
        %v2295 = vld [vmem:[%s10 + $0x54] sm:$0xf]
        %v2296 = vld [vmem:[%s10 + $0x58] sm:$0xf]
        %v2297 = vld [vmem:[%s10 + $0x5c] sm:$0xf]
        %v2298 = vld [vmem:[%s10 + $0x60] sm:$0xf]
        %v2299 = vld [vmem:[%s10 + $0x64] sm:$0xf]
        %v2300 = vld [vmem:[%s10 + $0x68] sm:$0xf]
        %v2301 = vld [vmem:[%s10 + $0x6c] sm:$0xf]
        %v2302 = vld [vmem:[%s10 + $0x70] sm:$0xf]
        %v2303 = vld [vmem:[%s10 + $0x74] sm:$0xf]
        %v2304 = vld [vmem:[%s10 + $0x78] sm:$0xf]
        %v2305 = vld [vmem:[%s10 + $0x7c] sm:$0xf]
        %v2306 = vld [vmem:[%s11] sm:$0x1]
        %v2308 = vlaneseq
        %v2309 = vshrl.u32 %v2308, 7
        %v2310 = vsub.s32 0, %v2309
        %v2311 = vrot.slane %v2306, %v2310
        %v2345 = vunpack.c.l.b16 %v2274
        %v2346 = vunpack.c.l.b16 %v2275
        %v2347 = vunpack.c.l.b16 %v2276
        %v2348 = vunpack.c.l.b16 %v2277
        %v2349 = vunpack.c.l.b16 %v2278
        %v2350 = vunpack.c.l.b16 %v2279
        %v2351 = vunpack.c.l.b16 %v2280
        %v2352 = vunpack.c.l.b16 %v2281
        %v2353 = vunpack.c.l.b16 %v2282
        %v2354 = vunpack.c.l.b16 %v2283
        %v2355 = vunpack.c.l.b16 %v2284
        %v2356 = vunpack.c.l.b16 %v2285
        %v2357 = vunpack.c.l.b16 %v2286
        %v2358 = vunpack.c.l.b16 %v2287
        %v2359 = vunpack.c.l.b16 %v2288
        %v2360 = vunpack.c.l.b16 %v2289
        %v2361 = vunpack.c.l.b16 %v2290
        %v2362 = vunpack.c.l.b16 %v2291
        %v2363 = vunpack.c.l.b16 %v2292
        %v2364 = vunpack.c.l.b16 %v2293
        %v2365 = vunpack.c.l.b16 %v2294
        %v2366 = vunpack.c.l.b16 %v2295
        %v2367 = vunpack.c.l.b16 %v2296
        %v2368 = vunpack.c.l.b16 %v2297
        %v2369 = vunpack.c.l.b16 %v2298
        %v2370 = vunpack.c.l.b16 %v2299
        %v2371 = vunpack.c.l.b16 %v2300
        %v2372 = vunpack.c.l.b16 %v2301
        %v2373 = vunpack.c.l.b16 %v2302
        %v2374 = vunpack.c.l.b16 %v2303
        %v2375 = vunpack.c.l.b16 %v2304
        %v2376 = vunpack.c.l.b16 %v2305
        %v2377 = vpack.c.b16 %v2346, %v2345
        %v2378 = vpack.c.b16 %v2348, %v2347
        %v2379 = vpack.c.b16 %v2350, %v2349
        %v2380 = vpack.c.b16 %v2352, %v2351
        %v2381 = vpack.c.b16 %v2354, %v2353
        %v2382 = vpack.c.b16 %v2356, %v2355
        %v2383 = vpack.c.b16 %v2358, %v2357
        %v2384 = vpack.c.b16 %v2360, %v2359
        %v2385 = vpack.c.b16 %v2362, %v2361
        %v2386 = vpack.c.b16 %v2364, %v2363
        %v2387 = vpack.c.b16 %v2366, %v2365
        %v2388 = vpack.c.b16 %v2368, %v2367
        %v2389 = vpack.c.b16 %v2370, %v2369
        %v2390 = vpack.c.b16 %v2372, %v2371
        %v2391 = vpack.c.b16 %v2374, %v2373
        %v2392 = vpack.c.b16 %v2376, %v2375
        %2409 = vmatprep.subr.bf16.mxu0 0
        %2410 = vmatpush1.bf16.msra.mxu0 %v2377
        %2411 = vmatprep.subr.bf16.mxu0 0
        %2412 = vmatpush1.bf16.msra.mxu0 %v2378
        %2413 = vmatprep.subr.bf16.mxu0 0
        %2414 = vmatpush1.bf16.msra.mxu0 %v2379
        %2415 = vmatprep.subr.bf16.mxu0 0
        %2416 = vmatpush1.bf16.msra.mxu0 %v2380
        %2417 = vmatprep.subr.bf16.mxu0 0
        %2418 = vmatpush1.bf16.msra.mxu0 %v2381
        %2419 = vmatprep.subr.bf16.mxu0 0
        %2420 = vmatpush1.bf16.msra.mxu0 %v2382
        %2421 = vmatprep.subr.bf16.mxu0 0
        %2422 = vmatpush1.bf16.msra.mxu0 %v2383
        %2423 = vmatprep.subr.bf16.mxu0 0
        %2424 = vmatpush1.bf16.msra.mxu0 %v2384
        %2425 = vmatprep.subr.bf16.mxu0 0
        %2426 = vmatpush1.bf16.msra.mxu0 %v2385
        %2427 = vmatprep.subr.bf16.mxu0 0
        %2428 = vmatpush1.bf16.msra.mxu0 %v2386
        %2429 = vmatprep.subr.bf16.mxu0 0
        %2430 = vmatpush1.bf16.msra.mxu0 %v2387
        %2431 = vmatprep.subr.bf16.mxu0 0
        %2432 = vmatpush1.bf16.msra.mxu0 %v2388
        %2433 = vmatprep.subr.bf16.mxu0 0
        %2434 = vmatpush1.bf16.msra.mxu0 %v2389
        %2435 = vmatprep.subr.bf16.mxu0 0
        %2436 = vmatpush1.bf16.msra.mxu0 %v2390
        %2437 = vmatprep.subr.bf16.mxu0 0
        %2438 = vmatpush1.bf16.msra.mxu0 %v2391
        %2439 = vmatprep.subr.bf16.mxu0 0
        %2440 = vmatpush1.bf16.msra.mxu0 %v2392
        %2441 = vmatprep.mubr.bf16.mxu0 %v2273
        %2442 = vmatmul.mubr.bf16.gmra.mrb[0].mxu0 %v2272
        %v2443 = vpop.f32.mrb[0].mxu0
        %v2444 = vadd.f32 %v2311, %v2443
        %v2445 = vpop.f32.mrb[0].mxu0
        %v2446 = vpop.f32.mrb[0].mxu0
        %v2447 = vpop.f32.mrb[0].mxu0
        %2448 = vdwg.mxu0
        %v2449 = vadd.f32 %v2164, %v2444
        %s2450 = scalar_lea.vmem %s12, 2
        %v2451 = vld [vmem:[%s2450] sm:$0x3]
        %v2452 = vsel %vm544, %v2449, 0.0
        %2453 = vadd.xlane.f32.xlu0 %v2452
        %v2454 = vpop.xlane.xlu0 %2453
        %v2455 = vmul.f32 %v2454, %v2144
        %v2456 = vsub.f32 %v2449, %v2455
        %v2457 = vmul.f32 %v2456, %v2456
        %v2458 = vsel %vm544, %v2457, 0.0
        %2459 = vadd.xlane.f32.xlu0 %v2458
        %v2460 = vpop.xlane.xlu0 %2459
        %v2461 = vmul.f32 %v2460, %v2144
        %v2462 = vadd.f32 %v2461, 1e-05
        %v2463 = vrsqrt.pop %v2462
        %v2464 = vmul.f32 %v2456, %v2463
        %v2465 = vlaneseq
        %v2466 = vshrl.u32 %v2465, 7
        %v2467 = vsub.s32 0, %v2466
        %v2468 = vrot.slane %v2451, %v2467
        %v2469 = vmul.f32 %v2464, %v2468
        %v2470 = vlaneseq
        %v2471 = vshrl.u32 %v2470, 7
        %v2472 = vsub.s32 1, %v2471
        %v2473 = vrot.slane %v2451, %v2472
        %v2474 = vadd.f32 %v2469, %v2473
        %s2475 = smul.u32 %s45, 128
        %s2476 = sld [smem:[#allocation6 + %s2475]]
        %s2477 = scalar_lea.vmem %s15, %s2476
        %v2478 = vld [vmem:[%s2477] sm:$0x1]
        %v2479 = vld [vmem:[%s16] sm:$0x1]
        %v2480 = vadd.f32 %v2478, %v2479
        %vm2481 = vcmask 516096
        %2482 = vst.msk [vmem:[#allocation2] sm:$0x1] %vm2481, %v2480
        %s2483 = sadd.s32 %s2475, 1
        %s2484 = sld [smem:[#allocation6 + %s2483]]
        %s2485 = scalar_lea.vmem %s15, %s2484
        %v2486 = vld [vmem:[%s2485] sm:$0x1]
        %v2487 = vld [vmem:[%s16 + $0x1] sm:$0x1]
        %v2488 = vadd.f32 %v2486, %v2487
        %2489 = vst.msk [vmem:[#allocation2 + $0x1] sm:$0x1] %vm2481, %v2488
        %s2490 = sadd.s32 %s2475, 2
        %s2491 = sld [smem:[#allocation6 + %s2490]]
        %s2492 = scalar_lea.vmem %s15, %s2491
        %v2493 = vld [vmem:[%s2492] sm:$0x1]
        %v2494 = vld [vmem:[%s16 + $0x2] sm:$0x1]
        %v2495 = vadd.f32 %v2493, %v2494
        %2496 = vst.msk [vmem:[#allocation2 + $0x2] sm:$0x1] %vm2481, %v2495
        %s2497 = sadd.s32 %s2475, 3
        %s2498 = sld [smem:[#allocation6 + %s2497]]
        %s2499 = scalar_lea.vmem %s15, %s2498
        %v2500 = vld [vmem:[%s2499] sm:$0x1]
        %v2501 = vld [vmem:[%s16 + $0x3] sm:$0x1]
        %v2502 = vadd.f32 %v2500, %v2501
        %2503 = vst.msk [vmem:[#allocation2 + $0x3] sm:$0x1] %vm2481, %v2502
        %s2504 = sadd.s32 %s2475, 4
        %s2505 = sld [smem:[#allocation6 + %s2504]]
        %s2506 = scalar_lea.vmem %s15, %s2505
        %v2507 = vld [vmem:[%s2506] sm:$0x1]
        %v2508 = vld [vmem:[%s16 + $0x4] sm:$0x1]
        %v2509 = vadd.f32 %v2507, %v2508
        %2510 = vst.msk [vmem:[#allocation2 + $0x4] sm:$0x1] %vm2481, %v2509
        %s2511 = sadd.s32 %s2475, 5
        %s2512 = sld [smem:[#allocation6 + %s2511]]
        %s2513 = scalar_lea.vmem %s15, %s2512
        %v2514 = vld [vmem:[%s2513] sm:$0x1]
        %v2515 = vld [vmem:[%s16 + $0x5] sm:$0x1]
        %v2516 = vadd.f32 %v2514, %v2515
        %2517 = vst.msk [vmem:[#allocation2 + $0x5] sm:$0x1] %vm2481, %v2516
        %s2518 = sadd.s32 %s2475, 6
        %s2519 = sld [smem:[#allocation6 + %s2518]]
        %s2520 = scalar_lea.vmem %s15, %s2519
        %v2521 = vld [vmem:[%s2520] sm:$0x1]
        %v2522 = vld [vmem:[%s16 + $0x6] sm:$0x1]
        %v2523 = vadd.f32 %v2521, %v2522
        %2524 = vst.msk [vmem:[#allocation2 + $0x6] sm:$0x1] %vm2481, %v2523
        %s2525 = sadd.s32 %s2475, 7
        %s2526 = sld [smem:[#allocation6 + %s2525]]
        %s2527 = scalar_lea.vmem %s15, %s2526
        %v2528 = vld [vmem:[%s2527] sm:$0x1]
        %v2529 = vld [vmem:[%s16 + $0x7] sm:$0x1]
        %v2530 = vadd.f32 %v2528, %v2529
        %2531 = vst.msk [vmem:[#allocation2 + $0x7] sm:$0x1] %vm2481, %v2530
        %v2532 = vld [vmem:[#allocation2] sm:$0xff]
        %v2533 = vpack.c.bf16 %v2532, %v2532
        %s2534 = scalar_lea.vmem %s4, 384
        %v2535 = vld [vmem:[%s2534] sm:$0xf]
        %v2536 = vld [vmem:[%s2534 + $0x4] sm:$0xf]
        %v2537 = vld [vmem:[%s2534 + $0x8] sm:$0xf]
        %v2538 = vld [vmem:[%s2534 + $0xc] sm:$0xf]
        %v2539 = vld [vmem:[%s2534 + $0x10] sm:$0xf]
        %v2540 = vld [vmem:[%s2534 + $0x14] sm:$0xf]
        %v2541 = vld [vmem:[%s2534 + $0x18] sm:$0xf]
        %v2542 = vld [vmem:[%s2534 + $0x1c] sm:$0xf]
        %s2543 = scalar_lea.vmem %s5, 12
        %v2544 = vld [vmem:[%s2543] sm:$0x1]
        %v2546 = vlaneseq
        %v2547 = vshrl.u32 %v2546, 7
        %v2548 = vsub.s32 0, %v2547
        %v2549 = vrot.slane %v2544, %v2548
        %v2559 = vunpack.c.l.b16 %v2535
        %v2560 = vunpack.c.l.b16 %v2536
        %v2561 = vunpack.c.l.b16 %v2537
        %v2562 = vunpack.c.l.b16 %v2538
        %v2563 = vunpack.c.l.b16 %v2539
        %v2564 = vunpack.c.l.b16 %v2540
        %v2565 = vunpack.c.l.b16 %v2541
        %v2566 = vunpack.c.l.b16 %v2542
        %v2567 = vpack.c.b16 %v2560, %v2559
        %v2568 = vpack.c.b16 %v2562, %v2561
        %v2569 = vpack.c.b16 %v2564, %v2563
        %v2570 = vpack.c.b16 %v2566, %v2565
        %v2576 = vsel %vm544, %v2533, 0
        %2578 = vmatprep.subr.bf16.mxu0 0
        %2579 = vmatpush1.bf16.msra.mxu0 %v2567
        %2580 = vmatprep.subr.bf16.mxu0 0
        %2581 = vmatpush1.bf16.msra.mxu0 %v2568
        %2582 = vmatprep.subr.bf16.mxu0 0
        %2583 = vmatpush1.bf16.msra.mxu0 %v2569
        %2584 = vmatprep.subr.bf16.mxu0 0
        %2585 = vmatpush1.bf16.msra.mxu0 %v2570
        %2586 = vmatprep.subr.bf16.mxu0 0
        %2587 = vmatpush1.bf16.msra.mxu0 0
        %2588 = vmatprep.subr.bf16.mxu0 0
        %2589 = vmatpush1.bf16.msra.mxu0 0
        %2590 = vmatprep.subr.bf16.mxu0 0
        %2591 = vmatpush1.bf16.msra.mxu0 0
        %2592 = vmatprep.subr.bf16.mxu0 0
        %2593 = vmatpush1.bf16.msra.mxu0 0
        %2594 = vmatprep.subr.bf16.mxu0 0
        %2595 = vmatpush1.bf16.msra.mxu0 0
        %2596 = vmatprep.subr.bf16.mxu0 0
        %2597 = vmatpush1.bf16.msra.mxu0 0
        %2598 = vmatprep.subr.bf16.mxu0 0
        %2599 = vmatpush1.bf16.msra.mxu0 0
        %2600 = vmatprep.subr.bf16.mxu0 0
        %2601 = vmatpush1.bf16.msra.mxu0 0
        %2602 = vmatprep.subr.bf16.mxu0 0
        %2603 = vmatpush1.bf16.msra.mxu0 0
        %2604 = vmatprep.subr.bf16.mxu0 0
        %2605 = vmatpush1.bf16.msra.mxu0 0
        %2606 = vmatprep.subr.bf16.mxu0 0
        %2607 = vmatpush1.bf16.msra.mxu0 0
        %2608 = vmatprep.subr.bf16.mxu0 0
        %2609 = vmatpush1.bf16.msra.mxu0 0
        %2610 = vmatprep.mubr.bf16.mxu0 0
        %2611 = vmatmul.mubr.bf16.gmra.mrb[0].mxu0 %v2576
        %v2612 = vpop.f32.mrb[0].mxu0
        %v2613 = vadd.f32 %v2549, %v2612
        %v2614 = vpop.f32.mrb[0].mxu0
        %v2615 = vpop.f32.mrb[0].mxu0
        %v2616 = vpop.f32.mrb[0].mxu0
        %2617 = vdwg.mxu0
        %v2618 = vpack.c.bf16 %v2613, %v2613
        %s2619 = scalar_lea.vmem %s4, 512
        %v2620 = vld [vmem:[%s2619] sm:$0xf]
        %v2621 = vld [vmem:[%s2619 + $0x4] sm:$0xf]
        %v2622 = vld [vmem:[%s2619 + $0x8] sm:$0xf]
        %v2623 = vld [vmem:[%s2619 + $0xc] sm:$0xf]
        %v2624 = vld [vmem:[%s2619 + $0x10] sm:$0xf]
        %v2625 = vld [vmem:[%s2619 + $0x14] sm:$0xf]
        %v2626 = vld [vmem:[%s2619 + $0x18] sm:$0xf]
        %v2627 = vld [vmem:[%s2619 + $0x1c] sm:$0xf]
        %s2628 = scalar_lea.vmem %s5, 16
        %v2629 = vld [vmem:[%s2628] sm:$0x1]
        %v2631 = vlaneseq
        %v2632 = vshrl.u32 %v2631, 7
        %v2633 = vsub.s32 0, %v2632
        %v2634 = vrot.slane %v2629, %v2633
        %v2644 = vunpack.c.l.b16 %v2620
        %v2645 = vunpack.c.l.b16 %v2621
        %v2646 = vunpack.c.l.b16 %v2622
        %v2647 = vunpack.c.l.b16 %v2623
        %v2648 = vunpack.c.l.b16 %v2624
        %v2649 = vunpack.c.l.b16 %v2625
        %v2650 = vunpack.c.l.b16 %v2626
        %v2651 = vunpack.c.l.b16 %v2627
        %v2652 = vpack.c.b16 %v2645, %v2644
        %v2653 = vpack.c.b16 %v2647, %v2646
        %v2654 = vpack.c.b16 %v2649, %v2648
        %v2655 = vpack.c.b16 %v2651, %v2650
        %2660 = vmatprep.subr.bf16.mxu0 0
        %2661 = vmatpush1.bf16.msra.mxu0 %v2652
        %2662 = vmatprep.subr.bf16.mxu0 0
        %2663 = vmatpush1.bf16.msra.mxu0 %v2653
        %2664 = vmatprep.subr.bf16.mxu0 0
        %2665 = vmatpush1.bf16.msra.mxu0 %v2654
        %2666 = vmatprep.subr.bf16.mxu0 0
        %2667 = vmatpush1.bf16.msra.mxu0 %v2655
        %2668 = vmatprep.subr.bf16.mxu0 0
        %2669 = vmatpush1.bf16.msra.mxu0 0
        %2670 = vmatprep.subr.bf16.mxu0 0
        %2671 = vmatpush1.bf16.msra.mxu0 0
        %2672 = vmatprep.subr.bf16.mxu0 0
        %2673 = vmatpush1.bf16.msra.mxu0 0
        %2674 = vmatprep.subr.bf16.mxu0 0
        %2675 = vmatpush1.bf16.msra.mxu0 0
        %2676 = vmatprep.subr.bf16.mxu0 0
        %2677 = vmatpush1.bf16.msra.mxu0 0
        %2678 = vmatprep.subr.bf16.mxu0 0
        %2679 = vmatpush1.bf16.msra.mxu0 0
        %2680 = vmatprep.subr.bf16.mxu0 0
        %2681 = vmatpush1.bf16.msra.mxu0 0
        %2682 = vmatprep.subr.bf16.mxu0 0
        %2683 = vmatpush1.bf16.msra.mxu0 0
        %2684 = vmatprep.subr.bf16.mxu0 0
        %2685 = vmatpush1.bf16.msra.mxu0 0
        %2686 = vmatprep.subr.bf16.mxu0 0
        %2687 = vmatpush1.bf16.msra.mxu0 0
        %2688 = vmatprep.subr.bf16.mxu0 0
        %2689 = vmatpush1.bf16.msra.mxu0 0
        %2690 = vmatprep.subr.bf16.mxu0 0
        %2691 = vmatpush1.bf16.msra.mxu0 0
        %2692 = vmatprep.mubr.bf16.mxu0 0
        %2693 = vmatmul.mubr.bf16.gmra.mrb[0].mxu0 %v2576
        %v2694 = vpop.f32.mrb[0].mxu0
        %v2695 = vadd.f32 %v2634, %v2694
        %v2696 = vpop.f32.mrb[0].mxu0
        %v2697 = vpop.f32.mrb[0].mxu0
        %v2698 = vpop.f32.mrb[0].mxu0
        %2699 = vdwg.mxu0
        %v2700 = vpack.c.bf16 %v2695, %v2695
        %s2701 = scalar_lea.vmem %s4, 640
        %v2702 = vld [vmem:[%s2701] sm:$0xf]
        %v2703 = vld [vmem:[%s2701 + $0x4] sm:$0xf]
        %v2704 = vld [vmem:[%s2701 + $0x8] sm:$0xf]
        %v2705 = vld [vmem:[%s2701 + $0xc] sm:$0xf]
        %v2706 = vld [vmem:[%s2701 + $0x10] sm:$0xf]
        %v2707 = vld [vmem:[%s2701 + $0x14] sm:$0xf]
        %v2708 = vld [vmem:[%s2701 + $0x18] sm:$0xf]
        %v2709 = vld [vmem:[%s2701 + $0x1c] sm:$0xf]
        %s2710 = scalar_lea.vmem %s5, 20
        %v2711 = vld [vmem:[%s2710] sm:$0x1]
        %v2713 = vlaneseq
        %v2714 = vshrl.u32 %v2713, 7
        %v2715 = vsub.s32 0, %v2714
        %v2716 = vrot.slane %v2711, %v2715
        %v2726 = vunpack.c.l.b16 %v2702
        %v2727 = vunpack.c.l.b16 %v2703
        %v2728 = vunpack.c.l.b16 %v2704
        %v2729 = vunpack.c.l.b16 %v2705
        %v2730 = vunpack.c.l.b16 %v2706
        %v2731 = vunpack.c.l.b16 %v2707
        %v2732 = vunpack.c.l.b16 %v2708
        %v2733 = vunpack.c.l.b16 %v2709
        %v2734 = vpack.c.b16 %v2727, %v2726
        %v2735 = vpack.c.b16 %v2729, %v2728
        %v2736 = vpack.c.b16 %v2731, %v2730
        %v2737 = vpack.c.b16 %v2733, %v2732
        %2742 = vmatprep.subr.bf16.mxu0 0
        %2743 = vmatpush1.bf16.msra.mxu0 %v2734
        %2744 = vmatprep.subr.bf16.mxu0 0
        %2745 = vmatpush1.bf16.msra.mxu0 %v2735
        %2746 = vmatprep.subr.bf16.mxu0 0
        %2747 = vmatpush1.bf16.msra.mxu0 %v2736
        %2748 = vmatprep.subr.bf16.mxu0 0
        %2749 = vmatpush1.bf16.msra.mxu0 %v2737
        %2750 = vmatprep.subr.bf16.mxu0 0
        %2751 = vmatpush1.bf16.msra.mxu0 0
        %2752 = vmatprep.subr.bf16.mxu0 0
        %2753 = vmatpush1.bf16.msra.mxu0 0
        %2754 = vmatprep.subr.bf16.mxu0 0
        %2755 = vmatpush1.bf16.msra.mxu0 0
        %2756 = vmatprep.subr.bf16.mxu0 0
        %2757 = vmatpush1.bf16.msra.mxu0 0
        %2758 = vmatprep.subr.bf16.mxu0 0
        %2759 = vmatpush1.bf16.msra.mxu0 0
        %2760 = vmatprep.subr.bf16.mxu0 0
        %2761 = vmatpush1.bf16.msra.mxu0 0
        %2762 = vmatprep.subr.bf16.mxu0 0
        %2763 = vmatpush1.bf16.msra.mxu0 0
        %2764 = vmatprep.subr.bf16.mxu0 0
        %2765 = vmatpush1.bf16.msra.mxu0 0
        %2766 = vmatprep.subr.bf16.mxu0 0
        %2767 = vmatpush1.bf16.msra.mxu0 0
        %2768 = vmatprep.subr.bf16.mxu0 0
        %2769 = vmatpush1.bf16.msra.mxu0 0
        %2770 = vmatprep.subr.bf16.mxu0 0
        %2771 = vmatpush1.bf16.msra.mxu0 0
        %2772 = vmatprep.subr.bf16.mxu0 0
        %2773 = vmatpush1.bf16.msra.mxu0 0
        %2774 = vmatprep.mubr.bf16.mxu0 0
        %2775 = vmatmul.mubr.bf16.gmra.mrb[0].mxu0 %v2576
        %v2776 = vpop.f32.mrb[0].mxu0
        %v2777 = vadd.f32 %v2716, %v2776
        %v2778 = vpop.f32.mrb[0].mxu0
        %v2779 = vpop.f32.mrb[0].mxu0
        %v2780 = vpop.f32.mrb[0].mxu0
        %2781 = vdwg.mxu0
        %v2782 = vpack.c.bf16 %v2777, %v2777
        %v2784 = vsel %vm753, %v2618, 0
        %v2787 = vsel %vm753, %v2700, 0
        %2789 = vmatprep.subr.bf16.mxu0 0
        %2790 = vmatpush1.bf16.xpose.msra.mxu0 %v2787
        %2791 = vmatprep.subr.bf16.mxu0 0
        %2792 = vmatpush1.bf16.xpose.msra.mxu0 0
        %2793 = vmatprep.subr.bf16.mxu0 0
        %2794 = vmatpush1.bf16.xpose.msra.mxu0 0
        %2795 = vmatprep.subr.bf16.mxu0 0
        %2796 = vmatpush1.bf16.xpose.msra.mxu0 0
        %2797 = vmatprep.subr.bf16.mxu0 0
        %2798 = vmatpush1.bf16.xpose.msra.mxu0 0
        %2799 = vmatprep.subr.bf16.mxu0 0
        %2800 = vmatpush1.bf16.xpose.msra.mxu0 0
        %2801 = vmatprep.subr.bf16.mxu0 0
        %2802 = vmatpush1.bf16.xpose.msra.mxu0 0
        %2803 = vmatprep.subr.bf16.mxu0 0
        %2804 = vmatpush1.bf16.xpose.msra.mxu0 0
        %2805 = vmatprep.subr.bf16.mxu0 0
        %2806 = vmatpush1.bf16.xpose.msra.mxu0 0
        %2807 = vmatprep.subr.bf16.mxu0 0
        %2808 = vmatpush1.bf16.xpose.msra.mxu0 0
        %2809 = vmatprep.subr.bf16.mxu0 0
        %2810 = vmatpush1.bf16.xpose.msra.mxu0 0
        %2811 = vmatprep.subr.bf16.mxu0 0
        %2812 = vmatpush1.bf16.xpose.msra.mxu0 0
        %2813 = vmatprep.subr.bf16.mxu0 0
        %2814 = vmatpush1.bf16.xpose.msra.mxu0 0
        %2815 = vmatprep.subr.bf16.mxu0 0
        %2816 = vmatpush1.bf16.xpose.msra.mxu0 0
        %2817 = vmatprep.subr.bf16.mxu0 0
        %2818 = vmatpush1.bf16.xpose.msra.mxu0 0
        %2819 = vmatprep.subr.bf16.mxu0 0
        %2820 = vmatpush1.bf16.xpose.msra.mxu0 0
        %2821 = vmatprep.mubr.bf16.mxu0 0
        %2822 = vmatmul.mubr.bf16.gmra.mrb[0].mxu0 %v2784
        %v2823 = vpop.f32.mrb[0].mxu0
        %v2824 = vadd.f32 0.0, %v2823
        %v2825 = vpop.f32.mrb[0].mxu0
        %v2826 = vpop.f32.mrb[0].mxu0
        %v2827 = vpop.f32.mrb[0].mxu0
        %2828 = vdwg.mxu0
        %v2829 = vmul.f32 %v2824, 0.25
        %v2830 = vadd.f32 %v2829, %v500
        %v2831 = vsel %vm802, %v2830, -inf
        %2832 = vmax.xlane.f32.xlu0 %v2831
        %v2833 = vpop.xlane.xlu0 %2832
        %v2834 = vsub.f32 %v2830, %v2833
        %v2835 = vmul.f32 %v2834, 1.442695
        %v2836 = vpow.pop %v2835
        %v2837 = vsel %vm802, %v2836, 0.0
        %2838 = vadd.xlane.f32.xlu0 %v2837
        %v2839 = vpop.xlane.xlu0 %2838
        %v2840 = vrcp.pop %v2839
        %v2841 = vmul.f32 %v2836, %v2840
        %v2842 = vpack.c.bf16 %v2841, %v2841
        %v2844 = vsel %vm802, %v2842, 0
        %v2847 = vsel %vm818, %v2782, 0
        %2849 = vmatprep.subr.bf16.mxu0 0
        %2850 = vmatpush1.bf16.msra.mxu0 %v2847
        %2851 = vmatprep.subr.bf16.mxu0 0
        %2852 = vmatpush1.bf16.msra.mxu0 0
        %2853 = vmatprep.subr.bf16.mxu0 0
        %2854 = vmatpush1.bf16.msra.mxu0 0
        %2855 = vmatprep.subr.bf16.mxu0 0
        %2856 = vmatpush1.bf16.msra.mxu0 0
        %2857 = vmatprep.subr.bf16.mxu0 0
        %2858 = vmatpush1.bf16.msra.mxu0 0
        %2859 = vmatprep.subr.bf16.mxu0 0
        %2860 = vmatpush1.bf16.msra.mxu0 0
        %2861 = vmatprep.subr.bf16.mxu0 0
        %2862 = vmatpush1.bf16.msra.mxu0 0
        %2863 = vmatprep.subr.bf16.mxu0 0
        %2864 = vmatpush1.bf16.msra.mxu0 0
        %2865 = vmatprep.subr.bf16.mxu0 0
        %2866 = vmatpush1.bf16.msra.mxu0 0
        %2867 = vmatprep.subr.bf16.mxu0 0
        %2868 = vmatpush1.bf16.msra.mxu0 0
        %2869 = vmatprep.subr.bf16.mxu0 0
        %2870 = vmatpush1.bf16.msra.mxu0 0
        %2871 = vmatprep.subr.bf16.mxu0 0
        %2872 = vmatpush1.bf16.msra.mxu0 0
        %2873 = vmatprep.subr.bf16.mxu0 0
        %2874 = vmatpush1.bf16.msra.mxu0 0
        %2875 = vmatprep.subr.bf16.mxu0 0
        %2876 = vmatpush1.bf16.msra.mxu0 0
        %2877 = vmatprep.subr.bf16.mxu0 0
        %2878 = vmatpush1.bf16.msra.mxu0 0
        %2879 = vmatprep.subr.bf16.mxu0 0
        %2880 = vmatpush1.bf16.msra.mxu0 0
        %2881 = vmatprep.mubr.bf16.mxu0 0
        %2882 = vmatmul.mubr.bf16.gmra.mrb[0].mxu0 %v2844
        %v2883 = vpop.f32.mrb[0].mxu0
        %v2884 = vadd.f32 0.0, %v2883
        %v2885 = vpop.f32.mrb[0].mxu0
        %v2886 = vpop.f32.mrb[0].mxu0
        %v2887 = vpop.f32.mrb[0].mxu0
        %2888 = vdwg.mxu0
        %v2889 = vpack.c.bf16 %v2884, %v2884
        %s2890 = scalar_lea.vmem %s6, 32
        %v2891 = vld [vmem:[%s2890] sm:$0xf]
        %v2892 = vld [vmem:[%s2890 + $0x4] sm:$0xf]
        %s2893 = scalar_lea.vmem %s4, 416
        %v2894 = vld [vmem:[%s2893] sm:$0xf]
        %v2895 = vld [vmem:[%s2893 + $0x4] sm:$0xf]
        %v2896 = vld [vmem:[%s2893 + $0x8] sm:$0xf]
        %v2897 = vld [vmem:[%s2893 + $0xc] sm:$0xf]
        %v2898 = vld [vmem:[%s2893 + $0x10] sm:$0xf]
        %v2899 = vld [vmem:[%s2893 + $0x14] sm:$0xf]
        %v2900 = vld [vmem:[%s2893 + $0x18] sm:$0xf]
        %v2901 = vld [vmem:[%s2893 + $0x1c] sm:$0xf]
        %s2902 = scalar_lea.vmem %s5, 13
        %v2903 = vld [vmem:[%s2902] sm:$0x1]
        %v2905 = vlaneseq
        %v2906 = vshrl.u32 %v2905, 7
        %v2907 = vsub.s32 0, %v2906
        %v2908 = vrot.slane %v2903, %v2907
        %v2918 = vunpack.c.l.b16 %v2894
        %v2919 = vunpack.c.l.b16 %v2895
        %v2920 = vunpack.c.l.b16 %v2896
        %v2921 = vunpack.c.l.b16 %v2897
        %v2922 = vunpack.c.l.b16 %v2898
        %v2923 = vunpack.c.l.b16 %v2899
        %v2924 = vunpack.c.l.b16 %v2900
        %v2925 = vunpack.c.l.b16 %v2901
        %v2926 = vpack.c.b16 %v2919, %v2918
        %v2927 = vpack.c.b16 %v2921, %v2920
        %v2928 = vpack.c.b16 %v2923, %v2922
        %v2929 = vpack.c.b16 %v2925, %v2924
        %2934 = vmatprep.subr.bf16.mxu0 0
        %2935 = vmatpush1.bf16.msra.mxu0 %v2926
        %2936 = vmatprep.subr.bf16.mxu0 0
        %2937 = vmatpush1.bf16.msra.mxu0 %v2927
        %2938 = vmatprep.subr.bf16.mxu0 0
        %2939 = vmatpush1.bf16.msra.mxu0 %v2928
        %2940 = vmatprep.subr.bf16.mxu0 0
        %2941 = vmatpush1.bf16.msra.mxu0 %v2929
        %2942 = vmatprep.subr.bf16.mxu0 0
        %2943 = vmatpush1.bf16.msra.mxu0 0
        %2944 = vmatprep.subr.bf16.mxu0 0
        %2945 = vmatpush1.bf16.msra.mxu0 0
        %2946 = vmatprep.subr.bf16.mxu0 0
        %2947 = vmatpush1.bf16.msra.mxu0 0
        %2948 = vmatprep.subr.bf16.mxu0 0
        %2949 = vmatpush1.bf16.msra.mxu0 0
        %2950 = vmatprep.subr.bf16.mxu0 0
        %2951 = vmatpush1.bf16.msra.mxu0 0
        %2952 = vmatprep.subr.bf16.mxu0 0
        %2953 = vmatpush1.bf16.msra.mxu0 0
        %2954 = vmatprep.subr.bf16.mxu0 0
        %2955 = vmatpush1.bf16.msra.mxu0 0
        %2956 = vmatprep.subr.bf16.mxu0 0
        %2957 = vmatpush1.bf16.msra.mxu0 0
        %2958 = vmatprep.subr.bf16.mxu0 0
        %2959 = vmatpush1.bf16.msra.mxu0 0
        %2960 = vmatprep.subr.bf16.mxu0 0
        %2961 = vmatpush1.bf16.msra.mxu0 0
        %2962 = vmatprep.subr.bf16.mxu0 0
        %2963 = vmatpush1.bf16.msra.mxu0 0
        %2964 = vmatprep.subr.bf16.mxu0 0
        %2965 = vmatpush1.bf16.msra.mxu0 0
        %2966 = vmatprep.mubr.bf16.mxu0 0
        %2967 = vmatmul.mubr.bf16.gmra.mrb[0].mxu0 %v2576
        %v2968 = vpop.f32.mrb[0].mxu0
        %v2969 = vadd.f32 %v2908, %v2968
        %v2970 = vpop.f32.mrb[0].mxu0
        %v2971 = vpop.f32.mrb[0].mxu0
        %v2972 = vpop.f32.mrb[0].mxu0
        %2973 = vdwg.mxu0
        %v2974 = vpack.c.bf16 %v2969, %v2969
        %s2975 = scalar_lea.vmem %s4, 544
        %v2976 = vld [vmem:[%s2975] sm:$0xf]
        %v2977 = vld [vmem:[%s2975 + $0x4] sm:$0xf]
        %v2978 = vld [vmem:[%s2975 + $0x8] sm:$0xf]
        %v2979 = vld [vmem:[%s2975 + $0xc] sm:$0xf]
        %v2980 = vld [vmem:[%s2975 + $0x10] sm:$0xf]
        %v2981 = vld [vmem:[%s2975 + $0x14] sm:$0xf]
        %v2982 = vld [vmem:[%s2975 + $0x18] sm:$0xf]
        %v2983 = vld [vmem:[%s2975 + $0x1c] sm:$0xf]
        %s2984 = scalar_lea.vmem %s5, 17
        %v2985 = vld [vmem:[%s2984] sm:$0x1]
        %v2987 = vlaneseq
        %v2988 = vshrl.u32 %v2987, 7
        %v2989 = vsub.s32 0, %v2988
        %v2990 = vrot.slane %v2985, %v2989
        %v3000 = vunpack.c.l.b16 %v2976
        %v3001 = vunpack.c.l.b16 %v2977
        %v3002 = vunpack.c.l.b16 %v2978
        %v3003 = vunpack.c.l.b16 %v2979
        %v3004 = vunpack.c.l.b16 %v2980
        %v3005 = vunpack.c.l.b16 %v2981
        %v3006 = vunpack.c.l.b16 %v2982
        %v3007 = vunpack.c.l.b16 %v2983
        %v3008 = vpack.c.b16 %v3001, %v3000
        %v3009 = vpack.c.b16 %v3003, %v3002
        %v3010 = vpack.c.b16 %v3005, %v3004
        %v3011 = vpack.c.b16 %v3007, %v3006
        %3016 = vmatprep.subr.bf16.mxu0 0
        %3017 = vmatpush1.bf16.msra.mxu0 %v3008
        %3018 = vmatprep.subr.bf16.mxu0 0
        %3019 = vmatpush1.bf16.msra.mxu0 %v3009
        %3020 = vmatprep.subr.bf16.mxu0 0
        %3021 = vmatpush1.bf16.msra.mxu0 %v3010
        %3022 = vmatprep.subr.bf16.mxu0 0
        %3023 = vmatpush1.bf16.msra.mxu0 %v3011
        %3024 = vmatprep.subr.bf16.mxu0 0
        %3025 = vmatpush1.bf16.msra.mxu0 0
        %3026 = vmatprep.subr.bf16.mxu0 0
        %3027 = vmatpush1.bf16.msra.mxu0 0
        %3028 = vmatprep.subr.bf16.mxu0 0
        %3029 = vmatpush1.bf16.msra.mxu0 0
        %3030 = vmatprep.subr.bf16.mxu0 0
        %3031 = vmatpush1.bf16.msra.mxu0 0
        %3032 = vmatprep.subr.bf16.mxu0 0
        %3033 = vmatpush1.bf16.msra.mxu0 0
        %3034 = vmatprep.subr.bf16.mxu0 0
        %3035 = vmatpush1.bf16.msra.mxu0 0
        %3036 = vmatprep.subr.bf16.mxu0 0
        %3037 = vmatpush1.bf16.msra.mxu0 0
        %3038 = vmatprep.subr.bf16.mxu0 0
        %3039 = vmatpush1.bf16.msra.mxu0 0
        %3040 = vmatprep.subr.bf16.mxu0 0
        %3041 = vmatpush1.bf16.msra.mxu0 0
        %3042 = vmatprep.subr.bf16.mxu0 0
        %3043 = vmatpush1.bf16.msra.mxu0 0
        %3044 = vmatprep.subr.bf16.mxu0 0
        %3045 = vmatpush1.bf16.msra.mxu0 0
        %3046 = vmatprep.subr.bf16.mxu0 0
        %3047 = vmatpush1.bf16.msra.mxu0 0
        %3048 = vmatprep.mubr.bf16.mxu0 0
        %3049 = vmatmul.mubr.bf16.gmra.mrb[0].mxu0 %v2576
        %v3050 = vpop.f32.mrb[0].mxu0
        %v3051 = vadd.f32 %v2990, %v3050
        %v3052 = vpop.f32.mrb[0].mxu0
        %v3053 = vpop.f32.mrb[0].mxu0
        %v3054 = vpop.f32.mrb[0].mxu0
        %3055 = vdwg.mxu0
        %v3056 = vpack.c.bf16 %v3051, %v3051
        %s3057 = scalar_lea.vmem %s4, 672
        %v3058 = vld [vmem:[%s3057] sm:$0xf]
        %v3059 = vld [vmem:[%s3057 + $0x4] sm:$0xf]
        %v3060 = vld [vmem:[%s3057 + $0x8] sm:$0xf]
        %v3061 = vld [vmem:[%s3057 + $0xc] sm:$0xf]
        %v3062 = vld [vmem:[%s3057 + $0x10] sm:$0xf]
        %v3063 = vld [vmem:[%s3057 + $0x14] sm:$0xf]
        %v3064 = vld [vmem:[%s3057 + $0x18] sm:$0xf]
        %v3065 = vld [vmem:[%s3057 + $0x1c] sm:$0xf]
        %s3066 = scalar_lea.vmem %s5, 21
        %v3067 = vld [vmem:[%s3066] sm:$0x1]
        %v3069 = vlaneseq
        %v3070 = vshrl.u32 %v3069, 7
        %v3071 = vsub.s32 0, %v3070
        %v3072 = vrot.slane %v3067, %v3071
        %v3082 = vunpack.c.l.b16 %v3058
        %v3083 = vunpack.c.l.b16 %v3059
        %v3084 = vunpack.c.l.b16 %v3060
        %v3085 = vunpack.c.l.b16 %v3061
        %v3086 = vunpack.c.l.b16 %v3062
        %v3087 = vunpack.c.l.b16 %v3063
        %v3088 = vunpack.c.l.b16 %v3064
        %v3089 = vunpack.c.l.b16 %v3065
        %v3090 = vpack.c.b16 %v3083, %v3082
        %v3091 = vpack.c.b16 %v3085, %v3084
        %v3092 = vpack.c.b16 %v3087, %v3086
        %v3093 = vpack.c.b16 %v3089, %v3088
        %3098 = vmatprep.subr.bf16.mxu0 0
        %3099 = vmatpush1.bf16.msra.mxu0 %v3090
        %3100 = vmatprep.subr.bf16.mxu0 0
        %3101 = vmatpush1.bf16.msra.mxu0 %v3091
        %3102 = vmatprep.subr.bf16.mxu0 0
        %3103 = vmatpush1.bf16.msra.mxu0 %v3092
        %3104 = vmatprep.subr.bf16.mxu0 0
        %3105 = vmatpush1.bf16.msra.mxu0 %v3093
        %3106 = vmatprep.subr.bf16.mxu0 0
        %3107 = vmatpush1.bf16.msra.mxu0 0
        %3108 = vmatprep.subr.bf16.mxu0 0
        %3109 = vmatpush1.bf16.msra.mxu0 0
        %3110 = vmatprep.subr.bf16.mxu0 0
        %3111 = vmatpush1.bf16.msra.mxu0 0
        %3112 = vmatprep.subr.bf16.mxu0 0
        %3113 = vmatpush1.bf16.msra.mxu0 0
        %3114 = vmatprep.subr.bf16.mxu0 0
        %3115 = vmatpush1.bf16.msra.mxu0 0
        %3116 = vmatprep.subr.bf16.mxu0 0
        %3117 = vmatpush1.bf16.msra.mxu0 0
        %3118 = vmatprep.subr.bf16.mxu0 0
        %3119 = vmatpush1.bf16.msra.mxu0 0
        %3120 = vmatprep.subr.bf16.mxu0 0
        %3121 = vmatpush1.bf16.msra.mxu0 0
        %3122 = vmatprep.subr.bf16.mxu0 0
        %3123 = vmatpush1.bf16.msra.mxu0 0
        %3124 = vmatprep.subr.bf16.mxu0 0
        %3125 = vmatpush1.bf16.msra.mxu0 0
        %3126 = vmatprep.subr.bf16.mxu0 0
        %3127 = vmatpush1.bf16.msra.mxu0 0
        %3128 = vmatprep.subr.bf16.mxu0 0
        %3129 = vmatpush1.bf16.msra.mxu0 0
        %3130 = vmatprep.mubr.bf16.mxu0 0
        %3131 = vmatmul.mubr.bf16.gmra.mrb[0].mxu0 %v2576
        %v3132 = vpop.f32.mrb[0].mxu0
        %v3133 = vadd.f32 %v3072, %v3132
        %v3134 = vpop.f32.mrb[0].mxu0
        %v3135 = vpop.f32.mrb[0].mxu0
        %v3136 = vpop.f32.mrb[0].mxu0
        %3137 = vdwg.mxu0
        %v3138 = vpack.c.bf16 %v3133, %v3133
        %v3140 = vsel %vm753, %v2974, 0
        %v3143 = vsel %vm753, %v3056, 0
        %3145 = vmatprep.subr.bf16.mxu0 0
        %3146 = vmatpush1.bf16.xpose.msra.mxu0 %v3143
        %3147 = vmatprep.subr.bf16.mxu0 0
        %3148 = vmatpush1.bf16.xpose.msra.mxu0 0
        %3149 = vmatprep.subr.bf16.mxu0 0
        %3150 = vmatpush1.bf16.xpose.msra.mxu0 0
        %3151 = vmatprep.subr.bf16.mxu0 0
        %3152 = vmatpush1.bf16.xpose.msra.mxu0 0
        %3153 = vmatprep.subr.bf16.mxu0 0
        %3154 = vmatpush1.bf16.xpose.msra.mxu0 0
        %3155 = vmatprep.subr.bf16.mxu0 0
        %3156 = vmatpush1.bf16.xpose.msra.mxu0 0
        %3157 = vmatprep.subr.bf16.mxu0 0
        %3158 = vmatpush1.bf16.xpose.msra.mxu0 0
        %3159 = vmatprep.subr.bf16.mxu0 0
        %3160 = vmatpush1.bf16.xpose.msra.mxu0 0
        %3161 = vmatprep.subr.bf16.mxu0 0
        %3162 = vmatpush1.bf16.xpose.msra.mxu0 0
        %3163 = vmatprep.subr.bf16.mxu0 0
        %3164 = vmatpush1.bf16.xpose.msra.mxu0 0
        %3165 = vmatprep.subr.bf16.mxu0 0
        %3166 = vmatpush1.bf16.xpose.msra.mxu0 0
        %3167 = vmatprep.subr.bf16.mxu0 0
        %3168 = vmatpush1.bf16.xpose.msra.mxu0 0
        %3169 = vmatprep.subr.bf16.mxu0 0
        %3170 = vmatpush1.bf16.xpose.msra.mxu0 0
        %3171 = vmatprep.subr.bf16.mxu0 0
        %3172 = vmatpush1.bf16.xpose.msra.mxu0 0
        %3173 = vmatprep.subr.bf16.mxu0 0
        %3174 = vmatpush1.bf16.xpose.msra.mxu0 0
        %3175 = vmatprep.subr.bf16.mxu0 0
        %3176 = vmatpush1.bf16.xpose.msra.mxu0 0
        %3177 = vmatprep.mubr.bf16.mxu0 0
        %3178 = vmatmul.mubr.bf16.gmra.mrb[0].mxu0 %v3140
        %v3179 = vpop.f32.mrb[0].mxu0
        %v3180 = vadd.f32 0.0, %v3179
        %v3181 = vpop.f32.mrb[0].mxu0
        %v3182 = vpop.f32.mrb[0].mxu0
        %v3183 = vpop.f32.mrb[0].mxu0
        %3184 = vdwg.mxu0
        %v3185 = vmul.f32 %v3180, 0.25
        %v3186 = vadd.f32 %v3185, %v500
        %v3187 = vsel %vm802, %v3186, -inf
        %3188 = vmax.xlane.f32.xlu0 %v3187
        %v3189 = vpop.xlane.xlu0 %3188
        %v3190 = vsub.f32 %v3186, %v3189
        %v3191 = vmul.f32 %v3190, 1.442695
        %v3192 = vpow.pop %v3191
        %v3193 = vsel %vm802, %v3192, 0.0
        %3194 = vadd.xlane.f32.xlu0 %v3193
        %v3195 = vpop.xlane.xlu0 %3194
        %v3196 = vrcp.pop %v3195
        %v3197 = vmul.f32 %v3192, %v3196
        %v3198 = vpack.c.bf16 %v3197, %v3197
        %v3200 = vsel %vm802, %v3198, 0
        %v3203 = vsel %vm818, %v3138, 0
        %3205 = vmatprep.subr.bf16.mxu0 0
        %3206 = vmatpush1.bf16.msra.mxu0 %v3203
        %3207 = vmatprep.subr.bf16.mxu0 0
        %3208 = vmatpush1.bf16.msra.mxu0 0
        %3209 = vmatprep.subr.bf16.mxu0 0
        %3210 = vmatpush1.bf16.msra.mxu0 0
        %3211 = vmatprep.subr.bf16.mxu0 0
        %3212 = vmatpush1.bf16.msra.mxu0 0
        %3213 = vmatprep.subr.bf16.mxu0 0
        %3214 = vmatpush1.bf16.msra.mxu0 0
        %3215 = vmatprep.subr.bf16.mxu0 0
        %3216 = vmatpush1.bf16.msra.mxu0 0
        %3217 = vmatprep.subr.bf16.mxu0 0
        %3218 = vmatpush1.bf16.msra.mxu0 0
        %3219 = vmatprep.subr.bf16.mxu0 0
        %3220 = vmatpush1.bf16.msra.mxu0 0
        %3221 = vmatprep.subr.bf16.mxu0 0
        %3222 = vmatpush1.bf16.msra.mxu0 0
        %3223 = vmatprep.subr.bf16.mxu0 0
        %3224 = vmatpush1.bf16.msra.mxu0 0
        %3225 = vmatprep.subr.bf16.mxu0 0
        %3226 = vmatpush1.bf16.msra.mxu0 0
        %3227 = vmatprep.subr.bf16.mxu0 0
        %3228 = vmatpush1.bf16.msra.mxu0 0
        %3229 = vmatprep.subr.bf16.mxu0 0
        %3230 = vmatpush1.bf16.msra.mxu0 0
        %3231 = vmatprep.subr.bf16.mxu0 0
        %3232 = vmatpush1.bf16.msra.mxu0 0
        %3233 = vmatprep.subr.bf16.mxu0 0
        %3234 = vmatpush1.bf16.msra.mxu0 0
        %3235 = vmatprep.subr.bf16.mxu0 0
        %3236 = vmatpush1.bf16.msra.mxu0 0
        %3237 = vmatprep.mubr.bf16.mxu0 0
        %3238 = vmatmul.mubr.bf16.gmra.mrb[0].mxu0 %v3200
        %v3239 = vpop.f32.mrb[0].mxu0
        %v3240 = vadd.f32 0.0, %v3239
        %v3241 = vpop.f32.mrb[0].mxu0
        %v3242 = vpop.f32.mrb[0].mxu0
        %v3243 = vpop.f32.mrb[0].mxu0
        %3244 = vdwg.mxu0
        %v3245 = vpack.c.bf16 %v3240, %v3240
        %s3246 = scalar_lea.vmem %s6, 40
        %v3247 = vld [vmem:[%s3246] sm:$0xf]
        %v3248 = vld [vmem:[%s3246 + $0x4] sm:$0xf]
        %v3251 = vunpack.c.l.b16 %v3247
        %v3252 = vunpack.c.l.b16 %v3248
        %v3253 = vpack.c.b16 %v3252, %v3251
        %v3256 = vsel %vm753, %v3245, 0
        %3258 = vmatprep.subr.bf16.mxu0 0
        %3259 = vmatpush1.bf16.msra.mxu0 %v3253
        %3260 = vmatprep.subr.bf16.mxu0 0
        %3261 = vmatpush1.bf16.msra.mxu0 0
        %3262 = vmatprep.subr.bf16.mxu0 0
        %3263 = vmatpush1.bf16.msra.mxu0 0
        %3264 = vmatprep.subr.bf16.mxu0 0
        %3265 = vmatpush1.bf16.msra.mxu0 0
        %3266 = vmatprep.subr.bf16.mxu0 0
        %3267 = vmatpush1.bf16.msra.mxu0 0
        %3268 = vmatprep.subr.bf16.mxu0 0
        %3269 = vmatpush1.bf16.msra.mxu0 0
        %3270 = vmatprep.subr.bf16.mxu0 0
        %3271 = vmatpush1.bf16.msra.mxu0 0
        %3272 = vmatprep.subr.bf16.mxu0 0
        %3273 = vmatpush1.bf16.msra.mxu0 0
        %3274 = vmatprep.subr.bf16.mxu0 0
        %3275 = vmatpush1.bf16.msra.mxu0 0
        %3276 = vmatprep.subr.bf16.mxu0 0
        %3277 = vmatpush1.bf16.msra.mxu0 0
        %3278 = vmatprep.subr.bf16.mxu0 0
        %3279 = vmatpush1.bf16.msra.mxu0 0
        %3280 = vmatprep.subr.bf16.mxu0 0
        %3281 = vmatpush1.bf16.msra.mxu0 0
        %3282 = vmatprep.subr.bf16.mxu0 0
        %3283 = vmatpush1.bf16.msra.mxu0 0
        %3284 = vmatprep.subr.bf16.mxu0 0
        %3285 = vmatpush1.bf16.msra.mxu0 0
        %3286 = vmatprep.subr.bf16.mxu0 0
        %3287 = vmatpush1.bf16.msra.mxu0 0
        %3288 = vmatprep.subr.bf16.mxu0 0
        %3289 = vmatpush1.bf16.msra.mxu0 0
        %3290 = vmatprep.mubr.bf16.mxu0 0
        %3291 = vmatmul.mubr.bf16.gmra.mrb[0].mxu0 %v3256
        %v3292 = vpop.f32.mrb[0].mxu0
        %v3293 = vadd.f32 0.0, %v3292
        %v3294 = vpop.f32.mrb[0].mxu0
        %v3295 = vpop.f32.mrb[0].mxu0
        %v3296 = vpop.f32.mrb[0].mxu0
        %3297 = vdwg.mxu0
        %v3300 = vunpack.c.l.b16 %v2891
        %v3301 = vunpack.c.l.b16 %v2892
        %v3302 = vpack.c.b16 %v3301, %v3300
        %v3305 = vsel %vm753, %v2889, 0
        %3307 = vmatprep.subr.bf16.mxu0 0
        %3308 = vmatpush1.bf16.msra.mxu0 %v3302
        %3309 = vmatprep.subr.bf16.mxu0 0
        %3310 = vmatpush1.bf16.msra.mxu0 0
        %3311 = vmatprep.subr.bf16.mxu0 0
        %3312 = vmatpush1.bf16.msra.mxu0 0
        %3313 = vmatprep.subr.bf16.mxu0 0
        %3314 = vmatpush1.bf16.msra.mxu0 0
        %3315 = vmatprep.subr.bf16.mxu0 0
        %3316 = vmatpush1.bf16.msra.mxu0 0
        %3317 = vmatprep.subr.bf16.mxu0 0
        %3318 = vmatpush1.bf16.msra.mxu0 0
        %3319 = vmatprep.subr.bf16.mxu0 0
        %3320 = vmatpush1.bf16.msra.mxu0 0
        %3321 = vmatprep.subr.bf16.mxu0 0
        %3322 = vmatpush1.bf16.msra.mxu0 0
        %3323 = vmatprep.subr.bf16.mxu0 0
        %3324 = vmatpush1.bf16.msra.mxu0 0
        %3325 = vmatprep.subr.bf16.mxu0 0
        %3326 = vmatpush1.bf16.msra.mxu0 0
        %3327 = vmatprep.subr.bf16.mxu0 0
        %3328 = vmatpush1.bf16.msra.mxu0 0
        %3329 = vmatprep.subr.bf16.mxu0 0
        %3330 = vmatpush1.bf16.msra.mxu0 0
        %3331 = vmatprep.subr.bf16.mxu0 0
        %3332 = vmatpush1.bf16.msra.mxu0 0
        %3333 = vmatprep.subr.bf16.mxu0 0
        %3334 = vmatpush1.bf16.msra.mxu0 0
        %3335 = vmatprep.subr.bf16.mxu0 0
        %3336 = vmatpush1.bf16.msra.mxu0 0
        %3337 = vmatprep.subr.bf16.mxu0 0
        %3338 = vmatpush1.bf16.msra.mxu0 0
        %3339 = vmatprep.mubr.bf16.mxu0 0
        %3340 = vmatmul.mubr.bf16.gmra.mrb[0].mxu0 %v3305
        %v3341 = vpop.f32.mrb[0].mxu0
        %v3342 = vadd.f32 %v3293, %v3341
        %v3343 = vpop.f32.mrb[0].mxu0
        %v3344 = vpop.f32.mrb[0].mxu0
        %v3345 = vpop.f32.mrb[0].mxu0
        %3346 = vdwg.mxu0
        %s3347 = scalar_lea.vmem %s4, 448
        %v3348 = vld [vmem:[%s3347] sm:$0xf]
        %v3349 = vld [vmem:[%s3347 + $0x4] sm:$0xf]
        %v3350 = vld [vmem:[%s3347 + $0x8] sm:$0xf]
        %v3351 = vld [vmem:[%s3347 + $0xc] sm:$0xf]
        %v3352 = vld [vmem:[%s3347 + $0x10] sm:$0xf]
        %v3353 = vld [vmem:[%s3347 + $0x14] sm:$0xf]
        %v3354 = vld [vmem:[%s3347 + $0x18] sm:$0xf]
        %v3355 = vld [vmem:[%s3347 + $0x1c] sm:$0xf]
        %s3356 = scalar_lea.vmem %s5, 14
        %v3357 = vld [vmem:[%s3356] sm:$0x1]
        %v3359 = vlaneseq
        %v3360 = vshrl.u32 %v3359, 7
        %v3361 = vsub.s32 0, %v3360
        %v3362 = vrot.slane %v3357, %v3361
        %v3372 = vunpack.c.l.b16 %v3348
        %v3373 = vunpack.c.l.b16 %v3349
        %v3374 = vunpack.c.l.b16 %v3350
        %v3375 = vunpack.c.l.b16 %v3351
        %v3376 = vunpack.c.l.b16 %v3352
        %v3377 = vunpack.c.l.b16 %v3353
        %v3378 = vunpack.c.l.b16 %v3354
        %v3379 = vunpack.c.l.b16 %v3355
        %v3380 = vpack.c.b16 %v3373, %v3372
        %v3381 = vpack.c.b16 %v3375, %v3374
        %v3382 = vpack.c.b16 %v3377, %v3376
        %v3383 = vpack.c.b16 %v3379, %v3378
        %3388 = vmatprep.subr.bf16.mxu0 0
        %3389 = vmatpush1.bf16.msra.mxu0 %v3380
        %3390 = vmatprep.subr.bf16.mxu0 0
        %3391 = vmatpush1.bf16.msra.mxu0 %v3381
        %3392 = vmatprep.subr.bf16.mxu0 0
        %3393 = vmatpush1.bf16.msra.mxu0 %v3382
        %3394 = vmatprep.subr.bf16.mxu0 0
        %3395 = vmatpush1.bf16.msra.mxu0 %v3383
        %3396 = vmatprep.subr.bf16.mxu0 0
        %3397 = vmatpush1.bf16.msra.mxu0 0
        %3398 = vmatprep.subr.bf16.mxu0 0
        %3399 = vmatpush1.bf16.msra.mxu0 0
        %3400 = vmatprep.subr.bf16.mxu0 0
        %3401 = vmatpush1.bf16.msra.mxu0 0
        %3402 = vmatprep.subr.bf16.mxu0 0
        %3403 = vmatpush1.bf16.msra.mxu0 0
        %3404 = vmatprep.subr.bf16.mxu0 0
        %3405 = vmatpush1.bf16.msra.mxu0 0
        %3406 = vmatprep.subr.bf16.mxu0 0
        %3407 = vmatpush1.bf16.msra.mxu0 0
        %3408 = vmatprep.subr.bf16.mxu0 0
        %3409 = vmatpush1.bf16.msra.mxu0 0
        %3410 = vmatprep.subr.bf16.mxu0 0
        %3411 = vmatpush1.bf16.msra.mxu0 0
        %3412 = vmatprep.subr.bf16.mxu0 0
        %3413 = vmatpush1.bf16.msra.mxu0 0
        %3414 = vmatprep.subr.bf16.mxu0 0
        %3415 = vmatpush1.bf16.msra.mxu0 0
        %3416 = vmatprep.subr.bf16.mxu0 0
        %3417 = vmatpush1.bf16.msra.mxu0 0
        %3418 = vmatprep.subr.bf16.mxu0 0
        %3419 = vmatpush1.bf16.msra.mxu0 0
        %3420 = vmatprep.mubr.bf16.mxu0 0
        %3421 = vmatmul.mubr.bf16.gmra.mrb[0].mxu0 %v2576
        %v3422 = vpop.f32.mrb[0].mxu0
        %v3423 = vadd.f32 %v3362, %v3422
        %v3424 = vpop.f32.mrb[0].mxu0
        %v3425 = vpop.f32.mrb[0].mxu0
        %v3426 = vpop.f32.mrb[0].mxu0
        %3427 = vdwg.mxu0
        %v3428 = vpack.c.bf16 %v3423, %v3423
        %s3429 = scalar_lea.vmem %s4, 576
        %v3430 = vld [vmem:[%s3429] sm:$0xf]
        %v3431 = vld [vmem:[%s3429 + $0x4] sm:$0xf]
        %v3432 = vld [vmem:[%s3429 + $0x8] sm:$0xf]
        %v3433 = vld [vmem:[%s3429 + $0xc] sm:$0xf]
        %v3434 = vld [vmem:[%s3429 + $0x10] sm:$0xf]
        %v3435 = vld [vmem:[%s3429 + $0x14] sm:$0xf]
        %v3436 = vld [vmem:[%s3429 + $0x18] sm:$0xf]
        %v3437 = vld [vmem:[%s3429 + $0x1c] sm:$0xf]
        %s3438 = scalar_lea.vmem %s5, 18
        %v3439 = vld [vmem:[%s3438] sm:$0x1]
        %v3441 = vlaneseq
        %v3442 = vshrl.u32 %v3441, 7
        %v3443 = vsub.s32 0, %v3442
        %v3444 = vrot.slane %v3439, %v3443
        %v3454 = vunpack.c.l.b16 %v3430
        %v3455 = vunpack.c.l.b16 %v3431
        %v3456 = vunpack.c.l.b16 %v3432
        %v3457 = vunpack.c.l.b16 %v3433
        %v3458 = vunpack.c.l.b16 %v3434
        %v3459 = vunpack.c.l.b16 %v3435
        %v3460 = vunpack.c.l.b16 %v3436
        %v3461 = vunpack.c.l.b16 %v3437
        %v3462 = vpack.c.b16 %v3455, %v3454
        %v3463 = vpack.c.b16 %v3457, %v3456
        %v3464 = vpack.c.b16 %v3459, %v3458
        %v3465 = vpack.c.b16 %v3461, %v3460
        %3470 = vmatprep.subr.bf16.mxu0 0
        %3471 = vmatpush1.bf16.msra.mxu0 %v3462
        %3472 = vmatprep.subr.bf16.mxu0 0
        %3473 = vmatpush1.bf16.msra.mxu0 %v3463
        %3474 = vmatprep.subr.bf16.mxu0 0
        %3475 = vmatpush1.bf16.msra.mxu0 %v3464
        %3476 = vmatprep.subr.bf16.mxu0 0
        %3477 = vmatpush1.bf16.msra.mxu0 %v3465
        %3478 = vmatprep.subr.bf16.mxu0 0
        %3479 = vmatpush1.bf16.msra.mxu0 0
        %3480 = vmatprep.subr.bf16.mxu0 0
        %3481 = vmatpush1.bf16.msra.mxu0 0
        %3482 = vmatprep.subr.bf16.mxu0 0
        %3483 = vmatpush1.bf16.msra.mxu0 0
        %3484 = vmatprep.subr.bf16.mxu0 0
        %3485 = vmatpush1.bf16.msra.mxu0 0
        %3486 = vmatprep.subr.bf16.mxu0 0
        %3487 = vmatpush1.bf16.msra.mxu0 0
        %3488 = vmatprep.subr.bf16.mxu0 0
        %3489 = vmatpush1.bf16.msra.mxu0 0
        %3490 = vmatprep.subr.bf16.mxu0 0
        %3491 = vmatpush1.bf16.msra.mxu0 0
        %3492 = vmatprep.subr.bf16.mxu0 0
        %3493 = vmatpush1.bf16.msra.mxu0 0
        %3494 = vmatprep.subr.bf16.mxu0 0
        %3495 = vmatpush1.bf16.msra.mxu0 0
        %3496 = vmatprep.subr.bf16.mxu0 0
        %3497 = vmatpush1.bf16.msra.mxu0 0
        %3498 = vmatprep.subr.bf16.mxu0 0
        %3499 = vmatpush1.bf16.msra.mxu0 0
        %3500 = vmatprep.subr.bf16.mxu0 0
        %3501 = vmatpush1.bf16.msra.mxu0 0
        %3502 = vmatprep.mubr.bf16.mxu0 0
        %3503 = vmatmul.mubr.bf16.gmra.mrb[0].mxu0 %v2576
        %v3504 = vpop.f32.mrb[0].mxu0
        %v3505 = vadd.f32 %v3444, %v3504
        %v3506 = vpop.f32.mrb[0].mxu0
        %v3507 = vpop.f32.mrb[0].mxu0
        %v3508 = vpop.f32.mrb[0].mxu0
        %3509 = vdwg.mxu0
        %v3510 = vpack.c.bf16 %v3505, %v3505
        %s3511 = scalar_lea.vmem %s4, 704
        %v3512 = vld [vmem:[%s3511] sm:$0xf]
        %v3513 = vld [vmem:[%s3511 + $0x4] sm:$0xf]
        %v3514 = vld [vmem:[%s3511 + $0x8] sm:$0xf]
        %v3515 = vld [vmem:[%s3511 + $0xc] sm:$0xf]
        %v3516 = vld [vmem:[%s3511 + $0x10] sm:$0xf]
        %v3517 = vld [vmem:[%s3511 + $0x14] sm:$0xf]
        %v3518 = vld [vmem:[%s3511 + $0x18] sm:$0xf]
        %v3519 = vld [vmem:[%s3511 + $0x1c] sm:$0xf]
        %s3520 = scalar_lea.vmem %s5, 22
        %v3521 = vld [vmem:[%s3520] sm:$0x1]
        %v3523 = vlaneseq
        %v3524 = vshrl.u32 %v3523, 7
        %v3525 = vsub.s32 0, %v3524
        %v3526 = vrot.slane %v3521, %v3525
        %v3536 = vunpack.c.l.b16 %v3512
        %v3537 = vunpack.c.l.b16 %v3513
        %v3538 = vunpack.c.l.b16 %v3514
        %v3539 = vunpack.c.l.b16 %v3515
        %v3540 = vunpack.c.l.b16 %v3516
        %v3541 = vunpack.c.l.b16 %v3517
        %v3542 = vunpack.c.l.b16 %v3518
        %v3543 = vunpack.c.l.b16 %v3519
        %v3544 = vpack.c.b16 %v3537, %v3536
        %v3545 = vpack.c.b16 %v3539, %v3538
        %v3546 = vpack.c.b16 %v3541, %v3540
        %v3547 = vpack.c.b16 %v3543, %v3542
        %3552 = vmatprep.subr.bf16.mxu0 0
        %3553 = vmatpush1.bf16.msra.mxu0 %v3544
        %3554 = vmatprep.subr.bf16.mxu0 0
        %3555 = vmatpush1.bf16.msra.mxu0 %v3545
        %3556 = vmatprep.subr.bf16.mxu0 0
        %3557 = vmatpush1.bf16.msra.mxu0 %v3546
        %3558 = vmatprep.subr.bf16.mxu0 0
        %3559 = vmatpush1.bf16.msra.mxu0 %v3547
        %3560 = vmatprep.subr.bf16.mxu0 0
        %3561 = vmatpush1.bf16.msra.mxu0 0
        %3562 = vmatprep.subr.bf16.mxu0 0
        %3563 = vmatpush1.bf16.msra.mxu0 0
        %3564 = vmatprep.subr.bf16.mxu0 0
        %3565 = vmatpush1.bf16.msra.mxu0 0
        %3566 = vmatprep.subr.bf16.mxu0 0
        %3567 = vmatpush1.bf16.msra.mxu0 0
        %3568 = vmatprep.subr.bf16.mxu0 0
        %3569 = vmatpush1.bf16.msra.mxu0 0
        %3570 = vmatprep.subr.bf16.mxu0 0
        %3571 = vmatpush1.bf16.msra.mxu0 0
        %3572 = vmatprep.subr.bf16.mxu0 0
        %3573 = vmatpush1.bf16.msra.mxu0 0
        %3574 = vmatprep.subr.bf16.mxu0 0
        %3575 = vmatpush1.bf16.msra.mxu0 0
        %3576 = vmatprep.subr.bf16.mxu0 0
        %3577 = vmatpush1.bf16.msra.mxu0 0
        %3578 = vmatprep.subr.bf16.mxu0 0
        %3579 = vmatpush1.bf16.msra.mxu0 0
        %3580 = vmatprep.subr.bf16.mxu0 0
        %3581 = vmatpush1.bf16.msra.mxu0 0
        %3582 = vmatprep.subr.bf16.mxu0 0
        %3583 = vmatpush1.bf16.msra.mxu0 0
        %3584 = vmatprep.mubr.bf16.mxu0 0
        %3585 = vmatmul.mubr.bf16.gmra.mrb[0].mxu0 %v2576
        %v3586 = vpop.f32.mrb[0].mxu0
        %v3587 = vadd.f32 %v3526, %v3586
        %v3588 = vpop.f32.mrb[0].mxu0
        %v3589 = vpop.f32.mrb[0].mxu0
        %v3590 = vpop.f32.mrb[0].mxu0
        %3591 = vdwg.mxu0
        %v3592 = vpack.c.bf16 %v3587, %v3587
        %v3594 = vsel %vm753, %v3428, 0
        %v3597 = vsel %vm753, %v3510, 0
        %3599 = vmatprep.subr.bf16.mxu0 0
        %3600 = vmatpush1.bf16.xpose.msra.mxu0 %v3597
        %3601 = vmatprep.subr.bf16.mxu0 0
        %3602 = vmatpush1.bf16.xpose.msra.mxu0 0
        %3603 = vmatprep.subr.bf16.mxu0 0
        %3604 = vmatpush1.bf16.xpose.msra.mxu0 0
        %3605 = vmatprep.subr.bf16.mxu0 0
        %3606 = vmatpush1.bf16.xpose.msra.mxu0 0
        %3607 = vmatprep.subr.bf16.mxu0 0
        %3608 = vmatpush1.bf16.xpose.msra.mxu0 0
        %3609 = vmatprep.subr.bf16.mxu0 0
        %3610 = vmatpush1.bf16.xpose.msra.mxu0 0
        %3611 = vmatprep.subr.bf16.mxu0 0
        %3612 = vmatpush1.bf16.xpose.msra.mxu0 0
        %3613 = vmatprep.subr.bf16.mxu0 0
        %3614 = vmatpush1.bf16.xpose.msra.mxu0 0
        %3615 = vmatprep.subr.bf16.mxu0 0
        %3616 = vmatpush1.bf16.xpose.msra.mxu0 0
        %3617 = vmatprep.subr.bf16.mxu0 0
        %3618 = vmatpush1.bf16.xpose.msra.mxu0 0
        %3619 = vmatprep.subr.bf16.mxu0 0
        %3620 = vmatpush1.bf16.xpose.msra.mxu0 0
        %3621 = vmatprep.subr.bf16.mxu0 0
        %3622 = vmatpush1.bf16.xpose.msra.mxu0 0
        %3623 = vmatprep.subr.bf16.mxu0 0
        %3624 = vmatpush1.bf16.xpose.msra.mxu0 0
        %3625 = vmatprep.subr.bf16.mxu0 0
        %3626 = vmatpush1.bf16.xpose.msra.mxu0 0
        %3627 = vmatprep.subr.bf16.mxu0 0
        %3628 = vmatpush1.bf16.xpose.msra.mxu0 0
        %3629 = vmatprep.subr.bf16.mxu0 0
        %3630 = vmatpush1.bf16.xpose.msra.mxu0 0
        %3631 = vmatprep.mubr.bf16.mxu0 0
        %3632 = vmatmul.mubr.bf16.gmra.mrb[0].mxu0 %v3594
        %v3633 = vpop.f32.mrb[0].mxu0
        %v3634 = vadd.f32 0.0, %v3633
        %v3635 = vpop.f32.mrb[0].mxu0
        %v3636 = vpop.f32.mrb[0].mxu0
        %v3637 = vpop.f32.mrb[0].mxu0
        %3638 = vdwg.mxu0
        %v3639 = vmul.f32 %v3634, 0.25
        %v3640 = vadd.f32 %v3639, %v500
        %v3641 = vsel %vm802, %v3640, -inf
        %3642 = vmax.xlane.f32.xlu0 %v3641
        %v3643 = vpop.xlane.xlu0 %3642
        %v3644 = vsub.f32 %v3640, %v3643
        %v3645 = vmul.f32 %v3644, 1.442695
        %v3646 = vpow.pop %v3645
        %v3647 = vsel %vm802, %v3646, 0.0
        %3648 = vadd.xlane.f32.xlu0 %v3647
        %v3649 = vpop.xlane.xlu0 %3648
        %v3650 = vrcp.pop %v3649
        %v3651 = vmul.f32 %v3646, %v3650
        %v3652 = vpack.c.bf16 %v3651, %v3651
        %v3654 = vsel %vm802, %v3652, 0
        %v3657 = vsel %vm818, %v3592, 0
        %3659 = vmatprep.subr.bf16.mxu0 0
        %3660 = vmatpush1.bf16.msra.mxu0 %v3657
        %3661 = vmatprep.subr.bf16.mxu0 0
        %3662 = vmatpush1.bf16.msra.mxu0 0
        %3663 = vmatprep.subr.bf16.mxu0 0
        %3664 = vmatpush1.bf16.msra.mxu0 0
        %3665 = vmatprep.subr.bf16.mxu0 0
        %3666 = vmatpush1.bf16.msra.mxu0 0
        %3667 = vmatprep.subr.bf16.mxu0 0
        %3668 = vmatpush1.bf16.msra.mxu0 0
        %3669 = vmatprep.subr.bf16.mxu0 0
        %3670 = vmatpush1.bf16.msra.mxu0 0
        %3671 = vmatprep.subr.bf16.mxu0 0
        %3672 = vmatpush1.bf16.msra.mxu0 0
        %3673 = vmatprep.subr.bf16.mxu0 0
        %3674 = vmatpush1.bf16.msra.mxu0 0
        %3675 = vmatprep.subr.bf16.mxu0 0
        %3676 = vmatpush1.bf16.msra.mxu0 0
        %3677 = vmatprep.subr.bf16.mxu0 0
        %3678 = vmatpush1.bf16.msra.mxu0 0
        %3679 = vmatprep.subr.bf16.mxu0 0
        %3680 = vmatpush1.bf16.msra.mxu0 0
        %3681 = vmatprep.subr.bf16.mxu0 0
        %3682 = vmatpush1.bf16.msra.mxu0 0
        %3683 = vmatprep.subr.bf16.mxu0 0
        %3684 = vmatpush1.bf16.msra.mxu0 0
        %3685 = vmatprep.subr.bf16.mxu0 0
        %3686 = vmatpush1.bf16.msra.mxu0 0
        %3687 = vmatprep.subr.bf16.mxu0 0
        %3688 = vmatpush1.bf16.msra.mxu0 0
        %3689 = vmatprep.subr.bf16.mxu0 0
        %3690 = vmatpush1.bf16.msra.mxu0 0
        %3691 = vmatprep.mubr.bf16.mxu0 0
        %3692 = vmatmul.mubr.bf16.gmra.mrb[0].mxu0 %v3654
        %v3693 = vpop.f32.mrb[0].mxu0
        %v3694 = vadd.f32 0.0, %v3693
        %v3695 = vpop.f32.mrb[0].mxu0
        %v3696 = vpop.f32.mrb[0].mxu0
        %v3697 = vpop.f32.mrb[0].mxu0
        %3698 = vdwg.mxu0
        %v3699 = vpack.c.bf16 %v3694, %v3694
        %s3700 = scalar_lea.vmem %s6, 48
        %v3701 = vld [vmem:[%s3700] sm:$0xf]
        %v3702 = vld [vmem:[%s3700 + $0x4] sm:$0xf]
        %v3705 = vunpack.c.l.b16 %v3701
        %v3706 = vunpack.c.l.b16 %v3702
        %v3707 = vpack.c.b16 %v3706, %v3705
        %v3710 = vsel %vm753, %v3699, 0
        %3712 = vmatprep.subr.bf16.mxu0 0
        %3713 = vmatpush1.bf16.msra.mxu0 %v3707
        %3714 = vmatprep.subr.bf16.mxu0 0
        %3715 = vmatpush1.bf16.msra.mxu0 0
        %3716 = vmatprep.subr.bf16.mxu0 0
        %3717 = vmatpush1.bf16.msra.mxu0 0
        %3718 = vmatprep.subr.bf16.mxu0 0
        %3719 = vmatpush1.bf16.msra.mxu0 0
        %3720 = vmatprep.subr.bf16.mxu0 0
        %3721 = vmatpush1.bf16.msra.mxu0 0
        %3722 = vmatprep.subr.bf16.mxu0 0
        %3723 = vmatpush1.bf16.msra.mxu0 0
        %3724 = vmatprep.subr.bf16.mxu0 0
        %3725 = vmatpush1.bf16.msra.mxu0 0
        %3726 = vmatprep.subr.bf16.mxu0 0
        %3727 = vmatpush1.bf16.msra.mxu0 0
        %3728 = vmatprep.subr.bf16.mxu0 0
        %3729 = vmatpush1.bf16.msra.mxu0 0
        %3730 = vmatprep.subr.bf16.mxu0 0
        %3731 = vmatpush1.bf16.msra.mxu0 0
        %3732 = vmatprep.subr.bf16.mxu0 0
        %3733 = vmatpush1.bf16.msra.mxu0 0
        %3734 = vmatprep.subr.bf16.mxu0 0
        %3735 = vmatpush1.bf16.msra.mxu0 0
        %3736 = vmatprep.subr.bf16.mxu0 0
        %3737 = vmatpush1.bf16.msra.mxu0 0
        %3738 = vmatprep.subr.bf16.mxu0 0
        %3739 = vmatpush1.bf16.msra.mxu0 0
        %3740 = vmatprep.subr.bf16.mxu0 0
        %3741 = vmatpush1.bf16.msra.mxu0 0
        %3742 = vmatprep.subr.bf16.mxu0 0
        %3743 = vmatpush1.bf16.msra.mxu0 0
        %3744 = vmatprep.mubr.bf16.mxu0 0
        %3745 = vmatmul.mubr.bf16.gmra.mrb[0].mxu0 %v3710
        %v3746 = vpop.f32.mrb[0].mxu0
        %v3747 = vadd.f32 0.0, %v3746
        %v3748 = vpop.f32.mrb[0].mxu0
        %v3749 = vpop.f32.mrb[0].mxu0
        %v3750 = vpop.f32.mrb[0].mxu0
        %3751 = vdwg.mxu0
        %v3752 = vadd.f32 %v3342, %v3747
        %s3753 = scalar_lea.vmem %s4, 480
        %v3754 = vld [vmem:[%s3753] sm:$0xf]
        %v3755 = vld [vmem:[%s3753 + $0x4] sm:$0xf]
        %v3756 = vld [vmem:[%s3753 + $0x8] sm:$0xf]
        %v3757 = vld [vmem:[%s3753 + $0xc] sm:$0xf]
        %v3758 = vld [vmem:[%s3753 + $0x10] sm:$0xf]
        %v3759 = vld [vmem:[%s3753 + $0x14] sm:$0xf]
        %v3760 = vld [vmem:[%s3753 + $0x18] sm:$0xf]
        %v3761 = vld [vmem:[%s3753 + $0x1c] sm:$0xf]
        %s3762 = scalar_lea.vmem %s5, 15
        %v3763 = vld [vmem:[%s3762] sm:$0x1]
        %v3765 = vlaneseq
        %v3766 = vshrl.u32 %v3765, 7
        %v3767 = vsub.s32 0, %v3766
        %v3768 = vrot.slane %v3763, %v3767
        %v3778 = vunpack.c.l.b16 %v3754
        %v3779 = vunpack.c.l.b16 %v3755
        %v3780 = vunpack.c.l.b16 %v3756
        %v3781 = vunpack.c.l.b16 %v3757
        %v3782 = vunpack.c.l.b16 %v3758
        %v3783 = vunpack.c.l.b16 %v3759
        %v3784 = vunpack.c.l.b16 %v3760
        %v3785 = vunpack.c.l.b16 %v3761
        %v3786 = vpack.c.b16 %v3779, %v3778
        %v3787 = vpack.c.b16 %v3781, %v3780
        %v3788 = vpack.c.b16 %v3783, %v3782
        %v3789 = vpack.c.b16 %v3785, %v3784
        %3794 = vmatprep.subr.bf16.mxu0 0
        %3795 = vmatpush1.bf16.msra.mxu0 %v3786
        %3796 = vmatprep.subr.bf16.mxu0 0
        %3797 = vmatpush1.bf16.msra.mxu0 %v3787
        %3798 = vmatprep.subr.bf16.mxu0 0
        %3799 = vmatpush1.bf16.msra.mxu0 %v3788
        %3800 = vmatprep.subr.bf16.mxu0 0
        %3801 = vmatpush1.bf16.msra.mxu0 %v3789
        %3802 = vmatprep.subr.bf16.mxu0 0
        %3803 = vmatpush1.bf16.msra.mxu0 0
        %3804 = vmatprep.subr.bf16.mxu0 0
        %3805 = vmatpush1.bf16.msra.mxu0 0
        %3806 = vmatprep.subr.bf16.mxu0 0
        %3807 = vmatpush1.bf16.msra.mxu0 0
        %3808 = vmatprep.subr.bf16.mxu0 0
        %3809 = vmatpush1.bf16.msra.mxu0 0
        %3810 = vmatprep.subr.bf16.mxu0 0
        %3811 = vmatpush1.bf16.msra.mxu0 0
        %3812 = vmatprep.subr.bf16.mxu0 0
        %3813 = vmatpush1.bf16.msra.mxu0 0
        %3814 = vmatprep.subr.bf16.mxu0 0
        %3815 = vmatpush1.bf16.msra.mxu0 0
        %3816 = vmatprep.subr.bf16.mxu0 0
        %3817 = vmatpush1.bf16.msra.mxu0 0
        %3818 = vmatprep.subr.bf16.mxu0 0
        %3819 = vmatpush1.bf16.msra.mxu0 0
        %3820 = vmatprep.subr.bf16.mxu0 0
        %3821 = vmatpush1.bf16.msra.mxu0 0
        %3822 = vmatprep.subr.bf16.mxu0 0
        %3823 = vmatpush1.bf16.msra.mxu0 0
        %3824 = vmatprep.subr.bf16.mxu0 0
        %3825 = vmatpush1.bf16.msra.mxu0 0
        %3826 = vmatprep.mubr.bf16.mxu0 0
        %3827 = vmatmul.mubr.bf16.gmra.mrb[0].mxu0 %v2576
        %v3828 = vpop.f32.mrb[0].mxu0
        %v3829 = vadd.f32 %v3768, %v3828
        %v3830 = vpop.f32.mrb[0].mxu0
        %v3831 = vpop.f32.mrb[0].mxu0
        %v3832 = vpop.f32.mrb[0].mxu0
        %3833 = vdwg.mxu0
        %v3834 = vpack.c.bf16 %v3829, %v3829
        %s3835 = scalar_lea.vmem %s4, 608
        %v3836 = vld [vmem:[%s3835] sm:$0xf]
        %v3837 = vld [vmem:[%s3835 + $0x4] sm:$0xf]
        %v3838 = vld [vmem:[%s3835 + $0x8] sm:$0xf]
        %v3839 = vld [vmem:[%s3835 + $0xc] sm:$0xf]
        %v3840 = vld [vmem:[%s3835 + $0x10] sm:$0xf]
        %v3841 = vld [vmem:[%s3835 + $0x14] sm:$0xf]
        %v3842 = vld [vmem:[%s3835 + $0x18] sm:$0xf]
        %v3843 = vld [vmem:[%s3835 + $0x1c] sm:$0xf]
        %s3844 = scalar_lea.vmem %s5, 19
        %v3845 = vld [vmem:[%s3844] sm:$0x1]
        %v3847 = vlaneseq
        %v3848 = vshrl.u32 %v3847, 7
        %v3849 = vsub.s32 0, %v3848
        %v3850 = vrot.slane %v3845, %v3849
        %v3860 = vunpack.c.l.b16 %v3836
        %v3861 = vunpack.c.l.b16 %v3837
        %v3862 = vunpack.c.l.b16 %v3838
        %v3863 = vunpack.c.l.b16 %v3839
        %v3864 = vunpack.c.l.b16 %v3840
        %v3865 = vunpack.c.l.b16 %v3841
        %v3866 = vunpack.c.l.b16 %v3842
        %v3867 = vunpack.c.l.b16 %v3843
        %v3868 = vpack.c.b16 %v3861, %v3860
        %v3869 = vpack.c.b16 %v3863, %v3862
        %v3870 = vpack.c.b16 %v3865, %v3864
        %v3871 = vpack.c.b16 %v3867, %v3866
        %3876 = vmatprep.subr.bf16.mxu0 0
        %3877 = vmatpush1.bf16.msra.mxu0 %v3868
        %3878 = vmatprep.subr.bf16.mxu0 0
        %3879 = vmatpush1.bf16.msra.mxu0 %v3869
        %3880 = vmatprep.subr.bf16.mxu0 0
        %3881 = vmatpush1.bf16.msra.mxu0 %v3870
        %3882 = vmatprep.subr.bf16.mxu0 0
        %3883 = vmatpush1.bf16.msra.mxu0 %v3871
        %3884 = vmatprep.subr.bf16.mxu0 0
        %3885 = vmatpush1.bf16.msra.mxu0 0
        %3886 = vmatprep.subr.bf16.mxu0 0
        %3887 = vmatpush1.bf16.msra.mxu0 0
        %3888 = vmatprep.subr.bf16.mxu0 0
        %3889 = vmatpush1.bf16.msra.mxu0 0
        %3890 = vmatprep.subr.bf16.mxu0 0
        %3891 = vmatpush1.bf16.msra.mxu0 0
        %3892 = vmatprep.subr.bf16.mxu0 0
        %3893 = vmatpush1.bf16.msra.mxu0 0
        %3894 = vmatprep.subr.bf16.mxu0 0
        %3895 = vmatpush1.bf16.msra.mxu0 0
        %3896 = vmatprep.subr.bf16.mxu0 0
        %3897 = vmatpush1.bf16.msra.mxu0 0
        %3898 = vmatprep.subr.bf16.mxu0 0
        %3899 = vmatpush1.bf16.msra.mxu0 0
        %3900 = vmatprep.subr.bf16.mxu0 0
        %3901 = vmatpush1.bf16.msra.mxu0 0
        %3902 = vmatprep.subr.bf16.mxu0 0
        %3903 = vmatpush1.bf16.msra.mxu0 0
        %3904 = vmatprep.subr.bf16.mxu0 0
        %3905 = vmatpush1.bf16.msra.mxu0 0
        %3906 = vmatprep.subr.bf16.mxu0 0
        %3907 = vmatpush1.bf16.msra.mxu0 0
        %3908 = vmatprep.mubr.bf16.mxu0 0
        %3909 = vmatmul.mubr.bf16.gmra.mrb[0].mxu0 %v2576
        %v3910 = vpop.f32.mrb[0].mxu0
        %v3911 = vadd.f32 %v3850, %v3910
        %v3912 = vpop.f32.mrb[0].mxu0
        %v3913 = vpop.f32.mrb[0].mxu0
        %v3914 = vpop.f32.mrb[0].mxu0
        %3915 = vdwg.mxu0
        %v3916 = vpack.c.bf16 %v3911, %v3911
        %s3917 = scalar_lea.vmem %s4, 736
        %v3918 = vld [vmem:[%s3917] sm:$0xf]
        %v3919 = vld [vmem:[%s3917 + $0x4] sm:$0xf]
        %v3920 = vld [vmem:[%s3917 + $0x8] sm:$0xf]
        %v3921 = vld [vmem:[%s3917 + $0xc] sm:$0xf]
        %v3922 = vld [vmem:[%s3917 + $0x10] sm:$0xf]
        %v3923 = vld [vmem:[%s3917 + $0x14] sm:$0xf]
        %v3924 = vld [vmem:[%s3917 + $0x18] sm:$0xf]
        %v3925 = vld [vmem:[%s3917 + $0x1c] sm:$0xf]
        %s3926 = scalar_lea.vmem %s5, 23
        %v3927 = vld [vmem:[%s3926] sm:$0x1]
        %v3929 = vlaneseq
        %v3930 = vshrl.u32 %v3929, 7
        %v3931 = vsub.s32 0, %v3930
        %v3932 = vrot.slane %v3927, %v3931
        %v3942 = vunpack.c.l.b16 %v3918
        %v3943 = vunpack.c.l.b16 %v3919
        %v3944 = vunpack.c.l.b16 %v3920
        %v3945 = vunpack.c.l.b16 %v3921
        %v3946 = vunpack.c.l.b16 %v3922
        %v3947 = vunpack.c.l.b16 %v3923
        %v3948 = vunpack.c.l.b16 %v3924
        %v3949 = vunpack.c.l.b16 %v3925
        %v3950 = vpack.c.b16 %v3943, %v3942
        %v3951 = vpack.c.b16 %v3945, %v3944
        %v3952 = vpack.c.b16 %v3947, %v3946
        %v3953 = vpack.c.b16 %v3949, %v3948
        %3958 = vmatprep.subr.bf16.mxu0 0
        %3959 = vmatpush1.bf16.msra.mxu0 %v3950
        %3960 = vmatprep.subr.bf16.mxu0 0
        %3961 = vmatpush1.bf16.msra.mxu0 %v3951
        %3962 = vmatprep.subr.bf16.mxu0 0
        %3963 = vmatpush1.bf16.msra.mxu0 %v3952
        %3964 = vmatprep.subr.bf16.mxu0 0
        %3965 = vmatpush1.bf16.msra.mxu0 %v3953
        %3966 = vmatprep.subr.bf16.mxu0 0
        %3967 = vmatpush1.bf16.msra.mxu0 0
        %3968 = vmatprep.subr.bf16.mxu0 0
        %3969 = vmatpush1.bf16.msra.mxu0 0
        %3970 = vmatprep.subr.bf16.mxu0 0
        %3971 = vmatpush1.bf16.msra.mxu0 0
        %3972 = vmatprep.subr.bf16.mxu0 0
        %3973 = vmatpush1.bf16.msra.mxu0 0
        %3974 = vmatprep.subr.bf16.mxu0 0
        %3975 = vmatpush1.bf16.msra.mxu0 0
        %3976 = vmatprep.subr.bf16.mxu0 0
        %3977 = vmatpush1.bf16.msra.mxu0 0
        %3978 = vmatprep.subr.bf16.mxu0 0
        %3979 = vmatpush1.bf16.msra.mxu0 0
        %3980 = vmatprep.subr.bf16.mxu0 0
        %3981 = vmatpush1.bf16.msra.mxu0 0
        %3982 = vmatprep.subr.bf16.mxu0 0
        %3983 = vmatpush1.bf16.msra.mxu0 0
        %3984 = vmatprep.subr.bf16.mxu0 0
        %3985 = vmatpush1.bf16.msra.mxu0 0
        %3986 = vmatprep.subr.bf16.mxu0 0
        %3987 = vmatpush1.bf16.msra.mxu0 0
        %3988 = vmatprep.subr.bf16.mxu0 0
        %3989 = vmatpush1.bf16.msra.mxu0 0
        %3990 = vmatprep.mubr.bf16.mxu0 0
        %3991 = vmatmul.mubr.bf16.gmra.mrb[0].mxu0 %v2576
        %v3992 = vpop.f32.mrb[0].mxu0
        %v3993 = vadd.f32 %v3932, %v3992
        %v3994 = vpop.f32.mrb[0].mxu0
        %v3995 = vpop.f32.mrb[0].mxu0
        %v3996 = vpop.f32.mrb[0].mxu0
        %3997 = vdwg.mxu0
        %v3998 = vpack.c.bf16 %v3993, %v3993
        %v4000 = vsel %vm753, %v3834, 0
        %v4003 = vsel %vm753, %v3916, 0
        %4005 = vmatprep.subr.bf16.mxu0 0
        %4006 = vmatpush1.bf16.xpose.msra.mxu0 %v4003
        %4007 = vmatprep.subr.bf16.mxu0 0
        %4008 = vmatpush1.bf16.xpose.msra.mxu0 0
        %4009 = vmatprep.subr.bf16.mxu0 0
        %4010 = vmatpush1.bf16.xpose.msra.mxu0 0
        %4011 = vmatprep.subr.bf16.mxu0 0
        %4012 = vmatpush1.bf16.xpose.msra.mxu0 0
        %4013 = vmatprep.subr.bf16.mxu0 0
        %4014 = vmatpush1.bf16.xpose.msra.mxu0 0
        %4015 = vmatprep.subr.bf16.mxu0 0
        %4016 = vmatpush1.bf16.xpose.msra.mxu0 0
        %4017 = vmatprep.subr.bf16.mxu0 0
        %4018 = vmatpush1.bf16.xpose.msra.mxu0 0
        %4019 = vmatprep.subr.bf16.mxu0 0
        %4020 = vmatpush1.bf16.xpose.msra.mxu0 0
        %4021 = vmatprep.subr.bf16.mxu0 0
        %4022 = vmatpush1.bf16.xpose.msra.mxu0 0
        %4023 = vmatprep.subr.bf16.mxu0 0
        %4024 = vmatpush1.bf16.xpose.msra.mxu0 0
        %4025 = vmatprep.subr.bf16.mxu0 0
        %4026 = vmatpush1.bf16.xpose.msra.mxu0 0
        %4027 = vmatprep.subr.bf16.mxu0 0
        %4028 = vmatpush1.bf16.xpose.msra.mxu0 0
        %4029 = vmatprep.subr.bf16.mxu0 0
        %4030 = vmatpush1.bf16.xpose.msra.mxu0 0
        %4031 = vmatprep.subr.bf16.mxu0 0
        %4032 = vmatpush1.bf16.xpose.msra.mxu0 0
        %4033 = vmatprep.subr.bf16.mxu0 0
        %4034 = vmatpush1.bf16.xpose.msra.mxu0 0
        %4035 = vmatprep.subr.bf16.mxu0 0
        %4036 = vmatpush1.bf16.xpose.msra.mxu0 0
        %4037 = vmatprep.mubr.bf16.mxu0 0
        %4038 = vmatmul.mubr.bf16.gmra.mrb[0].mxu0 %v4000
        %v4039 = vpop.f32.mrb[0].mxu0
        %v4040 = vadd.f32 0.0, %v4039
        %v4041 = vpop.f32.mrb[0].mxu0
        %v4042 = vpop.f32.mrb[0].mxu0
        %v4043 = vpop.f32.mrb[0].mxu0
        %4044 = vdwg.mxu0
        %v4045 = vmul.f32 %v4040, 0.25
        %v4046 = vadd.f32 %v4045, %v500
        %v4047 = vsel %vm802, %v4046, -inf
        %4048 = vmax.xlane.f32.xlu0 %v4047
        %v4049 = vpop.xlane.xlu0 %4048
        %v4050 = vsub.f32 %v4046, %v4049
        %v4051 = vmul.f32 %v4050, 1.442695
        %v4052 = vpow.pop %v4051
        %v4053 = vsel %vm802, %v4052, 0.0
        %4054 = vadd.xlane.f32.xlu0 %v4053
        %v4055 = vpop.xlane.xlu0 %4054
        %v4056 = vrcp.pop %v4055
        %v4057 = vmul.f32 %v4052, %v4056
        %v4058 = vpack.c.bf16 %v4057, %v4057
        %v4060 = vsel %vm802, %v4058, 0
        %v4063 = vsel %vm818, %v3998, 0
        %4065 = vmatprep.subr.bf16.mxu0 0
        %4066 = vmatpush1.bf16.msra.mxu0 %v4063
        %4067 = vmatprep.subr.bf16.mxu0 0
        %4068 = vmatpush1.bf16.msra.mxu0 0
        %4069 = vmatprep.subr.bf16.mxu0 0
        %4070 = vmatpush1.bf16.msra.mxu0 0
        %4071 = vmatprep.subr.bf16.mxu0 0
        %4072 = vmatpush1.bf16.msra.mxu0 0
        %4073 = vmatprep.subr.bf16.mxu0 0
        %4074 = vmatpush1.bf16.msra.mxu0 0
        %4075 = vmatprep.subr.bf16.mxu0 0
        %4076 = vmatpush1.bf16.msra.mxu0 0
        %4077 = vmatprep.subr.bf16.mxu0 0
        %4078 = vmatpush1.bf16.msra.mxu0 0
        %4079 = vmatprep.subr.bf16.mxu0 0
        %4080 = vmatpush1.bf16.msra.mxu0 0
        %4081 = vmatprep.subr.bf16.mxu0 0
        %4082 = vmatpush1.bf16.msra.mxu0 0
        %4083 = vmatprep.subr.bf16.mxu0 0
        %4084 = vmatpush1.bf16.msra.mxu0 0
        %4085 = vmatprep.subr.bf16.mxu0 0
        %4086 = vmatpush1.bf16.msra.mxu0 0
        %4087 = vmatprep.subr.bf16.mxu0 0
        %4088 = vmatpush1.bf16.msra.mxu0 0
        %4089 = vmatprep.subr.bf16.mxu0 0
        %4090 = vmatpush1.bf16.msra.mxu0 0
        %4091 = vmatprep.subr.bf16.mxu0 0
        %4092 = vmatpush1.bf16.msra.mxu0 0
        %4093 = vmatprep.subr.bf16.mxu0 0
        %4094 = vmatpush1.bf16.msra.mxu0 0
        %4095 = vmatprep.subr.bf16.mxu0 0
        %4096 = vmatpush1.bf16.msra.mxu0 0
        %4097 = vmatprep.mubr.bf16.mxu0 0
        %4098 = vmatmul.mubr.bf16.gmra.mrb[0].mxu0 %v4060
        %v4099 = vpop.f32.mrb[0].mxu0
        %v4100 = vadd.f32 0.0, %v4099
        %v4101 = vpop.f32.mrb[0].mxu0
        %v4102 = vpop.f32.mrb[0].mxu0
        %v4103 = vpop.f32.mrb[0].mxu0
        %4104 = vdwg.mxu0
        %v4105 = vpack.c.bf16 %v4100, %v4100
        %s4106 = scalar_lea.vmem %s6, 56
        %v4107 = vld [vmem:[%s4106] sm:$0xf]
        %v4108 = vld [vmem:[%s4106 + $0x4] sm:$0xf]
        %v4111 = vunpack.c.l.b16 %v4107
        %v4112 = vunpack.c.l.b16 %v4108
        %v4113 = vpack.c.b16 %v4112, %v4111
        %v4116 = vsel %vm753, %v4105, 0
        %4118 = vmatprep.subr.bf16.mxu0 0
        %4119 = vmatpush1.bf16.msra.mxu0 %v4113
        %4120 = vmatprep.subr.bf16.mxu0 0
        %4121 = vmatpush1.bf16.msra.mxu0 0
        %4122 = vmatprep.subr.bf16.mxu0 0
        %4123 = vmatpush1.bf16.msra.mxu0 0
        %4124 = vmatprep.subr.bf16.mxu0 0
        %4125 = vmatpush1.bf16.msra.mxu0 0
        %4126 = vmatprep.subr.bf16.mxu0 0
        %4127 = vmatpush1.bf16.msra.mxu0 0
        %4128 = vmatprep.subr.bf16.mxu0 0
        %4129 = vmatpush1.bf16.msra.mxu0 0
        %4130 = vmatprep.subr.bf16.mxu0 0
        %4131 = vmatpush1.bf16.msra.mxu0 0
        %4132 = vmatprep.subr.bf16.mxu0 0
        %4133 = vmatpush1.bf16.msra.mxu0 0
        %4134 = vmatprep.subr.bf16.mxu0 0
        %4135 = vmatpush1.bf16.msra.mxu0 0
        %4136 = vmatprep.subr.bf16.mxu0 0
        %4137 = vmatpush1.bf16.msra.mxu0 0
        %4138 = vmatprep.subr.bf16.mxu0 0
        %4139 = vmatpush1.bf16.msra.mxu0 0
        %4140 = vmatprep.subr.bf16.mxu0 0
        %4141 = vmatpush1.bf16.msra.mxu0 0
        %4142 = vmatprep.subr.bf16.mxu0 0
        %4143 = vmatpush1.bf16.msra.mxu0 0
        %4144 = vmatprep.subr.bf16.mxu0 0
        %4145 = vmatpush1.bf16.msra.mxu0 0
        %4146 = vmatprep.subr.bf16.mxu0 0
        %4147 = vmatpush1.bf16.msra.mxu0 0
        %4148 = vmatprep.subr.bf16.mxu0 0
        %4149 = vmatpush1.bf16.msra.mxu0 0
        %4150 = vmatprep.mubr.bf16.mxu0 0
        %4151 = vmatmul.mubr.bf16.gmra.mrb[0].mxu0 %v4116
        %v4152 = vpop.f32.mrb[0].mxu0
        %v4153 = vadd.f32 0.0, %v4152
        %v4154 = vpop.f32.mrb[0].mxu0
        %v4155 = vpop.f32.mrb[0].mxu0
        %v4156 = vpop.f32.mrb[0].mxu0
        %4157 = vdwg.mxu0
        %v4158 = vadd.f32 %v3752, %v4153
        %s4159 = scalar_lea.vmem %s7, 1
        %v4160 = vld [vmem:[%s4159] sm:$0x1]
        %v4162 = vlaneseq
        %v4163 = vshrl.u32 %v4162, 7
        %v4164 = vsub.s32 0, %v4163
        %v4165 = vrot.slane %v4160, %v4164
        %v4167 = vadd.f32 %v4158, %v4165
        %v4168 = vadd.f32 %v2532, %v4167
        %s4169 = scalar_lea.vmem %s12, 4
        %v4170 = vld [vmem:[%s4169] sm:$0x3]
        %v4171 = vsel %vm544, %v4168, 0.0
        %4172 = vadd.xlane.f32.xlu0 %v4171
        %v4173 = vpop.xlane.xlu0 %4172
        %v4174 = vmul.f32 %v4173, %v2144
        %v4175 = vsub.f32 %v4168, %v4174
        %v4176 = vmul.f32 %v4175, %v4175
        %v4177 = vsel %vm544, %v4176, 0.0
        %4178 = vadd.xlane.f32.xlu0 %v4177
        %v4179 = vpop.xlane.xlu0 %4178
        %v4180 = vmul.f32 %v4179, %v2144
        %v4181 = vadd.f32 %v4180, 1e-05
        %v4182 = vrsqrt.pop %v4181
        %v4183 = vmul.f32 %v4175, %v4182
        %v4184 = vlaneseq
        %v4185 = vshrl.u32 %v4184, 7
        %v4186 = vsub.s32 0, %v4185
        %v4187 = vrot.slane %v4170, %v4186
        %v4188 = vmul.f32 %v4183, %v4187
        %v4189 = vlaneseq
        %v4190 = vshrl.u32 %v4189, 7
        %v4191 = vsub.s32 1, %v4190
        %v4192 = vrot.slane %v4170, %v4191
        %v4193 = vadd.f32 %v4188, %v4192
        %v4194 = vpack.c.bf16 %v4193, %v4193
        %v4195 = vpack.c.bf16 %v2474, %v2474
        %s4196 = scalar_lea.vmem %s4, 768
        %v4197 = vld [vmem:[%s4196] sm:$0xf]
        %v4198 = vld [vmem:[%s4196 + $0x4] sm:$0xf]
        %v4199 = vld [vmem:[%s4196 + $0x8] sm:$0xf]
        %v4200 = vld [vmem:[%s4196 + $0xc] sm:$0xf]
        %v4201 = vld [vmem:[%s4196 + $0x10] sm:$0xf]
        %v4202 = vld [vmem:[%s4196 + $0x14] sm:$0xf]
        %v4203 = vld [vmem:[%s4196 + $0x18] sm:$0xf]
        %v4204 = vld [vmem:[%s4196 + $0x1c] sm:$0xf]
        %s4205 = scalar_lea.vmem %s5, 24
        %v4206 = vld [vmem:[%s4205] sm:$0x1]
        %v4208 = vlaneseq
        %v4209 = vshrl.u32 %v4208, 7
        %v4210 = vsub.s32 0, %v4209
        %v4211 = vrot.slane %v4206, %v4210
        %v4221 = vunpack.c.l.b16 %v4197
        %v4222 = vunpack.c.l.b16 %v4198
        %v4223 = vunpack.c.l.b16 %v4199
        %v4224 = vunpack.c.l.b16 %v4200
        %v4225 = vunpack.c.l.b16 %v4201
        %v4226 = vunpack.c.l.b16 %v4202
        %v4227 = vunpack.c.l.b16 %v4203
        %v4228 = vunpack.c.l.b16 %v4204
        %v4229 = vpack.c.b16 %v4222, %v4221
        %v4230 = vpack.c.b16 %v4224, %v4223
        %v4231 = vpack.c.b16 %v4226, %v4225
        %v4232 = vpack.c.b16 %v4228, %v4227
        %v4238 = vsel %vm544, %v4194, 0
        %4240 = vmatprep.subr.bf16.mxu0 0
        %4241 = vmatpush1.bf16.msra.mxu0 %v4229
        %4242 = vmatprep.subr.bf16.mxu0 0
        %4243 = vmatpush1.bf16.msra.mxu0 %v4230
        %4244 = vmatprep.subr.bf16.mxu0 0
        %4245 = vmatpush1.bf16.msra.mxu0 %v4231
        %4246 = vmatprep.subr.bf16.mxu0 0
        %4247 = vmatpush1.bf16.msra.mxu0 %v4232
        %4248 = vmatprep.subr.bf16.mxu0 0
        %4249 = vmatpush1.bf16.msra.mxu0 0
        %4250 = vmatprep.subr.bf16.mxu0 0
        %4251 = vmatpush1.bf16.msra.mxu0 0
        %4252 = vmatprep.subr.bf16.mxu0 0
        %4253 = vmatpush1.bf16.msra.mxu0 0
        %4254 = vmatprep.subr.bf16.mxu0 0
        %4255 = vmatpush1.bf16.msra.mxu0 0
        %4256 = vmatprep.subr.bf16.mxu0 0
        %4257 = vmatpush1.bf16.msra.mxu0 0
        %4258 = vmatprep.subr.bf16.mxu0 0
        %4259 = vmatpush1.bf16.msra.mxu0 0
        %4260 = vmatprep.subr.bf16.mxu0 0
        %4261 = vmatpush1.bf16.msra.mxu0 0
        %4262 = vmatprep.subr.bf16.mxu0 0
        %4263 = vmatpush1.bf16.msra.mxu0 0
        %4264 = vmatprep.subr.bf16.mxu0 0
        %4265 = vmatpush1.bf16.msra.mxu0 0
        %4266 = vmatprep.subr.bf16.mxu0 0
        %4267 = vmatpush1.bf16.msra.mxu0 0
        %4268 = vmatprep.subr.bf16.mxu0 0
        %4269 = vmatpush1.bf16.msra.mxu0 0
        %4270 = vmatprep.subr.bf16.mxu0 0
        %4271 = vmatpush1.bf16.msra.mxu0 0
        %4272 = vmatprep.mubr.bf16.mxu0 0
        %4273 = vmatmul.mubr.bf16.gmra.mrb[0].mxu0 %v4238
        %v4274 = vpop.f32.mrb[0].mxu0
        %v4275 = vadd.f32 %v4211, %v4274
        %v4276 = vpop.f32.mrb[0].mxu0
        %v4277 = vpop.f32.mrb[0].mxu0
        %v4278 = vpop.f32.mrb[0].mxu0
        %4279 = vdwg.mxu0
        %v4280 = vpack.c.bf16 %v4275, %v4275
        %s4281 = scalar_lea.vmem %s4, 896
        %v4282 = vld [vmem:[%s4281] sm:$0xf]
        %v4283 = vld [vmem:[%s4281 + $0x4] sm:$0xf]
        %v4284 = vld [vmem:[%s4281 + $0x8] sm:$0xf]
        %v4285 = vld [vmem:[%s4281 + $0xc] sm:$0xf]
        %v4286 = vld [vmem:[%s4281 + $0x10] sm:$0xf]
        %v4287 = vld [vmem:[%s4281 + $0x14] sm:$0xf]
        %v4288 = vld [vmem:[%s4281 + $0x18] sm:$0xf]
        %v4289 = vld [vmem:[%s4281 + $0x1c] sm:$0xf]
        %s4290 = scalar_lea.vmem %s5, 28
        %v4291 = vld [vmem:[%s4290] sm:$0x1]
        %v4293 = vlaneseq
        %v4294 = vshrl.u32 %v4293, 7
        %v4295 = vsub.s32 0, %v4294
        %v4296 = vrot.slane %v4291, %v4295
        %v4306 = vunpack.c.l.b16 %v4282
        %v4307 = vunpack.c.l.b16 %v4283
        %v4308 = vunpack.c.l.b16 %v4284
        %v4309 = vunpack.c.l.b16 %v4285
        %v4310 = vunpack.c.l.b16 %v4286
        %v4311 = vunpack.c.l.b16 %v4287
        %v4312 = vunpack.c.l.b16 %v4288
        %v4313 = vunpack.c.l.b16 %v4289
        %v4314 = vpack.c.b16 %v4307, %v4306
        %v4315 = vpack.c.b16 %v4309, %v4308
        %v4316 = vpack.c.b16 %v4311, %v4310
        %v4317 = vpack.c.b16 %v4313, %v4312
        %v4323 = vsel %vm544, %v4195, 0
        %4325 = vmatprep.subr.bf16.mxu0 0
        %4326 = vmatpush1.bf16.msra.mxu0 %v4314
        %4327 = vmatprep.subr.bf16.mxu0 0
        %4328 = vmatpush1.bf16.msra.mxu0 %v4315
        %4329 = vmatprep.subr.bf16.mxu0 0
        %4330 = vmatpush1.bf16.msra.mxu0 %v4316
        %4331 = vmatprep.subr.bf16.mxu0 0
        %4332 = vmatpush1.bf16.msra.mxu0 %v4317
        %4333 = vmatprep.subr.bf16.mxu0 0
        %4334 = vmatpush1.bf16.msra.mxu0 0
        %4335 = vmatprep.subr.bf16.mxu0 0
        %4336 = vmatpush1.bf16.msra.mxu0 0
        %4337 = vmatprep.subr.bf16.mxu0 0
        %4338 = vmatpush1.bf16.msra.mxu0 0
        %4339 = vmatprep.subr.bf16.mxu0 0
        %4340 = vmatpush1.bf16.msra.mxu0 0
        %4341 = vmatprep.subr.bf16.mxu0 0
        %4342 = vmatpush1.bf16.msra.mxu0 0
        %4343 = vmatprep.subr.bf16.mxu0 0
        %4344 = vmatpush1.bf16.msra.mxu0 0
        %4345 = vmatprep.subr.bf16.mxu0 0
        %4346 = vmatpush1.bf16.msra.mxu0 0
        %4347 = vmatprep.subr.bf16.mxu0 0
        %4348 = vmatpush1.bf16.msra.mxu0 0
        %4349 = vmatprep.subr.bf16.mxu0 0
        %4350 = vmatpush1.bf16.msra.mxu0 0
        %4351 = vmatprep.subr.bf16.mxu0 0
        %4352 = vmatpush1.bf16.msra.mxu0 0
        %4353 = vmatprep.subr.bf16.mxu0 0
        %4354 = vmatpush1.bf16.msra.mxu0 0
        %4355 = vmatprep.subr.bf16.mxu0 0
        %4356 = vmatpush1.bf16.msra.mxu0 0
        %4357 = vmatprep.mubr.bf16.mxu0 0
        %4358 = vmatmul.mubr.bf16.gmra.mrb[0].mxu0 %v4323
        %v4359 = vpop.f32.mrb[0].mxu0
        %v4360 = vadd.f32 %v4296, %v4359
        %v4361 = vpop.f32.mrb[0].mxu0
        %v4362 = vpop.f32.mrb[0].mxu0
        %v4363 = vpop.f32.mrb[0].mxu0
        %4364 = vdwg.mxu0
        %v4365 = vpack.c.bf16 %v4360, %v4360
        %s4366 = scalar_lea.vmem %s4, 1024
        %v4367 = vld [vmem:[%s4366] sm:$0xf]
        %v4368 = vld [vmem:[%s4366 + $0x4] sm:$0xf]
        %v4369 = vld [vmem:[%s4366 + $0x8] sm:$0xf]
        %v4370 = vld [vmem:[%s4366 + $0xc] sm:$0xf]
        %v4371 = vld [vmem:[%s4366 + $0x10] sm:$0xf]
        %v4372 = vld [vmem:[%s4366 + $0x14] sm:$0xf]
        %v4373 = vld [vmem:[%s4366 + $0x18] sm:$0xf]
        %v4374 = vld [vmem:[%s4366 + $0x1c] sm:$0xf]
        %s4375 = scalar_lea.vmem %s5, 32
        %v4376 = vld [vmem:[%s4375] sm:$0x1]
        %v4378 = vlaneseq
        %v4379 = vshrl.u32 %v4378, 7
        %v4380 = vsub.s32 0, %v4379
        %v4381 = vrot.slane %v4376, %v4380
        %v4391 = vunpack.c.l.b16 %v4367
        %v4392 = vunpack.c.l.b16 %v4368
        %v4393 = vunpack.c.l.b16 %v4369
        %v4394 = vunpack.c.l.b16 %v4370
        %v4395 = vunpack.c.l.b16 %v4371
        %v4396 = vunpack.c.l.b16 %v4372
        %v4397 = vunpack.c.l.b16 %v4373
        %v4398 = vunpack.c.l.b16 %v4374
        %v4399 = vpack.c.b16 %v4392, %v4391
        %v4400 = vpack.c.b16 %v4394, %v4393
        %v4401 = vpack.c.b16 %v4396, %v4395
        %v4402 = vpack.c.b16 %v4398, %v4397
        %4407 = vmatprep.subr.bf16.mxu0 0
        %4408 = vmatpush1.bf16.msra.mxu0 %v4399
        %4409 = vmatprep.subr.bf16.mxu0 0
        %4410 = vmatpush1.bf16.msra.mxu0 %v4400
        %4411 = vmatprep.subr.bf16.mxu0 0
        %4412 = vmatpush1.bf16.msra.mxu0 %v4401
        %4413 = vmatprep.subr.bf16.mxu0 0
        %4414 = vmatpush1.bf16.msra.mxu0 %v4402
        %4415 = vmatprep.subr.bf16.mxu0 0
        %4416 = vmatpush1.bf16.msra.mxu0 0
        %4417 = vmatprep.subr.bf16.mxu0 0
        %4418 = vmatpush1.bf16.msra.mxu0 0
        %4419 = vmatprep.subr.bf16.mxu0 0
        %4420 = vmatpush1.bf16.msra.mxu0 0
        %4421 = vmatprep.subr.bf16.mxu0 0
        %4422 = vmatpush1.bf16.msra.mxu0 0
        %4423 = vmatprep.subr.bf16.mxu0 0
        %4424 = vmatpush1.bf16.msra.mxu0 0
        %4425 = vmatprep.subr.bf16.mxu0 0
        %4426 = vmatpush1.bf16.msra.mxu0 0
        %4427 = vmatprep.subr.bf16.mxu0 0
        %4428 = vmatpush1.bf16.msra.mxu0 0
        %4429 = vmatprep.subr.bf16.mxu0 0
        %4430 = vmatpush1.bf16.msra.mxu0 0
        %4431 = vmatprep.subr.bf16.mxu0 0
        %4432 = vmatpush1.bf16.msra.mxu0 0
        %4433 = vmatprep.subr.bf16.mxu0 0
        %4434 = vmatpush1.bf16.msra.mxu0 0
        %4435 = vmatprep.subr.bf16.mxu0 0
        %4436 = vmatpush1.bf16.msra.mxu0 0
        %4437 = vmatprep.subr.bf16.mxu0 0
        %4438 = vmatpush1.bf16.msra.mxu0 0
        %4439 = vmatprep.mubr.bf16.mxu0 0
        %4440 = vmatmul.mubr.bf16.gmra.mrb[0].mxu0 %v4323
        %v4441 = vpop.f32.mrb[0].mxu0
        %v4442 = vadd.f32 %v4381, %v4441
        %v4443 = vpop.f32.mrb[0].mxu0
        %v4444 = vpop.f32.mrb[0].mxu0
        %v4445 = vpop.f32.mrb[0].mxu0
        %4446 = vdwg.mxu0
        %v4447 = vpack.c.bf16 %v4442, %v4442
        %v4449 = vsel %vm753, %v4280, 0
        %v4452 = vsel %vm753, %v4365, 0
        %4454 = vmatprep.subr.bf16.mxu0 0
        %4455 = vmatpush1.bf16.xpose.msra.mxu0 %v4452
        %4456 = vmatprep.subr.bf16.mxu0 0
        %4457 = vmatpush1.bf16.xpose.msra.mxu0 0
        %4458 = vmatprep.subr.bf16.mxu0 0
        %4459 = vmatpush1.bf16.xpose.msra.mxu0 0
        %4460 = vmatprep.subr.bf16.mxu0 0
        %4461 = vmatpush1.bf16.xpose.msra.mxu0 0
        %4462 = vmatprep.subr.bf16.mxu0 0
        %4463 = vmatpush1.bf16.xpose.msra.mxu0 0
        %4464 = vmatprep.subr.bf16.mxu0 0
        %4465 = vmatpush1.bf16.xpose.msra.mxu0 0
        %4466 = vmatprep.subr.bf16.mxu0 0
        %4467 = vmatpush1.bf16.xpose.msra.mxu0 0
        %4468 = vmatprep.subr.bf16.mxu0 0
        %4469 = vmatpush1.bf16.xpose.msra.mxu0 0
        %4470 = vmatprep.subr.bf16.mxu0 0
        %4471 = vmatpush1.bf16.xpose.msra.mxu0 0
        %4472 = vmatprep.subr.bf16.mxu0 0
        %4473 = vmatpush1.bf16.xpose.msra.mxu0 0
        %4474 = vmatprep.subr.bf16.mxu0 0
        %4475 = vmatpush1.bf16.xpose.msra.mxu0 0
        %4476 = vmatprep.subr.bf16.mxu0 0
        %4477 = vmatpush1.bf16.xpose.msra.mxu0 0
        %4478 = vmatprep.subr.bf16.mxu0 0
        %4479 = vmatpush1.bf16.xpose.msra.mxu0 0
        %4480 = vmatprep.subr.bf16.mxu0 0
        %4481 = vmatpush1.bf16.xpose.msra.mxu0 0
        %4482 = vmatprep.subr.bf16.mxu0 0
        %4483 = vmatpush1.bf16.xpose.msra.mxu0 0
        %4484 = vmatprep.subr.bf16.mxu0 0
        %4485 = vmatpush1.bf16.xpose.msra.mxu0 0
        %4486 = vmatprep.mubr.bf16.mxu0 0
        %4487 = vmatmul.mubr.bf16.gmra.mrb[0].mxu0 %v4449
        %v4488 = vpop.f32.mrb[0].mxu0
        %v4489 = vadd.f32 0.0, %v4488
        %v4490 = vpop.f32.mrb[0].mxu0
        %v4491 = vpop.f32.mrb[0].mxu0
        %v4492 = vpop.f32.mrb[0].mxu0
        %4493 = vdwg.mxu0
        %v4494 = vmul.f32 %v4489, 0.25
        %v4495 = vadd.f32 %v4494, %v502
        %v4496 = vsel %vm802, %v4495, -inf
        %4497 = vmax.xlane.f32.xlu0 %v4496
        %v4498 = vpop.xlane.xlu0 %4497
        %v4499 = vsub.f32 %v4495, %v4498
        %v4500 = vmul.f32 %v4499, 1.442695
        %v4501 = vpow.pop %v4500
        %v4502 = vsel %vm802, %v4501, 0.0
        %4503 = vadd.xlane.f32.xlu0 %v4502
        %v4504 = vpop.xlane.xlu0 %4503
        %v4505 = vrcp.pop %v4504
        %v4506 = vmul.f32 %v4501, %v4505
        %v4507 = vpack.c.bf16 %v4506, %v4506
        %v4509 = vsel %vm802, %v4507, 0
        %v4512 = vsel %vm818, %v4447, 0
        %4514 = vmatprep.subr.bf16.mxu0 0
        %4515 = vmatpush1.bf16.msra.mxu0 %v4512
        %4516 = vmatprep.subr.bf16.mxu0 0
        %4517 = vmatpush1.bf16.msra.mxu0 0
        %4518 = vmatprep.subr.bf16.mxu0 0
        %4519 = vmatpush1.bf16.msra.mxu0 0
        %4520 = vmatprep.subr.bf16.mxu0 0
        %4521 = vmatpush1.bf16.msra.mxu0 0
        %4522 = vmatprep.subr.bf16.mxu0 0
        %4523 = vmatpush1.bf16.msra.mxu0 0
        %4524 = vmatprep.subr.bf16.mxu0 0
        %4525 = vmatpush1.bf16.msra.mxu0 0
        %4526 = vmatprep.subr.bf16.mxu0 0
        %4527 = vmatpush1.bf16.msra.mxu0 0
        %4528 = vmatprep.subr.bf16.mxu0 0
        %4529 = vmatpush1.bf16.msra.mxu0 0
        %4530 = vmatprep.subr.bf16.mxu0 0
        %4531 = vmatpush1.bf16.msra.mxu0 0
        %4532 = vmatprep.subr.bf16.mxu0 0
        %4533 = vmatpush1.bf16.msra.mxu0 0
        %4534 = vmatprep.subr.bf16.mxu0 0
        %4535 = vmatpush1.bf16.msra.mxu0 0
        %4536 = vmatprep.subr.bf16.mxu0 0
        %4537 = vmatpush1.bf16.msra.mxu0 0
        %4538 = vmatprep.subr.bf16.mxu0 0
        %4539 = vmatpush1.bf16.msra.mxu0 0
        %4540 = vmatprep.subr.bf16.mxu0 0
        %4541 = vmatpush1.bf16.msra.mxu0 0
        %4542 = vmatprep.subr.bf16.mxu0 0
        %4543 = vmatpush1.bf16.msra.mxu0 0
        %4544 = vmatprep.subr.bf16.mxu0 0
        %4545 = vmatpush1.bf16.msra.mxu0 0
        %4546 = vmatprep.mubr.bf16.mxu0 0
        %4547 = vmatmul.mubr.bf16.gmra.mrb[0].mxu0 %v4509
        %v4548 = vpop.f32.mrb[0].mxu0
        %v4549 = vadd.f32 0.0, %v4548
        %v4550 = vpop.f32.mrb[0].mxu0
        %v4551 = vpop.f32.mrb[0].mxu0
        %v4552 = vpop.f32.mrb[0].mxu0
        %4553 = vdwg.mxu0
        %v4554 = vpack.c.bf16 %v4549, %v4549
        %s4555 = scalar_lea.vmem %s6, 64
        %v4556 = vld [vmem:[%s4555] sm:$0xf]
        %v4557 = vld [vmem:[%s4555 + $0x4] sm:$0xf]
        %s4558 = scalar_lea.vmem %s4, 800
        %v4559 = vld [vmem:[%s4558] sm:$0xf]
        %v4560 = vld [vmem:[%s4558 + $0x4] sm:$0xf]
        %v4561 = vld [vmem:[%s4558 + $0x8] sm:$0xf]
        %v4562 = vld [vmem:[%s4558 + $0xc] sm:$0xf]
        %v4563 = vld [vmem:[%s4558 + $0x10] sm:$0xf]
        %v4564 = vld [vmem:[%s4558 + $0x14] sm:$0xf]
        %v4565 = vld [vmem:[%s4558 + $0x18] sm:$0xf]
        %v4566 = vld [vmem:[%s4558 + $0x1c] sm:$0xf]
        %s4567 = scalar_lea.vmem %s5, 25
        %v4568 = vld [vmem:[%s4567] sm:$0x1]
        %v4570 = vlaneseq
        %v4571 = vshrl.u32 %v4570, 7
        %v4572 = vsub.s32 0, %v4571
        %v4573 = vrot.slane %v4568, %v4572
        %v4583 = vunpack.c.l.b16 %v4559
        %v4584 = vunpack.c.l.b16 %v4560
        %v4585 = vunpack.c.l.b16 %v4561
        %v4586 = vunpack.c.l.b16 %v4562
        %v4587 = vunpack.c.l.b16 %v4563
        %v4588 = vunpack.c.l.b16 %v4564
        %v4589 = vunpack.c.l.b16 %v4565
        %v4590 = vunpack.c.l.b16 %v4566
        %v4591 = vpack.c.b16 %v4584, %v4583
        %v4592 = vpack.c.b16 %v4586, %v4585
        %v4593 = vpack.c.b16 %v4588, %v4587
        %v4594 = vpack.c.b16 %v4590, %v4589
        %4599 = vmatprep.subr.bf16.mxu0 0
        %4600 = vmatpush1.bf16.msra.mxu0 %v4591
        %4601 = vmatprep.subr.bf16.mxu0 0
        %4602 = vmatpush1.bf16.msra.mxu0 %v4592
        %4603 = vmatprep.subr.bf16.mxu0 0
        %4604 = vmatpush1.bf16.msra.mxu0 %v4593
        %4605 = vmatprep.subr.bf16.mxu0 0
        %4606 = vmatpush1.bf16.msra.mxu0 %v4594
        %4607 = vmatprep.subr.bf16.mxu0 0
        %4608 = vmatpush1.bf16.msra.mxu0 0
        %4609 = vmatprep.subr.bf16.mxu0 0
        %4610 = vmatpush1.bf16.msra.mxu0 0
        %4611 = vmatprep.subr.bf16.mxu0 0
        %4612 = vmatpush1.bf16.msra.mxu0 0
        %4613 = vmatprep.subr.bf16.mxu0 0
        %4614 = vmatpush1.bf16.msra.mxu0 0
        %4615 = vmatprep.subr.bf16.mxu0 0
        %4616 = vmatpush1.bf16.msra.mxu0 0
        %4617 = vmatprep.subr.bf16.mxu0 0
        %4618 = vmatpush1.bf16.msra.mxu0 0
        %4619 = vmatprep.subr.bf16.mxu0 0
        %4620 = vmatpush1.bf16.msra.mxu0 0
        %4621 = vmatprep.subr.bf16.mxu0 0
        %4622 = vmatpush1.bf16.msra.mxu0 0
        %4623 = vmatprep.subr.bf16.mxu0 0
        %4624 = vmatpush1.bf16.msra.mxu0 0
        %4625 = vmatprep.subr.bf16.mxu0 0
        %4626 = vmatpush1.bf16.msra.mxu0 0
        %4627 = vmatprep.subr.bf16.mxu0 0
        %4628 = vmatpush1.bf16.msra.mxu0 0
        %4629 = vmatprep.subr.bf16.mxu0 0
        %4630 = vmatpush1.bf16.msra.mxu0 0
        %4631 = vmatprep.mubr.bf16.mxu0 0
        %4632 = vmatmul.mubr.bf16.gmra.mrb[0].mxu0 %v4238
        %v4633 = vpop.f32.mrb[0].mxu0
        %v4634 = vadd.f32 %v4573, %v4633
        %v4635 = vpop.f32.mrb[0].mxu0
        %v4636 = vpop.f32.mrb[0].mxu0
        %v4637 = vpop.f32.mrb[0].mxu0
        %4638 = vdwg.mxu0
        %v4639 = vpack.c.bf16 %v4634, %v4634
        %s4640 = scalar_lea.vmem %s4, 928
        %v4641 = vld [vmem:[%s4640] sm:$0xf]
        %v4642 = vld [vmem:[%s4640 + $0x4] sm:$0xf]
        %v4643 = vld [vmem:[%s4640 + $0x8] sm:$0xf]
        %v4644 = vld [vmem:[%s4640 + $0xc] sm:$0xf]
        %v4645 = vld [vmem:[%s4640 + $0x10] sm:$0xf]
        %v4646 = vld [vmem:[%s4640 + $0x14] sm:$0xf]
        %v4647 = vld [vmem:[%s4640 + $0x18] sm:$0xf]
        %v4648 = vld [vmem:[%s4640 + $0x1c] sm:$0xf]
        %s4649 = scalar_lea.vmem %s5, 29
        %v4650 = vld [vmem:[%s4649] sm:$0x1]
        %v4652 = vlaneseq
        %v4653 = vshrl.u32 %v4652, 7
        %v4654 = vsub.s32 0, %v4653
        %v4655 = vrot.slane %v4650, %v4654
        %v4665 = vunpack.c.l.b16 %v4641
        %v4666 = vunpack.c.l.b16 %v4642
        %v4667 = vunpack.c.l.b16 %v4643
        %v4668 = vunpack.c.l.b16 %v4644
        %v4669 = vunpack.c.l.b16 %v4645
        %v4670 = vunpack.c.l.b16 %v4646
        %v4671 = vunpack.c.l.b16 %v4647
        %v4672 = vunpack.c.l.b16 %v4648
        %v4673 = vpack.c.b16 %v4666, %v4665
        %v4674 = vpack.c.b16 %v4668, %v4667
        %v4675 = vpack.c.b16 %v4670, %v4669
        %v4676 = vpack.c.b16 %v4672, %v4671
        %4681 = vmatprep.subr.bf16.mxu0 0
        %4682 = vmatpush1.bf16.msra.mxu0 %v4673
        %4683 = vmatprep.subr.bf16.mxu0 0
        %4684 = vmatpush1.bf16.msra.mxu0 %v4674
        %4685 = vmatprep.subr.bf16.mxu0 0
        %4686 = vmatpush1.bf16.msra.mxu0 %v4675
        %4687 = vmatprep.subr.bf16.mxu0 0
        %4688 = vmatpush1.bf16.msra.mxu0 %v4676
        %4689 = vmatprep.subr.bf16.mxu0 0
        %4690 = vmatpush1.bf16.msra.mxu0 0
        %4691 = vmatprep.subr.bf16.mxu0 0
        %4692 = vmatpush1.bf16.msra.mxu0 0
        %4693 = vmatprep.subr.bf16.mxu0 0
        %4694 = vmatpush1.bf16.msra.mxu0 0
        %4695 = vmatprep.subr.bf16.mxu0 0
        %4696 = vmatpush1.bf16.msra.mxu0 0
        %4697 = vmatprep.subr.bf16.mxu0 0
        %4698 = vmatpush1.bf16.msra.mxu0 0
        %4699 = vmatprep.subr.bf16.mxu0 0
        %4700 = vmatpush1.bf16.msra.mxu0 0
        %4701 = vmatprep.subr.bf16.mxu0 0
        %4702 = vmatpush1.bf16.msra.mxu0 0
        %4703 = vmatprep.subr.bf16.mxu0 0
        %4704 = vmatpush1.bf16.msra.mxu0 0
        %4705 = vmatprep.subr.bf16.mxu0 0
        %4706 = vmatpush1.bf16.msra.mxu0 0
        %4707 = vmatprep.subr.bf16.mxu0 0
        %4708 = vmatpush1.bf16.msra.mxu0 0
        %4709 = vmatprep.subr.bf16.mxu0 0
        %4710 = vmatpush1.bf16.msra.mxu0 0
        %4711 = vmatprep.subr.bf16.mxu0 0
        %4712 = vmatpush1.bf16.msra.mxu0 0
        %4713 = vmatprep.mubr.bf16.mxu0 0
        %4714 = vmatmul.mubr.bf16.gmra.mrb[0].mxu0 %v4323
        %v4715 = vpop.f32.mrb[0].mxu0
        %v4716 = vadd.f32 %v4655, %v4715
        %v4717 = vpop.f32.mrb[0].mxu0
        %v4718 = vpop.f32.mrb[0].mxu0
        %v4719 = vpop.f32.mrb[0].mxu0
        %4720 = vdwg.mxu0
        %v4721 = vpack.c.bf16 %v4716, %v4716
        %s4722 = scalar_lea.vmem %s4, 1056
        %v4723 = vld [vmem:[%s4722] sm:$0xf]
        %v4724 = vld [vmem:[%s4722 + $0x4] sm:$0xf]
        %v4725 = vld [vmem:[%s4722 + $0x8] sm:$0xf]
        %v4726 = vld [vmem:[%s4722 + $0xc] sm:$0xf]
        %v4727 = vld [vmem:[%s4722 + $0x10] sm:$0xf]
        %v4728 = vld [vmem:[%s4722 + $0x14] sm:$0xf]
        %v4729 = vld [vmem:[%s4722 + $0x18] sm:$0xf]
        %v4730 = vld [vmem:[%s4722 + $0x1c] sm:$0xf]
        %s4731 = scalar_lea.vmem %s5, 33
        %v4732 = vld [vmem:[%s4731] sm:$0x1]
        %v4734 = vlaneseq
        %v4735 = vshrl.u32 %v4734, 7
        %v4736 = vsub.s32 0, %v4735
        %v4737 = vrot.slane %v4732, %v4736
        %v4747 = vunpack.c.l.b16 %v4723
        %v4748 = vunpack.c.l.b16 %v4724
        %v4749 = vunpack.c.l.b16 %v4725
        %v4750 = vunpack.c.l.b16 %v4726
        %v4751 = vunpack.c.l.b16 %v4727
        %v4752 = vunpack.c.l.b16 %v4728
        %v4753 = vunpack.c.l.b16 %v4729
        %v4754 = vunpack.c.l.b16 %v4730
        %v4755 = vpack.c.b16 %v4748, %v4747
        %v4756 = vpack.c.b16 %v4750, %v4749
        %v4757 = vpack.c.b16 %v4752, %v4751
        %v4758 = vpack.c.b16 %v4754, %v4753
        %4763 = vmatprep.subr.bf16.mxu0 0
        %4764 = vmatpush1.bf16.msra.mxu0 %v4755
        %4765 = vmatprep.subr.bf16.mxu0 0
        %4766 = vmatpush1.bf16.msra.mxu0 %v4756
        %4767 = vmatprep.subr.bf16.mxu0 0
        %4768 = vmatpush1.bf16.msra.mxu0 %v4757
        %4769 = vmatprep.subr.bf16.mxu0 0
        %4770 = vmatpush1.bf16.msra.mxu0 %v4758
        %4771 = vmatprep.subr.bf16.mxu0 0
        %4772 = vmatpush1.bf16.msra.mxu0 0
        %4773 = vmatprep.subr.bf16.mxu0 0
        %4774 = vmatpush1.bf16.msra.mxu0 0
        %4775 = vmatprep.subr.bf16.mxu0 0
        %4776 = vmatpush1.bf16.msra.mxu0 0
        %4777 = vmatprep.subr.bf16.mxu0 0
        %4778 = vmatpush1.bf16.msra.mxu0 0
        %4779 = vmatprep.subr.bf16.mxu0 0
        %4780 = vmatpush1.bf16.msra.mxu0 0
        %4781 = vmatprep.subr.bf16.mxu0 0
        %4782 = vmatpush1.bf16.msra.mxu0 0
        %4783 = vmatprep.subr.bf16.mxu0 0
        %4784 = vmatpush1.bf16.msra.mxu0 0
        %4785 = vmatprep.subr.bf16.mxu0 0
        %4786 = vmatpush1.bf16.msra.mxu0 0
        %4787 = vmatprep.subr.bf16.mxu0 0
        %4788 = vmatpush1.bf16.msra.mxu0 0
        %4789 = vmatprep.subr.bf16.mxu0 0
        %4790 = vmatpush1.bf16.msra.mxu0 0
        %4791 = vmatprep.subr.bf16.mxu0 0
        %4792 = vmatpush1.bf16.msra.mxu0 0
        %4793 = vmatprep.subr.bf16.mxu0 0
        %4794 = vmatpush1.bf16.msra.mxu0 0
        %4795 = vmatprep.mubr.bf16.mxu0 0
        %4796 = vmatmul.mubr.bf16.gmra.mrb[0].mxu0 %v4323
        %v4797 = vpop.f32.mrb[0].mxu0
        %v4798 = vadd.f32 %v4737, %v4797
        %v4799 = vpop.f32.mrb[0].mxu0
        %v4800 = vpop.f32.mrb[0].mxu0
        %v4801 = vpop.f32.mrb[0].mxu0
        %4802 = vdwg.mxu0
        %v4803 = vpack.c.bf16 %v4798, %v4798
        %v4805 = vsel %vm753, %v4639, 0
        %v4808 = vsel %vm753, %v4721, 0
        %4810 = vmatprep.subr.bf16.mxu0 0
        %4811 = vmatpush1.bf16.xpose.msra.mxu0 %v4808
        %4812 = vmatprep.subr.bf16.mxu0 0
        %4813 = vmatpush1.bf16.xpose.msra.mxu0 0
        %4814 = vmatprep.subr.bf16.mxu0 0
        %4815 = vmatpush1.bf16.xpose.msra.mxu0 0
        %4816 = vmatprep.subr.bf16.mxu0 0
        %4817 = vmatpush1.bf16.xpose.msra.mxu0 0
        %4818 = vmatprep.subr.bf16.mxu0 0
        %4819 = vmatpush1.bf16.xpose.msra.mxu0 0
        %4820 = vmatprep.subr.bf16.mxu0 0
        %4821 = vmatpush1.bf16.xpose.msra.mxu0 0
        %4822 = vmatprep.subr.bf16.mxu0 0
        %4823 = vmatpush1.bf16.xpose.msra.mxu0 0
        %4824 = vmatprep.subr.bf16.mxu0 0
        %4825 = vmatpush1.bf16.xpose.msra.mxu0 0
        %4826 = vmatprep.subr.bf16.mxu0 0
        %4827 = vmatpush1.bf16.xpose.msra.mxu0 0
        %4828 = vmatprep.subr.bf16.mxu0 0
        %4829 = vmatpush1.bf16.xpose.msra.mxu0 0
        %4830 = vmatprep.subr.bf16.mxu0 0
        %4831 = vmatpush1.bf16.xpose.msra.mxu0 0
        %4832 = vmatprep.subr.bf16.mxu0 0
        %4833 = vmatpush1.bf16.xpose.msra.mxu0 0
        %4834 = vmatprep.subr.bf16.mxu0 0
        %4835 = vmatpush1.bf16.xpose.msra.mxu0 0
        %4836 = vmatprep.subr.bf16.mxu0 0
        %4837 = vmatpush1.bf16.xpose.msra.mxu0 0
        %4838 = vmatprep.subr.bf16.mxu0 0
        %4839 = vmatpush1.bf16.xpose.msra.mxu0 0
        %4840 = vmatprep.subr.bf16.mxu0 0
        %4841 = vmatpush1.bf16.xpose.msra.mxu0 0
        %4842 = vmatprep.mubr.bf16.mxu0 0
        %4843 = vmatmul.mubr.bf16.gmra.mrb[0].mxu0 %v4805
        %v4844 = vpop.f32.mrb[0].mxu0
        %v4845 = vadd.f32 0.0, %v4844
        %v4846 = vpop.f32.mrb[0].mxu0
        %v4847 = vpop.f32.mrb[0].mxu0
        %v4848 = vpop.f32.mrb[0].mxu0
        %4849 = vdwg.mxu0
        %v4850 = vmul.f32 %v4845, 0.25
        %v4851 = vadd.f32 %v4850, %v502
        %v4852 = vsel %vm802, %v4851, -inf
        %4853 = vmax.xlane.f32.xlu0 %v4852
        %v4854 = vpop.xlane.xlu0 %4853
        %v4855 = vsub.f32 %v4851, %v4854
        %v4856 = vmul.f32 %v4855, 1.442695
        %v4857 = vpow.pop %v4856
        %v4858 = vsel %vm802, %v4857, 0.0
        %4859 = vadd.xlane.f32.xlu0 %v4858
        %v4860 = vpop.xlane.xlu0 %4859
        %v4861 = vrcp.pop %v4860
        %v4862 = vmul.f32 %v4857, %v4861
        %v4863 = vpack.c.bf16 %v4862, %v4862
        %v4865 = vsel %vm802, %v4863, 0
        %v4868 = vsel %vm818, %v4803, 0
        %4870 = vmatprep.subr.bf16.mxu0 0
        %4871 = vmatpush1.bf16.msra.mxu0 %v4868
        %4872 = vmatprep.subr.bf16.mxu0 0
        %4873 = vmatpush1.bf16.msra.mxu0 0
        %4874 = vmatprep.subr.bf16.mxu0 0
        %4875 = vmatpush1.bf16.msra.mxu0 0
        %4876 = vmatprep.subr.bf16.mxu0 0
        %4877 = vmatpush1.bf16.msra.mxu0 0
        %4878 = vmatprep.subr.bf16.mxu0 0
        %4879 = vmatpush1.bf16.msra.mxu0 0
        %4880 = vmatprep.subr.bf16.mxu0 0
        %4881 = vmatpush1.bf16.msra.mxu0 0
        %4882 = vmatprep.subr.bf16.mxu0 0
        %4883 = vmatpush1.bf16.msra.mxu0 0
        %4884 = vmatprep.subr.bf16.mxu0 0
        %4885 = vmatpush1.bf16.msra.mxu0 0
        %4886 = vmatprep.subr.bf16.mxu0 0
        %4887 = vmatpush1.bf16.msra.mxu0 0
        %4888 = vmatprep.subr.bf16.mxu0 0
        %4889 = vmatpush1.bf16.msra.mxu0 0
        %4890 = vmatprep.subr.bf16.mxu0 0
        %4891 = vmatpush1.bf16.msra.mxu0 0
        %4892 = vmatprep.subr.bf16.mxu0 0
        %4893 = vmatpush1.bf16.msra.mxu0 0
        %4894 = vmatprep.subr.bf16.mxu0 0
        %4895 = vmatpush1.bf16.msra.mxu0 0
        %4896 = vmatprep.subr.bf16.mxu0 0
        %4897 = vmatpush1.bf16.msra.mxu0 0
        %4898 = vmatprep.subr.bf16.mxu0 0
        %4899 = vmatpush1.bf16.msra.mxu0 0
        %4900 = vmatprep.subr.bf16.mxu0 0
        %4901 = vmatpush1.bf16.msra.mxu0 0
        %4902 = vmatprep.mubr.bf16.mxu0 0
        %4903 = vmatmul.mubr.bf16.gmra.mrb[0].mxu0 %v4865
        %v4904 = vpop.f32.mrb[0].mxu0
        %v4905 = vadd.f32 0.0, %v4904
        %v4906 = vpop.f32.mrb[0].mxu0
        %v4907 = vpop.f32.mrb[0].mxu0
        %v4908 = vpop.f32.mrb[0].mxu0
        %4909 = vdwg.mxu0
        %v4910 = vpack.c.bf16 %v4905, %v4905
        %s4911 = scalar_lea.vmem %s6, 72
        %v4912 = vld [vmem:[%s4911] sm:$0xf]
        %v4913 = vld [vmem:[%s4911 + $0x4] sm:$0xf]
        %v4916 = vunpack.c.l.b16 %v4912
        %v4917 = vunpack.c.l.b16 %v4913
        %v4918 = vpack.c.b16 %v4917, %v4916
        %v4921 = vsel %vm753, %v4910, 0
        %4923 = vmatprep.subr.bf16.mxu0 0
        %4924 = vmatpush1.bf16.msra.mxu0 %v4918
        %4925 = vmatprep.subr.bf16.mxu0 0
        %4926 = vmatpush1.bf16.msra.mxu0 0
        %4927 = vmatprep.subr.bf16.mxu0 0
        %4928 = vmatpush1.bf16.msra.mxu0 0
        %4929 = vmatprep.subr.bf16.mxu0 0
        %4930 = vmatpush1.bf16.msra.mxu0 0
        %4931 = vmatprep.subr.bf16.mxu0 0
        %4932 = vmatpush1.bf16.msra.mxu0 0
        %4933 = vmatprep.subr.bf16.mxu0 0
        %4934 = vmatpush1.bf16.msra.mxu0 0
        %4935 = vmatprep.subr.bf16.mxu0 0
        %4936 = vmatpush1.bf16.msra.mxu0 0
        %4937 = vmatprep.subr.bf16.mxu0 0
        %4938 = vmatpush1.bf16.msra.mxu0 0
        %4939 = vmatprep.subr.bf16.mxu0 0
        %4940 = vmatpush1.bf16.msra.mxu0 0
        %4941 = vmatprep.subr.bf16.mxu0 0
        %4942 = vmatpush1.bf16.msra.mxu0 0
        %4943 = vmatprep.subr.bf16.mxu0 0
        %4944 = vmatpush1.bf16.msra.mxu0 0
        %4945 = vmatprep.subr.bf16.mxu0 0
        %4946 = vmatpush1.bf16.msra.mxu0 0
        %4947 = vmatprep.subr.bf16.mxu0 0
        %4948 = vmatpush1.bf16.msra.mxu0 0
        %4949 = vmatprep.subr.bf16.mxu0 0
        %4950 = vmatpush1.bf16.msra.mxu0 0
        %4951 = vmatprep.subr.bf16.mxu0 0
        %4952 = vmatpush1.bf16.msra.mxu0 0
        %4953 = vmatprep.subr.bf16.mxu0 0
        %4954 = vmatpush1.bf16.msra.mxu0 0
        %4955 = vmatprep.mubr.bf16.mxu0 0
        %4956 = vmatmul.mubr.bf16.gmra.mrb[0].mxu0 %v4921
        %v4957 = vpop.f32.mrb[0].mxu0
        %v4958 = vadd.f32 0.0, %v4957
        %v4959 = vpop.f32.mrb[0].mxu0
        %v4960 = vpop.f32.mrb[0].mxu0
        %v4961 = vpop.f32.mrb[0].mxu0
        %4962 = vdwg.mxu0
        %v4965 = vunpack.c.l.b16 %v4556
        %v4966 = vunpack.c.l.b16 %v4557
        %v4967 = vpack.c.b16 %v4966, %v4965
        %v4970 = vsel %vm753, %v4554, 0
        %4972 = vmatprep.subr.bf16.mxu0 0
        %4973 = vmatpush1.bf16.msra.mxu0 %v4967
        %4974 = vmatprep.subr.bf16.mxu0 0
        %4975 = vmatpush1.bf16.msra.mxu0 0
        %4976 = vmatprep.subr.bf16.mxu0 0
        %4977 = vmatpush1.bf16.msra.mxu0 0
        %4978 = vmatprep.subr.bf16.mxu0 0
        %4979 = vmatpush1.bf16.msra.mxu0 0
        %4980 = vmatprep.subr.bf16.mxu0 0
        %4981 = vmatpush1.bf16.msra.mxu0 0
        %4982 = vmatprep.subr.bf16.mxu0 0
        %4983 = vmatpush1.bf16.msra.mxu0 0
        %4984 = vmatprep.subr.bf16.mxu0 0
        %4985 = vmatpush1.bf16.msra.mxu0 0
        %4986 = vmatprep.subr.bf16.mxu0 0
        %4987 = vmatpush1.bf16.msra.mxu0 0
        %4988 = vmatprep.subr.bf16.mxu0 0
        %4989 = vmatpush1.bf16.msra.mxu0 0
        %4990 = vmatprep.subr.bf16.mxu0 0
        %4991 = vmatpush1.bf16.msra.mxu0 0
        %4992 = vmatprep.subr.bf16.mxu0 0
        %4993 = vmatpush1.bf16.msra.mxu0 0
        %4994 = vmatprep.subr.bf16.mxu0 0
        %4995 = vmatpush1.bf16.msra.mxu0 0
        %4996 = vmatprep.subr.bf16.mxu0 0
        %4997 = vmatpush1.bf16.msra.mxu0 0
        %4998 = vmatprep.subr.bf16.mxu0 0
        %4999 = vmatpush1.bf16.msra.mxu0 0
        %5000 = vmatprep.subr.bf16.mxu0 0
        %5001 = vmatpush1.bf16.msra.mxu0 0
        %5002 = vmatprep.subr.bf16.mxu0 0
        %5003 = vmatpush1.bf16.msra.mxu0 0
        %5004 = vmatprep.mubr.bf16.mxu0 0
        %5005 = vmatmul.mubr.bf16.gmra.mrb[0].mxu0 %v4970
        %v5006 = vpop.f32.mrb[0].mxu0
        %v5007 = vadd.f32 %v4958, %v5006
        %v5008 = vpop.f32.mrb[0].mxu0
        %v5009 = vpop.f32.mrb[0].mxu0
        %v5010 = vpop.f32.mrb[0].mxu0
        %5011 = vdwg.mxu0
        %s5012 = scalar_lea.vmem %s4, 832
        %v5013 = vld [vmem:[%s5012] sm:$0xf]
        %v5014 = vld [vmem:[%s5012 + $0x4] sm:$0xf]
        %v5015 = vld [vmem:[%s5012 + $0x8] sm:$0xf]
        %v5016 = vld [vmem:[%s5012 + $0xc] sm:$0xf]
        %v5017 = vld [vmem:[%s5012 + $0x10] sm:$0xf]
        %v5018 = vld [vmem:[%s5012 + $0x14] sm:$0xf]
        %v5019 = vld [vmem:[%s5012 + $0x18] sm:$0xf]
        %v5020 = vld [vmem:[%s5012 + $0x1c] sm:$0xf]
        %s5021 = scalar_lea.vmem %s5, 26
        %v5022 = vld [vmem:[%s5021] sm:$0x1]
        %v5024 = vlaneseq
        %v5025 = vshrl.u32 %v5024, 7
        %v5026 = vsub.s32 0, %v5025
        %v5027 = vrot.slane %v5022, %v5026
        %v5037 = vunpack.c.l.b16 %v5013
        %v5038 = vunpack.c.l.b16 %v5014
        %v5039 = vunpack.c.l.b16 %v5015
        %v5040 = vunpack.c.l.b16 %v5016
        %v5041 = vunpack.c.l.b16 %v5017
        %v5042 = vunpack.c.l.b16 %v5018
        %v5043 = vunpack.c.l.b16 %v5019
        %v5044 = vunpack.c.l.b16 %v5020
        %v5045 = vpack.c.b16 %v5038, %v5037
        %v5046 = vpack.c.b16 %v5040, %v5039
        %v5047 = vpack.c.b16 %v5042, %v5041
        %v5048 = vpack.c.b16 %v5044, %v5043
        %5053 = vmatprep.subr.bf16.mxu0 0
        %5054 = vmatpush1.bf16.msra.mxu0 %v5045
        %5055 = vmatprep.subr.bf16.mxu0 0
        %5056 = vmatpush1.bf16.msra.mxu0 %v5046
        %5057 = vmatprep.subr.bf16.mxu0 0
        %5058 = vmatpush1.bf16.msra.mxu0 %v5047
        %5059 = vmatprep.subr.bf16.mxu0 0
        %5060 = vmatpush1.bf16.msra.mxu0 %v5048
        %5061 = vmatprep.subr.bf16.mxu0 0
        %5062 = vmatpush1.bf16.msra.mxu0 0
        %5063 = vmatprep.subr.bf16.mxu0 0
        %5064 = vmatpush1.bf16.msra.mxu0 0
        %5065 = vmatprep.subr.bf16.mxu0 0
        %5066 = vmatpush1.bf16.msra.mxu0 0
        %5067 = vmatprep.subr.bf16.mxu0 0
        %5068 = vmatpush1.bf16.msra.mxu0 0
        %5069 = vmatprep.subr.bf16.mxu0 0
        %5070 = vmatpush1.bf16.msra.mxu0 0
        %5071 = vmatprep.subr.bf16.mxu0 0
        %5072 = vmatpush1.bf16.msra.mxu0 0
        %5073 = vmatprep.subr.bf16.mxu0 0
        %5074 = vmatpush1.bf16.msra.mxu0 0
        %5075 = vmatprep.subr.bf16.mxu0 0
        %5076 = vmatpush1.bf16.msra.mxu0 0
        %5077 = vmatprep.subr.bf16.mxu0 0
        %5078 = vmatpush1.bf16.msra.mxu0 0
        %5079 = vmatprep.subr.bf16.mxu0 0
        %5080 = vmatpush1.bf16.msra.mxu0 0
        %5081 = vmatprep.subr.bf16.mxu0 0
        %5082 = vmatpush1.bf16.msra.mxu0 0
        %5083 = vmatprep.subr.bf16.mxu0 0
        %5084 = vmatpush1.bf16.msra.mxu0 0
        %5085 = vmatprep.mubr.bf16.mxu0 0
        %5086 = vmatmul.mubr.bf16.gmra.mrb[0].mxu0 %v4238
        %v5087 = vpop.f32.mrb[0].mxu0
        %v5088 = vadd.f32 %v5027, %v5087
        %v5089 = vpop.f32.mrb[0].mxu0
        %v5090 = vpop.f32.mrb[0].mxu0
        %v5091 = vpop.f32.mrb[0].mxu0
        %5092 = vdwg.mxu0
        %v5093 = vpack.c.bf16 %v5088, %v5088
        %s5094 = scalar_lea.vmem %s4, 960
        %v5095 = vld [vmem:[%s5094] sm:$0xf]
        %v5096 = vld [vmem:[%s5094 + $0x4] sm:$0xf]
        %v5097 = vld [vmem:[%s5094 + $0x8] sm:$0xf]
        %v5098 = vld [vmem:[%s5094 + $0xc] sm:$0xf]
        %v5099 = vld [vmem:[%s5094 + $0x10] sm:$0xf]
        %v5100 = vld [vmem:[%s5094 + $0x14] sm:$0xf]
        %v5101 = vld [vmem:[%s5094 + $0x18] sm:$0xf]
        %v5102 = vld [vmem:[%s5094 + $0x1c] sm:$0xf]
        %s5103 = scalar_lea.vmem %s5, 30
        %v5104 = vld [vmem:[%s5103] sm:$0x1]
        %v5106 = vlaneseq
        %v5107 = vshrl.u32 %v5106, 7
        %v5108 = vsub.s32 0, %v5107
        %v5109 = vrot.slane %v5104, %v5108
        %v5119 = vunpack.c.l.b16 %v5095
        %v5120 = vunpack.c.l.b16 %v5096
        %v5121 = vunpack.c.l.b16 %v5097
        %v5122 = vunpack.c.l.b16 %v5098
        %v5123 = vunpack.c.l.b16 %v5099
        %v5124 = vunpack.c.l.b16 %v5100
        %v5125 = vunpack.c.l.b16 %v5101
        %v5126 = vunpack.c.l.b16 %v5102
        %v5127 = vpack.c.b16 %v5120, %v5119
        %v5128 = vpack.c.b16 %v5122, %v5121
        %v5129 = vpack.c.b16 %v5124, %v5123
        %v5130 = vpack.c.b16 %v5126, %v5125
        %5135 = vmatprep.subr.bf16.mxu0 0
        %5136 = vmatpush1.bf16.msra.mxu0 %v5127
        %5137 = vmatprep.subr.bf16.mxu0 0
        %5138 = vmatpush1.bf16.msra.mxu0 %v5128
        %5139 = vmatprep.subr.bf16.mxu0 0
        %5140 = vmatpush1.bf16.msra.mxu0 %v5129
        %5141 = vmatprep.subr.bf16.mxu0 0
        %5142 = vmatpush1.bf16.msra.mxu0 %v5130
        %5143 = vmatprep.subr.bf16.mxu0 0
        %5144 = vmatpush1.bf16.msra.mxu0 0
        %5145 = vmatprep.subr.bf16.mxu0 0
        %5146 = vmatpush1.bf16.msra.mxu0 0
        %5147 = vmatprep.subr.bf16.mxu0 0
        %5148 = vmatpush1.bf16.msra.mxu0 0
        %5149 = vmatprep.subr.bf16.mxu0 0
        %5150 = vmatpush1.bf16.msra.mxu0 0
        %5151 = vmatprep.subr.bf16.mxu0 0
        %5152 = vmatpush1.bf16.msra.mxu0 0
        %5153 = vmatprep.subr.bf16.mxu0 0
        %5154 = vmatpush1.bf16.msra.mxu0 0
        %5155 = vmatprep.subr.bf16.mxu0 0
        %5156 = vmatpush1.bf16.msra.mxu0 0
        %5157 = vmatprep.subr.bf16.mxu0 0
        %5158 = vmatpush1.bf16.msra.mxu0 0
        %5159 = vmatprep.subr.bf16.mxu0 0
        %5160 = vmatpush1.bf16.msra.mxu0 0
        %5161 = vmatprep.subr.bf16.mxu0 0
        %5162 = vmatpush1.bf16.msra.mxu0 0
        %5163 = vmatprep.subr.bf16.mxu0 0
        %5164 = vmatpush1.bf16.msra.mxu0 0
        %5165 = vmatprep.subr.bf16.mxu0 0
        %5166 = vmatpush1.bf16.msra.mxu0 0
        %5167 = vmatprep.mubr.bf16.mxu0 0
        %5168 = vmatmul.mubr.bf16.gmra.mrb[0].mxu0 %v4323
        %v5169 = vpop.f32.mrb[0].mxu0
        %v5170 = vadd.f32 %v5109, %v5169
        %v5171 = vpop.f32.mrb[0].mxu0
        %v5172 = vpop.f32.mrb[0].mxu0
        %v5173 = vpop.f32.mrb[0].mxu0
        %5174 = vdwg.mxu0
        %v5175 = vpack.c.bf16 %v5170, %v5170
        %s5176 = scalar_lea.vmem %s4, 1088
        %v5177 = vld [vmem:[%s5176] sm:$0xf]
        %v5178 = vld [vmem:[%s5176 + $0x4] sm:$0xf]
        %v5179 = vld [vmem:[%s5176 + $0x8] sm:$0xf]
        %v5180 = vld [vmem:[%s5176 + $0xc] sm:$0xf]
        %v5181 = vld [vmem:[%s5176 + $0x10] sm:$0xf]
        %v5182 = vld [vmem:[%s5176 + $0x14] sm:$0xf]
        %v5183 = vld [vmem:[%s5176 + $0x18] sm:$0xf]
        %v5184 = vld [vmem:[%s5176 + $0x1c] sm:$0xf]
        %s5185 = scalar_lea.vmem %s5, 34
        %v5186 = vld [vmem:[%s5185] sm:$0x1]
        %v5188 = vlaneseq
        %v5189 = vshrl.u32 %v5188, 7
        %v5190 = vsub.s32 0, %v5189
        %v5191 = vrot.slane %v5186, %v5190
        %v5201 = vunpack.c.l.b16 %v5177
        %v5202 = vunpack.c.l.b16 %v5178
        %v5203 = vunpack.c.l.b16 %v5179
        %v5204 = vunpack.c.l.b16 %v5180
        %v5205 = vunpack.c.l.b16 %v5181
        %v5206 = vunpack.c.l.b16 %v5182
        %v5207 = vunpack.c.l.b16 %v5183
        %v5208 = vunpack.c.l.b16 %v5184
        %v5209 = vpack.c.b16 %v5202, %v5201
        %v5210 = vpack.c.b16 %v5204, %v5203
        %v5211 = vpack.c.b16 %v5206, %v5205
        %v5212 = vpack.c.b16 %v5208, %v5207
        %5217 = vmatprep.subr.bf16.mxu0 0
        %5218 = vmatpush1.bf16.msra.mxu0 %v5209
        %5219 = vmatprep.subr.bf16.mxu0 0
        %5220 = vmatpush1.bf16.msra.mxu0 %v5210
        %5221 = vmatprep.subr.bf16.mxu0 0
        %5222 = vmatpush1.bf16.msra.mxu0 %v5211
        %5223 = vmatprep.subr.bf16.mxu0 0
        %5224 = vmatpush1.bf16.msra.mxu0 %v5212
        %5225 = vmatprep.subr.bf16.mxu0 0
        %5226 = vmatpush1.bf16.msra.mxu0 0
        %5227 = vmatprep.subr.bf16.mxu0 0
        %5228 = vmatpush1.bf16.msra.mxu0 0
        %5229 = vmatprep.subr.bf16.mxu0 0
        %5230 = vmatpush1.bf16.msra.mxu0 0
        %5231 = vmatprep.subr.bf16.mxu0 0
        %5232 = vmatpush1.bf16.msra.mxu0 0
        %5233 = vmatprep.subr.bf16.mxu0 0
        %5234 = vmatpush1.bf16.msra.mxu0 0
        %5235 = vmatprep.subr.bf16.mxu0 0
        %5236 = vmatpush1.bf16.msra.mxu0 0
        %5237 = vmatprep.subr.bf16.mxu0 0
        %5238 = vmatpush1.bf16.msra.mxu0 0
        %5239 = vmatprep.subr.bf16.mxu0 0
        %5240 = vmatpush1.bf16.msra.mxu0 0
        %5241 = vmatprep.subr.bf16.mxu0 0
        %5242 = vmatpush1.bf16.msra.mxu0 0
        %5243 = vmatprep.subr.bf16.mxu0 0
        %5244 = vmatpush1.bf16.msra.mxu0 0
        %5245 = vmatprep.subr.bf16.mxu0 0
        %5246 = vmatpush1.bf16.msra.mxu0 0
        %5247 = vmatprep.subr.bf16.mxu0 0
        %5248 = vmatpush1.bf16.msra.mxu0 0
        %5249 = vmatprep.mubr.bf16.mxu0 0
        %5250 = vmatmul.mubr.bf16.gmra.mrb[0].mxu0 %v4323
        %v5251 = vpop.f32.mrb[0].mxu0
        %v5252 = vadd.f32 %v5191, %v5251
        %v5253 = vpop.f32.mrb[0].mxu0
        %v5254 = vpop.f32.mrb[0].mxu0
        %v5255 = vpop.f32.mrb[0].mxu0
        %5256 = vdwg.mxu0
        %v5257 = vpack.c.bf16 %v5252, %v5252
        %v5259 = vsel %vm753, %v5093, 0
        %v5262 = vsel %vm753, %v5175, 0
        %5264 = vmatprep.subr.bf16.mxu0 0
        %5265 = vmatpush1.bf16.xpose.msra.mxu0 %v5262
        %5266 = vmatprep.subr.bf16.mxu0 0
        %5267 = vmatpush1.bf16.xpose.msra.mxu0 0
        %5268 = vmatprep.subr.bf16.mxu0 0
        %5269 = vmatpush1.bf16.xpose.msra.mxu0 0
        %5270 = vmatprep.subr.bf16.mxu0 0
        %5271 = vmatpush1.bf16.xpose.msra.mxu0 0
        %5272 = vmatprep.subr.bf16.mxu0 0
        %5273 = vmatpush1.bf16.xpose.msra.mxu0 0
        %5274 = vmatprep.subr.bf16.mxu0 0
        %5275 = vmatpush1.bf16.xpose.msra.mxu0 0
        %5276 = vmatprep.subr.bf16.mxu0 0
        %5277 = vmatpush1.bf16.xpose.msra.mxu0 0
        %5278 = vmatprep.subr.bf16.mxu0 0
        %5279 = vmatpush1.bf16.xpose.msra.mxu0 0
        %5280 = vmatprep.subr.bf16.mxu0 0
        %5281 = vmatpush1.bf16.xpose.msra.mxu0 0
        %5282 = vmatprep.subr.bf16.mxu0 0
        %5283 = vmatpush1.bf16.xpose.msra.mxu0 0
        %5284 = vmatprep.subr.bf16.mxu0 0
        %5285 = vmatpush1.bf16.xpose.msra.mxu0 0
        %5286 = vmatprep.subr.bf16.mxu0 0
        %5287 = vmatpush1.bf16.xpose.msra.mxu0 0
        %5288 = vmatprep.subr.bf16.mxu0 0
        %5289 = vmatpush1.bf16.xpose.msra.mxu0 0
        %5290 = vmatprep.subr.bf16.mxu0 0
        %5291 = vmatpush1.bf16.xpose.msra.mxu0 0
        %5292 = vmatprep.subr.bf16.mxu0 0
        %5293 = vmatpush1.bf16.xpose.msra.mxu0 0
        %5294 = vmatprep.subr.bf16.mxu0 0
        %5295 = vmatpush1.bf16.xpose.msra.mxu0 0
        %5296 = vmatprep.mubr.bf16.mxu0 0
        %5297 = vmatmul.mubr.bf16.gmra.mrb[0].mxu0 %v5259
        %v5298 = vpop.f32.mrb[0].mxu0
        %v5299 = vadd.f32 0.0, %v5298
        %v5300 = vpop.f32.mrb[0].mxu0
        %v5301 = vpop.f32.mrb[0].mxu0
        %v5302 = vpop.f32.mrb[0].mxu0
        %5303 = vdwg.mxu0
        %v5304 = vmul.f32 %v5299, 0.25
        %v5305 = vadd.f32 %v5304, %v502
        %v5306 = vsel %vm802, %v5305, -inf
        %5307 = vmax.xlane.f32.xlu0 %v5306
        %v5308 = vpop.xlane.xlu0 %5307
        %v5309 = vsub.f32 %v5305, %v5308
        %v5310 = vmul.f32 %v5309, 1.442695
        %v5311 = vpow.pop %v5310
        %v5312 = vsel %vm802, %v5311, 0.0
        %5313 = vadd.xlane.f32.xlu0 %v5312
        %v5314 = vpop.xlane.xlu0 %5313
        %v5315 = vrcp.pop %v5314
        %v5316 = vmul.f32 %v5311, %v5315
        %v5317 = vpack.c.bf16 %v5316, %v5316
        %v5319 = vsel %vm802, %v5317, 0
        %v5322 = vsel %vm818, %v5257, 0
        %5324 = vmatprep.subr.bf16.mxu0 0
        %5325 = vmatpush1.bf16.msra.mxu0 %v5322
        %5326 = vmatprep.subr.bf16.mxu0 0
        %5327 = vmatpush1.bf16.msra.mxu0 0
        %5328 = vmatprep.subr.bf16.mxu0 0
        %5329 = vmatpush1.bf16.msra.mxu0 0
        %5330 = vmatprep.subr.bf16.mxu0 0
        %5331 = vmatpush1.bf16.msra.mxu0 0
        %5332 = vmatprep.subr.bf16.mxu0 0
        %5333 = vmatpush1.bf16.msra.mxu0 0
        %5334 = vmatprep.subr.bf16.mxu0 0
        %5335 = vmatpush1.bf16.msra.mxu0 0
        %5336 = vmatprep.subr.bf16.mxu0 0
        %5337 = vmatpush1.bf16.msra.mxu0 0
        %5338 = vmatprep.subr.bf16.mxu0 0
        %5339 = vmatpush1.bf16.msra.mxu0 0
        %5340 = vmatprep.subr.bf16.mxu0 0
        %5341 = vmatpush1.bf16.msra.mxu0 0
        %5342 = vmatprep.subr.bf16.mxu0 0
        %5343 = vmatpush1.bf16.msra.mxu0 0
        %5344 = vmatprep.subr.bf16.mxu0 0
        %5345 = vmatpush1.bf16.msra.mxu0 0
        %5346 = vmatprep.subr.bf16.mxu0 0
        %5347 = vmatpush1.bf16.msra.mxu0 0
        %5348 = vmatprep.subr.bf16.mxu0 0
        %5349 = vmatpush1.bf16.msra.mxu0 0
        %5350 = vmatprep.subr.bf16.mxu0 0
        %5351 = vmatpush1.bf16.msra.mxu0 0
        %5352 = vmatprep.subr.bf16.mxu0 0
        %5353 = vmatpush1.bf16.msra.mxu0 0
        %5354 = vmatprep.subr.bf16.mxu0 0
        %5355 = vmatpush1.bf16.msra.mxu0 0
        %5356 = vmatprep.mubr.bf16.mxu0 0
        %5357 = vmatmul.mubr.bf16.gmra.mrb[0].mxu0 %v5319
        %v5358 = vpop.f32.mrb[0].mxu0
        %v5359 = vadd.f32 0.0, %v5358
        %v5360 = vpop.f32.mrb[0].mxu0
        %v5361 = vpop.f32.mrb[0].mxu0
        %v5362 = vpop.f32.mrb[0].mxu0
        %5363 = vdwg.mxu0
        %v5364 = vpack.c.bf16 %v5359, %v5359
        %s5365 = scalar_lea.vmem %s6, 80
        %v5366 = vld [vmem:[%s5365] sm:$0xf]
        %v5367 = vld [vmem:[%s5365 + $0x4] sm:$0xf]
        %v5370 = vunpack.c.l.b16 %v5366
        %v5371 = vunpack.c.l.b16 %v5367
        %v5372 = vpack.c.b16 %v5371, %v5370
        %v5375 = vsel %vm753, %v5364, 0
        %5377 = vmatprep.subr.bf16.mxu0 0
        %5378 = vmatpush1.bf16.msra.mxu0 %v5372
        %5379 = vmatprep.subr.bf16.mxu0 0
        %5380 = vmatpush1.bf16.msra.mxu0 0
        %5381 = vmatprep.subr.bf16.mxu0 0
        %5382 = vmatpush1.bf16.msra.mxu0 0
        %5383 = vmatprep.subr.bf16.mxu0 0
        %5384 = vmatpush1.bf16.msra.mxu0 0
        %5385 = vmatprep.subr.bf16.mxu0 0
        %5386 = vmatpush1.bf16.msra.mxu0 0
        %5387 = vmatprep.subr.bf16.mxu0 0
        %5388 = vmatpush1.bf16.msra.mxu0 0
        %5389 = vmatprep.subr.bf16.mxu0 0
        %5390 = vmatpush1.bf16.msra.mxu0 0
        %5391 = vmatprep.subr.bf16.mxu0 0
        %5392 = vmatpush1.bf16.msra.mxu0 0
        %5393 = vmatprep.subr.bf16.mxu0 0
        %5394 = vmatpush1.bf16.msra.mxu0 0
        %5395 = vmatprep.subr.bf16.mxu0 0
        %5396 = vmatpush1.bf16.msra.mxu0 0
        %5397 = vmatprep.subr.bf16.mxu0 0
        %5398 = vmatpush1.bf16.msra.mxu0 0
        %5399 = vmatprep.subr.bf16.mxu0 0
        %5400 = vmatpush1.bf16.msra.mxu0 0
        %5401 = vmatprep.subr.bf16.mxu0 0
        %5402 = vmatpush1.bf16.msra.mxu0 0
        %5403 = vmatprep.subr.bf16.mxu0 0
        %5404 = vmatpush1.bf16.msra.mxu0 0
        %5405 = vmatprep.subr.bf16.mxu0 0
        %5406 = vmatpush1.bf16.msra.mxu0 0
        %5407 = vmatprep.subr.bf16.mxu0 0
        %5408 = vmatpush1.bf16.msra.mxu0 0
        %5409 = vmatprep.mubr.bf16.mxu0 0
        %5410 = vmatmul.mubr.bf16.gmra.mrb[0].mxu0 %v5375
        %v5411 = vpop.f32.mrb[0].mxu0
        %v5412 = vadd.f32 0.0, %v5411
        %v5413 = vpop.f32.mrb[0].mxu0
        %v5414 = vpop.f32.mrb[0].mxu0
        %v5415 = vpop.f32.mrb[0].mxu0
        %5416 = vdwg.mxu0
        %v5417 = vadd.f32 %v5007, %v5412
        %s5418 = scalar_lea.vmem %s4, 864
        %v5419 = vld [vmem:[%s5418] sm:$0xf]
        %v5420 = vld [vmem:[%s5418 + $0x4] sm:$0xf]
        %v5421 = vld [vmem:[%s5418 + $0x8] sm:$0xf]
        %v5422 = vld [vmem:[%s5418 + $0xc] sm:$0xf]
        %v5423 = vld [vmem:[%s5418 + $0x10] sm:$0xf]
        %v5424 = vld [vmem:[%s5418 + $0x14] sm:$0xf]
        %v5425 = vld [vmem:[%s5418 + $0x18] sm:$0xf]
        %v5426 = vld [vmem:[%s5418 + $0x1c] sm:$0xf]
        %s5427 = scalar_lea.vmem %s5, 27
        %v5428 = vld [vmem:[%s5427] sm:$0x1]
        %v5430 = vlaneseq
        %v5431 = vshrl.u32 %v5430, 7
        %v5432 = vsub.s32 0, %v5431
        %v5433 = vrot.slane %v5428, %v5432
        %v5443 = vunpack.c.l.b16 %v5419
        %v5444 = vunpack.c.l.b16 %v5420
        %v5445 = vunpack.c.l.b16 %v5421
        %v5446 = vunpack.c.l.b16 %v5422
        %v5447 = vunpack.c.l.b16 %v5423
        %v5448 = vunpack.c.l.b16 %v5424
        %v5449 = vunpack.c.l.b16 %v5425
        %v5450 = vunpack.c.l.b16 %v5426
        %v5451 = vpack.c.b16 %v5444, %v5443
        %v5452 = vpack.c.b16 %v5446, %v5445
        %v5453 = vpack.c.b16 %v5448, %v5447
        %v5454 = vpack.c.b16 %v5450, %v5449
        %5459 = vmatprep.subr.bf16.mxu0 0
        %5460 = vmatpush1.bf16.msra.mxu0 %v5451
        %5461 = vmatprep.subr.bf16.mxu0 0
        %5462 = vmatpush1.bf16.msra.mxu0 %v5452
        %5463 = vmatprep.subr.bf16.mxu0 0
        %5464 = vmatpush1.bf16.msra.mxu0 %v5453
        %5465 = vmatprep.subr.bf16.mxu0 0
        %5466 = vmatpush1.bf16.msra.mxu0 %v5454
        %5467 = vmatprep.subr.bf16.mxu0 0
        %5468 = vmatpush1.bf16.msra.mxu0 0
        %5469 = vmatprep.subr.bf16.mxu0 0
        %5470 = vmatpush1.bf16.msra.mxu0 0
        %5471 = vmatprep.subr.bf16.mxu0 0
        %5472 = vmatpush1.bf16.msra.mxu0 0
        %5473 = vmatprep.subr.bf16.mxu0 0
        %5474 = vmatpush1.bf16.msra.mxu0 0
        %5475 = vmatprep.subr.bf16.mxu0 0
        %5476 = vmatpush1.bf16.msra.mxu0 0
        %5477 = vmatprep.subr.bf16.mxu0 0
        %5478 = vmatpush1.bf16.msra.mxu0 0
        %5479 = vmatprep.subr.bf16.mxu0 0
        %5480 = vmatpush1.bf16.msra.mxu0 0
        %5481 = vmatprep.subr.bf16.mxu0 0
        %5482 = vmatpush1.bf16.msra.mxu0 0
        %5483 = vmatprep.subr.bf16.mxu0 0
        %5484 = vmatpush1.bf16.msra.mxu0 0
        %5485 = vmatprep.subr.bf16.mxu0 0
        %5486 = vmatpush1.bf16.msra.mxu0 0
        %5487 = vmatprep.subr.bf16.mxu0 0
        %5488 = vmatpush1.bf16.msra.mxu0 0
        %5489 = vmatprep.subr.bf16.mxu0 0
        %5490 = vmatpush1.bf16.msra.mxu0 0
        %5491 = vmatprep.mubr.bf16.mxu0 0
        %5492 = vmatmul.mubr.bf16.gmra.mrb[0].mxu0 %v4238
        %v5493 = vpop.f32.mrb[0].mxu0
        %v5494 = vadd.f32 %v5433, %v5493
        %v5495 = vpop.f32.mrb[0].mxu0
        %v5496 = vpop.f32.mrb[0].mxu0
        %v5497 = vpop.f32.mrb[0].mxu0
        %5498 = vdwg.mxu0
        %v5499 = vpack.c.bf16 %v5494, %v5494
        %s5500 = scalar_lea.vmem %s4, 992
        %v5501 = vld [vmem:[%s5500] sm:$0xf]
        %v5502 = vld [vmem:[%s5500 + $0x4] sm:$0xf]
        %v5503 = vld [vmem:[%s5500 + $0x8] sm:$0xf]
        %v5504 = vld [vmem:[%s5500 + $0xc] sm:$0xf]
        %v5505 = vld [vmem:[%s5500 + $0x10] sm:$0xf]
        %v5506 = vld [vmem:[%s5500 + $0x14] sm:$0xf]
        %v5507 = vld [vmem:[%s5500 + $0x18] sm:$0xf]
        %v5508 = vld [vmem:[%s5500 + $0x1c] sm:$0xf]
        %s5509 = scalar_lea.vmem %s5, 31
        %v5510 = vld [vmem:[%s5509] sm:$0x1]
        %v5512 = vlaneseq
        %v5513 = vshrl.u32 %v5512, 7
        %v5514 = vsub.s32 0, %v5513
        %v5515 = vrot.slane %v5510, %v5514
        %v5525 = vunpack.c.l.b16 %v5501
        %v5526 = vunpack.c.l.b16 %v5502
        %v5527 = vunpack.c.l.b16 %v5503
        %v5528 = vunpack.c.l.b16 %v5504
        %v5529 = vunpack.c.l.b16 %v5505
        %v5530 = vunpack.c.l.b16 %v5506
        %v5531 = vunpack.c.l.b16 %v5507
        %v5532 = vunpack.c.l.b16 %v5508
        %v5533 = vpack.c.b16 %v5526, %v5525
        %v5534 = vpack.c.b16 %v5528, %v5527
        %v5535 = vpack.c.b16 %v5530, %v5529
        %v5536 = vpack.c.b16 %v5532, %v5531
        %5541 = vmatprep.subr.bf16.mxu0 0
        %5542 = vmatpush1.bf16.msra.mxu0 %v5533
        %5543 = vmatprep.subr.bf16.mxu0 0
        %5544 = vmatpush1.bf16.msra.mxu0 %v5534
        %5545 = vmatprep.subr.bf16.mxu0 0
        %5546 = vmatpush1.bf16.msra.mxu0 %v5535
        %5547 = vmatprep.subr.bf16.mxu0 0
        %5548 = vmatpush1.bf16.msra.mxu0 %v5536
        %5549 = vmatprep.subr.bf16.mxu0 0
        %5550 = vmatpush1.bf16.msra.mxu0 0
        %5551 = vmatprep.subr.bf16.mxu0 0
        %5552 = vmatpush1.bf16.msra.mxu0 0
        %5553 = vmatprep.subr.bf16.mxu0 0
        %5554 = vmatpush1.bf16.msra.mxu0 0
        %5555 = vmatprep.subr.bf16.mxu0 0
        %5556 = vmatpush1.bf16.msra.mxu0 0
        %5557 = vmatprep.subr.bf16.mxu0 0
        %5558 = vmatpush1.bf16.msra.mxu0 0
        %5559 = vmatprep.subr.bf16.mxu0 0
        %5560 = vmatpush1.bf16.msra.mxu0 0
        %5561 = vmatprep.subr.bf16.mxu0 0
        %5562 = vmatpush1.bf16.msra.mxu0 0
        %5563 = vmatprep.subr.bf16.mxu0 0
        %5564 = vmatpush1.bf16.msra.mxu0 0
        %5565 = vmatprep.subr.bf16.mxu0 0
        %5566 = vmatpush1.bf16.msra.mxu0 0
        %5567 = vmatprep.subr.bf16.mxu0 0
        %5568 = vmatpush1.bf16.msra.mxu0 0
        %5569 = vmatprep.subr.bf16.mxu0 0
        %5570 = vmatpush1.bf16.msra.mxu0 0
        %5571 = vmatprep.subr.bf16.mxu0 0
        %5572 = vmatpush1.bf16.msra.mxu0 0
        %5573 = vmatprep.mubr.bf16.mxu0 0
        %5574 = vmatmul.mubr.bf16.gmra.mrb[0].mxu0 %v4323
        %v5575 = vpop.f32.mrb[0].mxu0
        %v5576 = vadd.f32 %v5515, %v5575
        %v5577 = vpop.f32.mrb[0].mxu0
        %v5578 = vpop.f32.mrb[0].mxu0
        %v5579 = vpop.f32.mrb[0].mxu0
        %5580 = vdwg.mxu0
        %v5581 = vpack.c.bf16 %v5576, %v5576
        %s5582 = scalar_lea.vmem %s4, 1120
        %v5583 = vld [vmem:[%s5582] sm:$0xf]
        %v5584 = vld [vmem:[%s5582 + $0x4] sm:$0xf]
        %v5585 = vld [vmem:[%s5582 + $0x8] sm:$0xf]
        %v5586 = vld [vmem:[%s5582 + $0xc] sm:$0xf]
        %v5587 = vld [vmem:[%s5582 + $0x10] sm:$0xf]
        %v5588 = vld [vmem:[%s5582 + $0x14] sm:$0xf]
        %v5589 = vld [vmem:[%s5582 + $0x18] sm:$0xf]
        %v5590 = vld [vmem:[%s5582 + $0x1c] sm:$0xf]
        %s5591 = scalar_lea.vmem %s5, 35
        %v5592 = vld [vmem:[%s5591] sm:$0x1]
        %v5594 = vlaneseq
        %v5595 = vshrl.u32 %v5594, 7
        %v5596 = vsub.s32 0, %v5595
        %v5597 = vrot.slane %v5592, %v5596
        %v5607 = vunpack.c.l.b16 %v5583
        %v5608 = vunpack.c.l.b16 %v5584
        %v5609 = vunpack.c.l.b16 %v5585
        %v5610 = vunpack.c.l.b16 %v5586
        %v5611 = vunpack.c.l.b16 %v5587
        %v5612 = vunpack.c.l.b16 %v5588
        %v5613 = vunpack.c.l.b16 %v5589
        %v5614 = vunpack.c.l.b16 %v5590
        %v5615 = vpack.c.b16 %v5608, %v5607
        %v5616 = vpack.c.b16 %v5610, %v5609
        %v5617 = vpack.c.b16 %v5612, %v5611
        %v5618 = vpack.c.b16 %v5614, %v5613
        %5623 = vmatprep.subr.bf16.mxu0 0
        %5624 = vmatpush1.bf16.msra.mxu0 %v5615
        %5625 = vmatprep.subr.bf16.mxu0 0
        %5626 = vmatpush1.bf16.msra.mxu0 %v5616
        %5627 = vmatprep.subr.bf16.mxu0 0
        %5628 = vmatpush1.bf16.msra.mxu0 %v5617
        %5629 = vmatprep.subr.bf16.mxu0 0
        %5630 = vmatpush1.bf16.msra.mxu0 %v5618
        %5631 = vmatprep.subr.bf16.mxu0 0
        %5632 = vmatpush1.bf16.msra.mxu0 0
        %5633 = vmatprep.subr.bf16.mxu0 0
        %5634 = vmatpush1.bf16.msra.mxu0 0
        %5635 = vmatprep.subr.bf16.mxu0 0
        %5636 = vmatpush1.bf16.msra.mxu0 0
        %5637 = vmatprep.subr.bf16.mxu0 0
        %5638 = vmatpush1.bf16.msra.mxu0 0
        %5639 = vmatprep.subr.bf16.mxu0 0
        %5640 = vmatpush1.bf16.msra.mxu0 0
        %5641 = vmatprep.subr.bf16.mxu0 0
        %5642 = vmatpush1.bf16.msra.mxu0 0
        %5643 = vmatprep.subr.bf16.mxu0 0
        %5644 = vmatpush1.bf16.msra.mxu0 0
        %5645 = vmatprep.subr.bf16.mxu0 0
        %5646 = vmatpush1.bf16.msra.mxu0 0
        %5647 = vmatprep.subr.bf16.mxu0 0
        %5648 = vmatpush1.bf16.msra.mxu0 0
        %5649 = vmatprep.subr.bf16.mxu0 0
        %5650 = vmatpush1.bf16.msra.mxu0 0
        %5651 = vmatprep.subr.bf16.mxu0 0
        %5652 = vmatpush1.bf16.msra.mxu0 0
        %5653 = vmatprep.subr.bf16.mxu0 0
        %5654 = vmatpush1.bf16.msra.mxu0 0
        %5655 = vmatprep.mubr.bf16.mxu0 0
        %5656 = vmatmul.mubr.bf16.gmra.mrb[0].mxu0 %v4323
        %v5657 = vpop.f32.mrb[0].mxu0
        %v5658 = vadd.f32 %v5597, %v5657
        %v5659 = vpop.f32.mrb[0].mxu0
        %v5660 = vpop.f32.mrb[0].mxu0
        %v5661 = vpop.f32.mrb[0].mxu0
        %5662 = vdwg.mxu0
        %v5663 = vpack.c.bf16 %v5658, %v5658
        %v5665 = vsel %vm753, %v5499, 0
        %v5668 = vsel %vm753, %v5581, 0
        %5670 = vmatprep.subr.bf16.mxu0 0
        %5671 = vmatpush1.bf16.xpose.msra.mxu0 %v5668
        %5672 = vmatprep.subr.bf16.mxu0 0
        %5673 = vmatpush1.bf16.xpose.msra.mxu0 0
        %5674 = vmatprep.subr.bf16.mxu0 0
        %5675 = vmatpush1.bf16.xpose.msra.mxu0 0
        %5676 = vmatprep.subr.bf16.mxu0 0
        %5677 = vmatpush1.bf16.xpose.msra.mxu0 0
        %5678 = vmatprep.subr.bf16.mxu0 0
        %5679 = vmatpush1.bf16.xpose.msra.mxu0 0
        %5680 = vmatprep.subr.bf16.mxu0 0
        %5681 = vmatpush1.bf16.xpose.msra.mxu0 0
        %5682 = vmatprep.subr.bf16.mxu0 0
        %5683 = vmatpush1.bf16.xpose.msra.mxu0 0
        %5684 = vmatprep.subr.bf16.mxu0 0
        %5685 = vmatpush1.bf16.xpose.msra.mxu0 0
        %5686 = vmatprep.subr.bf16.mxu0 0
        %5687 = vmatpush1.bf16.xpose.msra.mxu0 0
        %5688 = vmatprep.subr.bf16.mxu0 0
        %5689 = vmatpush1.bf16.xpose.msra.mxu0 0
        %5690 = vmatprep.subr.bf16.mxu0 0
        %5691 = vmatpush1.bf16.xpose.msra.mxu0 0
        %5692 = vmatprep.subr.bf16.mxu0 0
        %5693 = vmatpush1.bf16.xpose.msra.mxu0 0
        %5694 = vmatprep.subr.bf16.mxu0 0
        %5695 = vmatpush1.bf16.xpose.msra.mxu0 0
        %5696 = vmatprep.subr.bf16.mxu0 0
        %5697 = vmatpush1.bf16.xpose.msra.mxu0 0
        %5698 = vmatprep.subr.bf16.mxu0 0
        %5699 = vmatpush1.bf16.xpose.msra.mxu0 0
        %5700 = vmatprep.subr.bf16.mxu0 0
        %5701 = vmatpush1.bf16.xpose.msra.mxu0 0
        %5702 = vmatprep.mubr.bf16.mxu0 0
        %5703 = vmatmul.mubr.bf16.gmra.mrb[0].mxu0 %v5665
        %v5704 = vpop.f32.mrb[0].mxu0
        %v5705 = vadd.f32 0.0, %v5704
        %v5706 = vpop.f32.mrb[0].mxu0
        %v5707 = vpop.f32.mrb[0].mxu0
        %v5708 = vpop.f32.mrb[0].mxu0
        %5709 = vdwg.mxu0
        %v5710 = vmul.f32 %v5705, 0.25
        %v5711 = vadd.f32 %v5710, %v502
        %v5712 = vsel %vm802, %v5711, -inf
        %5713 = vmax.xlane.f32.xlu0 %v5712
        %v5714 = vpop.xlane.xlu0 %5713
        %v5715 = vsub.f32 %v5711, %v5714
        %v5716 = vmul.f32 %v5715, 1.442695
        %v5717 = vpow.pop %v5716
        %v5718 = vsel %vm802, %v5717, 0.0
        %5719 = vadd.xlane.f32.xlu0 %v5718
        %v5720 = vpop.xlane.xlu0 %5719
        %v5721 = vrcp.pop %v5720
        %v5722 = vmul.f32 %v5717, %v5721
        %v5723 = vpack.c.bf16 %v5722, %v5722
        %v5725 = vsel %vm802, %v5723, 0
        %v5728 = vsel %vm818, %v5663, 0
        %5730 = vmatprep.subr.bf16.mxu0 0
        %5731 = vmatpush1.bf16.msra.mxu0 %v5728
        %5732 = vmatprep.subr.bf16.mxu0 0
        %5733 = vmatpush1.bf16.msra.mxu0 0
        %5734 = vmatprep.subr.bf16.mxu0 0
        %5735 = vmatpush1.bf16.msra.mxu0 0
        %5736 = vmatprep.subr.bf16.mxu0 0
        %5737 = vmatpush1.bf16.msra.mxu0 0
        %5738 = vmatprep.subr.bf16.mxu0 0
        %5739 = vmatpush1.bf16.msra.mxu0 0
        %5740 = vmatprep.subr.bf16.mxu0 0
        %5741 = vmatpush1.bf16.msra.mxu0 0
        %5742 = vmatprep.subr.bf16.mxu0 0
        %5743 = vmatpush1.bf16.msra.mxu0 0
        %5744 = vmatprep.subr.bf16.mxu0 0
        %5745 = vmatpush1.bf16.msra.mxu0 0
        %5746 = vmatprep.subr.bf16.mxu0 0
        %5747 = vmatpush1.bf16.msra.mxu0 0
        %5748 = vmatprep.subr.bf16.mxu0 0
        %5749 = vmatpush1.bf16.msra.mxu0 0
        %5750 = vmatprep.subr.bf16.mxu0 0
        %5751 = vmatpush1.bf16.msra.mxu0 0
        %5752 = vmatprep.subr.bf16.mxu0 0
        %5753 = vmatpush1.bf16.msra.mxu0 0
        %5754 = vmatprep.subr.bf16.mxu0 0
        %5755 = vmatpush1.bf16.msra.mxu0 0
        %5756 = vmatprep.subr.bf16.mxu0 0
        %5757 = vmatpush1.bf16.msra.mxu0 0
        %5758 = vmatprep.subr.bf16.mxu0 0
        %5759 = vmatpush1.bf16.msra.mxu0 0
        %5760 = vmatprep.subr.bf16.mxu0 0
        %5761 = vmatpush1.bf16.msra.mxu0 0
        %5762 = vmatprep.mubr.bf16.mxu0 0
        %5763 = vmatmul.mubr.bf16.gmra.mrb[0].mxu0 %v5725
        %v5764 = vpop.f32.mrb[0].mxu0
        %v5765 = vadd.f32 0.0, %v5764
        %v5766 = vpop.f32.mrb[0].mxu0
        %v5767 = vpop.f32.mrb[0].mxu0
        %v5768 = vpop.f32.mrb[0].mxu0
        %5769 = vdwg.mxu0
        %v5770 = vpack.c.bf16 %v5765, %v5765
        %s5771 = scalar_lea.vmem %s6, 88
        %v5772 = vld [vmem:[%s5771] sm:$0xf]
        %v5773 = vld [vmem:[%s5771 + $0x4] sm:$0xf]
        %v5776 = vunpack.c.l.b16 %v5772
        %v5777 = vunpack.c.l.b16 %v5773
        %v5778 = vpack.c.b16 %v5777, %v5776
        %v5781 = vsel %vm753, %v5770, 0
        %5783 = vmatprep.subr.bf16.mxu0 0
        %5784 = vmatpush1.bf16.msra.mxu0 %v5778
        %5785 = vmatprep.subr.bf16.mxu0 0
        %5786 = vmatpush1.bf16.msra.mxu0 0
        %5787 = vmatprep.subr.bf16.mxu0 0
        %5788 = vmatpush1.bf16.msra.mxu0 0
        %5789 = vmatprep.subr.bf16.mxu0 0
        %5790 = vmatpush1.bf16.msra.mxu0 0
        %5791 = vmatprep.subr.bf16.mxu0 0
        %5792 = vmatpush1.bf16.msra.mxu0 0
        %5793 = vmatprep.subr.bf16.mxu0 0
        %5794 = vmatpush1.bf16.msra.mxu0 0
        %5795 = vmatprep.subr.bf16.mxu0 0
        %5796 = vmatpush1.bf16.msra.mxu0 0
        %5797 = vmatprep.subr.bf16.mxu0 0
        %5798 = vmatpush1.bf16.msra.mxu0 0
        %5799 = vmatprep.subr.bf16.mxu0 0
        %5800 = vmatpush1.bf16.msra.mxu0 0
        %5801 = vmatprep.subr.bf16.mxu0 0
        %5802 = vmatpush1.bf16.msra.mxu0 0
        %5803 = vmatprep.subr.bf16.mxu0 0
        %5804 = vmatpush1.bf16.msra.mxu0 0
        %5805 = vmatprep.subr.bf16.mxu0 0
        %5806 = vmatpush1.bf16.msra.mxu0 0
        %5807 = vmatprep.subr.bf16.mxu0 0
        %5808 = vmatpush1.bf16.msra.mxu0 0
        %5809 = vmatprep.subr.bf16.mxu0 0
        %5810 = vmatpush1.bf16.msra.mxu0 0
        %5811 = vmatprep.subr.bf16.mxu0 0
        %5812 = vmatpush1.bf16.msra.mxu0 0
        %5813 = vmatprep.subr.bf16.mxu0 0
        %5814 = vmatpush1.bf16.msra.mxu0 0
        %5815 = vmatprep.mubr.bf16.mxu0 0
        %5816 = vmatmul.mubr.bf16.gmra.mrb[0].mxu0 %v5781
        %v5817 = vpop.f32.mrb[0].mxu0
        %v5818 = vadd.f32 0.0, %v5817
        %v5819 = vpop.f32.mrb[0].mxu0
        %v5820 = vpop.f32.mrb[0].mxu0
        %v5821 = vpop.f32.mrb[0].mxu0
        %5822 = vdwg.mxu0
        %v5823 = vadd.f32 %v5417, %v5818
        %s5824 = scalar_lea.vmem %s7, 2
        %v5825 = vld [vmem:[%s5824] sm:$0x1]
        %v5827 = vlaneseq
        %v5828 = vshrl.u32 %v5827, 7
        %v5829 = vsub.s32 0, %v5828
        %v5830 = vrot.slane %v5825, %v5829
        %v5832 = vadd.f32 %v5823, %v5830
        %v5833 = vadd.f32 %v4193, %v5832
        %s5834 = scalar_lea.vmem %s12, 6
        %v5835 = vld [vmem:[%s5834] sm:$0x3]
        %v5836 = vsel %vm544, %v5833, 0.0
        %5837 = vadd.xlane.f32.xlu0 %v5836
        %v5838 = vpop.xlane.xlu0 %5837
        %v5839 = vmul.f32 %v5838, %v2144
        %v5840 = vsub.f32 %v5833, %v5839
        %v5841 = vmul.f32 %v5840, %v5840
        %v5842 = vsel %vm544, %v5841, 0.0
        %5843 = vadd.xlane.f32.xlu0 %v5842
        %v5844 = vpop.xlane.xlu0 %5843
        %v5845 = vmul.f32 %v5844, %v2144
        %v5846 = vadd.f32 %v5845, 1e-05
        %v5847 = vrsqrt.pop %v5846
        %v5848 = vmul.f32 %v5840, %v5847
        %v5849 = vlaneseq
        %v5850 = vshrl.u32 %v5849, 7
        %v5851 = vsub.s32 0, %v5850
        %v5852 = vrot.slane %v5835, %v5851
        %v5853 = vmul.f32 %v5848, %v5852
        %v5854 = vlaneseq
        %v5855 = vshrl.u32 %v5854, 7
        %v5856 = vsub.s32 1, %v5855
        %v5857 = vrot.slane %v5835, %v5856
        %v5858 = vadd.f32 %v5853, %v5857
        %v5859 = vpack.c.bf16 %v5858, %v5858
        %s5860 = scalar_lea.vmem %s8, 64
        %v5861 = vld [vmem:[%s5860] sm:$0xff]
        %v5862 = vld [vmem:[%s5860 + $0x8] sm:$0xff]
        %v5863 = vld [vmem:[%s5860 + $0x10] sm:$0xff]
        %v5864 = vld [vmem:[%s5860 + $0x18] sm:$0xff]
        %v5865 = vld [vmem:[%s5860 + $0x20] sm:$0xff]
        %v5866 = vld [vmem:[%s5860 + $0x28] sm:$0xff]
        %v5867 = vld [vmem:[%s5860 + $0x30] sm:$0xff]
        %v5868 = vld [vmem:[%s5860 + $0x38] sm:$0xff]
        %s5869 = scalar_lea.vmem %s9, 2
        %v5870 = vld [vmem:[%s5869] sm:$0x3]
        %v5872 = vlaneseq
        %v5873 = vshrl.u32 %v5872, 7
        %v5874 = vsub.s32 0, %v5873
        %v5875 = vrot.slane %v5870, %v5874
        %v5876 = vlaneseq
        %v5877 = vshrl.u32 %v5876, 7
        %v5878 = vsub.s32 1, %v5877
        %v5879 = vrot.slane %v5870, %v5878
        %v5890 = vunpack.c.l.b16 %v5861
        %v5891 = vunpack.c.h.b16 %v5861
        %v5892 = vunpack.c.l.b16 %v5862
        %v5893 = vunpack.c.h.b16 %v5862
        %v5894 = vunpack.c.l.b16 %v5863
        %v5895 = vunpack.c.h.b16 %v5863
        %v5896 = vunpack.c.l.b16 %v5864
        %v5897 = vunpack.c.h.b16 %v5864
        %v5898 = vunpack.c.l.b16 %v5865
        %v5899 = vunpack.c.h.b16 %v5865
        %v5900 = vunpack.c.l.b16 %v5866
        %v5901 = vunpack.c.h.b16 %v5866
        %v5902 = vunpack.c.l.b16 %v5867
        %v5903 = vunpack.c.h.b16 %v5867
        %v5904 = vunpack.c.l.b16 %v5868
        %v5905 = vunpack.c.h.b16 %v5868
        %v5906 = vpack.c.b16 %v5892, %v5890
        %v5907 = vpack.c.b16 %v5893, %v5891
        %v5908 = vpack.c.b16 %v5896, %v5894
        %v5909 = vpack.c.b16 %v5897, %v5895
        %v5910 = vpack.c.b16 %v5900, %v5898
        %v5911 = vpack.c.b16 %v5901, %v5899
        %v5912 = vpack.c.b16 %v5904, %v5902
        %v5913 = vpack.c.b16 %v5905, %v5903
        %v5923 = vsel %vm544, %v5859, 0
        %5925 = vmatprep.subr.bf16.mxu0 %v5907
        %5926 = vmatpush1.bf16.msra.mxu0 %v5906
        %5927 = vmatprep.subr.bf16.mxu0 %v5909
        %5928 = vmatpush1.bf16.msra.mxu0 %v5908
        %5929 = vmatprep.subr.bf16.mxu0 %v5911
        %5930 = vmatpush1.bf16.msra.mxu0 %v5910
        %5931 = vmatprep.subr.bf16.mxu0 %v5913
        %5932 = vmatpush1.bf16.msra.mxu0 %v5912
        %5933 = vmatprep.subr.bf16.mxu0 0
        %5934 = vmatpush1.bf16.msra.mxu0 0
        %5935 = vmatprep.subr.bf16.mxu0 0
        %5936 = vmatpush1.bf16.msra.mxu0 0
        %5937 = vmatprep.subr.bf16.mxu0 0
        %5938 = vmatpush1.bf16.msra.mxu0 0
        %5939 = vmatprep.subr.bf16.mxu0 0
        %5940 = vmatpush1.bf16.msra.mxu0 0
        %5941 = vmatprep.subr.bf16.mxu0 0
        %5942 = vmatpush1.bf16.msra.mxu0 0
        %5943 = vmatprep.subr.bf16.mxu0 0
        %5944 = vmatpush1.bf16.msra.mxu0 0
        %5945 = vmatprep.subr.bf16.mxu0 0
        %5946 = vmatpush1.bf16.msra.mxu0 0
        %5947 = vmatprep.subr.bf16.mxu0 0
        %5948 = vmatpush1.bf16.msra.mxu0 0
        %5949 = vmatprep.subr.bf16.mxu0 0
        %5950 = vmatpush1.bf16.msra.mxu0 0
        %5951 = vmatprep.subr.bf16.mxu0 0
        %5952 = vmatpush1.bf16.msra.mxu0 0
        %5953 = vmatprep.subr.bf16.mxu0 0
        %5954 = vmatpush1.bf16.msra.mxu0 0
        %5955 = vmatprep.subr.bf16.mxu0 0
        %5956 = vmatpush1.bf16.msra.mxu0 0
        %5957 = vmatprep.mubr.bf16.mxu0 0
        %5958 = vmatmul.mubr.bf16.gmra.mrb[0].mxu0 %v5923
        %v5959 = vpop.f32.mrb[0].mxu0
        %v5960 = vadd.f32 %v5875, %v5959
        %v5961 = vpop.f32.mrb[0].mxu0
        %v5962 = vadd.f32 %v5879, %v5961
        %v5963 = vpop.f32.mrb[0].mxu0
        %v5964 = vpop.f32.mrb[0].mxu0
        %5965 = vdwg.mxu0
        %v5966 = vmax.f32 %v5960, 0.0
        %v5967 = vmax.f32 %v5962, 0.0
        %v5968 = vpack.c.bf16 %v5966, %v5966
        %v5969 = vpack.c.bf16 %v5967, %v5967
        %s5970 = scalar_lea.vmem %s10, 128
        %v5971 = vld [vmem:[%s5970] sm:$0xf]
        %v5972 = vld [vmem:[%s5970 + $0x4] sm:$0xf]
        %v5973 = vld [vmem:[%s5970 + $0x8] sm:$0xf]
        %v5974 = vld [vmem:[%s5970 + $0xc] sm:$0xf]
        %v5975 = vld [vmem:[%s5970 + $0x10] sm:$0xf]
        %v5976 = vld [vmem:[%s5970 + $0x14] sm:$0xf]
        %v5977 = vld [vmem:[%s5970 + $0x18] sm:$0xf]
        %v5978 = vld [vmem:[%s5970 + $0x1c] sm:$0xf]
        %v5979 = vld [vmem:[%s5970 + $0x20] sm:$0xf]
        %v5980 = vld [vmem:[%s5970 + $0x24] sm:$0xf]
        %v5981 = vld [vmem:[%s5970 + $0x28] sm:$0xf]
        %v5982 = vld [vmem:[%s5970 + $0x2c] sm:$0xf]
        %v5983 = vld [vmem:[%s5970 + $0x30] sm:$0xf]
        %v5984 = vld [vmem:[%s5970 + $0x34] sm:$0xf]
        %v5985 = vld [vmem:[%s5970 + $0x38] sm:$0xf]
        %v5986 = vld [vmem:[%s5970 + $0x3c] sm:$0xf]
        %v5987 = vld [vmem:[%s5970 + $0x40] sm:$0xf]
        %v5988 = vld [vmem:[%s5970 + $0x44] sm:$0xf]
        %v5989 = vld [vmem:[%s5970 + $0x48] sm:$0xf]
        %v5990 = vld [vmem:[%s5970 + $0x4c] sm:$0xf]
        %v5991 = vld [vmem:[%s5970 + $0x50] sm:$0xf]
        %v5992 = vld [vmem:[%s5970 + $0x54] sm:$0xf]
        %v5993 = vld [vmem:[%s5970 + $0x58] sm:$0xf]
        %v5994 = vld [vmem:[%s5970 + $0x5c] sm:$0xf]
        %v5995 = vld [vmem:[%s5970 + $0x60] sm:$0xf]
        %v5996 = vld [vmem:[%s5970 + $0x64] sm:$0xf]
        %v5997 = vld [vmem:[%s5970 + $0x68] sm:$0xf]
        %v5998 = vld [vmem:[%s5970 + $0x6c] sm:$0xf]
        %v5999 = vld [vmem:[%s5970 + $0x70] sm:$0xf]
        %v6000 = vld [vmem:[%s5970 + $0x74] sm:$0xf]
        %v6001 = vld [vmem:[%s5970 + $0x78] sm:$0xf]
        %v6002 = vld [vmem:[%s5970 + $0x7c] sm:$0xf]
        %s6003 = scalar_lea.vmem %s11, 1
        %v6004 = vld [vmem:[%s6003] sm:$0x1]
        %v6006 = vlaneseq
        %v6007 = vshrl.u32 %v6006, 7
        %v6008 = vsub.s32 0, %v6007
        %v6009 = vrot.slane %v6004, %v6008
        %v6043 = vunpack.c.l.b16 %v5971
        %v6044 = vunpack.c.l.b16 %v5972
        %v6045 = vunpack.c.l.b16 %v5973
        %v6046 = vunpack.c.l.b16 %v5974
        %v6047 = vunpack.c.l.b16 %v5975
        %v6048 = vunpack.c.l.b16 %v5976
        %v6049 = vunpack.c.l.b16 %v5977
        %v6050 = vunpack.c.l.b16 %v5978
        %v6051 = vunpack.c.l.b16 %v5979
        %v6052 = vunpack.c.l.b16 %v5980
        %v6053 = vunpack.c.l.b16 %v5981
        %v6054 = vunpack.c.l.b16 %v5982
        %v6055 = vunpack.c.l.b16 %v5983
        %v6056 = vunpack.c.l.b16 %v5984
        %v6057 = vunpack.c.l.b16 %v5985
        %v6058 = vunpack.c.l.b16 %v5986
        %v6059 = vunpack.c.l.b16 %v5987
        %v6060 = vunpack.c.l.b16 %v5988
        %v6061 = vunpack.c.l.b16 %v5989
        %v6062 = vunpack.c.l.b16 %v5990
        %v6063 = vunpack.c.l.b16 %v5991
        %v6064 = vunpack.c.l.b16 %v5992
        %v6065 = vunpack.c.l.b16 %v5993
        %v6066 = vunpack.c.l.b16 %v5994
        %v6067 = vunpack.c.l.b16 %v5995
        %v6068 = vunpack.c.l.b16 %v5996
        %v6069 = vunpack.c.l.b16 %v5997
        %v6070 = vunpack.c.l.b16 %v5998
        %v6071 = vunpack.c.l.b16 %v5999
        %v6072 = vunpack.c.l.b16 %v6000
        %v6073 = vunpack.c.l.b16 %v6001
        %v6074 = vunpack.c.l.b16 %v6002
        %v6075 = vpack.c.b16 %v6044, %v6043
        %v6076 = vpack.c.b16 %v6046, %v6045
        %v6077 = vpack.c.b16 %v6048, %v6047
        %v6078 = vpack.c.b16 %v6050, %v6049
        %v6079 = vpack.c.b16 %v6052, %v6051
        %v6080 = vpack.c.b16 %v6054, %v6053
        %v6081 = vpack.c.b16 %v6056, %v6055
        %v6082 = vpack.c.b16 %v6058, %v6057
        %v6083 = vpack.c.b16 %v6060, %v6059
        %v6084 = vpack.c.b16 %v6062, %v6061
        %v6085 = vpack.c.b16 %v6064, %v6063
        %v6086 = vpack.c.b16 %v6066, %v6065
        %v6087 = vpack.c.b16 %v6068, %v6067
        %v6088 = vpack.c.b16 %v6070, %v6069
        %v6089 = vpack.c.b16 %v6072, %v6071
        %v6090 = vpack.c.b16 %v6074, %v6073
        %6107 = vmatprep.subr.bf16.mxu0 0
        %6108 = vmatpush1.bf16.msra.mxu0 %v6075
        %6109 = vmatprep.subr.bf16.mxu0 0
        %6110 = vmatpush1.bf16.msra.mxu0 %v6076
        %6111 = vmatprep.subr.bf16.mxu0 0
        %6112 = vmatpush1.bf16.msra.mxu0 %v6077
        %6113 = vmatprep.subr.bf16.mxu0 0
        %6114 = vmatpush1.bf16.msra.mxu0 %v6078
        %6115 = vmatprep.subr.bf16.mxu0 0
        %6116 = vmatpush1.bf16.msra.mxu0 %v6079
        %6117 = vmatprep.subr.bf16.mxu0 0
        %6118 = vmatpush1.bf16.msra.mxu0 %v6080
        %6119 = vmatprep.subr.bf16.mxu0 0
        %6120 = vmatpush1.bf16.msra.mxu0 %v6081
        %6121 = vmatprep.subr.bf16.mxu0 0
        %6122 = vmatpush1.bf16.msra.mxu0 %v6082
        %6123 = vmatprep.subr.bf16.mxu0 0
        %6124 = vmatpush1.bf16.msra.mxu0 %v6083
        %6125 = vmatprep.subr.bf16.mxu0 0
        %6126 = vmatpush1.bf16.msra.mxu0 %v6084
        %6127 = vmatprep.subr.bf16.mxu0 0
        %6128 = vmatpush1.bf16.msra.mxu0 %v6085
        %6129 = vmatprep.subr.bf16.mxu0 0
        %6130 = vmatpush1.bf16.msra.mxu0 %v6086
        %6131 = vmatprep.subr.bf16.mxu0 0
        %6132 = vmatpush1.bf16.msra.mxu0 %v6087
        %6133 = vmatprep.subr.bf16.mxu0 0
        %6134 = vmatpush1.bf16.msra.mxu0 %v6088
        %6135 = vmatprep.subr.bf16.mxu0 0
        %6136 = vmatpush1.bf16.msra.mxu0 %v6089
        %6137 = vmatprep.subr.bf16.mxu0 0
        %6138 = vmatpush1.bf16.msra.mxu0 %v6090
        %6139 = vmatprep.mubr.bf16.mxu0 %v5969
        %6140 = vmatmul.mubr.bf16.gmra.mrb[0].mxu0 %v5968
        %v6141 = vpop.f32.mrb[0].mxu0
        %v6142 = vadd.f32 %v6009, %v6141
        %v6143 = vpop.f32.mrb[0].mxu0
        %v6144 = vpop.f32.mrb[0].mxu0
        %v6145 = vpop.f32.mrb[0].mxu0
        %6146 = vdwg.mxu0
        %v6147 = vadd.f32 %v5858, %v6142
        %s6148 = scalar_lea.vmem %s12, 8
        %v6149 = vld [vmem:[%s6148] sm:$0x3]
        %v6150 = vsel %vm544, %v6147, 0.0
        %6151 = vadd.xlane.f32.xlu0 %v6150
        %v6152 = vpop.xlane.xlu0 %6151
        %v6153 = vmul.f32 %v6152, %v2144
        %v6154 = vsub.f32 %v6147, %v6153
        %v6155 = vmul.f32 %v6154, %v6154
        %v6156 = vsel %vm544, %v6155, 0.0
        %6157 = vadd.xlane.f32.xlu0 %v6156
        %v6158 = vpop.xlane.xlu0 %6157
        %v6159 = vmul.f32 %v6158, %v2144
        %v6160 = vadd.f32 %v6159, 1e-05
        %v6161 = vrsqrt.pop %v6160
        %v6162 = vmul.f32 %v6154, %v6161
        %v6163 = vlaneseq
        %v6164 = vshrl.u32 %v6163, 7
        %v6165 = vsub.s32 0, %v6164
        %v6166 = vrot.slane %v6149, %v6165
        %v6167 = vmul.f32 %v6162, %v6166
        %v6168 = vlaneseq
        %v6169 = vshrl.u32 %v6168, 7
        %v6170 = vsub.s32 1, %v6169
        %v6171 = vrot.slane %v6149, %v6170
        %v6172 = vadd.f32 %v6167, %v6171
        %v6173 = vpack.c.bf16 %v6172, %v6172
        %v6174 = vld [vmem:[%s13] sm:$0xf]
        %v6175 = vld [vmem:[%s13 + $0x4] sm:$0xf]
        %v6176 = vld [vmem:[%s13 + $0x8] sm:$0xf]
        %v6177 = vld [vmem:[%s13 + $0xc] sm:$0xf]
        %v6178 = vld [vmem:[%s13 + $0x10] sm:$0xf]
        %v6179 = vld [vmem:[%s13 + $0x14] sm:$0xf]
        %v6180 = vld [vmem:[%s13 + $0x18] sm:$0xf]
        %v6181 = vld [vmem:[%s13 + $0x1c] sm:$0xf]
        %v6182 = vld [vmem:[%s14] sm:$0x1]
        %v6184 = vlaneseq
        %v6185 = vshrl.u32 %v6184, 7
        %v6186 = vsub.s32 0, %v6185
        %v6187 = vrot.slane %v6182, %v6186
        %v6197 = vunpack.c.l.b16 %v6174
        %v6198 = vunpack.c.l.b16 %v6175
        %v6199 = vunpack.c.l.b16 %v6176
        %v6200 = vunpack.c.l.b16 %v6177
        %v6201 = vunpack.c.l.b16 %v6178
        %v6202 = vunpack.c.l.b16 %v6179
        %v6203 = vunpack.c.l.b16 %v6180
        %v6204 = vunpack.c.l.b16 %v6181
        %v6205 = vpack.c.b16 %v6198, %v6197
        %v6206 = vpack.c.b16 %v6200, %v6199
        %v6207 = vpack.c.b16 %v6202, %v6201
        %v6208 = vpack.c.b16 %v6204, %v6203
        %v6214 = vsel %vm544, %v6173, 0
        %6216 = vmatprep.subr.bf16.mxu0 0
        %6217 = vmatpush1.bf16.msra.mxu0 %v6205
        %6218 = vmatprep.subr.bf16.mxu0 0
        %6219 = vmatpush1.bf16.msra.mxu0 %v6206
        %6220 = vmatprep.subr.bf16.mxu0 0
        %6221 = vmatpush1.bf16.msra.mxu0 %v6207
        %6222 = vmatprep.subr.bf16.mxu0 0
        %6223 = vmatpush1.bf16.msra.mxu0 %v6208
        %6224 = vmatprep.subr.bf16.mxu0 0
        %6225 = vmatpush1.bf16.msra.mxu0 0
        %6226 = vmatprep.subr.bf16.mxu0 0
        %6227 = vmatpush1.bf16.msra.mxu0 0
        %6228 = vmatprep.subr.bf16.mxu0 0
        %6229 = vmatpush1.bf16.msra.mxu0 0
        %6230 = vmatprep.subr.bf16.mxu0 0
        %6231 = vmatpush1.bf16.msra.mxu0 0
        %6232 = vmatprep.subr.bf16.mxu0 0
        %6233 = vmatpush1.bf16.msra.mxu0 0
        %6234 = vmatprep.subr.bf16.mxu0 0
        %6235 = vmatpush1.bf16.msra.mxu0 0
        %6236 = vmatprep.subr.bf16.mxu0 0
        %6237 = vmatpush1.bf16.msra.mxu0 0
        %6238 = vmatprep.subr.bf16.mxu0 0
        %6239 = vmatpush1.bf16.msra.mxu0 0
        %6240 = vmatprep.subr.bf16.mxu0 0
        %6241 = vmatpush1.bf16.msra.mxu0 0
        %6242 = vmatprep.subr.bf16.mxu0 0
        %6243 = vmatpush1.bf16.msra.mxu0 0
        %6244 = vmatprep.subr.bf16.mxu0 0
        %6245 = vmatpush1.bf16.msra.mxu0 0
        %6246 = vmatprep.subr.bf16.mxu0 0
        %6247 = vmatpush1.bf16.msra.mxu0 0
        %6248 = vmatprep.mubr.bf16.mxu0 0
        %6249 = vmatmul.mubr.bf16.gmra.mrb[0].mxu0 %v6214
        %v6250 = vpop.f32.mrb[0].mxu0
        %v6251 = vadd.f32 %v6187, %v6250
        %v6252 = vpop.f32.mrb[0].mxu0
        %v6253 = vpop.f32.mrb[0].mxu0
        %v6254 = vpop.f32.mrb[0].mxu0
        %6255 = vdwg.mxu0
        %6256 = vmax.xlane.f32.xlu0 %v6251
        %v6257 = vpop.xlane.xlu0 %6256
        %v6258 = vsub.f32 %v6251, %v6257
        %v6259 = vmul.f32 %v6258, 1.442695
        %v6260 = vpow.pop %v6259
        %6261 = vadd.xlane.f32.xlu0 %v6260
        %v6262 = vpop.xlane.xlu0 %6261
        %v6263 = vlog2.pop %v6262
        %v6264 = vmul.f32 %v6263, 0.6931472
        %v6265 = vadd.f32 %v6264, %v6257
        %v6266 = vsub.f32 %v6251, %v6265
        %6267 = vst [vmem:[%s475] sm:$0xff] %v6266
        %s6268 = sand.u32 %s352, 1
        %s6269 = scalar_lea.sflag [#allocation8], %s6268
        %s6270 = sand.u32 %s352, 1
        %s6271 = smul.addr %s6270, 8
        %s6272 = scalar_lea.vmem [#allocation7], %s6271
        // Predicated region
        $region77: #{tpu_custom_call.1} parent=75 // pred_check
          %p6273 = pneg %p362
        $region78: #{tpu_custom_call.1} parent=75 // pred_check_branch
          %6275 = sbr.rel (%p6273) target = $region80
        $region79: #{tpu_custom_call.1} parent=75 // pred_region
          %s6277 = ssub.s32 128, 128
          %6278 = vsyncadd %s6269, %s6277
          %s6279 = smul.addr %s45, 128
          %s6280 = scalar_lea.hbm %s17, %s6279
          %s6282 = sshll.u32 %s6272, 4
          %s6283 = int_to_ptr.vmem [resolvable:$true] %s6282
          %6285 = dma.vmem_to_hbm [thread:$0]  %s6283, 128, %s6280, %s6269
        $region80: #{tpu_custom_call.1} parent=75 // pred_fallthru
          _
      $region76: #{tpu_custom_call.1} parent=5 // pred_fallthru
        _
      %p6286 = scmp.le.s32.totalorder 2, %s40
      // Predicated region
      $region81: #{tpu_custom_call.1} parent=5 // pred_check
        %p6287 = pneg %p6286
      $region82: #{tpu_custom_call.1} parent=5 // pred_check_branch
        %6289 = sbr.rel (%p6287) target = $region84
      $region83: #{tpu_custom_call.1} parent=5 // pred_region
        %s6290 = ssub.s32 %s40, 2
        // Predicated region
        $region85: #{tpu_custom_call.1} parent=83 // pred_check
          %p6291 = pneg %p368
        $region86: #{tpu_custom_call.1} parent=83 // pred_check_branch
          %6293 = sbr.rel (%p6291) target = $region88
        $region87: #{tpu_custom_call.1} parent=83 // pred_region
          %s6294 = sand.u32 %s353, 1
          %s6295 = scalar_lea.sflag [#allocation8], %s6294
          %s6296 = sand.u32 %s353, 1
          %s6297 = smul.addr %s6296, 8
          %s6298 = scalar_lea.vmem [#allocation7], %s6297
          %6299 = dma.done %s6295, 128
        $region88: #{tpu_custom_call.1} parent=83 // pred_fallthru
          _
      $region84: #{tpu_custom_call.1} parent=5 // pred_fallthru
        _
    $region6: #{tpu_custom_call.1} parent=1 // loop_footer
      %s44 = sadd.s32 1, %s40
    $region7: #{tpu_custom_call.1} parent=1 // loop_footer_branch
      %39 = sbr.rel target = $region3
    $region8: #{tpu_custom_call.1} parent=1 // loop_exit
      _
    %6300 = vsyncpa [#allocation8], 1
    %s6301 = scalar_lea.sflag [#allocation8], 1
    %6302 = vsyncpa %s6301, 1

</llo_original>
